<compile_context>
chip_gen: v7x
topology: tpu7x:2x2x1
jax: 0.10.0
libtpu: 0.0.40
codegen_flags: <defaults>
</compile_context>

<pallas_src>
import math

import jax
import jax.numpy as jnp
from jax.experimental import pallas as pl
from jax.experimental.pallas import tpu as pltpu


# ----------------------------------------------------------------------------
# Small helpers
# ----------------------------------------------------------------------------
def _tpu_generation():
    """Best-effort TPU generation from device_kind ('TPU v6 lite' -> 6, ...)."""
    try:
        kind = jax.devices()[0].device_kind.lower()
    except Exception:
        return 0
    for g in (7, 6, 5, 4):
        if f"v{g}" in kind:
            return g
    return 0


def _softmax_over_points(s):
    """Softmax over axis=1 of (GB, N, 1) logits; EUP approx reciprocal."""
    s = s - jnp.max(s, axis=1, keepdims=True)
    e = jnp.exp(s)
    return e * pl.reciprocal(jnp.sum(e, axis=1, keepdims=True), approx=True)


# ----------------------------------------------------------------------------
# Pallas kernel factory: static flags select the v5e vs v6e/v7x code path.
# ----------------------------------------------------------------------------
def _make_encoder_kernel(mxu_logits: bool, bf16_elementwise: bool):
    def encoder_kernel(x_ref,
                       w1_ref, bn1s_ref, c1_ref,
                       w2_ref, wl1_ref, wm1_ref, bm1_ref,
                       w3l_ref, w3g_ref, bn2s_ref, c2_ref,
                       w4_ref, wl2_ref, wm2_ref, bm2_ref,
                       o_ref):
        GB, N, CIN = x_ref.shape
        K1 = w1_ref.shape[0]            # 16 (padded input channels)
        C2 = w2_ref.shape[1]            # 256
        C3 = w4_ref.shape[1]            # 512 (encoder_channel)
        bf16 = jnp.bfloat16

        # ---- input: pad 10 -> 16 channels and cast in-kernel (no HBM round trip)
        x = x_ref[...].astype(bf16).reshape(GB * N, CIN)
        if CIN < K1:
            x = jnp.concatenate(
                [x, jnp.zeros((GB * N, K1 - CIN), bf16)], axis=-1)

        # ---- first_conv: Conv1d(10,128,1) + BN + ReLU  (b1/BN folded: bn1s, c1)
        h = jnp.dot(x, w1_ref[...], preferred_element_type=jnp.float32)
        if bf16_elementwise:
            h_act = jnp.maximum(
                h.astype(bf16) * bn1s_ref[...].astype(bf16)
                + c1_ref[...].astype(bf16), 0.0)                       # bf16 VALU
        else:
            h_act = jnp.maximum(h * bn1s_ref[...] + c1_ref[...], 0.0).astype(bf16)

        # ---- first_conv: Conv1d(128,256,1)  (bias b2 folded away, see prep)
        f = jnp.dot(h_act, w2_ref[...],
                    preferred_element_type=jnp.float32)                # (GB*N, 256) f32
        f3d = f.reshape(GB, N, C2)

        # ---- atten_pool1: softmax over points -> weighted sum -> Linear(256,256)
        if mxu_logits:
            # logits = f @ ws1 = h_act @ (w2 @ ws1): reuse bf16 LHS, tiny MXU matmul
            s = jnp.dot(h_act, wl1_ref[...],
                        preferred_element_type=jnp.float32).reshape(GB, N, 1)
        else:
            s = jnp.sum(f3d * wl1_ref[...], axis=-1, keepdims=True)
        attn = _softmax_over_points(s)
        pooled = jnp.sum(attn * f3d, axis=1)                           # (GB, 256) f32
        g1 = jnp.dot(pooled.astype(bf16), wm1_ref[...],
                     preferred_element_type=jnp.float32) + bm1_ref[...]

        # ---- second_conv layer 1 with split weight:
        #      cat([global, local]) @ w3 == local @ w3l + global @ w3g
        #      all per-point constants folded into g_fold = h2g*bn2s + c2.
        h2g = jnp.dot(g1.astype(bf16), w3g_ref[...],
                      preferred_element_type=jnp.float32)              # (GB, 512)
        gfold = h2g * bn2s_ref[...] + c2_ref[...]                      # (GB, 512) f32
        h2l = jnp.dot(f.astype(bf16), w3l_ref[...],
                      preferred_element_type=jnp.float32).reshape(GB, N, C3)
        if bf16_elementwise:
            h2_act = jnp.maximum(
                h2l.astype(bf16) * bn2s_ref[...].astype(bf16)
                + gfold.astype(bf16)[:, None, :], 0.0)                 # bf16 VALU
        else:
            h2_act = jnp.maximum(h2l * bn2s_ref[...] + gfold[:, None, :],
                                 0.0).astype(bf16)
        h2_act = h2_act.reshape(GB * N, C3)

        # ---- second_conv layer 2 (bias b4 folded away)
        f2 = jnp.dot(h2_act, w4_ref[...],
                     preferred_element_type=jnp.float32)               # (GB*N, 512) f32
        f2_3d = f2.reshape(GB, N, C3)

        # ---- atten_pool2
        if mxu_logits:
            s2 = jnp.dot(h2_act, wl2_ref[...],
                         preferred_element_type=jnp.float32).reshape(GB, N, 1)
        else:
            s2 = jnp.sum(f2_3d * wl2_ref[...], axis=-1, keepdims=True)
        attn2 = _softmax_over_points(s2)
        pooled2 = jnp.sum(attn2 * f2_3d, axis=1)                       # (GB, 512) f32
        out = jnp.dot(pooled2.astype(bf16), wm2_ref[...],
                      preferred_element_type=jnp.float32) + bm2_ref[...]

        o_ref[...] = out.astype(o_ref.dtype)

    return encoder_kernel


# ----------------------------------------------------------------------------
# Weight preparation: bias / BN folding and bf16 casts.
# ----------------------------------------------------------------------------
def _prepare_weights(params, mxu_logits):
    bf16 = jnp.bfloat16
    c_half = params['w3'].shape[0] // 2                        # 256

    # first_conv layer 1: conv bias + eval-mode BN folded into (bn1s, c1)
    w1 = jnp.pad(params['w1'], ((0, 16 - params['w1'].shape[0]), (0, 0)))  # (16,128)
    bn1s, bn1t = params['bn1_s'], params['bn1_t']
    c1 = params['b1'] * bn1s + bn1t

    # first_conv layer 2: softmax shift-invariance + sum(attn)=1 =>
    # dropping b2 only shifts the pooled vector by b2 -> fold into bm1 / c2.
    w2, b2 = params['w2'], params['b2']
    ws1, wm1 = params['ws1'], params['wm1']
    bm1 = params['bm1'] + b2 @ wm1

    # w3 split: torch.cat([feature_global, feature], dim=channel) means
    # input-channel rows [0:256] act on the pooled (global) feature and rows
    # [256:512] on the per-point feature (Conv1d weight (out,in,1) stored
    # transposed as (in,out) in params).
    w3 = params['w3']
    w3g, w3l = w3[:c_half, :], w3[c_half:, :]
    bn2s, bn2t = params['bn2_s'], params['bn2_t']
    c2 = (params['b3'] + b2 @ w3l) * bn2s + bn2t               # (1,512)

    # second_conv layer 2: same b4 fold into bm2.
    w4, b4 = params['w4'], params['b4']
    ws2, wm2 = params['ws2'], params['wm2']
    bm2 = params['bm2'] + b4 @ wm2

    if mxu_logits:
        # attention logits on the MXU: s = h_act @ (w2@ws1), s2 = h2_act @ (w4@ws2)
        wl1 = (w2 @ ws1).astype(bf16)                          # (128, 1)
        wl2 = (w4 @ ws2).astype(bf16)                          # (512, 1)
    else:
        # v5e: MXU is the saturated slot, keep logits on VPU/XLU
        wl1 = ws1.T                                            # (1, 256) f32
        wl2 = ws2.T                                            # (1, 512) f32

    return [
        w1.astype(bf16), bn1s, c1,
        w2.astype(bf16), wl1, wm1.astype(bf16), bm1,
        w3l.astype(bf16), w3g.astype(bf16), bn2s, c2,
        w4.astype(bf16), wl2, wm2.astype(bf16), bm2,
    ]


def _replicated_spec(arr):
    nd = arr.ndim
    return pl.BlockSpec(arr.shape, lambda i, _nd=nd: (0,) * _nd)


def _pick_group_batch(bg, gen):
    """Groups per grid step. Big GB fills the MXU and amortises the ~0.35us
    step overhead; v7x (64 MiB VMEM/TC, 2 TCs) caps GB and prefers an even
    number of grid steps."""
    cap = 128 if gen in (4, 5) else 64
    divs = [d for d in range(8, min(bg, cap) + 1, 8) if bg % d == 0]
    if bg <= cap:
        divs.append(bg)            # block == full batch dim is always legal
    if gen >= 7:
        even = [d for d in divs if (bg // d) % 2 == 0]
        if even:
            return max(even)
    return max(divs) if divs else bg


def encoder_pallas(x, params):
    """x: (BG, N, 10) float32 -> (BG, 512) float32."""
    BG, N, cin = x.shape
    C_OUT = params['wm2'].shape[1]

    gen = _tpu_generation()
    fast = gen not in (4, 5)       # v6e/v7x (or unknown): bf16 VPU + MXU logits
    weights = _prepare_weights(params, mxu_logits=fast)
    kernel = _make_encoder_kernel(mxu_logits=fast, bf16_elementwise=fast)
    GB = _pick_group_batch(BG, gen)

    # Advisory cost hint so XLA schedules the surrounding knn/gather glue well.
    per_point_macs = 16 * 128 + 128 * 256 + 256 * 512 + 512 * 512
    if fast:
        per_point_macs += 128 + 512                     # logit matmuls
    per_group_macs = 256 * 256 + 256 * 512 + 512 * 512
    flops = 2 * BG * N * per_point_macs + 2 * BG * per_group_macs
    bytes_accessed = (int(x.size) * x.dtype.itemsize
                      + sum(int(w.size) * w.dtype.itemsize for w in weights)
                      + BG * C_OUT * 4)
    cost = pl.CostEstimate(flops=int(flops),
                           transcendentals=int(2 * BG * (N + 1)),
                           bytes_accessed=int(bytes_accessed))

    cp_kwargs = dict(dimension_semantics=("parallel",))
    if gen >= 7:
        cp_kwargs["vmem_limit_bytes"] = 40 * 1024 * 1024    # 64 MiB physical/TC
    elif gen in (4, 5, 6):
        cp_kwargs["vmem_limit_bytes"] = 64 * 1024 * 1024    # 128 MiB physical

    return pl.pallas_call(
        kernel,
        out_shape=jax.ShapeDtypeStruct((BG, C_OUT), jnp.float32),
        grid_spec=pltpu.PrefetchScalarGridSpec(
            num_scalar_prefetch=0,
            grid=(BG // GB,),
            in_specs=[pl.BlockSpec((GB, N, cin), lambda i: (i, 0, 0))]
                     + [_replicated_spec(w) for w in weights],
            out_specs=pl.BlockSpec((GB, C_OUT), lambda i: (i, 0)),
        ),
        compiler_params=pltpu.CompilerParams(**cp_kwargs),
        cost_estimate=cost,
    )(x, *weights)


# ----------------------------------------------------------------------------
# Plain-JAX glue: sampling, kNN grouping, relative-feature construction.
# ----------------------------------------------------------------------------
def simple_encoder_forward(xyz, n_group, group_size, params):
    """xyz: (B, Np, 3) -> (center (B,G,3), features (B,G,512))."""
    B, Np, _ = xyz.shape

    # TODO(synk): misc.random_sample is external; use a deterministic
    # fixed-key permutation as the random center sampler.
    perm = jax.random.permutation(jax.random.PRNGKey(42), Np)[:n_group]
    center = xyz[:, perm, :]                                        # (B, G, 3)

    # knn_point(group_size, xyz, center): squared distances + top-k smallest.
    d = (jnp.sum(center ** 2, axis=-1, keepdims=True)
         + jnp.sum(xyz ** 2, axis=-1)[:, None, :]
         - 2.0 * jnp.einsum('bgd,bnd->bgn', center, xyz))           # (B, G, Np)
    _, idx = jax.lax.top_k(-d, group_size)                          # (B, G, k)

    neighborhood = jax.vmap(lambda pts, ind: pts[ind])(xyz, idx)    # (B, G, k, 3)
    xyz_tile = jnp.broadcast_to(center[:, :, None, :],
                                (B, n_group, group_size, 3))
    relative_xyz = xyz_tile - neighborhood
    relative_dis = jnp.sqrt(jnp.sum(relative_xyz ** 2, axis=-1, keepdims=True))
    relative_feature = jnp.concatenate(
        [relative_dis, relative_xyz, xyz_tile, neighborhood], axis=-1)  # (B,G,k,10)

    # Raw f32 (BG, N, 10) goes straight into the kernel (pad + bf16 cast happen
    # inside the kernel).
    x = relative_feature.reshape(B * n_group, group_size, 10).astype(jnp.float32)
    feats = encoder_pallas(x, params)                               # (B*G, 512)
    return center, feats.reshape(B, n_group, -1)


# ----------------------------------------------------------------------------
# Deterministic parameter init (PyTorch-style uniform(-1/sqrt(cin), 1/sqrt(cin))).
# ----------------------------------------------------------------------------
def init_params(key, eps=1e-5):
    def linear(k, cin, cout):
        kw, kb = jax.random.split(k)
        bound = 1.0 / math.sqrt(cin)
        w = jax.random.uniform(kw, (cin, cout), jnp.float32, -bound, bound)
        b = jax.random.uniform(kb, (1, cout), jnp.float32, -bound, bound)
        return w, b

    ks = jax.random.split(key, 8)
    p = {}
    p['w1'], p['b1'] = linear(ks[0], 10, 128)
    # BatchNorm1d defaults: gamma=1, beta=0, running_mean=0, running_var=1 (eval mode)
    p['bn1_s'] = jnp.full((1, 128), 1.0 / math.sqrt(1.0 + eps), jnp.float32)
    p['bn1_t'] = jnp.zeros((1, 128), jnp.float32)
    p['w2'], p['b2'] = linear(ks[1], 128, 256)
    p['ws1'], p['bs1'] = linear(ks[2], 256, 1)
    p['wm1'], p['bm1'] = linear(ks[3], 256, 256)
    p['w3'], p['b3'] = linear(ks[4], 512, 512)
    p['bn2_s'] = jnp.full((1, 512), 1.0 / math.sqrt(1.0 + eps), jnp.float32)
    p['bn2_t'] = jnp.zeros((1, 512), jnp.float32)
    p['w4'], p['b4'] = linear(ks[5], 512, 512)       # encoder_channel = 512
    p['ws2'], p['bs2'] = linear(ks[6], 512, 1)
    p['wm2'], p['bm2'] = linear(ks[7], 512, 512)
    return p


if __name__ == "__main__":
    key = jax.random.PRNGKey(0)
    kx, kp = jax.random.split(key)

    B, NUM_POINTS = 2, 128
    N_GROUP, GROUP_SIZE = 8, 32            # module default k=32
    EMBED_DIMS = 512                       # required for shape consistency (see NOTE)

    xyz = jax.random.normal(kx, (B, NUM_POINTS, 3), jnp.float32)
    params = init_params(kp)

    center, features = simple_encoder_forward(xyz, N_GROUP, GROUP_SIZE, params)
    jax.block_until_ready((center, features))

    assert center.shape == (B, N_GROUP, 3)
    assert features.shape == (B, N_GROUP, EMBED_DIMS)
    assert bool(jnp.all(jnp.isfinite(features)))
    print("KERNEL_OK")
</pallas_src>

<mosaic_0001>
module attributes {stable_mosaic.version = 11 : i64} {
  func.func @encoder_kernel(%arg0: i32, %arg1: memref<16x32x10xf32, #tpu.memory_space<vmem>>, %arg2: memref<16x128xbf16, #tpu.memory_space<vmem>>, %arg3: memref<1x128xf32, #tpu.memory_space<vmem>>, %arg4: memref<1x128xf32, #tpu.memory_space<vmem>>, %arg5: memref<128x256xbf16, #tpu.memory_space<vmem>>, %arg6: memref<128x1xbf16, #tpu.memory_space<vmem>>, %arg7: memref<256x256xbf16, #tpu.memory_space<vmem>>, %arg8: memref<1x256xf32, #tpu.memory_space<vmem>>, %arg9: memref<256x512xbf16, #tpu.memory_space<vmem>>, %arg10: memref<256x512xbf16, #tpu.memory_space<vmem>>, %arg11: memref<1x512xf32, #tpu.memory_space<vmem>>, %arg12: memref<1x512xf32, #tpu.memory_space<vmem>>, %arg13: memref<512x512xbf16, #tpu.memory_space<vmem>>, %arg14: memref<512x1xbf16, #tpu.memory_space<vmem>>, %arg15: memref<512x512xbf16, #tpu.memory_space<vmem>>, %arg16: memref<1x512xf32, #tpu.memory_space<vmem>>, %arg17: memref<16x512xf32, #tpu.memory_space<vmem>>) attributes {dimension_semantics = [#tpu.dimension_semantics<parallel>], iteration_bounds = array<i64: 1>, scalar_prefetch = 0 : i64, scratch_operands = 0 : i64, tpu.core_type = #tpu.core_type<tc>, window_params = [{transform_indices = @transform_0, window_bounds = array<i64: 16, 32, 10>}, {pipeline_mode = #tpu.pipeline_mode<synchronous>, transform_indices = @transform_1, window_bounds = array<i64: 16, 128>}, {pipeline_mode = #tpu.pipeline_mode<synchronous>, transform_indices = @transform_2, window_bounds = array<i64: 1, 128>}, {pipeline_mode = #tpu.pipeline_mode<synchronous>, transform_indices = @transform_3, window_bounds = array<i64: 1, 128>}, {pipeline_mode = #tpu.pipeline_mode<synchronous>, transform_indices = @transform_4, window_bounds = array<i64: 128, 256>}, {pipeline_mode = #tpu.pipeline_mode<synchronous>, transform_indices = @transform_5, window_bounds = array<i64: 128, 1>}, {pipeline_mode = #tpu.pipeline_mode<synchronous>, transform_indices = @transform_6, window_bounds = array<i64: 256, 256>}, {pipeline_mode = #tpu.pipeline_mode<synchronous>, transform_indices = @transform_7, window_bounds = array<i64: 1, 256>}, {pipeline_mode = #tpu.pipeline_mode<synchronous>, transform_indices = @transform_8, window_bounds = array<i64: 256, 512>}, {pipeline_mode = #tpu.pipeline_mode<synchronous>, transform_indices = @transform_9, window_bounds = array<i64: 256, 512>}, {pipeline_mode = #tpu.pipeline_mode<synchronous>, transform_indices = @transform_10, window_bounds = array<i64: 1, 512>}, {pipeline_mode = #tpu.pipeline_mode<synchronous>, transform_indices = @transform_11, window_bounds = array<i64: 1, 512>}, {pipeline_mode = #tpu.pipeline_mode<synchronous>, transform_indices = @transform_12, window_bounds = array<i64: 512, 512>}, {pipeline_mode = #tpu.pipeline_mode<synchronous>, transform_indices = @transform_13, window_bounds = array<i64: 512, 1>}, {pipeline_mode = #tpu.pipeline_mode<synchronous>, transform_indices = @transform_14, window_bounds = array<i64: 512, 512>}, {pipeline_mode = #tpu.pipeline_mode<synchronous>, transform_indices = @transform_15, window_bounds = array<i64: 1, 512>}, {transform_indices = @transform_16, window_bounds = array<i64: 16, 512>}]} {
    %c0 = arith.constant 0 : index
    %c0_0 = arith.constant 0 : index
    %c0_1 = arith.constant 0 : index
    %0 = vector.load %arg1[%c0, %c0_0, %c0_1] : memref<16x32x10xf32, #tpu.memory_space<vmem>>, vector<16x32x10xf32>
    %1 = arith.truncf %0 : vector<16x32x10xf32> to vector<16x32x10xbf16>
    %2 = vector.shape_cast %1 : vector<16x32x10xbf16> to vector<512x10xbf16>
    %cst = arith.constant 0.000000e+00 : bf16
    %3 = vector.broadcast %cst : bf16 to vector<512x6xbf16>
    %4 = tpu.concatenate %2, %3 in 1 : vector<512x10xbf16>, vector<512x6xbf16> -> vector<512x16xbf16>
    %c0_2 = arith.constant 0 : index
    %c0_3 = arith.constant 0 : index
    %5 = vector.load %arg2[%c0_2, %c0_3] : memref<16x128xbf16, #tpu.memory_space<vmem>>, vector<16x128xbf16>
    %cst_4 = arith.constant dense<0.000000e+00> : vector<512x128xf32>
    %6 = tpu.matmul %4, %5, %cst_4 {dimension_numbers = #tpu.dot_dimension_numbers<[1], [0], [0], [1], [0, 0, 1, 1], [], []>} : vector<512x16xbf16>, vector<16x128xbf16>, vector<512x128xf32> -> vector<512x128xf32>
    %7 = arith.truncf %6 : vector<512x128xf32> to vector<512x128xbf16>
    %c0_5 = arith.constant 0 : index
    %c0_6 = arith.constant 0 : index
    %8 = vector.load %arg3[%c0_5, %c0_6] : memref<1x128xf32, #tpu.memory_space<vmem>>, vector<1x128xf32>
    %9 = arith.truncf %8 : vector<1x128xf32> to vector<1x128xbf16>
    %10 = vector.broadcast %9 : vector<1x128xbf16> to vector<512x128xbf16>
    %11 = arith.mulf %7, %10 : vector<512x128xbf16>
    %c0_7 = arith.constant 0 : index
    %c0_8 = arith.constant 0 : index
    %12 = vector.load %arg4[%c0_7, %c0_8] : memref<1x128xf32, #tpu.memory_space<vmem>>, vector<1x128xf32>
    %13 = arith.truncf %12 : vector<1x128xf32> to vector<1x128xbf16>
    %14 = vector.broadcast %13 : vector<1x128xbf16> to vector<512x128xbf16>
    %15 = arith.addf %11, %14 : vector<512x128xbf16>
    %cst_9 = arith.constant 0.000000e+00 : bf16
    %16 = vector.broadcast %cst_9 : bf16 to vector<512x128xbf16>
    %17 = arith.maximumf %15, %16 : vector<512x128xbf16>
    %c0_10 = arith.constant 0 : index
    %c0_11 = arith.constant 0 : index
    %18 = vector.load %arg5[%c0_10, %c0_11] : memref<128x256xbf16, #tpu.memory_space<vmem>>, vector<128x256xbf16>
    %cst_12 = arith.constant dense<0.000000e+00> : vector<512x256xf32>
    %19 = tpu.matmul %17, %18, %cst_12 {dimension_numbers = #tpu.dot_dimension_numbers<[1], [0], [0], [1], [0, 0, 1, 1], [], []>} : vector<512x128xbf16>, vector<128x256xbf16>, vector<512x256xf32> -> vector<512x256xf32>
    %20 = vector.shape_cast %19 : vector<512x256xf32> to vector<16x32x256xf32>
    %c0_13 = arith.constant 0 : index
    %c0_14 = arith.constant 0 : index
    %21 = vector.load %arg6[%c0_13, %c0_14] : memref<128x1xbf16, #tpu.memory_space<vmem>>, vector<128x1xbf16>
    %cst_15 = arith.constant dense<0.000000e+00> : vector<512x1xf32>
    %22 = tpu.matmul %17, %21, %cst_15 {dimension_numbers = #tpu.dot_dimension_numbers<[1], [0], [0], [1], [0, 0, 1, 1], [], []>} : vector<512x128xbf16>, vector<128x1xbf16>, vector<512x1xf32> -> vector<512x1xf32>
    %23 = vector.shape_cast %22 : vector<512x1xf32> to vector<16x32x1xf32>
    %cst_16 = arith.constant dense<0xFF800000> : vector<16x1xf32>
    %24 = vector.multi_reduction <maximumf>, %23, %cst_16 [1] : vector<16x32x1xf32> to vector<16x1xf32>
    %25 = vector.shape_cast %24 : vector<16x1xf32> to vector<16x1x1xf32>
    %26 = vector.broadcast %25 : vector<16x1x1xf32> to vector<16x32x1xf32>
    %27 = arith.subf %23, %26 : vector<16x32x1xf32>
    %28 = math.exp %27 : vector<16x32x1xf32>
    %cst_17 = arith.constant dense<0.000000e+00> : vector<16x1xf32>
    %29 = vector.multi_reduction <add>, %28, %cst_17 [1] : vector<16x32x1xf32> to vector<16x1xf32>
    %30 = vector.shape_cast %29 : vector<16x1xf32> to vector<16x1x1xf32>
    %31 = tpu.reciprocal %30 {approx = true} : vector<16x1x1xf32> -> vector<16x1x1xf32>
    %32 = vector.broadcast %31 : vector<16x1x1xf32> to vector<16x32x1xf32>
    %33 = arith.mulf %28, %32 : vector<16x32x1xf32>
    %34 = vector.broadcast %33 : vector<16x32x1xf32> to vector<16x32x256xf32>
    %35 = arith.mulf %34, %20 : vector<16x32x256xf32>
    %cst_18 = arith.constant dense<0.000000e+00> : vector<16x256xf32>
    %36 = vector.multi_reduction <add>, %35, %cst_18 [1] : vector<16x32x256xf32> to vector<16x256xf32>
    %37 = arith.truncf %36 : vector<16x256xf32> to vector<16x256xbf16>
    %c0_19 = arith.constant 0 : index
    %c0_20 = arith.constant 0 : index
    %38 = vector.load %arg7[%c0_19, %c0_20] : memref<256x256xbf16, #tpu.memory_space<vmem>>, vector<256x256xbf16>
    %cst_21 = arith.constant dense<0.000000e+00> : vector<16x256xf32>
    %39 = tpu.matmul %37, %38, %cst_21 {dimension_numbers = #tpu.dot_dimension_numbers<[1], [0], [0], [1], [0, 0, 1, 1], [], []>} : vector<16x256xbf16>, vector<256x256xbf16>, vector<16x256xf32> -> vector<16x256xf32>
    %c0_22 = arith.constant 0 : index
    %c0_23 = arith.constant 0 : index
    %40 = vector.load %arg8[%c0_22, %c0_23] : memref<1x256xf32, #tpu.memory_space<vmem>>, vector<1x256xf32>
    %41 = vector.broadcast %40 : vector<1x256xf32> to vector<16x256xf32>
    %42 = arith.addf %39, %41 : vector<16x256xf32>
    %43 = arith.truncf %42 : vector<16x256xf32> to vector<16x256xbf16>
    %c0_24 = arith.constant 0 : index
    %c0_25 = arith.constant 0 : index
    %44 = vector.load %arg10[%c0_24, %c0_25] : memref<256x512xbf16, #tpu.memory_space<vmem>>, vector<256x512xbf16>
    %cst_26 = arith.constant dense<0.000000e+00> : vector<16x512xf32>
    %45 = tpu.matmul %43, %44, %cst_26 {dimension_numbers = #tpu.dot_dimension_numbers<[1], [0], [0], [1], [0, 0, 1, 1], [], []>} : vector<16x256xbf16>, vector<256x512xbf16>, vector<16x512xf32> -> vector<16x512xf32>
    %c0_27 = arith.constant 0 : index
    %c0_28 = arith.constant 0 : index
    %46 = vector.load %arg11[%c0_27, %c0_28] : memref<1x512xf32, #tpu.memory_space<vmem>>, vector<1x512xf32>
    %47 = vector.broadcast %46 : vector<1x512xf32> to vector<16x512xf32>
    %48 = arith.mulf %45, %47 : vector<16x512xf32>
    %c0_29 = arith.constant 0 : index
    %c0_30 = arith.constant 0 : index
    %49 = vector.load %arg12[%c0_29, %c0_30] : memref<1x512xf32, #tpu.memory_space<vmem>>, vector<1x512xf32>
    %50 = vector.broadcast %49 : vector<1x512xf32> to vector<16x512xf32>
    %51 = arith.addf %48, %50 : vector<16x512xf32>
    %52 = arith.truncf %19 : vector<512x256xf32> to vector<512x256xbf16>
    %c0_31 = arith.constant 0 : index
    %c0_32 = arith.constant 0 : index
    %53 = vector.load %arg9[%c0_31, %c0_32] : memref<256x512xbf16, #tpu.memory_space<vmem>>, vector<256x512xbf16>
    %cst_33 = arith.constant dense<0.000000e+00> : vector<512x512xf32>
    %54 = tpu.matmul %52, %53, %cst_33 {dimension_numbers = #tpu.dot_dimension_numbers<[1], [0], [0], [1], [0, 0, 1, 1], [], []>} : vector<512x256xbf16>, vector<256x512xbf16>, vector<512x512xf32> -> vector<512x512xf32>
    %55 = vector.shape_cast %54 : vector<512x512xf32> to vector<16x32x512xf32>
    %56 = arith.truncf %55 : vector<16x32x512xf32> to vector<16x32x512xbf16>
    %c0_34 = arith.constant 0 : index
    %c0_35 = arith.constant 0 : index
    %57 = vector.load %arg11[%c0_34, %c0_35] : memref<1x512xf32, #tpu.memory_space<vmem>>, vector<1x512xf32>
    %58 = arith.truncf %57 : vector<1x512xf32> to vector<1x512xbf16>
    %59 = vector.shape_cast %58 : vector<1x512xbf16> to vector<1x1x512xbf16>
    %60 = vector.broadcast %59 : vector<1x1x512xbf16> to vector<16x32x512xbf16>
    %61 = arith.mulf %56, %60 : vector<16x32x512xbf16>
    %62 = arith.truncf %51 : vector<16x512xf32> to vector<16x512xbf16>
    %63 = vector.shape_cast %62 : vector<16x512xbf16> to vector<16x1x512xbf16>
    %64 = vector.broadcast %63 : vector<16x1x512xbf16> to vector<16x32x512xbf16>
    %65 = arith.addf %61, %64 : vector<16x32x512xbf16>
    %cst_36 = arith.constant 0.000000e+00 : bf16
    %66 = vector.broadcast %cst_36 : bf16 to vector<16x32x512xbf16>
    %67 = arith.maximumf %65, %66 : vector<16x32x512xbf16>
    %68 = vector.shape_cast %67 : vector<16x32x512xbf16> to vector<512x512xbf16>
    %c0_37 = arith.constant 0 : index
    %c0_38 = arith.constant 0 : index
    %69 = vector.load %arg13[%c0_37, %c0_38] : memref<512x512xbf16, #tpu.memory_space<vmem>>, vector<512x512xbf16>
    %cst_39 = arith.constant dense<0.000000e+00> : vector<512x512xf32>
    %70 = tpu.matmul %68, %69, %cst_39 {dimension_numbers = #tpu.dot_dimension_numbers<[1], [0], [0], [1], [0, 0, 1, 1], [], []>} : vector<512x512xbf16>, vector<512x512xbf16>, vector<512x512xf32> -> vector<512x512xf32>
    %71 = vector.shape_cast %70 : vector<512x512xf32> to vector<16x32x512xf32>
    %c0_40 = arith.constant 0 : index
    %c0_41 = arith.constant 0 : index
    %72 = vector.load %arg14[%c0_40, %c0_41] : memref<512x1xbf16, #tpu.memory_space<vmem>>, vector<512x1xbf16>
    %cst_42 = arith.constant dense<0.000000e+00> : vector<512x1xf32>
    %73 = tpu.matmul %68, %72, %cst_42 {dimension_numbers = #tpu.dot_dimension_numbers<[1], [0], [0], [1], [0, 0, 1, 1], [], []>} : vector<512x512xbf16>, vector<512x1xbf16>, vector<512x1xf32> -> vector<512x1xf32>
    %74 = vector.shape_cast %73 : vector<512x1xf32> to vector<16x32x1xf32>
    %cst_43 = arith.constant dense<0xFF800000> : vector<16x1xf32>
    %75 = vector.multi_reduction <maximumf>, %74, %cst_43 [1] : vector<16x32x1xf32> to vector<16x1xf32>
    %76 = vector.shape_cast %75 : vector<16x1xf32> to vector<16x1x1xf32>
    %77 = vector.broadcast %76 : vector<16x1x1xf32> to vector<16x32x1xf32>
    %78 = arith.subf %74, %77 : vector<16x32x1xf32>
    %79 = math.exp %78 : vector<16x32x1xf32>
    %cst_44 = arith.constant dense<0.000000e+00> : vector<16x1xf32>
    %80 = vector.multi_reduction <add>, %79, %cst_44 [1] : vector<16x32x1xf32> to vector<16x1xf32>
    %81 = vector.shape_cast %80 : vector<16x1xf32> to vector<16x1x1xf32>
    %82 = tpu.reciprocal %81 {approx = true} : vector<16x1x1xf32> -> vector<16x1x1xf32>
    %83 = vector.broadcast %82 : vector<16x1x1xf32> to vector<16x32x1xf32>
    %84 = arith.mulf %79, %83 : vector<16x32x1xf32>
    %85 = vector.broadcast %84 : vector<16x32x1xf32> to vector<16x32x512xf32>
    %86 = arith.mulf %85, %71 : vector<16x32x512xf32>
    %cst_45 = arith.constant dense<0.000000e+00> : vector<16x512xf32>
    %87 = vector.multi_reduction <add>, %86, %cst_45 [1] : vector<16x32x512xf32> to vector<16x512xf32>
    %88 = arith.truncf %87 : vector<16x512xf32> to vector<16x512xbf16>
    %c0_46 = arith.constant 0 : index
    %c0_47 = arith.constant 0 : index
    %89 = vector.load %arg15[%c0_46, %c0_47] : memref<512x512xbf16, #tpu.memory_space<vmem>>, vector<512x512xbf16>
    %cst_48 = arith.constant dense<0.000000e+00> : vector<16x512xf32>
    %90 = tpu.matmul %88, %89, %cst_48 {dimension_numbers = #tpu.dot_dimension_numbers<[1], [0], [0], [1], [0, 0, 1, 1], [], []>} : vector<16x512xbf16>, vector<512x512xbf16>, vector<16x512xf32> -> vector<16x512xf32>
    %c0_49 = arith.constant 0 : index
    %c0_50 = arith.constant 0 : index
    %91 = vector.load %arg16[%c0_49, %c0_50] : memref<1x512xf32, #tpu.memory_space<vmem>>, vector<1x512xf32>
    %92 = vector.broadcast %91 : vector<1x512xf32> to vector<16x512xf32>
    %93 = arith.addf %90, %92 : vector<16x512xf32>
    %c0_51 = arith.constant 0 : index
    %c0_52 = arith.constant 0 : index
    %94 = vector.load %arg17[%c0_51, %c0_52] : memref<16x512xf32, #tpu.memory_space<vmem>>, vector<16x512xf32>
    tpu.vector_store %arg17[%c0_51, %c0_52], %93 {strides = array<i32>} : memref<16x512xf32, #tpu.memory_space<vmem>>, vector<16x512xf32>,
    return
  }
  func.func @transform_0(%arg0: i32) -> (i32, i32, i32) {
    %c0_i32 = arith.constant 0 : i32
    %c0_i32_0 = arith.constant 0 : i32
    %c0_i32_1 = arith.constant 0 : i32
    return %arg0, %c0_i32, %c0_i32_0 : i32, i32, i32
  }
  func.func @transform_1(%arg0: i32) -> (i32, i32) {
    %c0_i32 = arith.constant 0 : i32
    %c0_i32_0 = arith.constant 0 : i32
    %c0_i32_1 = arith.constant 0 : i32
    return %c0_i32, %c0_i32_0 : i32, i32
  }
  func.func @transform_2(%arg0: i32) -> (i32, i32) {
    %c0_i32 = arith.constant 0 : i32
    %c0_i32_0 = arith.constant 0 : i32
    %c0_i32_1 = arith.constant 0 : i32
    return %c0_i32, %c0_i32_0 : i32, i32
  }
  func.func @transform_3(%arg0: i32) -> (i32, i32) {
    %c0_i32 = arith.constant 0 : i32
    %c0_i32_0 = arith.constant 0 : i32
    %c0_i32_1 = arith.constant 0 : i32
    return %c0_i32, %c0_i32_0 : i32, i32
  }
  func.func @transform_4(%arg0: i32) -> (i32, i32) {
    %c0_i32 = arith.constant 0 : i32
    %c0_i32_0 = arith.constant 0 : i32
    %c0_i32_1 = arith.constant 0 : i32
    return %c0_i32, %c0_i32_0 : i32, i32
  }
  func.func @transform_5(%arg0: i32) -> (i32, i32) {
    %c0_i32 = arith.constant 0 : i32
    %c0_i32_0 = arith.constant 0 : i32
    %c0_i32_1 = arith.constant 0 : i32
    return %c0_i32, %c0_i32_0 : i32, i32
  }
  func.func @transform_6(%arg0: i32) -> (i32, i32) {
    %c0_i32 = arith.constant 0 : i32
    %c0_i32_0 = arith.constant 0 : i32
    %c0_i32_1 = arith.constant 0 : i32
    return %c0_i32, %c0_i32_0 : i32, i32
  }
  func.func @transform_7(%arg0: i32) -> (i32, i32) {
    %c0_i32 = arith.constant 0 : i32
    %c0_i32_0 = arith.constant 0 : i32
    %c0_i32_1 = arith.constant 0 : i32
    return %c0_i32, %c0_i32_0 : i32, i32
  }
  func.func @transform_8(%arg0: i32) -> (i32, i32) {
    %c0_i32 = arith.constant 0 : i32
    %c0_i32_0 = arith.constant 0 : i32
    %c0_i32_1 = arith.constant 0 : i32
    return %c0_i32, %c0_i32_0 : i32, i32
  }
  func.func @transform_9(%arg0: i32) -> (i32, i32) {
    %c0_i32 = arith.constant 0 : i32
    %c0_i32_0 = arith.constant 0 : i32
    %c0_i32_1 = arith.constant 0 : i32
    return %c0_i32, %c0_i32_0 : i32, i32
  }
  func.func @transform_10(%arg0: i32) -> (i32, i32) {
    %c0_i32 = arith.constant 0 : i32
    %c0_i32_0 = arith.constant 0 : i32
    %c0_i32_1 = arith.constant 0 : i32
    return %c0_i32, %c0_i32_0 : i32, i32
  }
  func.func @transform_11(%arg0: i32) -> (i32, i32) {
    %c0_i32 = arith.constant 0 : i32
    %c0_i32_0 = arith.constant 0 : i32
    %c0_i32_1 = arith.constant 0 : i32
    return %c0_i32, %c0_i32_0 : i32, i32
  }
  func.func @transform_12(%arg0: i32) -> (i32, i32) {
    %c0_i32 = arith.constant 0 : i32
    %c0_i32_0 = arith.constant 0 : i32
    %c0_i32_1 = arith.constant 0 : i32
    return %c0_i32, %c0_i32_0 : i32, i32
  }
  func.func @transform_13(%arg0: i32) -> (i32, i32) {
    %c0_i32 = arith.constant 0 : i32
    %c0_i32_0 = arith.constant 0 : i32
    %c0_i32_1 = arith.constant 0 : i32
    return %c0_i32, %c0_i32_0 : i32, i32
  }
  func.func @transform_14(%arg0: i32) -> (i32, i32) {
    %c0_i32 = arith.constant 0 : i32
    %c0_i32_0 = arith.constant 0 : i32
    %c0_i32_1 = arith.constant 0 : i32
    return %c0_i32, %c0_i32_0 : i32, i32
  }
  func.func @transform_15(%arg0: i32) -> (i32, i32) {
    %c0_i32 = arith.constant 0 : i32
    %c0_i32_0 = arith.constant 0 : i32
    %c0_i32_1 = arith.constant 0 : i32
    return %c0_i32, %c0_i32_0 : i32, i32
  }
  func.func @transform_16(%arg0: i32) -> (i32, i32) {
    %c0_i32 = arith.constant 0 : i32
    %c0_i32_0 = arith.constant 0 : i32
    return %arg0, %c0_i32 : i32, i32
  }
}

</mosaic_0001>

<llo_original>
// kernel: tpu_custom_call.1
$region0: #{tpu_custom_call.1}
  #allocation0 [shape = 'u32[]', space=smem, size = 0x4, offset = 0x4, fixed_abs, tag = 'smem constant byte address 0x4 - core index']
  #allocation1 [shape = 'u32[144,128]{1,0:T(1,128)}', space=vmem, size = 0x12000, scoped, tag = 'internal scratch']
  %s0 = inlined_call_operand.vmem [shape: f32[16,32,10], index: 0, kind: input, shape index: {}]
  %s1 = inlined_call_operand.vmem [shape: bf16[16,128], index: 1, kind: input, shape index: {}]
  %s2 = inlined_call_operand.hbm [shape: f32[1,128], index: 2, kind: input, shape index: {}]
  %s3 = inlined_call_operand.hbm [shape: f32[1,128], index: 3, kind: input, shape index: {}]
  %s4 = inlined_call_operand.hbm [shape: bf16[128,256], index: 4, kind: input, shape index: {}]
  %s5 = inlined_call_operand.vmem [shape: bf16[128,1], index: 5, kind: input, shape index: {}]
  %s6 = inlined_call_operand.hbm [shape: bf16[256,256], index: 6, kind: input, shape index: {}]
  %s7 = inlined_call_operand.vmem [shape: f32[1,256], index: 7, kind: input, shape index: {}]
  %s8 = inlined_call_operand.hbm [shape: bf16[256,512], index: 8, kind: input, shape index: {}]
  %s9 = inlined_call_operand.hbm [shape: bf16[256,512], index: 9, kind: input, shape index: {}]
  %s10 = inlined_call_operand.vmem [shape: f32[1,512], index: 10, kind: input, shape index: {}]
  %s11 = inlined_call_operand.vmem [shape: f32[1,512], index: 11, kind: input, shape index: {}]
  %s12 = inlined_call_operand.vmem [shape: bf16[512,512], index: 12, kind: input, shape index: {}]
  %s13 = inlined_call_operand.vmem [shape: bf16[512,1], index: 13, kind: input, shape index: {}]
  %s14 = inlined_call_operand.hbm [shape: bf16[512,512], index: 14, kind: input, shape index: {}]
  %s15 = inlined_call_operand.vmem [shape: f32[1,512], index: 15, kind: input, shape index: {}]
  %s16 = inlined_call_operand.hbm [shape: f32[16,512], index: 16, kind: output, shape index: {}]
  %s17 = sld [smem:[#allocation0]]
  $region102: #{tpu_custom_call.1} parent=0
    _
  %s19 = ssub.s32 1, %s17
  %s20 = scalar_select 0, %s19, %s17
  $region1: #{tpu_custom_call.1} parent=0
    #allocation2 [shape = 'u8[512]{0}', space=vmem, size = 0x400, scoped, tag = 'input window, operand 2, single buffered']
    #allocation3 [shape = 's32[1]{0}', space=sflag, size = 0x4, scoped, tag = 'scoped memory for tpu_custom_call.1']
    #allocation4 [shape = 's32[1]{0}', space=sflag, size = 0x4, scoped, tag = 'scoped memory for tpu_custom_call.1']
    #allocation5 [shape = 'u8[512]{0}', space=vmem, size = 0x400, scoped, tag = 'input window, operand 3, single buffered']
    #allocation6 [shape = 's32[1]{0}', space=sflag, size = 0x4, scoped, tag = 'scoped memory for tpu_custom_call.1']
    #allocation7 [shape = 'u8[65536]{0}', space=vmem, size = 0x10000, scoped, tag = 'input window, operand 4, single buffered']
    #allocation8 [shape = 'u8[131072]{0}', space=vmem, size = 0x20000, scoped, tag = 'input window, operand 6, single buffered']
    #allocation9 [shape = 's32[1]{0}', space=sflag, size = 0x4, scoped, tag = 'scoped memory for tpu_custom_call.1']
    #allocation10 [shape = 'u8[262144]{0}', space=vmem, size = 0x40000, scoped, tag = 'input window, operand 8, single buffered']
    #allocation11 [shape = 'u8[262144]{0}', space=vmem, size = 0x40000, scoped, tag = 'input window, operand 9, single buffered']
    #allocation12 [shape = 's32[1]{0}', space=sflag, size = 0x4, scoped, tag = 'scoped memory for tpu_custom_call.1']
    #allocation13 [shape = 'u8[524288]{0}', space=vmem, size = 0x80000, scoped, tag = 'input window, operand 14, single buffered']
    #allocation14 [shape = 'u8[32768]{0}', space=vmem, size = 0x8000, scoped, tag = 'output window, operand 0, single buffered']
    %21 = vsyncpa [#allocation3], 0
    %22 = vsyncpa [#allocation6], 0
    %23 = vsyncpa [#allocation9], 0
    %24 = vsyncpa [#allocation12], 0
    %25 = vsyncpa [#allocation4], 0
    // Predicated region
    $region2: #{tpu_custom_call.1} parent=1 // pred_check
      _
    $region3: #{tpu_custom_call.1} parent=1 // pred_check_branch
      %27 = sbr.rel (0) target = $region5
    $region4: #{tpu_custom_call.1} parent=1 // pred_region
      _
    $region5: #{tpu_custom_call.1} parent=1 // pred_fallthru
      _
    // Predicated region
    $region6: #{tpu_custom_call.1} parent=1 // pred_check
      _
    $region7: #{tpu_custom_call.1} parent=1 // pred_check_branch
      %29 = sbr.rel (0) target = $region9
    $region8: #{tpu_custom_call.1} parent=1 // pred_region
      _
    $region9: #{tpu_custom_call.1} parent=1 // pred_fallthru
      _
    // Predicated region
    $region10: #{tpu_custom_call.1} parent=1 // pred_check
      _
    $region11: #{tpu_custom_call.1} parent=1 // pred_check_branch
      %31 = sbr.rel (0) target = $region13
    $region12: #{tpu_custom_call.1} parent=1 // pred_region
      %s33 = ssub.s32 16, 16
      %34 = vsyncadd [#allocation3], %s33
      %s36 = sshll.u32 [#allocation2], 4
      %s37 = int_to_ptr.vmem [resolvable:$true] %s36
      %39 = dma.hbm_to_vmem [thread:$0]  %s2, 16, %s37, [#allocation3]
    $region13: #{tpu_custom_call.1} parent=1 // pred_fallthru
      _
    // Predicated region
    $region14: #{tpu_custom_call.1} parent=1 // pred_check
      _
    $region15: #{tpu_custom_call.1} parent=1 // pred_check_branch
      %41 = sbr.rel (0) target = $region17
    $region16: #{tpu_custom_call.1} parent=1 // pred_region
      %s43 = ssub.s32 16, 16
      %44 = vsyncadd [#allocation6], %s43
      %s46 = sshll.u32 [#allocation5], 4
      %s47 = int_to_ptr.vmem [resolvable:$true] %s46
      %49 = dma.hbm_to_vmem [thread:$0]  %s3, 16, %s47, [#allocation6]
    $region17: #{tpu_custom_call.1} parent=1 // pred_fallthru
      _
    // Predicated region
    $region18: #{tpu_custom_call.1} parent=1 // pred_check
      _
    $region19: #{tpu_custom_call.1} parent=1 // pred_check_branch
      %51 = sbr.rel (0) target = $region21
    $region20: #{tpu_custom_call.1} parent=1 // pred_region
      %s53 = ssub.s32 2048, 2048
      %54 = vsyncadd [#allocation6], %s53
      %s55 = sshll.u32 [#allocation7], 4
      %s56 = int_to_ptr.vmem [resolvable:$true] %s55
      %61 = dma.hbm_to_vmem [thread:$0]  %s4, 2048, %s56, [#allocation6], 128, 128, 8
    $region21: #{tpu_custom_call.1} parent=1 // pred_fallthru
      _
    // Predicated region
    $region22: #{tpu_custom_call.1} parent=1 // pred_check
      _
    $region23: #{tpu_custom_call.1} parent=1 // pred_check_branch
      %63 = sbr.rel (0) target = $region25
    $region24: #{tpu_custom_call.1} parent=1 // pred_region
      _
    $region25: #{tpu_custom_call.1} parent=1 // pred_fallthru
      _
    // Predicated region
    $region26: #{tpu_custom_call.1} parent=1 // pred_check
      _
    $region27: #{tpu_custom_call.1} parent=1 // pred_check_branch
      %65 = sbr.rel (0) target = $region29
    $region28: #{tpu_custom_call.1} parent=1 // pred_region
      %s67 = ssub.s32 4096, 4096
      %68 = vsyncadd [#allocation9], %s67
      %s69 = sshll.u32 [#allocation8], 4
      %s70 = int_to_ptr.vmem [resolvable:$true] %s69
      %75 = dma.hbm_to_vmem [thread:$0]  %s6, 4096, %s70, [#allocation9], 128, 128, 8
    $region29: #{tpu_custom_call.1} parent=1 // pred_fallthru
      _
    // Predicated region
    $region30: #{tpu_custom_call.1} parent=1 // pred_check
      _
    $region31: #{tpu_custom_call.1} parent=1 // pred_check_branch
      %77 = sbr.rel (0) target = $region33
    $region32: #{tpu_custom_call.1} parent=1 // pred_region
      _
    $region33: #{tpu_custom_call.1} parent=1 // pred_fallthru
      _
    // Predicated region
    $region34: #{tpu_custom_call.1} parent=1 // pred_check
      _
    $region35: #{tpu_custom_call.1} parent=1 // pred_check_branch
      %79 = sbr.rel (0) target = $region37
    $region36: #{tpu_custom_call.1} parent=1 // pred_region
      %s81 = ssub.s32 8192, 8192
      %82 = vsyncadd [#allocation9], %s81
      %s83 = sshll.u32 [#allocation10], 4
      %s84 = int_to_ptr.vmem [resolvable:$true] %s83
      %89 = dma.hbm_to_vmem [thread:$0]  %s8, 8192, %s84, [#allocation9], 256, 256, 16
    $region37: #{tpu_custom_call.1} parent=1 // pred_fallthru
      _
    // Predicated region
    $region38: #{tpu_custom_call.1} parent=1 // pred_check
      _
    $region39: #{tpu_custom_call.1} parent=1 // pred_check_branch
      %91 = sbr.rel (0) target = $region41
    $region40: #{tpu_custom_call.1} parent=1 // pred_region
      %s93 = ssub.s32 8192, 8192
      %94 = vsyncadd [#allocation12], %s93
      %s95 = sshll.u32 [#allocation11], 4
      %s96 = int_to_ptr.vmem [resolvable:$true] %s95
      %101 = dma.hbm_to_vmem [thread:$0]  %s9, 8192, %s96, [#allocation12], 256, 256, 16
    $region41: #{tpu_custom_call.1} parent=1 // pred_fallthru
      _
    // Predicated region
    $region42: #{tpu_custom_call.1} parent=1 // pred_check
      _
    $region43: #{tpu_custom_call.1} parent=1 // pred_check_branch
      %103 = sbr.rel (0) target = $region45
    $region44: #{tpu_custom_call.1} parent=1 // pred_region
      _
    $region45: #{tpu_custom_call.1} parent=1 // pred_fallthru
      _
    // Predicated region
    $region46: #{tpu_custom_call.1} parent=1 // pred_check
      _
    $region47: #{tpu_custom_call.1} parent=1 // pred_check_branch
      %105 = sbr.rel (0) target = $region49
    $region48: #{tpu_custom_call.1} parent=1 // pred_region
      _
    $region49: #{tpu_custom_call.1} parent=1 // pred_fallthru
      _
    // Predicated region
    $region50: #{tpu_custom_call.1} parent=1 // pred_check
      _
    $region51: #{tpu_custom_call.1} parent=1 // pred_check_branch
      %107 = sbr.rel (0) target = $region53
    $region52: #{tpu_custom_call.1} parent=1 // pred_region
      _
    $region53: #{tpu_custom_call.1} parent=1 // pred_fallthru
      _
    // Predicated region
    $region54: #{tpu_custom_call.1} parent=1 // pred_check
      _
    $region55: #{tpu_custom_call.1} parent=1 // pred_check_branch
      %109 = sbr.rel (0) target = $region57
    $region56: #{tpu_custom_call.1} parent=1 // pred_region
      _
    $region57: #{tpu_custom_call.1} parent=1 // pred_fallthru
      _
    // Predicated region
    $region58: #{tpu_custom_call.1} parent=1 // pred_check
      _
    $region59: #{tpu_custom_call.1} parent=1 // pred_check_branch
      %111 = sbr.rel (0) target = $region61
    $region60: #{tpu_custom_call.1} parent=1 // pred_region
      %s113 = ssub.s32 16384, 16384
      %114 = vsyncadd [#allocation12], %s113
      %s115 = sshll.u32 [#allocation13], 4
      %s116 = int_to_ptr.vmem [resolvable:$true] %s115
      %121 = dma.hbm_to_vmem [thread:$0]  %s14, 16384, %s116, [#allocation12], 256, 256, 16
    $region61: #{tpu_custom_call.1} parent=1 // pred_fallthru
      _
    // Predicated region
    $region62: #{tpu_custom_call.1} parent=1 // pred_check
      _
    $region63: #{tpu_custom_call.1} parent=1 // pred_check_branch
      %123 = sbr.rel (0) target = $region65
    $region64: #{tpu_custom_call.1} parent=1 // pred_region
      _
    $region65: #{tpu_custom_call.1} parent=1 // pred_fallthru
      _
    // Predicated region
    $region66: #{tpu_custom_call.1} parent=1 // pred_check
      _
    $region67: #{tpu_custom_call.1} parent=1 // pred_check_branch
      %125 = sbr.rel (0) target = $region69
    $region68: #{tpu_custom_call.1} parent=1 // pred_region
      %126 = dma.done [#allocation3], 16
    $region69: #{tpu_custom_call.1} parent=1 // pred_fallthru
      _
    // Predicated region
    $region70: #{tpu_custom_call.1} parent=1 // pred_check
      _
    $region71: #{tpu_custom_call.1} parent=1 // pred_check_branch
      %128 = sbr.rel (0) target = $region73
    $region72: #{tpu_custom_call.1} parent=1 // pred_region
      %129 = dma.done [#allocation6], 16
    $region73: #{tpu_custom_call.1} parent=1 // pred_fallthru
      _
    // Predicated region
    $region74: #{tpu_custom_call.1} parent=1 // pred_check
      _
    $region75: #{tpu_custom_call.1} parent=1 // pred_check_branch
      %131 = sbr.rel (0) target = $region77
    $region76: #{tpu_custom_call.1} parent=1 // pred_region
      %132 = dma.done [#allocation6], 2048
    $region77: #{tpu_custom_call.1} parent=1 // pred_fallthru
      _
    // Predicated region
    $region78: #{tpu_custom_call.1} parent=1 // pred_check
      _
    $region79: #{tpu_custom_call.1} parent=1 // pred_check_branch
      %134 = sbr.rel (0) target = $region81
    $region80: #{tpu_custom_call.1} parent=1 // pred_region
      %135 = dma.done [#allocation9], 4096
    $region81: #{tpu_custom_call.1} parent=1 // pred_fallthru
      _
    // Predicated region
    $region82: #{tpu_custom_call.1} parent=1 // pred_check
      _
    $region83: #{tpu_custom_call.1} parent=1 // pred_check_branch
      %137 = sbr.rel (0) target = $region85
    $region84: #{tpu_custom_call.1} parent=1 // pred_region
      %138 = dma.done [#allocation9], 8192
    $region85: #{tpu_custom_call.1} parent=1 // pred_fallthru
      _
    // Predicated region
    $region86: #{tpu_custom_call.1} parent=1 // pred_check
      _
    $region87: #{tpu_custom_call.1} parent=1 // pred_check_branch
      %140 = sbr.rel (0) target = $region89
    $region88: #{tpu_custom_call.1} parent=1 // pred_region
      %141 = dma.done [#allocation12], 8192
    $region89: #{tpu_custom_call.1} parent=1 // pred_fallthru
      _
    // Predicated region
    $region90: #{tpu_custom_call.1} parent=1 // pred_check
      _
    $region91: #{tpu_custom_call.1} parent=1 // pred_check_branch
      %143 = sbr.rel (0) target = $region93
    $region92: #{tpu_custom_call.1} parent=1 // pred_region
      %144 = dma.done [#allocation12], 16384
    $region93: #{tpu_custom_call.1} parent=1 // pred_fallthru
      _
    %v146 = vld [vmem:[%s0] sm:$0xff]
    %v147 = vld [vmem:[%s0 + $0x8] sm:$0xff]
    %v148 = vld [vmem:[%s0 + $0x10] sm:$0xff]
    %v149 = vld [vmem:[%s0 + $0x18] sm:$0xff]
    %v150 = vld [vmem:[%s0 + $0x20] sm:$0xff]
    %v151 = vld [vmem:[%s0 + $0x28] sm:$0xff]
    %v152 = vld [vmem:[%s0 + $0x30] sm:$0xff]
    %v153 = vld [vmem:[%s0 + $0x38] sm:$0xff]
    %v154 = vld [vmem:[%s0 + $0x40] sm:$0xff]
    %v155 = vld [vmem:[%s0 + $0x48] sm:$0xff]
    %v156 = vld [vmem:[%s0 + $0x50] sm:$0xff]
    %v157 = vld [vmem:[%s0 + $0x58] sm:$0xff]
    %v158 = vld [vmem:[%s0 + $0x60] sm:$0xff]
    %v159 = vld [vmem:[%s0 + $0x68] sm:$0xff]
    %v160 = vld [vmem:[%s0 + $0x70] sm:$0xff]
    %v161 = vld [vmem:[%s0 + $0x78] sm:$0xff]
    %v162 = vld [vmem:[%s0 + $0x80] sm:$0xff]
    %v163 = vld [vmem:[%s0 + $0x88] sm:$0xff]
    %v164 = vld [vmem:[%s0 + $0x90] sm:$0xff]
    %v165 = vld [vmem:[%s0 + $0x98] sm:$0xff]
    %v166 = vld [vmem:[%s0 + $0xa0] sm:$0xff]
    %v167 = vld [vmem:[%s0 + $0xa8] sm:$0xff]
    %v168 = vld [vmem:[%s0 + $0xb0] sm:$0xff]
    %v169 = vld [vmem:[%s0 + $0xb8] sm:$0xff]
    %v170 = vld [vmem:[%s0 + $0xc0] sm:$0xff]
    %v171 = vld [vmem:[%s0 + $0xc8] sm:$0xff]
    %v172 = vld [vmem:[%s0 + $0xd0] sm:$0xff]
    %v173 = vld [vmem:[%s0 + $0xd8] sm:$0xff]
    %v174 = vld [vmem:[%s0 + $0xe0] sm:$0xff]
    %v175 = vld [vmem:[%s0 + $0xe8] sm:$0xff]
    %v176 = vld [vmem:[%s0 + $0xf0] sm:$0xff]
    %v177 = vld [vmem:[%s0 + $0xf8] sm:$0xff]
    %v178 = vld [vmem:[%s0 + $0x100] sm:$0xff]
    %v179 = vld [vmem:[%s0 + $0x108] sm:$0xff]
    %v180 = vld [vmem:[%s0 + $0x110] sm:$0xff]
    %v181 = vld [vmem:[%s0 + $0x118] sm:$0xff]
    %v182 = vld [vmem:[%s0 + $0x120] sm:$0xff]
    %v183 = vld [vmem:[%s0 + $0x128] sm:$0xff]
    %v184 = vld [vmem:[%s0 + $0x130] sm:$0xff]
    %v185 = vld [vmem:[%s0 + $0x138] sm:$0xff]
    %v186 = vld [vmem:[%s0 + $0x140] sm:$0xff]
    %v187 = vld [vmem:[%s0 + $0x148] sm:$0xff]
    %v188 = vld [vmem:[%s0 + $0x150] sm:$0xff]
    %v189 = vld [vmem:[%s0 + $0x158] sm:$0xff]
    %v190 = vld [vmem:[%s0 + $0x160] sm:$0xff]
    %v191 = vld [vmem:[%s0 + $0x168] sm:$0xff]
    %v192 = vld [vmem:[%s0 + $0x170] sm:$0xff]
    %v193 = vld [vmem:[%s0 + $0x178] sm:$0xff]
    %v194 = vld [vmem:[%s0 + $0x180] sm:$0xff]
    %v195 = vld [vmem:[%s0 + $0x188] sm:$0xff]
    %v196 = vld [vmem:[%s0 + $0x190] sm:$0xff]
    %v197 = vld [vmem:[%s0 + $0x198] sm:$0xff]
    %v198 = vld [vmem:[%s0 + $0x1a0] sm:$0xff]
    %v199 = vld [vmem:[%s0 + $0x1a8] sm:$0xff]
    %v200 = vld [vmem:[%s0 + $0x1b0] sm:$0xff]
    %v201 = vld [vmem:[%s0 + $0x1b8] sm:$0xff]
    %v202 = vld [vmem:[%s0 + $0x1c0] sm:$0xff]
    %v203 = vld [vmem:[%s0 + $0x1c8] sm:$0xff]
    %v204 = vld [vmem:[%s0 + $0x1d0] sm:$0xff]
    %v205 = vld [vmem:[%s0 + $0x1d8] sm:$0xff]
    %v206 = vld [vmem:[%s0 + $0x1e0] sm:$0xff]
    %v207 = vld [vmem:[%s0 + $0x1e8] sm:$0xff]
    %v208 = vld [vmem:[%s0 + $0x1f0] sm:$0xff]
    %v209 = vld [vmem:[%s0 + $0x1f8] sm:$0xff]
    %v210 = vpack.c.bf16 %v147, %v146
    %v211 = vpack.c.bf16 %v149, %v148
    %v212 = vpack.c.bf16 %v151, %v150
    %v213 = vpack.c.bf16 %v153, %v152
    %v214 = vpack.c.bf16 %v155, %v154
    %v215 = vpack.c.bf16 %v157, %v156
    %v216 = vpack.c.bf16 %v159, %v158
    %v217 = vpack.c.bf16 %v161, %v160
    %v218 = vpack.c.bf16 %v163, %v162
    %v219 = vpack.c.bf16 %v165, %v164
    %v220 = vpack.c.bf16 %v167, %v166
    %v221 = vpack.c.bf16 %v169, %v168
    %v222 = vpack.c.bf16 %v171, %v170
    %v223 = vpack.c.bf16 %v173, %v172
    %v224 = vpack.c.bf16 %v175, %v174
    %v225 = vpack.c.bf16 %v177, %v176
    %v226 = vpack.c.bf16 %v179, %v178
    %v227 = vpack.c.bf16 %v181, %v180
    %v228 = vpack.c.bf16 %v183, %v182
    %v229 = vpack.c.bf16 %v185, %v184
    %v230 = vpack.c.bf16 %v187, %v186
    %v231 = vpack.c.bf16 %v189, %v188
    %v232 = vpack.c.bf16 %v191, %v190
    %v233 = vpack.c.bf16 %v193, %v192
    %v234 = vpack.c.bf16 %v195, %v194
    %v235 = vpack.c.bf16 %v197, %v196
    %v236 = vpack.c.bf16 %v199, %v198
    %v237 = vpack.c.bf16 %v201, %v200
    %v238 = vpack.c.bf16 %v203, %v202
    %v239 = vpack.c.bf16 %v205, %v204
    %v240 = vpack.c.bf16 %v207, %v206
    %v241 = vpack.c.bf16 %v209, %v208
    %vm242 = vcmask 80896
    %v245 = vsel %vm242, %v210, 0
    %v247 = vsel %vm242, %v211, 0
    %v249 = vsel %vm242, %v212, 0
    %v251 = vsel %vm242, %v213, 0
    %v253 = vsel %vm242, %v214, 0
    %v255 = vsel %vm242, %v215, 0
    %v257 = vsel %vm242, %v216, 0
    %v259 = vsel %vm242, %v217, 0
    %v261 = vsel %vm242, %v218, 0
    %v263 = vsel %vm242, %v219, 0
    %v265 = vsel %vm242, %v220, 0
    %v267 = vsel %vm242, %v221, 0
    %v269 = vsel %vm242, %v222, 0
    %v271 = vsel %vm242, %v223, 0
    %v273 = vsel %vm242, %v224, 0
    %v275 = vsel %vm242, %v225, 0
    %v277 = vsel %vm242, %v226, 0
    %v279 = vsel %vm242, %v227, 0
    %v281 = vsel %vm242, %v228, 0
    %v283 = vsel %vm242, %v229, 0
    %v285 = vsel %vm242, %v230, 0
    %v287 = vsel %vm242, %v231, 0
    %v289 = vsel %vm242, %v232, 0
    %v291 = vsel %vm242, %v233, 0
    %v293 = vsel %vm242, %v234, 0
    %v295 = vsel %vm242, %v235, 0
    %v297 = vsel %vm242, %v236, 0
    %v299 = vsel %vm242, %v237, 0
    %v301 = vsel %vm242, %v238, 0
    %v303 = vsel %vm242, %v239, 0
    %v305 = vsel %vm242, %v240, 0
    %v307 = vsel %vm242, %v241, 0
    %v308 = vld [vmem:[%s1] sm:$0xf]
    %v309 = vld [vmem:[%s1 + $0x4] sm:$0xf]
    %v312 = vunpack.c.l.b16 %v308
    %v313 = vunpack.c.l.b16 %v309
    %v314 = vpack.c.b16 %v313, %v312
    %vm316 = vcmask 130048
    %v317 = vsel %vm316, %v245, 0
    %v319 = vsel %vm316, %v247, 0
    %v321 = vsel %vm316, %v249, 0
    %v323 = vsel %vm316, %v251, 0
    %v325 = vsel %vm316, %v253, 0
    %v327 = vsel %vm316, %v255, 0
    %v329 = vsel %vm316, %v257, 0
    %v331 = vsel %vm316, %v259, 0
    %v333 = vsel %vm316, %v261, 0
    %v335 = vsel %vm316, %v263, 0
    %v337 = vsel %vm316, %v265, 0
    %v339 = vsel %vm316, %v267, 0
    %v341 = vsel %vm316, %v269, 0
    %v343 = vsel %vm316, %v271, 0
    %v345 = vsel %vm316, %v273, 0
    %v347 = vsel %vm316, %v275, 0
    %v349 = vsel %vm316, %v277, 0
    %v351 = vsel %vm316, %v279, 0
    %v353 = vsel %vm316, %v281, 0
    %v355 = vsel %vm316, %v283, 0
    %v357 = vsel %vm316, %v285, 0
    %v359 = vsel %vm316, %v287, 0
    %v361 = vsel %vm316, %v289, 0
    %v363 = vsel %vm316, %v291, 0
    %v365 = vsel %vm316, %v293, 0
    %v367 = vsel %vm316, %v295, 0
    %v369 = vsel %vm316, %v297, 0
    %v371 = vsel %vm316, %v299, 0
    %v373 = vsel %vm316, %v301, 0
    %v375 = vsel %vm316, %v303, 0
    %v377 = vsel %vm316, %v305, 0
    %v379 = vsel %vm316, %v307, 0
    %381 = vmatprep.subr.bf16.mxu0 0
    %382 = vmatpush1.bf16.msra.mxu0 %v314
    %383 = vmatprep.subr.bf16.mxu0 0
    %384 = vmatpush1.bf16.msra.mxu0 0
    %385 = vmatprep.subr.bf16.mxu0 0
    %386 = vmatpush1.bf16.msra.mxu0 0
    %387 = vmatprep.subr.bf16.mxu0 0
    %388 = vmatpush1.bf16.msra.mxu0 0
    %389 = vmatprep.subr.bf16.mxu0 0
    %390 = vmatpush1.bf16.msra.mxu0 0
    %391 = vmatprep.subr.bf16.mxu0 0
    %392 = vmatpush1.bf16.msra.mxu0 0
    %393 = vmatprep.subr.bf16.mxu0 0
    %394 = vmatpush1.bf16.msra.mxu0 0
    %395 = vmatprep.subr.bf16.mxu0 0
    %396 = vmatpush1.bf16.msra.mxu0 0
    %397 = vmatprep.subr.bf16.mxu0 0
    %398 = vmatpush1.bf16.msra.mxu0 0
    %399 = vmatprep.subr.bf16.mxu0 0
    %400 = vmatpush1.bf16.msra.mxu0 0
    %401 = vmatprep.subr.bf16.mxu0 0
    %402 = vmatpush1.bf16.msra.mxu0 0
    %403 = vmatprep.subr.bf16.mxu0 0
    %404 = vmatpush1.bf16.msra.mxu0 0
    %405 = vmatprep.subr.bf16.mxu0 0
    %406 = vmatpush1.bf16.msra.mxu0 0
    %407 = vmatprep.subr.bf16.mxu0 0
    %408 = vmatpush1.bf16.msra.mxu0 0
    %409 = vmatprep.subr.bf16.mxu0 0
    %410 = vmatpush1.bf16.msra.mxu0 0
    %411 = vmatprep.subr.bf16.mxu0 0
    %412 = vmatpush1.bf16.msra.mxu0 0
    %413 = vmatprep.mubr.bf16.mxu0 0
    %414 = vmatmul.mubr.bf16.gmra.mrb[0].mxu0 %v317
    %v415 = vpop.f32.mrb[0].mxu0
    %v416 = vadd.f32 0.0, %v415
    %v417 = vpop.f32.mrb[0].mxu0
    %v418 = vpop.f32.mrb[0].mxu0
    %v419 = vadd.f32 0.0, %v418
    %v420 = vpop.f32.mrb[0].mxu0
    %421 = vmatprep.mubr.bf16.mxu0 0
    %422 = vmatmul.mubr.bf16.gmra.mrb[0].mxu0 %v319
    %v423 = vpop.f32.mrb[0].mxu0
    %v424 = vadd.f32 0.0, %v423
    %v425 = vpop.f32.mrb[0].mxu0
    %v426 = vpop.f32.mrb[0].mxu0
    %v427 = vadd.f32 0.0, %v426
    %v428 = vpop.f32.mrb[0].mxu0
    %429 = vmatprep.mubr.bf16.mxu0 0
    %430 = vmatmul.mubr.bf16.gmra.mrb[0].mxu0 %v321
    %v431 = vpop.f32.mrb[0].mxu0
    %v432 = vadd.f32 0.0, %v431
    %v433 = vpop.f32.mrb[0].mxu0
    %v434 = vpop.f32.mrb[0].mxu0
    %v435 = vadd.f32 0.0, %v434
    %v436 = vpop.f32.mrb[0].mxu0
    %437 = vmatprep.mubr.bf16.mxu0 0
    %438 = vmatmul.mubr.bf16.gmra.mrb[0].mxu0 %v323
    %v439 = vpop.f32.mrb[0].mxu0
    %v440 = vadd.f32 0.0, %v439
    %v441 = vpop.f32.mrb[0].mxu0
    %v442 = vpop.f32.mrb[0].mxu0
    %v443 = vadd.f32 0.0, %v442
    %v444 = vpop.f32.mrb[0].mxu0
    %445 = vmatprep.mubr.bf16.mxu0 0
    %446 = vmatmul.mubr.bf16.gmra.mrb[0].mxu0 %v325
    %v447 = vpop.f32.mrb[0].mxu0
    %v448 = vadd.f32 0.0, %v447
    %v449 = vpop.f32.mrb[0].mxu0
    %v450 = vpop.f32.mrb[0].mxu0
    %v451 = vadd.f32 0.0, %v450
    %v452 = vpop.f32.mrb[0].mxu0
    %453 = vmatprep.mubr.bf16.mxu0 0
    %454 = vmatmul.mubr.bf16.gmra.mrb[0].mxu0 %v327
    %v455 = vpop.f32.mrb[0].mxu0
    %v456 = vadd.f32 0.0, %v455
    %v457 = vpop.f32.mrb[0].mxu0
    %v458 = vpop.f32.mrb[0].mxu0
    %v459 = vadd.f32 0.0, %v458
    %v460 = vpop.f32.mrb[0].mxu0
    %461 = vmatprep.mubr.bf16.mxu0 0
    %462 = vmatmul.mubr.bf16.gmra.mrb[0].mxu0 %v329
    %v463 = vpop.f32.mrb[0].mxu0
    %v464 = vadd.f32 0.0, %v463
    %v465 = vpop.f32.mrb[0].mxu0
    %v466 = vpop.f32.mrb[0].mxu0
    %v467 = vadd.f32 0.0, %v466
    %v468 = vpop.f32.mrb[0].mxu0
    %469 = vmatprep.mubr.bf16.mxu0 0
    %470 = vmatmul.mubr.bf16.gmra.mrb[0].mxu0 %v331
    %v471 = vpop.f32.mrb[0].mxu0
    %v472 = vadd.f32 0.0, %v471
    %v473 = vpop.f32.mrb[0].mxu0
    %v474 = vpop.f32.mrb[0].mxu0
    %v475 = vadd.f32 0.0, %v474
    %v476 = vpop.f32.mrb[0].mxu0
    %477 = vmatprep.mubr.bf16.mxu0 0
    %478 = vmatmul.mubr.bf16.gmra.mrb[0].mxu0 %v333
    %v479 = vpop.f32.mrb[0].mxu0
    %v480 = vadd.f32 0.0, %v479
    %v481 = vpop.f32.mrb[0].mxu0
    %v482 = vpop.f32.mrb[0].mxu0
    %v483 = vadd.f32 0.0, %v482
    %v484 = vpop.f32.mrb[0].mxu0
    %485 = vmatprep.mubr.bf16.mxu0 0
    %486 = vmatmul.mubr.bf16.gmra.mrb[0].mxu0 %v335
    %v487 = vpop.f32.mrb[0].mxu0
    %v488 = vadd.f32 0.0, %v487
    %v489 = vpop.f32.mrb[0].mxu0
    %v490 = vpop.f32.mrb[0].mxu0
    %v491 = vadd.f32 0.0, %v490
    %v492 = vpop.f32.mrb[0].mxu0
    %493 = vmatprep.mubr.bf16.mxu0 0
    %494 = vmatmul.mubr.bf16.gmra.mrb[0].mxu0 %v337
    %v495 = vpop.f32.mrb[0].mxu0
    %v496 = vadd.f32 0.0, %v495
    %v497 = vpop.f32.mrb[0].mxu0
    %v498 = vpop.f32.mrb[0].mxu0
    %v499 = vadd.f32 0.0, %v498
    %v500 = vpop.f32.mrb[0].mxu0
    %501 = vmatprep.mubr.bf16.mxu0 0
    %502 = vmatmul.mubr.bf16.gmra.mrb[0].mxu0 %v339
    %v503 = vpop.f32.mrb[0].mxu0
    %v504 = vadd.f32 0.0, %v503
    %v505 = vpop.f32.mrb[0].mxu0
    %v506 = vpop.f32.mrb[0].mxu0
    %v507 = vadd.f32 0.0, %v506
    %v508 = vpop.f32.mrb[0].mxu0
    %509 = vmatprep.mubr.bf16.mxu0 0
    %510 = vmatmul.mubr.bf16.gmra.mrb[0].mxu0 %v341
    %v511 = vpop.f32.mrb[0].mxu0
    %v512 = vadd.f32 0.0, %v511
    %v513 = vpop.f32.mrb[0].mxu0
    %v514 = vpop.f32.mrb[0].mxu0
    %v515 = vadd.f32 0.0, %v514
    %v516 = vpop.f32.mrb[0].mxu0
    %517 = vmatprep.mubr.bf16.mxu0 0
    %518 = vmatmul.mubr.bf16.gmra.mrb[0].mxu0 %v343
    %v519 = vpop.f32.mrb[0].mxu0
    %v520 = vadd.f32 0.0, %v519
    %v521 = vpop.f32.mrb[0].mxu0
    %v522 = vpop.f32.mrb[0].mxu0
    %v523 = vadd.f32 0.0, %v522
    %v524 = vpop.f32.mrb[0].mxu0
    %525 = vmatprep.mubr.bf16.mxu0 0
    %526 = vmatmul.mubr.bf16.gmra.mrb[0].mxu0 %v345
    %v527 = vpop.f32.mrb[0].mxu0
    %v528 = vadd.f32 0.0, %v527
    %v529 = vpop.f32.mrb[0].mxu0
    %v530 = vpop.f32.mrb[0].mxu0
    %v531 = vadd.f32 0.0, %v530
    %v532 = vpop.f32.mrb[0].mxu0
    %533 = vmatprep.mubr.bf16.mxu0 0
    %534 = vmatmul.mubr.bf16.gmra.mrb[0].mxu0 %v347
    %v535 = vpop.f32.mrb[0].mxu0
    %v536 = vadd.f32 0.0, %v535
    %v537 = vpop.f32.mrb[0].mxu0
    %v538 = vpop.f32.mrb[0].mxu0
    %v539 = vadd.f32 0.0, %v538
    %v540 = vpop.f32.mrb[0].mxu0
    %541 = vmatprep.mubr.bf16.mxu0 0
    %542 = vmatmul.mubr.bf16.gmra.mrb[0].mxu0 %v349
    %v543 = vpop.f32.mrb[0].mxu0
    %v544 = vadd.f32 0.0, %v543
    %v545 = vpop.f32.mrb[0].mxu0
    %v546 = vpop.f32.mrb[0].mxu0
    %v547 = vadd.f32 0.0, %v546
    %v548 = vpop.f32.mrb[0].mxu0
    %549 = vmatprep.mubr.bf16.mxu0 0
    %550 = vmatmul.mubr.bf16.gmra.mrb[0].mxu0 %v351
    %v551 = vpop.f32.mrb[0].mxu0
    %v552 = vadd.f32 0.0, %v551
    %v553 = vpop.f32.mrb[0].mxu0
    %v554 = vpop.f32.mrb[0].mxu0
    %v555 = vadd.f32 0.0, %v554
    %v556 = vpop.f32.mrb[0].mxu0
    %557 = vmatprep.mubr.bf16.mxu0 0
    %558 = vmatmul.mubr.bf16.gmra.mrb[0].mxu0 %v353
    %v559 = vpop.f32.mrb[0].mxu0
    %v560 = vadd.f32 0.0, %v559
    %v561 = vpop.f32.mrb[0].mxu0
    %v562 = vpop.f32.mrb[0].mxu0
    %v563 = vadd.f32 0.0, %v562
    %v564 = vpop.f32.mrb[0].mxu0
    %565 = vmatprep.mubr.bf16.mxu0 0
    %566 = vmatmul.mubr.bf16.gmra.mrb[0].mxu0 %v355
    %v567 = vpop.f32.mrb[0].mxu0
    %v568 = vadd.f32 0.0, %v567
    %v569 = vpop.f32.mrb[0].mxu0
    %v570 = vpop.f32.mrb[0].mxu0
    %v571 = vadd.f32 0.0, %v570
    %v572 = vpop.f32.mrb[0].mxu0
    %573 = vmatprep.mubr.bf16.mxu0 0
    %574 = vmatmul.mubr.bf16.gmra.mrb[0].mxu0 %v357
    %v575 = vpop.f32.mrb[0].mxu0
    %v576 = vadd.f32 0.0, %v575
    %v577 = vpop.f32.mrb[0].mxu0
    %v578 = vpop.f32.mrb[0].mxu0
    %v579 = vadd.f32 0.0, %v578
    %v580 = vpop.f32.mrb[0].mxu0
    %581 = vmatprep.mubr.bf16.mxu0 0
    %582 = vmatmul.mubr.bf16.gmra.mrb[0].mxu0 %v359
    %v583 = vpop.f32.mrb[0].mxu0
    %v584 = vadd.f32 0.0, %v583
    %v585 = vpop.f32.mrb[0].mxu0
    %v586 = vpop.f32.mrb[0].mxu0
    %v587 = vadd.f32 0.0, %v586
    %v588 = vpop.f32.mrb[0].mxu0
    %589 = vmatprep.mubr.bf16.mxu0 0
    %590 = vmatmul.mubr.bf16.gmra.mrb[0].mxu0 %v361
    %v591 = vpop.f32.mrb[0].mxu0
    %v592 = vadd.f32 0.0, %v591
    %v593 = vpop.f32.mrb[0].mxu0
    %v594 = vpop.f32.mrb[0].mxu0
    %v595 = vadd.f32 0.0, %v594
    %v596 = vpop.f32.mrb[0].mxu0
    %597 = vmatprep.mubr.bf16.mxu0 0
    %598 = vmatmul.mubr.bf16.gmra.mrb[0].mxu0 %v363
    %v599 = vpop.f32.mrb[0].mxu0
    %v600 = vadd.f32 0.0, %v599
    %v601 = vpop.f32.mrb[0].mxu0
    %v602 = vpop.f32.mrb[0].mxu0
    %v603 = vadd.f32 0.0, %v602
    %v604 = vpop.f32.mrb[0].mxu0
    %605 = vmatprep.mubr.bf16.mxu0 0
    %606 = vmatmul.mubr.bf16.gmra.mrb[0].mxu0 %v365
    %v607 = vpop.f32.mrb[0].mxu0
    %v608 = vadd.f32 0.0, %v607
    %v609 = vpop.f32.mrb[0].mxu0
    %v610 = vpop.f32.mrb[0].mxu0
    %v611 = vadd.f32 0.0, %v610
    %v612 = vpop.f32.mrb[0].mxu0
    %613 = vmatprep.mubr.bf16.mxu0 0
    %614 = vmatmul.mubr.bf16.gmra.mrb[0].mxu0 %v367
    %v615 = vpop.f32.mrb[0].mxu0
    %v616 = vadd.f32 0.0, %v615
    %v617 = vpop.f32.mrb[0].mxu0
    %v618 = vpop.f32.mrb[0].mxu0
    %v619 = vadd.f32 0.0, %v618
    %v620 = vpop.f32.mrb[0].mxu0
    %621 = vmatprep.mubr.bf16.mxu0 0
    %622 = vmatmul.mubr.bf16.gmra.mrb[0].mxu0 %v369
    %v623 = vpop.f32.mrb[0].mxu0
    %v624 = vadd.f32 0.0, %v623
    %v625 = vpop.f32.mrb[0].mxu0
    %v626 = vpop.f32.mrb[0].mxu0
    %v627 = vadd.f32 0.0, %v626
    %v628 = vpop.f32.mrb[0].mxu0
    %629 = vmatprep.mubr.bf16.mxu0 0
    %630 = vmatmul.mubr.bf16.gmra.mrb[0].mxu0 %v371
    %v631 = vpop.f32.mrb[0].mxu0
    %v632 = vadd.f32 0.0, %v631
    %v633 = vpop.f32.mrb[0].mxu0
    %v634 = vpop.f32.mrb[0].mxu0
    %v635 = vadd.f32 0.0, %v634
    %v636 = vpop.f32.mrb[0].mxu0
    %637 = vmatprep.mubr.bf16.mxu0 0
    %638 = vmatmul.mubr.bf16.gmra.mrb[0].mxu0 %v373
    %v639 = vpop.f32.mrb[0].mxu0
    %v640 = vadd.f32 0.0, %v639
    %v641 = vpop.f32.mrb[0].mxu0
    %v642 = vpop.f32.mrb[0].mxu0
    %v643 = vadd.f32 0.0, %v642
    %v644 = vpop.f32.mrb[0].mxu0
    %645 = vmatprep.mubr.bf16.mxu0 0
    %646 = vmatmul.mubr.bf16.gmra.mrb[0].mxu0 %v375
    %v647 = vpop.f32.mrb[0].mxu0
    %v648 = vadd.f32 0.0, %v647
    %v649 = vpop.f32.mrb[0].mxu0
    %v650 = vpop.f32.mrb[0].mxu0
    %v651 = vadd.f32 0.0, %v650
    %v652 = vpop.f32.mrb[0].mxu0
    %653 = vmatprep.mubr.bf16.mxu0 0
    %654 = vmatmul.mubr.bf16.gmra.mrb[0].mxu0 %v377
    %v655 = vpop.f32.mrb[0].mxu0
    %v656 = vadd.f32 0.0, %v655
    %v657 = vpop.f32.mrb[0].mxu0
    %v658 = vpop.f32.mrb[0].mxu0
    %v659 = vadd.f32 0.0, %v658
    %v660 = vpop.f32.mrb[0].mxu0
    %661 = vmatprep.mubr.bf16.mxu0 0
    %662 = vmatmul.mubr.bf16.gmra.mrb[0].mxu0 %v379
    %v663 = vpop.f32.mrb[0].mxu0
    %v664 = vadd.f32 0.0, %v663
    %v665 = vpop.f32.mrb[0].mxu0
    %v666 = vpop.f32.mrb[0].mxu0
    %v667 = vadd.f32 0.0, %v666
    %v668 = vpop.f32.mrb[0].mxu0
    %669 = vdwg.mxu0
    %v670 = vpack.c.bf16 %v419, %v416
    %v671 = vpack.c.bf16 %v427, %v424
    %v672 = vpack.c.bf16 %v435, %v432
    %v673 = vpack.c.bf16 %v443, %v440
    %v674 = vpack.c.bf16 %v451, %v448
    %v675 = vpack.c.bf16 %v459, %v456
    %v676 = vpack.c.bf16 %v467, %v464
    %v677 = vpack.c.bf16 %v475, %v472
    %v678 = vpack.c.bf16 %v483, %v480
    %v679 = vpack.c.bf16 %v491, %v488
    %v680 = vpack.c.bf16 %v499, %v496
    %v681 = vpack.c.bf16 %v507, %v504
    %v682 = vpack.c.bf16 %v515, %v512
    %v683 = vpack.c.bf16 %v523, %v520
    %v684 = vpack.c.bf16 %v531, %v528
    %v685 = vpack.c.bf16 %v539, %v536
    %v686 = vpack.c.bf16 %v547, %v544
    %v687 = vpack.c.bf16 %v555, %v552
    %v688 = vpack.c.bf16 %v563, %v560
    %v689 = vpack.c.bf16 %v571, %v568
    %v690 = vpack.c.bf16 %v579, %v576
    %v691 = vpack.c.bf16 %v587, %v584
    %v692 = vpack.c.bf16 %v595, %v592
    %v693 = vpack.c.bf16 %v603, %v600
    %v694 = vpack.c.bf16 %v611, %v608
    %v695 = vpack.c.bf16 %v619, %v616
    %v696 = vpack.c.bf16 %v627, %v624
    %v697 = vpack.c.bf16 %v635, %v632
    %v698 = vpack.c.bf16 %v643, %v640
    %v699 = vpack.c.bf16 %v651, %v648
    %v700 = vpack.c.bf16 %v659, %v656
    %v701 = vpack.c.bf16 %v667, %v664
    %v702 = vld [vmem:[#allocation2] sm:$0x1]
    %v703 = vpack.c.bf16 %v702, %v702
    %v705 = vpack.i.b16 %v703, %v703
    %v707 = vlaneseq
    %v708 = vshrl.u32 %v707, 7
    %v709 = vsub.s32 0, %v708
    %v710 = vrot.slane %v705, %v709
    %v711 = vmul.bf16 %v670, %v710
    %v712 = vmul.bf16 %v671, %v710
    %v713 = vmul.bf16 %v672, %v710
    %v714 = vmul.bf16 %v673, %v710
    %v715 = vmul.bf16 %v674, %v710
    %v716 = vmul.bf16 %v675, %v710
    %v717 = vmul.bf16 %v676, %v710
    %v718 = vmul.bf16 %v677, %v710
    %v719 = vmul.bf16 %v678, %v710
    %v720 = vmul.bf16 %v679, %v710
    %v721 = vmul.bf16 %v680, %v710
    %v722 = vmul.bf16 %v681, %v710
    %v723 = vmul.bf16 %v682, %v710
    %v724 = vmul.bf16 %v683, %v710
    %v725 = vmul.bf16 %v684, %v710
    %v726 = vmul.bf16 %v685, %v710
    %v727 = vmul.bf16 %v686, %v710
    %v728 = vmul.bf16 %v687, %v710
    %v729 = vmul.bf16 %v688, %v710
    %v730 = vmul.bf16 %v689, %v710
    %v731 = vmul.bf16 %v690, %v710
    %v732 = vmul.bf16 %v691, %v710
    %v733 = vmul.bf16 %v692, %v710
    %v734 = vmul.bf16 %v693, %v710
    %v735 = vmul.bf16 %v694, %v710
    %v736 = vmul.bf16 %v695, %v710
    %v737 = vmul.bf16 %v696, %v710
    %v738 = vmul.bf16 %v697, %v710
    %v739 = vmul.bf16 %v698, %v710
    %v740 = vmul.bf16 %v699, %v710
    %v741 = vmul.bf16 %v700, %v710
    %v742 = vmul.bf16 %v701, %v710
    %v743 = vld [vmem:[#allocation5] sm:$0x1]
    %v744 = vpack.c.bf16 %v743, %v743
    %v746 = vpack.i.b16 %v744, %v744
    %v748 = vlaneseq
    %v749 = vshrl.u32 %v748, 7
    %v750 = vsub.s32 0, %v749
    %v751 = vrot.slane %v746, %v750
    %v752 = vadd.bf16 %v711, %v751
    %v753 = vadd.bf16 %v712, %v751
    %v754 = vadd.bf16 %v713, %v751
    %v755 = vadd.bf16 %v714, %v751
    %v756 = vadd.bf16 %v715, %v751
    %v757 = vadd.bf16 %v716, %v751
    %v758 = vadd.bf16 %v717, %v751
    %v759 = vadd.bf16 %v718, %v751
    %v760 = vadd.bf16 %v719, %v751
    %v761 = vadd.bf16 %v720, %v751
    %v762 = vadd.bf16 %v721, %v751
    %v763 = vadd.bf16 %v722, %v751
    %v764 = vadd.bf16 %v723, %v751
    %v765 = vadd.bf16 %v724, %v751
    %v766 = vadd.bf16 %v725, %v751
    %v767 = vadd.bf16 %v726, %v751
    %v768 = vadd.bf16 %v727, %v751
    %v769 = vadd.bf16 %v728, %v751
    %v770 = vadd.bf16 %v729, %v751
    %v771 = vadd.bf16 %v730, %v751
    %v772 = vadd.bf16 %v731, %v751
    %v773 = vadd.bf16 %v732, %v751
    %v774 = vadd.bf16 %v733, %v751
    %v775 = vadd.bf16 %v734, %v751
    %v776 = vadd.bf16 %v735, %v751
    %v777 = vadd.bf16 %v736, %v751
    %v778 = vadd.bf16 %v737, %v751
    %v779 = vadd.bf16 %v738, %v751
    %v780 = vadd.bf16 %v739, %v751
    %v781 = vadd.bf16 %v740, %v751
    %v782 = vadd.bf16 %v741, %v751
    %v783 = vadd.bf16 %v742, %v751
    %v784 = vmax.bf16 %v752, 0
    %v785 = vmax.bf16 %v753, 0
    %v786 = vmax.bf16 %v754, 0
    %v787 = vmax.bf16 %v755, 0
    %v788 = vmax.bf16 %v756, 0
    %v789 = vmax.bf16 %v757, 0
    %v790 = vmax.bf16 %v758, 0
    %v791 = vmax.bf16 %v759, 0
    %v792 = vmax.bf16 %v760, 0
    %v793 = vmax.bf16 %v761, 0
    %v794 = vmax.bf16 %v762, 0
    %v795 = vmax.bf16 %v763, 0
    %v796 = vmax.bf16 %v764, 0
    %v797 = vmax.bf16 %v765, 0
    %v798 = vmax.bf16 %v766, 0
    %v799 = vmax.bf16 %v767, 0
    %v800 = vmax.bf16 %v768, 0
    %v801 = vmax.bf16 %v769, 0
    %v802 = vmax.bf16 %v770, 0
    %v803 = vmax.bf16 %v771, 0
    %v804 = vmax.bf16 %v772, 0
    %v805 = vmax.bf16 %v773, 0
    %v806 = vmax.bf16 %v774, 0
    %v807 = vmax.bf16 %v775, 0
    %v808 = vmax.bf16 %v776, 0
    %v809 = vmax.bf16 %v777, 0
    %v810 = vmax.bf16 %v778, 0
    %v811 = vmax.bf16 %v779, 0
    %v812 = vmax.bf16 %v780, 0
    %v813 = vmax.bf16 %v781, 0
    %v814 = vmax.bf16 %v782, 0
    %v815 = vmax.bf16 %v783, 0
    %v816 = vld [vmem:[#allocation7] sm:$0xff]
    %v817 = vld [vmem:[#allocation7 + $0x8] sm:$0xff]
    %v818 = vld [vmem:[#allocation7 + $0x10] sm:$0xff]
    %v819 = vld [vmem:[#allocation7 + $0x18] sm:$0xff]
    %v820 = vld [vmem:[#allocation7 + $0x20] sm:$0xff]
    %v821 = vld [vmem:[#allocation7 + $0x28] sm:$0xff]
    %v822 = vld [vmem:[#allocation7 + $0x30] sm:$0xff]
    %v823 = vld [vmem:[#allocation7 + $0x38] sm:$0xff]
    %v824 = vld [vmem:[#allocation7 + $0x40] sm:$0xff]
    %v825 = vld [vmem:[#allocation7 + $0x48] sm:$0xff]
    %v826 = vld [vmem:[#allocation7 + $0x50] sm:$0xff]
    %v827 = vld [vmem:[#allocation7 + $0x58] sm:$0xff]
    %v828 = vld [vmem:[#allocation7 + $0x60] sm:$0xff]
    %v829 = vld [vmem:[#allocation7 + $0x68] sm:$0xff]
    %v830 = vld [vmem:[#allocation7 + $0x70] sm:$0xff]
    %v831 = vld [vmem:[#allocation7 + $0x78] sm:$0xff]
    %v848 = vunpack.c.l.b16 %v816
    %v849 = vunpack.c.h.b16 %v816
    %v850 = vunpack.c.l.b16 %v817
    %v851 = vunpack.c.h.b16 %v817
    %v852 = vunpack.c.l.b16 %v818
    %v853 = vunpack.c.h.b16 %v818
    %v854 = vunpack.c.l.b16 %v819
    %v855 = vunpack.c.h.b16 %v819
    %v856 = vunpack.c.l.b16 %v820
    %v857 = vunpack.c.h.b16 %v820
    %v858 = vunpack.c.l.b16 %v821
    %v859 = vunpack.c.h.b16 %v821
    %v860 = vunpack.c.l.b16 %v822
    %v861 = vunpack.c.h.b16 %v822
    %v862 = vunpack.c.l.b16 %v823
    %v863 = vunpack.c.h.b16 %v823
    %v864 = vunpack.c.l.b16 %v824
    %v865 = vunpack.c.h.b16 %v824
    %v866 = vunpack.c.l.b16 %v825
    %v867 = vunpack.c.h.b16 %v825
    %v868 = vunpack.c.l.b16 %v826
    %v869 = vunpack.c.h.b16 %v826
    %v870 = vunpack.c.l.b16 %v827
    %v871 = vunpack.c.h.b16 %v827
    %v872 = vunpack.c.l.b16 %v828
    %v873 = vunpack.c.h.b16 %v828
    %v874 = vunpack.c.l.b16 %v829
    %v875 = vunpack.c.h.b16 %v829
    %v876 = vunpack.c.l.b16 %v830
    %v877 = vunpack.c.h.b16 %v830
    %v878 = vunpack.c.l.b16 %v831
    %v879 = vunpack.c.h.b16 %v831
    %v880 = vpack.c.b16 %v850, %v848
    %v881 = vpack.c.b16 %v851, %v849
    %v882 = vpack.c.b16 %v854, %v852
    %v883 = vpack.c.b16 %v855, %v853
    %v884 = vpack.c.b16 %v858, %v856
    %v885 = vpack.c.b16 %v859, %v857
    %v886 = vpack.c.b16 %v862, %v860
    %v887 = vpack.c.b16 %v863, %v861
    %v888 = vpack.c.b16 %v866, %v864
    %v889 = vpack.c.b16 %v867, %v865
    %v890 = vpack.c.b16 %v870, %v868
    %v891 = vpack.c.b16 %v871, %v869
    %v892 = vpack.c.b16 %v874, %v872
    %v893 = vpack.c.b16 %v875, %v873
    %v894 = vpack.c.b16 %v878, %v876
    %v895 = vpack.c.b16 %v879, %v877
    %912 = vmatprep.subr.bf16.mxu0 %v881
    %913 = vmatpush1.bf16.msra.mxu0 %v880
    %914 = vmatprep.subr.bf16.mxu0 %v883
    %915 = vmatpush1.bf16.msra.mxu0 %v882
    %916 = vmatprep.subr.bf16.mxu0 %v885
    %917 = vmatpush1.bf16.msra.mxu0 %v884
    %918 = vmatprep.subr.bf16.mxu0 %v887
    %919 = vmatpush1.bf16.msra.mxu0 %v886
    %920 = vmatprep.subr.bf16.mxu0 %v889
    %921 = vmatpush1.bf16.msra.mxu0 %v888
    %922 = vmatprep.subr.bf16.mxu0 %v891
    %923 = vmatpush1.bf16.msra.mxu0 %v890
    %924 = vmatprep.subr.bf16.mxu0 %v893
    %925 = vmatpush1.bf16.msra.mxu0 %v892
    %926 = vmatprep.subr.bf16.mxu0 %v895
    %927 = vmatpush1.bf16.msra.mxu0 %v894
    %928 = vmatprep.subr.bf16.mxu0 0
    %929 = vmatpush1.bf16.msra.mxu0 0
    %930 = vmatprep.subr.bf16.mxu0 0
    %931 = vmatpush1.bf16.msra.mxu0 0
    %932 = vmatprep.subr.bf16.mxu0 0
    %933 = vmatpush1.bf16.msra.mxu0 0
    %934 = vmatprep.subr.bf16.mxu0 0
    %935 = vmatpush1.bf16.msra.mxu0 0
    %936 = vmatprep.subr.bf16.mxu0 0
    %937 = vmatpush1.bf16.msra.mxu0 0
    %938 = vmatprep.subr.bf16.mxu0 0
    %939 = vmatpush1.bf16.msra.mxu0 0
    %940 = vmatprep.subr.bf16.mxu0 0
    %941 = vmatpush1.bf16.msra.mxu0 0
    %942 = vmatprep.subr.bf16.mxu0 0
    %943 = vmatpush1.bf16.msra.mxu0 0
    %944 = vmatprep.mubr.bf16.mxu0 0
    %945 = vmatmul.mubr.bf16.gmra.mrb[0].mxu0 %v784
    %v946 = vpop.f32.mrb[0].mxu0
    %v947 = vadd.f32 0.0, %v946
    %v948 = vpop.f32.mrb[0].mxu0
    %v949 = vadd.f32 0.0, %v948
    %v950 = vpop.f32.mrb[0].mxu0
    %v951 = vadd.f32 0.0, %v950
    %v952 = vpop.f32.mrb[0].mxu0
    %v953 = vadd.f32 0.0, %v952
    %954 = vmatprep.mubr.bf16.mxu0 0
    %955 = vmatmul.mubr.bf16.gmra.mrb[0].mxu0 %v785
    %v956 = vpop.f32.mrb[0].mxu0
    %v957 = vadd.f32 0.0, %v956
    %v958 = vpop.f32.mrb[0].mxu0
    %v959 = vadd.f32 0.0, %v958
    %v960 = vpop.f32.mrb[0].mxu0
    %v961 = vadd.f32 0.0, %v960
    %v962 = vpop.f32.mrb[0].mxu0
    %v963 = vadd.f32 0.0, %v962
    %964 = vmatprep.mubr.bf16.mxu0 0
    %965 = vmatmul.mubr.bf16.gmra.mrb[0].mxu0 %v786
    %v966 = vpop.f32.mrb[0].mxu0
    %v967 = vadd.f32 0.0, %v966
    %v968 = vpop.f32.mrb[0].mxu0
    %v969 = vadd.f32 0.0, %v968
    %v970 = vpop.f32.mrb[0].mxu0
    %v971 = vadd.f32 0.0, %v970
    %v972 = vpop.f32.mrb[0].mxu0
    %v973 = vadd.f32 0.0, %v972
    %974 = vmatprep.mubr.bf16.mxu0 0
    %975 = vmatmul.mubr.bf16.gmra.mrb[0].mxu0 %v787
    %v976 = vpop.f32.mrb[0].mxu0
    %v977 = vadd.f32 0.0, %v976
    %v978 = vpop.f32.mrb[0].mxu0
    %v979 = vadd.f32 0.0, %v978
    %v980 = vpop.f32.mrb[0].mxu0
    %v981 = vadd.f32 0.0, %v980
    %v982 = vpop.f32.mrb[0].mxu0
    %v983 = vadd.f32 0.0, %v982
    %984 = vmatprep.mubr.bf16.mxu0 0
    %985 = vmatmul.mubr.bf16.gmra.mrb[0].mxu0 %v788
    %v986 = vpop.f32.mrb[0].mxu0
    %v987 = vadd.f32 0.0, %v986
    %v988 = vpop.f32.mrb[0].mxu0
    %v989 = vadd.f32 0.0, %v988
    %v990 = vpop.f32.mrb[0].mxu0
    %v991 = vadd.f32 0.0, %v990
    %v992 = vpop.f32.mrb[0].mxu0
    %v993 = vadd.f32 0.0, %v992
    %994 = vmatprep.mubr.bf16.mxu0 0
    %995 = vmatmul.mubr.bf16.gmra.mrb[0].mxu0 %v789
    %v996 = vpop.f32.mrb[0].mxu0
    %v997 = vadd.f32 0.0, %v996
    %v998 = vpop.f32.mrb[0].mxu0
    %v999 = vadd.f32 0.0, %v998
    %v1000 = vpop.f32.mrb[0].mxu0
    %v1001 = vadd.f32 0.0, %v1000
    %v1002 = vpop.f32.mrb[0].mxu0
    %v1003 = vadd.f32 0.0, %v1002
    %1004 = vmatprep.mubr.bf16.mxu0 0
    %1005 = vmatmul.mubr.bf16.gmra.mrb[0].mxu0 %v790
    %v1006 = vpop.f32.mrb[0].mxu0
    %v1007 = vadd.f32 0.0, %v1006
    %v1008 = vpop.f32.mrb[0].mxu0
    %v1009 = vadd.f32 0.0, %v1008
    %v1010 = vpop.f32.mrb[0].mxu0
    %v1011 = vadd.f32 0.0, %v1010
    %v1012 = vpop.f32.mrb[0].mxu0
    %v1013 = vadd.f32 0.0, %v1012
    %1014 = vmatprep.mubr.bf16.mxu0 0
    %1015 = vmatmul.mubr.bf16.gmra.mrb[0].mxu0 %v791
    %v1016 = vpop.f32.mrb[0].mxu0
    %v1017 = vadd.f32 0.0, %v1016
    %v1018 = vpop.f32.mrb[0].mxu0
    %v1019 = vadd.f32 0.0, %v1018
    %v1020 = vpop.f32.mrb[0].mxu0
    %v1021 = vadd.f32 0.0, %v1020
    %v1022 = vpop.f32.mrb[0].mxu0
    %v1023 = vadd.f32 0.0, %v1022
    %1024 = vmatprep.mubr.bf16.mxu0 0
    %1025 = vmatmul.mubr.bf16.gmra.mrb[0].mxu0 %v792
    %v1026 = vpop.f32.mrb[0].mxu0
    %v1027 = vadd.f32 0.0, %v1026
    %v1028 = vpop.f32.mrb[0].mxu0
    %v1029 = vadd.f32 0.0, %v1028
    %v1030 = vpop.f32.mrb[0].mxu0
    %v1031 = vadd.f32 0.0, %v1030
    %v1032 = vpop.f32.mrb[0].mxu0
    %v1033 = vadd.f32 0.0, %v1032
    %1034 = vmatprep.mubr.bf16.mxu0 0
    %1035 = vmatmul.mubr.bf16.gmra.mrb[0].mxu0 %v793
    %v1036 = vpop.f32.mrb[0].mxu0
    %v1037 = vadd.f32 0.0, %v1036
    %v1038 = vpop.f32.mrb[0].mxu0
    %v1039 = vadd.f32 0.0, %v1038
    %v1040 = vpop.f32.mrb[0].mxu0
    %v1041 = vadd.f32 0.0, %v1040
    %v1042 = vpop.f32.mrb[0].mxu0
    %v1043 = vadd.f32 0.0, %v1042
    %1044 = vmatprep.mubr.bf16.mxu0 0
    %1045 = vmatmul.mubr.bf16.gmra.mrb[0].mxu0 %v794
    %v1046 = vpop.f32.mrb[0].mxu0
    %v1047 = vadd.f32 0.0, %v1046
    %v1048 = vpop.f32.mrb[0].mxu0
    %v1049 = vadd.f32 0.0, %v1048
    %v1050 = vpop.f32.mrb[0].mxu0
    %v1051 = vadd.f32 0.0, %v1050
    %v1052 = vpop.f32.mrb[0].mxu0
    %v1053 = vadd.f32 0.0, %v1052
    %1054 = vmatprep.mubr.bf16.mxu0 0
    %1055 = vmatmul.mubr.bf16.gmra.mrb[0].mxu0 %v795
    %v1056 = vpop.f32.mrb[0].mxu0
    %v1057 = vadd.f32 0.0, %v1056
    %v1058 = vpop.f32.mrb[0].mxu0
    %v1059 = vadd.f32 0.0, %v1058
    %v1060 = vpop.f32.mrb[0].mxu0
    %v1061 = vadd.f32 0.0, %v1060
    %v1062 = vpop.f32.mrb[0].mxu0
    %v1063 = vadd.f32 0.0, %v1062
    %1064 = vmatprep.mubr.bf16.mxu0 0
    %1065 = vmatmul.mubr.bf16.gmra.mrb[0].mxu0 %v796
    %v1066 = vpop.f32.mrb[0].mxu0
    %v1067 = vadd.f32 0.0, %v1066
    %v1068 = vpop.f32.mrb[0].mxu0
    %v1069 = vadd.f32 0.0, %v1068
    %v1070 = vpop.f32.mrb[0].mxu0
    %v1071 = vadd.f32 0.0, %v1070
    %v1072 = vpop.f32.mrb[0].mxu0
    %v1073 = vadd.f32 0.0, %v1072
    %1074 = vmatprep.mubr.bf16.mxu0 0
    %1075 = vmatmul.mubr.bf16.gmra.mrb[0].mxu0 %v797
    %v1076 = vpop.f32.mrb[0].mxu0
    %v1077 = vadd.f32 0.0, %v1076
    %v1078 = vpop.f32.mrb[0].mxu0
    %v1079 = vadd.f32 0.0, %v1078
    %v1080 = vpop.f32.mrb[0].mxu0
    %v1081 = vadd.f32 0.0, %v1080
    %v1082 = vpop.f32.mrb[0].mxu0
    %v1083 = vadd.f32 0.0, %v1082
    %1084 = vmatprep.mubr.bf16.mxu0 0
    %1085 = vmatmul.mubr.bf16.gmra.mrb[0].mxu0 %v798
    %v1086 = vpop.f32.mrb[0].mxu0
    %v1087 = vadd.f32 0.0, %v1086
    %v1088 = vpop.f32.mrb[0].mxu0
    %v1089 = vadd.f32 0.0, %v1088
    %v1090 = vpop.f32.mrb[0].mxu0
    %v1091 = vadd.f32 0.0, %v1090
    %v1092 = vpop.f32.mrb[0].mxu0
    %v1093 = vadd.f32 0.0, %v1092
    %1094 = vmatprep.mubr.bf16.mxu0 0
    %1095 = vmatmul.mubr.bf16.gmra.mrb[0].mxu0 %v799
    %v1096 = vpop.f32.mrb[0].mxu0
    %v1097 = vadd.f32 0.0, %v1096
    %v1098 = vpop.f32.mrb[0].mxu0
    %v1099 = vadd.f32 0.0, %v1098
    %v1100 = vpop.f32.mrb[0].mxu0
    %v1101 = vadd.f32 0.0, %v1100
    %v1102 = vpop.f32.mrb[0].mxu0
    %v1103 = vadd.f32 0.0, %v1102
    %1104 = vmatprep.mubr.bf16.mxu0 0
    %1105 = vmatmul.mubr.bf16.gmra.mrb[0].mxu0 %v800
    %v1106 = vpop.f32.mrb[0].mxu0
    %v1107 = vadd.f32 0.0, %v1106
    %v1108 = vpop.f32.mrb[0].mxu0
    %v1109 = vadd.f32 0.0, %v1108
    %v1110 = vpop.f32.mrb[0].mxu0
    %v1111 = vadd.f32 0.0, %v1110
    %v1112 = vpop.f32.mrb[0].mxu0
    %v1113 = vadd.f32 0.0, %v1112
    %1114 = vmatprep.mubr.bf16.mxu0 0
    %1115 = vmatmul.mubr.bf16.gmra.mrb[0].mxu0 %v801
    %v1116 = vpop.f32.mrb[0].mxu0
    %v1117 = vadd.f32 0.0, %v1116
    %v1118 = vpop.f32.mrb[0].mxu0
    %v1119 = vadd.f32 0.0, %v1118
    %v1120 = vpop.f32.mrb[0].mxu0
    %v1121 = vadd.f32 0.0, %v1120
    %v1122 = vpop.f32.mrb[0].mxu0
    %v1123 = vadd.f32 0.0, %v1122
    %1124 = vmatprep.mubr.bf16.mxu0 0
    %1125 = vmatmul.mubr.bf16.gmra.mrb[0].mxu0 %v802
    %v1126 = vpop.f32.mrb[0].mxu0
    %v1127 = vadd.f32 0.0, %v1126
    %v1128 = vpop.f32.mrb[0].mxu0
    %v1129 = vadd.f32 0.0, %v1128
    %v1130 = vpop.f32.mrb[0].mxu0
    %v1131 = vadd.f32 0.0, %v1130
    %v1132 = vpop.f32.mrb[0].mxu0
    %v1133 = vadd.f32 0.0, %v1132
    %1134 = vmatprep.mubr.bf16.mxu0 0
    %1135 = vmatmul.mubr.bf16.gmra.mrb[0].mxu0 %v803
    %v1136 = vpop.f32.mrb[0].mxu0
    %v1137 = vadd.f32 0.0, %v1136
    %v1138 = vpop.f32.mrb[0].mxu0
    %v1139 = vadd.f32 0.0, %v1138
    %v1140 = vpop.f32.mrb[0].mxu0
    %v1141 = vadd.f32 0.0, %v1140
    %v1142 = vpop.f32.mrb[0].mxu0
    %v1143 = vadd.f32 0.0, %v1142
    %1144 = vmatprep.mubr.bf16.mxu0 0
    %1145 = vmatmul.mubr.bf16.gmra.mrb[0].mxu0 %v804
    %v1146 = vpop.f32.mrb[0].mxu0
    %v1147 = vadd.f32 0.0, %v1146
    %v1148 = vpop.f32.mrb[0].mxu0
    %v1149 = vadd.f32 0.0, %v1148
    %v1150 = vpop.f32.mrb[0].mxu0
    %v1151 = vadd.f32 0.0, %v1150
    %v1152 = vpop.f32.mrb[0].mxu0
    %v1153 = vadd.f32 0.0, %v1152
    %1154 = vmatprep.mubr.bf16.mxu0 0
    %1155 = vmatmul.mubr.bf16.gmra.mrb[0].mxu0 %v805
    %v1156 = vpop.f32.mrb[0].mxu0
    %v1157 = vadd.f32 0.0, %v1156
    %v1158 = vpop.f32.mrb[0].mxu0
    %v1159 = vadd.f32 0.0, %v1158
    %v1160 = vpop.f32.mrb[0].mxu0
    %v1161 = vadd.f32 0.0, %v1160
    %v1162 = vpop.f32.mrb[0].mxu0
    %v1163 = vadd.f32 0.0, %v1162
    %1164 = vmatprep.mubr.bf16.mxu0 0
    %1165 = vmatmul.mubr.bf16.gmra.mrb[0].mxu0 %v806
    %v1166 = vpop.f32.mrb[0].mxu0
    %v1167 = vadd.f32 0.0, %v1166
    %v1168 = vpop.f32.mrb[0].mxu0
    %v1169 = vadd.f32 0.0, %v1168
    %v1170 = vpop.f32.mrb[0].mxu0
    %v1171 = vadd.f32 0.0, %v1170
    %v1172 = vpop.f32.mrb[0].mxu0
    %v1173 = vadd.f32 0.0, %v1172
    %1174 = vmatprep.mubr.bf16.mxu0 0
    %1175 = vmatmul.mubr.bf16.gmra.mrb[0].mxu0 %v807
    %v1176 = vpop.f32.mrb[0].mxu0
    %v1177 = vadd.f32 0.0, %v1176
    %v1178 = vpop.f32.mrb[0].mxu0
    %v1179 = vadd.f32 0.0, %v1178
    %v1180 = vpop.f32.mrb[0].mxu0
    %v1181 = vadd.f32 0.0, %v1180
    %v1182 = vpop.f32.mrb[0].mxu0
    %v1183 = vadd.f32 0.0, %v1182
    %1184 = vmatprep.mubr.bf16.mxu0 0
    %1185 = vmatmul.mubr.bf16.gmra.mrb[0].mxu0 %v808
    %v1186 = vpop.f32.mrb[0].mxu0
    %v1187 = vadd.f32 0.0, %v1186
    %v1188 = vpop.f32.mrb[0].mxu0
    %v1189 = vadd.f32 0.0, %v1188
    %v1190 = vpop.f32.mrb[0].mxu0
    %v1191 = vadd.f32 0.0, %v1190
    %v1192 = vpop.f32.mrb[0].mxu0
    %v1193 = vadd.f32 0.0, %v1192
    %1194 = vmatprep.mubr.bf16.mxu0 0
    %1195 = vmatmul.mubr.bf16.gmra.mrb[0].mxu0 %v809
    %v1196 = vpop.f32.mrb[0].mxu0
    %v1197 = vadd.f32 0.0, %v1196
    %v1198 = vpop.f32.mrb[0].mxu0
    %v1199 = vadd.f32 0.0, %v1198
    %v1200 = vpop.f32.mrb[0].mxu0
    %v1201 = vadd.f32 0.0, %v1200
    %v1202 = vpop.f32.mrb[0].mxu0
    %v1203 = vadd.f32 0.0, %v1202
    %1204 = vmatprep.mubr.bf16.mxu0 0
    %1205 = vmatmul.mubr.bf16.gmra.mrb[0].mxu0 %v810
    %v1206 = vpop.f32.mrb[0].mxu0
    %v1207 = vadd.f32 0.0, %v1206
    %v1208 = vpop.f32.mrb[0].mxu0
    %v1209 = vadd.f32 0.0, %v1208
    %v1210 = vpop.f32.mrb[0].mxu0
    %v1211 = vadd.f32 0.0, %v1210
    %v1212 = vpop.f32.mrb[0].mxu0
    %v1213 = vadd.f32 0.0, %v1212
    %1214 = vmatprep.mubr.bf16.mxu0 0
    %1215 = vmatmul.mubr.bf16.gmra.mrb[0].mxu0 %v811
    %v1216 = vpop.f32.mrb[0].mxu0
    %v1217 = vadd.f32 0.0, %v1216
    %v1218 = vpop.f32.mrb[0].mxu0
    %v1219 = vadd.f32 0.0, %v1218
    %v1220 = vpop.f32.mrb[0].mxu0
    %v1221 = vadd.f32 0.0, %v1220
    %v1222 = vpop.f32.mrb[0].mxu0
    %v1223 = vadd.f32 0.0, %v1222
    %1224 = vmatprep.mubr.bf16.mxu0 0
    %1225 = vmatmul.mubr.bf16.gmra.mrb[0].mxu0 %v812
    %v1226 = vpop.f32.mrb[0].mxu0
    %v1227 = vadd.f32 0.0, %v1226
    %v1228 = vpop.f32.mrb[0].mxu0
    %v1229 = vadd.f32 0.0, %v1228
    %v1230 = vpop.f32.mrb[0].mxu0
    %v1231 = vadd.f32 0.0, %v1230
    %v1232 = vpop.f32.mrb[0].mxu0
    %v1233 = vadd.f32 0.0, %v1232
    %1234 = vmatprep.mubr.bf16.mxu0 0
    %1235 = vmatmul.mubr.bf16.gmra.mrb[0].mxu0 %v813
    %v1236 = vpop.f32.mrb[0].mxu0
    %v1237 = vadd.f32 0.0, %v1236
    %v1238 = vpop.f32.mrb[0].mxu0
    %v1239 = vadd.f32 0.0, %v1238
    %v1240 = vpop.f32.mrb[0].mxu0
    %v1241 = vadd.f32 0.0, %v1240
    %v1242 = vpop.f32.mrb[0].mxu0
    %v1243 = vadd.f32 0.0, %v1242
    %1244 = vmatprep.mubr.bf16.mxu0 0
    %1245 = vmatmul.mubr.bf16.gmra.mrb[0].mxu0 %v814
    %v1246 = vpop.f32.mrb[0].mxu0
    %v1247 = vadd.f32 0.0, %v1246
    %v1248 = vpop.f32.mrb[0].mxu0
    %v1249 = vadd.f32 0.0, %v1248
    %v1250 = vpop.f32.mrb[0].mxu0
    %v1251 = vadd.f32 0.0, %v1250
    %v1252 = vpop.f32.mrb[0].mxu0
    %v1253 = vadd.f32 0.0, %v1252
    %1254 = vmatprep.mubr.bf16.mxu0 0
    %1255 = vmatmul.mubr.bf16.gmra.mrb[0].mxu0 %v815
    %v1256 = vpop.f32.mrb[0].mxu0
    %v1257 = vadd.f32 0.0, %v1256
    %v1258 = vpop.f32.mrb[0].mxu0
    %v1259 = vadd.f32 0.0, %v1258
    %v1260 = vpop.f32.mrb[0].mxu0
    %v1261 = vadd.f32 0.0, %v1260
    %v1262 = vpop.f32.mrb[0].mxu0
    %v1263 = vadd.f32 0.0, %v1262
    %1264 = vdwg.mxu0
    %v1265 = vld [vmem:[%s5] sm:$0xf]
    %v1266 = vld [vmem:[%s5 + $0x4] sm:$0xf]
    %v1267 = vld [vmem:[%s5 + $0x8] sm:$0xf]
    %v1268 = vld [vmem:[%s5 + $0xc] sm:$0xf]
    %v1269 = vld [vmem:[%s5 + $0x10] sm:$0xf]
    %v1270 = vld [vmem:[%s5 + $0x14] sm:$0xf]
    %v1271 = vld [vmem:[%s5 + $0x18] sm:$0xf]
    %v1272 = vld [vmem:[%s5 + $0x1c] sm:$0xf]
    %v1273 = vld [vmem:[%s5 + $0x20] sm:$0xf]
    %v1274 = vld [vmem:[%s5 + $0x24] sm:$0xf]
    %v1275 = vld [vmem:[%s5 + $0x28] sm:$0xf]
    %v1276 = vld [vmem:[%s5 + $0x2c] sm:$0xf]
    %v1277 = vld [vmem:[%s5 + $0x30] sm:$0xf]
    %v1278 = vld [vmem:[%s5 + $0x34] sm:$0xf]
    %v1279 = vld [vmem:[%s5 + $0x38] sm:$0xf]
    %v1280 = vld [vmem:[%s5 + $0x3c] sm:$0xf]
    %v1297 = vunpack.c.l.b16 %v1265
    %v1298 = vunpack.c.l.b16 %v1266
    %v1299 = vunpack.c.l.b16 %v1267
    %v1300 = vunpack.c.l.b16 %v1268
    %v1301 = vunpack.c.l.b16 %v1269
    %v1302 = vunpack.c.l.b16 %v1270
    %v1303 = vunpack.c.l.b16 %v1271
    %v1304 = vunpack.c.l.b16 %v1272
    %v1305 = vunpack.c.l.b16 %v1273
    %v1306 = vunpack.c.l.b16 %v1274
    %v1307 = vunpack.c.l.b16 %v1275
    %v1308 = vunpack.c.l.b16 %v1276
    %v1309 = vunpack.c.l.b16 %v1277
    %v1310 = vunpack.c.l.b16 %v1278
    %v1311 = vunpack.c.l.b16 %v1279
    %v1312 = vunpack.c.l.b16 %v1280
    %v1313 = vpack.c.b16 %v1298, %v1297
    %v1314 = vpack.c.b16 %v1300, %v1299
    %v1315 = vpack.c.b16 %v1302, %v1301
    %v1316 = vpack.c.b16 %v1304, %v1303
    %v1317 = vpack.c.b16 %v1306, %v1305
    %v1318 = vpack.c.b16 %v1308, %v1307
    %v1319 = vpack.c.b16 %v1310, %v1309
    %v1320 = vpack.c.b16 %v1312, %v1311
    %1329 = vmatprep.subr.bf16.mxu0 0
    %1330 = vmatpush1.bf16.msra.mxu0 %v1313
    %1331 = vmatprep.subr.bf16.mxu0 0
    %1332 = vmatpush1.bf16.msra.mxu0 %v1314
    %1333 = vmatprep.subr.bf16.mxu0 0
    %1334 = vmatpush1.bf16.msra.mxu0 %v1315
    %1335 = vmatprep.subr.bf16.mxu0 0
    %1336 = vmatpush1.bf16.msra.mxu0 %v1316
    %1337 = vmatprep.subr.bf16.mxu0 0
    %1338 = vmatpush1.bf16.msra.mxu0 %v1317
    %1339 = vmatprep.subr.bf16.mxu0 0
    %1340 = vmatpush1.bf16.msra.mxu0 %v1318
    %1341 = vmatprep.subr.bf16.mxu0 0
    %1342 = vmatpush1.bf16.msra.mxu0 %v1319
    %1343 = vmatprep.subr.bf16.mxu0 0
    %1344 = vmatpush1.bf16.msra.mxu0 %v1320
    %1345 = vmatprep.subr.bf16.mxu0 0
    %1346 = vmatpush1.bf16.msra.mxu0 0
    %1347 = vmatprep.subr.bf16.mxu0 0
    %1348 = vmatpush1.bf16.msra.mxu0 0
    %1349 = vmatprep.subr.bf16.mxu0 0
    %1350 = vmatpush1.bf16.msra.mxu0 0
    %1351 = vmatprep.subr.bf16.mxu0 0
    %1352 = vmatpush1.bf16.msra.mxu0 0
    %1353 = vmatprep.subr.bf16.mxu0 0
    %1354 = vmatpush1.bf16.msra.mxu0 0
    %1355 = vmatprep.subr.bf16.mxu0 0
    %1356 = vmatpush1.bf16.msra.mxu0 0
    %1357 = vmatprep.subr.bf16.mxu0 0
    %1358 = vmatpush1.bf16.msra.mxu0 0
    %1359 = vmatprep.subr.bf16.mxu0 0
    %1360 = vmatpush1.bf16.msra.mxu0 0
    %1361 = vmatprep.mubr.bf16.mxu0 0
    %1362 = vmatmul.mubr.bf16.gmra.mrb[0].mxu0 %v784
    %v1363 = vpop.f32.mrb[0].mxu0
    %v1364 = vadd.f32 0.0, %v1363
    %v1365 = vpop.f32.mrb[0].mxu0
    %v1366 = vpop.f32.mrb[0].mxu0
    %v1367 = vadd.f32 0.0, %v1366
    %v1368 = vpop.f32.mrb[0].mxu0
    %1369 = vmatprep.mubr.bf16.mxu0 0
    %1370 = vmatmul.mubr.bf16.gmra.mrb[0].mxu0 %v785
    %v1371 = vpop.f32.mrb[0].mxu0
    %v1372 = vadd.f32 0.0, %v1371
    %v1373 = vpop.f32.mrb[0].mxu0
    %v1374 = vpop.f32.mrb[0].mxu0
    %v1375 = vadd.f32 0.0, %v1374
    %v1376 = vpop.f32.mrb[0].mxu0
    %1377 = vmatprep.mubr.bf16.mxu0 0
    %1378 = vmatmul.mubr.bf16.gmra.mrb[0].mxu0 %v786
    %v1379 = vpop.f32.mrb[0].mxu0
    %v1380 = vadd.f32 0.0, %v1379
    %v1381 = vpop.f32.mrb[0].mxu0
    %v1382 = vpop.f32.mrb[0].mxu0
    %v1383 = vadd.f32 0.0, %v1382
    %v1384 = vpop.f32.mrb[0].mxu0
    %1385 = vmatprep.mubr.bf16.mxu0 0
    %1386 = vmatmul.mubr.bf16.gmra.mrb[0].mxu0 %v787
    %v1387 = vpop.f32.mrb[0].mxu0
    %v1388 = vadd.f32 0.0, %v1387
    %v1389 = vpop.f32.mrb[0].mxu0
    %v1390 = vpop.f32.mrb[0].mxu0
    %v1391 = vadd.f32 0.0, %v1390
    %v1392 = vpop.f32.mrb[0].mxu0
    %1393 = vmatprep.mubr.bf16.mxu0 0
    %1394 = vmatmul.mubr.bf16.gmra.mrb[0].mxu0 %v788
    %v1395 = vpop.f32.mrb[0].mxu0
    %v1396 = vadd.f32 0.0, %v1395
    %v1397 = vpop.f32.mrb[0].mxu0
    %v1398 = vpop.f32.mrb[0].mxu0
    %v1399 = vadd.f32 0.0, %v1398
    %v1400 = vpop.f32.mrb[0].mxu0
    %1401 = vmatprep.mubr.bf16.mxu0 0
    %1402 = vmatmul.mubr.bf16.gmra.mrb[0].mxu0 %v789
    %v1403 = vpop.f32.mrb[0].mxu0
    %v1404 = vadd.f32 0.0, %v1403
    %v1405 = vpop.f32.mrb[0].mxu0
    %v1406 = vpop.f32.mrb[0].mxu0
    %v1407 = vadd.f32 0.0, %v1406
    %v1408 = vpop.f32.mrb[0].mxu0
    %1409 = vmatprep.mubr.bf16.mxu0 0
    %1410 = vmatmul.mubr.bf16.gmra.mrb[0].mxu0 %v790
    %v1411 = vpop.f32.mrb[0].mxu0
    %v1412 = vadd.f32 0.0, %v1411
    %v1413 = vpop.f32.mrb[0].mxu0
    %v1414 = vpop.f32.mrb[0].mxu0
    %v1415 = vadd.f32 0.0, %v1414
    %v1416 = vpop.f32.mrb[0].mxu0
    %1417 = vmatprep.mubr.bf16.mxu0 0
    %1418 = vmatmul.mubr.bf16.gmra.mrb[0].mxu0 %v791
    %v1419 = vpop.f32.mrb[0].mxu0
    %v1420 = vadd.f32 0.0, %v1419
    %v1421 = vpop.f32.mrb[0].mxu0
    %v1422 = vpop.f32.mrb[0].mxu0
    %v1423 = vadd.f32 0.0, %v1422
    %v1424 = vpop.f32.mrb[0].mxu0
    %1425 = vmatprep.mubr.bf16.mxu0 0
    %1426 = vmatmul.mubr.bf16.gmra.mrb[0].mxu0 %v792
    %v1427 = vpop.f32.mrb[0].mxu0
    %v1428 = vadd.f32 0.0, %v1427
    %v1429 = vpop.f32.mrb[0].mxu0
    %v1430 = vpop.f32.mrb[0].mxu0
    %v1431 = vadd.f32 0.0, %v1430
    %v1432 = vpop.f32.mrb[0].mxu0
    %1433 = vmatprep.mubr.bf16.mxu0 0
    %1434 = vmatmul.mubr.bf16.gmra.mrb[0].mxu0 %v793
    %v1435 = vpop.f32.mrb[0].mxu0
    %v1436 = vadd.f32 0.0, %v1435
    %v1437 = vpop.f32.mrb[0].mxu0
    %v1438 = vpop.f32.mrb[0].mxu0
    %v1439 = vadd.f32 0.0, %v1438
    %v1440 = vpop.f32.mrb[0].mxu0
    %1441 = vmatprep.mubr.bf16.mxu0 0
    %1442 = vmatmul.mubr.bf16.gmra.mrb[0].mxu0 %v794
    %v1443 = vpop.f32.mrb[0].mxu0
    %v1444 = vadd.f32 0.0, %v1443
    %v1445 = vpop.f32.mrb[0].mxu0
    %v1446 = vpop.f32.mrb[0].mxu0
    %v1447 = vadd.f32 0.0, %v1446
    %v1448 = vpop.f32.mrb[0].mxu0
    %1449 = vmatprep.mubr.bf16.mxu0 0
    %1450 = vmatmul.mubr.bf16.gmra.mrb[0].mxu0 %v795
    %v1451 = vpop.f32.mrb[0].mxu0
    %v1452 = vadd.f32 0.0, %v1451
    %v1453 = vpop.f32.mrb[0].mxu0
    %v1454 = vpop.f32.mrb[0].mxu0
    %v1455 = vadd.f32 0.0, %v1454
    %v1456 = vpop.f32.mrb[0].mxu0
    %1457 = vmatprep.mubr.bf16.mxu0 0
    %1458 = vmatmul.mubr.bf16.gmra.mrb[0].mxu0 %v796
    %v1459 = vpop.f32.mrb[0].mxu0
    %v1460 = vadd.f32 0.0, %v1459
    %v1461 = vpop.f32.mrb[0].mxu0
    %v1462 = vpop.f32.mrb[0].mxu0
    %v1463 = vadd.f32 0.0, %v1462
    %v1464 = vpop.f32.mrb[0].mxu0
    %1465 = vmatprep.mubr.bf16.mxu0 0
    %1466 = vmatmul.mubr.bf16.gmra.mrb[0].mxu0 %v797
    %v1467 = vpop.f32.mrb[0].mxu0
    %v1468 = vadd.f32 0.0, %v1467
    %v1469 = vpop.f32.mrb[0].mxu0
    %v1470 = vpop.f32.mrb[0].mxu0
    %v1471 = vadd.f32 0.0, %v1470
    %v1472 = vpop.f32.mrb[0].mxu0
    %1473 = vmatprep.mubr.bf16.mxu0 0
    %1474 = vmatmul.mubr.bf16.gmra.mrb[0].mxu0 %v798
    %v1475 = vpop.f32.mrb[0].mxu0
    %v1476 = vadd.f32 0.0, %v1475
    %v1477 = vpop.f32.mrb[0].mxu0
    %v1478 = vpop.f32.mrb[0].mxu0
    %v1479 = vadd.f32 0.0, %v1478
    %v1480 = vpop.f32.mrb[0].mxu0
    %1481 = vmatprep.mubr.bf16.mxu0 0
    %1482 = vmatmul.mubr.bf16.gmra.mrb[0].mxu0 %v799
    %v1483 = vpop.f32.mrb[0].mxu0
    %v1484 = vadd.f32 0.0, %v1483
    %v1485 = vpop.f32.mrb[0].mxu0
    %v1486 = vpop.f32.mrb[0].mxu0
    %v1487 = vadd.f32 0.0, %v1486
    %v1488 = vpop.f32.mrb[0].mxu0
    %1489 = vmatprep.mubr.bf16.mxu0 0
    %1490 = vmatmul.mubr.bf16.gmra.mrb[0].mxu0 %v800
    %v1491 = vpop.f32.mrb[0].mxu0
    %v1492 = vadd.f32 0.0, %v1491
    %v1493 = vpop.f32.mrb[0].mxu0
    %v1494 = vpop.f32.mrb[0].mxu0
    %v1495 = vadd.f32 0.0, %v1494
    %v1496 = vpop.f32.mrb[0].mxu0
    %1497 = vmatprep.mubr.bf16.mxu0 0
    %1498 = vmatmul.mubr.bf16.gmra.mrb[0].mxu0 %v801
    %v1499 = vpop.f32.mrb[0].mxu0
    %v1500 = vadd.f32 0.0, %v1499
    %v1501 = vpop.f32.mrb[0].mxu0
    %v1502 = vpop.f32.mrb[0].mxu0
    %v1503 = vadd.f32 0.0, %v1502
    %v1504 = vpop.f32.mrb[0].mxu0
    %1505 = vmatprep.mubr.bf16.mxu0 0
    %1506 = vmatmul.mubr.bf16.gmra.mrb[0].mxu0 %v802
    %v1507 = vpop.f32.mrb[0].mxu0
    %v1508 = vadd.f32 0.0, %v1507
    %v1509 = vpop.f32.mrb[0].mxu0
    %v1510 = vpop.f32.mrb[0].mxu0
    %v1511 = vadd.f32 0.0, %v1510
    %v1512 = vpop.f32.mrb[0].mxu0
    %1513 = vmatprep.mubr.bf16.mxu0 0
    %1514 = vmatmul.mubr.bf16.gmra.mrb[0].mxu0 %v803
    %v1515 = vpop.f32.mrb[0].mxu0
    %v1516 = vadd.f32 0.0, %v1515
    %v1517 = vpop.f32.mrb[0].mxu0
    %v1518 = vpop.f32.mrb[0].mxu0
    %v1519 = vadd.f32 0.0, %v1518
    %v1520 = vpop.f32.mrb[0].mxu0
    %1521 = vmatprep.mubr.bf16.mxu0 0
    %1522 = vmatmul.mubr.bf16.gmra.mrb[0].mxu0 %v804
    %v1523 = vpop.f32.mrb[0].mxu0
    %v1524 = vadd.f32 0.0, %v1523
    %v1525 = vpop.f32.mrb[0].mxu0
    %v1526 = vpop.f32.mrb[0].mxu0
    %v1527 = vadd.f32 0.0, %v1526
    %v1528 = vpop.f32.mrb[0].mxu0
    %1529 = vmatprep.mubr.bf16.mxu0 0
    %1530 = vmatmul.mubr.bf16.gmra.mrb[0].mxu0 %v805
    %v1531 = vpop.f32.mrb[0].mxu0
    %v1532 = vadd.f32 0.0, %v1531
    %v1533 = vpop.f32.mrb[0].mxu0
    %v1534 = vpop.f32.mrb[0].mxu0
    %v1535 = vadd.f32 0.0, %v1534
    %v1536 = vpop.f32.mrb[0].mxu0
    %1537 = vmatprep.mubr.bf16.mxu0 0
    %1538 = vmatmul.mubr.bf16.gmra.mrb[0].mxu0 %v806
    %v1539 = vpop.f32.mrb[0].mxu0
    %v1540 = vadd.f32 0.0, %v1539
    %v1541 = vpop.f32.mrb[0].mxu0
    %v1542 = vpop.f32.mrb[0].mxu0
    %v1543 = vadd.f32 0.0, %v1542
    %v1544 = vpop.f32.mrb[0].mxu0
    %1545 = vmatprep.mubr.bf16.mxu0 0
    %1546 = vmatmul.mubr.bf16.gmra.mrb[0].mxu0 %v807
    %v1547 = vpop.f32.mrb[0].mxu0
    %v1548 = vadd.f32 0.0, %v1547
    %v1549 = vpop.f32.mrb[0].mxu0
    %v1550 = vpop.f32.mrb[0].mxu0
    %v1551 = vadd.f32 0.0, %v1550
    %v1552 = vpop.f32.mrb[0].mxu0
    %1553 = vmatprep.mubr.bf16.mxu0 0
    %1554 = vmatmul.mubr.bf16.gmra.mrb[0].mxu0 %v808
    %v1555 = vpop.f32.mrb[0].mxu0
    %v1556 = vadd.f32 0.0, %v1555
    %v1557 = vpop.f32.mrb[0].mxu0
    %v1558 = vpop.f32.mrb[0].mxu0
    %v1559 = vadd.f32 0.0, %v1558
    %v1560 = vpop.f32.mrb[0].mxu0
    %1561 = vmatprep.mubr.bf16.mxu0 0
    %1562 = vmatmul.mubr.bf16.gmra.mrb[0].mxu0 %v809
    %v1563 = vpop.f32.mrb[0].mxu0
    %v1564 = vadd.f32 0.0, %v1563
    %v1565 = vpop.f32.mrb[0].mxu0
    %v1566 = vpop.f32.mrb[0].mxu0
    %v1567 = vadd.f32 0.0, %v1566
    %v1568 = vpop.f32.mrb[0].mxu0
    %1569 = vmatprep.mubr.bf16.mxu0 0
    %1570 = vmatmul.mubr.bf16.gmra.mrb[0].mxu0 %v810
    %v1571 = vpop.f32.mrb[0].mxu0
    %v1572 = vadd.f32 0.0, %v1571
    %v1573 = vpop.f32.mrb[0].mxu0
    %v1574 = vpop.f32.mrb[0].mxu0
    %v1575 = vadd.f32 0.0, %v1574
    %v1576 = vpop.f32.mrb[0].mxu0
    %1577 = vmatprep.mubr.bf16.mxu0 0
    %1578 = vmatmul.mubr.bf16.gmra.mrb[0].mxu0 %v811
    %v1579 = vpop.f32.mrb[0].mxu0
    %v1580 = vadd.f32 0.0, %v1579
    %v1581 = vpop.f32.mrb[0].mxu0
    %v1582 = vpop.f32.mrb[0].mxu0
    %v1583 = vadd.f32 0.0, %v1582
    %v1584 = vpop.f32.mrb[0].mxu0
    %1585 = vmatprep.mubr.bf16.mxu0 0
    %1586 = vmatmul.mubr.bf16.gmra.mrb[0].mxu0 %v812
    %v1587 = vpop.f32.mrb[0].mxu0
    %v1588 = vadd.f32 0.0, %v1587
    %v1589 = vpop.f32.mrb[0].mxu0
    %v1590 = vpop.f32.mrb[0].mxu0
    %v1591 = vadd.f32 0.0, %v1590
    %v1592 = vpop.f32.mrb[0].mxu0
    %1593 = vmatprep.mubr.bf16.mxu0 0
    %1594 = vmatmul.mubr.bf16.gmra.mrb[0].mxu0 %v813
    %v1595 = vpop.f32.mrb[0].mxu0
    %v1596 = vadd.f32 0.0, %v1595
    %v1597 = vpop.f32.mrb[0].mxu0
    %v1598 = vpop.f32.mrb[0].mxu0
    %v1599 = vadd.f32 0.0, %v1598
    %v1600 = vpop.f32.mrb[0].mxu0
    %1601 = vmatprep.mubr.bf16.mxu0 0
    %1602 = vmatmul.mubr.bf16.gmra.mrb[0].mxu0 %v814
    %v1603 = vpop.f32.mrb[0].mxu0
    %v1604 = vadd.f32 0.0, %v1603
    %v1605 = vpop.f32.mrb[0].mxu0
    %v1606 = vpop.f32.mrb[0].mxu0
    %v1607 = vadd.f32 0.0, %v1606
    %v1608 = vpop.f32.mrb[0].mxu0
    %1609 = vmatprep.mubr.bf16.mxu0 0
    %1610 = vmatmul.mubr.bf16.gmra.mrb[0].mxu0 %v815
    %v1611 = vpop.f32.mrb[0].mxu0
    %v1612 = vadd.f32 0.0, %v1611
    %v1613 = vpop.f32.mrb[0].mxu0
    %v1614 = vpop.f32.mrb[0].mxu0
    %v1615 = vadd.f32 0.0, %v1614
    %v1616 = vpop.f32.mrb[0].mxu0
    %1617 = vdwg.mxu0
    %vm1618 = vcmask 7168
    %v1619 = vsel %vm1618, %v1364, -inf
    %v1620 = vsel %vm1618, %v1367, -inf
    %v1621 = vmax.f32 %v1619, %v1620
    %v1622 = vsel %vm1618, %v1372, -inf
    %v1623 = vmax.f32 %v1621, %v1622
    %v1624 = vsel %vm1618, %v1375, -inf
    %v1625 = vmax.f32 %v1623, %v1624
    %v1626 = vrot.slane %v1625, 4
    %v1627 = vmax.f32 %v1625, %v1626
    %v1628 = vrot.slane %v1627, 2
    %v1629 = vmax.f32 %v1627, %v1628
    %v1630 = vrot.slane %v1629, 1
    %v1631 = vmax.f32 %v1629, %v1630
    %v1632 = vsel %vm1618, %v1380, -inf
    %v1633 = vsel %vm1618, %v1383, -inf
    %v1634 = vmax.f32 %v1632, %v1633
    %v1635 = vsel %vm1618, %v1388, -inf
    %v1636 = vmax.f32 %v1634, %v1635
    %v1637 = vsel %vm1618, %v1391, -inf
    %v1638 = vmax.f32 %v1636, %v1637
    %v1639 = vrot.slane %v1638, 4
    %v1640 = vmax.f32 %v1638, %v1639
    %v1641 = vrot.slane %v1640, 2
    %v1642 = vmax.f32 %v1640, %v1641
    %v1643 = vrot.slane %v1642, 1
    %v1644 = vmax.f32 %v1642, %v1643
    %v1645 = vsel %vm1618, %v1396, -inf
    %v1646 = vsel %vm1618, %v1399, -inf
    %v1647 = vmax.f32 %v1645, %v1646
    %v1648 = vsel %vm1618, %v1404, -inf
    %v1649 = vmax.f32 %v1647, %v1648
    %v1650 = vsel %vm1618, %v1407, -inf
    %v1651 = vmax.f32 %v1649, %v1650
    %v1652 = vrot.slane %v1651, 4
    %v1653 = vmax.f32 %v1651, %v1652
    %v1654 = vrot.slane %v1653, 2
    %v1655 = vmax.f32 %v1653, %v1654
    %v1656 = vrot.slane %v1655, 1
    %v1657 = vmax.f32 %v1655, %v1656
    %v1658 = vsel %vm1618, %v1412, -inf
    %v1659 = vsel %vm1618, %v1415, -inf
    %v1660 = vmax.f32 %v1658, %v1659
    %v1661 = vsel %vm1618, %v1420, -inf
    %v1662 = vmax.f32 %v1660, %v1661
    %v1663 = vsel %vm1618, %v1423, -inf
    %v1664 = vmax.f32 %v1662, %v1663
    %v1665 = vrot.slane %v1664, 4
    %v1666 = vmax.f32 %v1664, %v1665
    %v1667 = vrot.slane %v1666, 2
    %v1668 = vmax.f32 %v1666, %v1667
    %v1669 = vrot.slane %v1668, 1
    %v1670 = vmax.f32 %v1668, %v1669
    %v1671 = vsel %vm1618, %v1428, -inf
    %v1672 = vsel %vm1618, %v1431, -inf
    %v1673 = vmax.f32 %v1671, %v1672
    %v1674 = vsel %vm1618, %v1436, -inf
    %v1675 = vmax.f32 %v1673, %v1674
    %v1676 = vsel %vm1618, %v1439, -inf
    %v1677 = vmax.f32 %v1675, %v1676
    %v1678 = vrot.slane %v1677, 4
    %v1679 = vmax.f32 %v1677, %v1678
    %v1680 = vrot.slane %v1679, 2
    %v1681 = vmax.f32 %v1679, %v1680
    %v1682 = vrot.slane %v1681, 1
    %v1683 = vmax.f32 %v1681, %v1682
    %v1684 = vsel %vm1618, %v1444, -inf
    %v1685 = vsel %vm1618, %v1447, -inf
    %v1686 = vmax.f32 %v1684, %v1685
    %v1687 = vsel %vm1618, %v1452, -inf
    %v1688 = vmax.f32 %v1686, %v1687
    %v1689 = vsel %vm1618, %v1455, -inf
    %v1690 = vmax.f32 %v1688, %v1689
    %v1691 = vrot.slane %v1690, 4
    %v1692 = vmax.f32 %v1690, %v1691
    %v1693 = vrot.slane %v1692, 2
    %v1694 = vmax.f32 %v1692, %v1693
    %v1695 = vrot.slane %v1694, 1
    %v1696 = vmax.f32 %v1694, %v1695
    %v1697 = vsel %vm1618, %v1460, -inf
    %v1698 = vsel %vm1618, %v1463, -inf
    %v1699 = vmax.f32 %v1697, %v1698
    %v1700 = vsel %vm1618, %v1468, -inf
    %v1701 = vmax.f32 %v1699, %v1700
    %v1702 = vsel %vm1618, %v1471, -inf
    %v1703 = vmax.f32 %v1701, %v1702
    %v1704 = vrot.slane %v1703, 4
    %v1705 = vmax.f32 %v1703, %v1704
    %v1706 = vrot.slane %v1705, 2
    %v1707 = vmax.f32 %v1705, %v1706
    %v1708 = vrot.slane %v1707, 1
    %v1709 = vmax.f32 %v1707, %v1708
    %v1710 = vsel %vm1618, %v1476, -inf
    %v1711 = vsel %vm1618, %v1479, -inf
    %v1712 = vmax.f32 %v1710, %v1711
    %v1713 = vsel %vm1618, %v1484, -inf
    %v1714 = vmax.f32 %v1712, %v1713
    %v1715 = vsel %vm1618, %v1487, -inf
    %v1716 = vmax.f32 %v1714, %v1715
    %v1717 = vrot.slane %v1716, 4
    %v1718 = vmax.f32 %v1716, %v1717
    %v1719 = vrot.slane %v1718, 2
    %v1720 = vmax.f32 %v1718, %v1719
    %v1721 = vrot.slane %v1720, 1
    %v1722 = vmax.f32 %v1720, %v1721
    %v1723 = vsel %vm1618, %v1492, -inf
    %v1724 = vsel %vm1618, %v1495, -inf
    %v1725 = vmax.f32 %v1723, %v1724
    %v1726 = vsel %vm1618, %v1500, -inf
    %v1727 = vmax.f32 %v1725, %v1726
    %v1728 = vsel %vm1618, %v1503, -inf
    %v1729 = vmax.f32 %v1727, %v1728
    %v1730 = vrot.slane %v1729, 4
    %v1731 = vmax.f32 %v1729, %v1730
    %v1732 = vrot.slane %v1731, 2
    %v1733 = vmax.f32 %v1731, %v1732
    %v1734 = vrot.slane %v1733, 1
    %v1735 = vmax.f32 %v1733, %v1734
    %v1736 = vsel %vm1618, %v1508, -inf
    %v1737 = vsel %vm1618, %v1511, -inf
    %v1738 = vmax.f32 %v1736, %v1737
    %v1739 = vsel %vm1618, %v1516, -inf
    %v1740 = vmax.f32 %v1738, %v1739
    %v1741 = vsel %vm1618, %v1519, -inf
    %v1742 = vmax.f32 %v1740, %v1741
    %v1743 = vrot.slane %v1742, 4
    %v1744 = vmax.f32 %v1742, %v1743
    %v1745 = vrot.slane %v1744, 2
    %v1746 = vmax.f32 %v1744, %v1745
    %v1747 = vrot.slane %v1746, 1
    %v1748 = vmax.f32 %v1746, %v1747
    %v1749 = vsel %vm1618, %v1524, -inf
    %v1750 = vsel %vm1618, %v1527, -inf
    %v1751 = vmax.f32 %v1749, %v1750
    %v1752 = vsel %vm1618, %v1532, -inf
    %v1753 = vmax.f32 %v1751, %v1752
    %v1754 = vsel %vm1618, %v1535, -inf
    %v1755 = vmax.f32 %v1753, %v1754
    %v1756 = vrot.slane %v1755, 4
    %v1757 = vmax.f32 %v1755, %v1756
    %v1758 = vrot.slane %v1757, 2
    %v1759 = vmax.f32 %v1757, %v1758
    %v1760 = vrot.slane %v1759, 1
    %v1761 = vmax.f32 %v1759, %v1760
    %v1762 = vsel %vm1618, %v1540, -inf
    %v1763 = vsel %vm1618, %v1543, -inf
    %v1764 = vmax.f32 %v1762, %v1763
    %v1765 = vsel %vm1618, %v1548, -inf
    %v1766 = vmax.f32 %v1764, %v1765
    %v1767 = vsel %vm1618, %v1551, -inf
    %v1768 = vmax.f32 %v1766, %v1767
    %v1769 = vrot.slane %v1768, 4
    %v1770 = vmax.f32 %v1768, %v1769
    %v1771 = vrot.slane %v1770, 2
    %v1772 = vmax.f32 %v1770, %v1771
    %v1773 = vrot.slane %v1772, 1
    %v1774 = vmax.f32 %v1772, %v1773
    %v1775 = vsel %vm1618, %v1556, -inf
    %v1776 = vsel %vm1618, %v1559, -inf
    %v1777 = vmax.f32 %v1775, %v1776
    %v1778 = vsel %vm1618, %v1564, -inf
    %v1779 = vmax.f32 %v1777, %v1778
    %v1780 = vsel %vm1618, %v1567, -inf
    %v1781 = vmax.f32 %v1779, %v1780
    %v1782 = vrot.slane %v1781, 4
    %v1783 = vmax.f32 %v1781, %v1782
    %v1784 = vrot.slane %v1783, 2
    %v1785 = vmax.f32 %v1783, %v1784
    %v1786 = vrot.slane %v1785, 1
    %v1787 = vmax.f32 %v1785, %v1786
    %v1788 = vsel %vm1618, %v1572, -inf
    %v1789 = vsel %vm1618, %v1575, -inf
    %v1790 = vmax.f32 %v1788, %v1789
    %v1791 = vsel %vm1618, %v1580, -inf
    %v1792 = vmax.f32 %v1790, %v1791
    %v1793 = vsel %vm1618, %v1583, -inf
    %v1794 = vmax.f32 %v1792, %v1793
    %v1795 = vrot.slane %v1794, 4
    %v1796 = vmax.f32 %v1794, %v1795
    %v1797 = vrot.slane %v1796, 2
    %v1798 = vmax.f32 %v1796, %v1797
    %v1799 = vrot.slane %v1798, 1
    %v1800 = vmax.f32 %v1798, %v1799
    %v1801 = vsel %vm1618, %v1588, -inf
    %v1802 = vsel %vm1618, %v1591, -inf
    %v1803 = vmax.f32 %v1801, %v1802
    %v1804 = vsel %vm1618, %v1596, -inf
    %v1805 = vmax.f32 %v1803, %v1804
    %v1806 = vsel %vm1618, %v1599, -inf
    %v1807 = vmax.f32 %v1805, %v1806
    %v1808 = vrot.slane %v1807, 4
    %v1809 = vmax.f32 %v1807, %v1808
    %v1810 = vrot.slane %v1809, 2
    %v1811 = vmax.f32 %v1809, %v1810
    %v1812 = vrot.slane %v1811, 1
    %v1813 = vmax.f32 %v1811, %v1812
    %v1814 = vsel %vm1618, %v1604, -inf
    %v1815 = vsel %vm1618, %v1607, -inf
    %v1816 = vmax.f32 %v1814, %v1815
    %v1817 = vsel %vm1618, %v1612, -inf
    %v1818 = vmax.f32 %v1816, %v1817
    %v1819 = vsel %vm1618, %v1615, -inf
    %v1820 = vmax.f32 %v1818, %v1819
    %v1821 = vrot.slane %v1820, 4
    %v1822 = vmax.f32 %v1820, %v1821
    %v1823 = vrot.slane %v1822, 2
    %v1824 = vmax.f32 %v1822, %v1823
    %v1825 = vrot.slane %v1824, 1
    %v1826 = vmax.f32 %v1824, %v1825
    %v1827 = vsub.f32 %v1364, %v1631
    %v1828 = vsub.f32 %v1367, %v1631
    %v1829 = vsub.f32 %v1372, %v1631
    %v1830 = vsub.f32 %v1375, %v1631
    %v1831 = vsub.f32 %v1380, %v1644
    %v1832 = vsub.f32 %v1383, %v1644
    %v1833 = vsub.f32 %v1388, %v1644
    %v1834 = vsub.f32 %v1391, %v1644
    %v1835 = vsub.f32 %v1396, %v1657
    %v1836 = vsub.f32 %v1399, %v1657
    %v1837 = vsub.f32 %v1404, %v1657
    %v1838 = vsub.f32 %v1407, %v1657
    %v1839 = vsub.f32 %v1412, %v1670
    %v1840 = vsub.f32 %v1415, %v1670
    %v1841 = vsub.f32 %v1420, %v1670
    %v1842 = vsub.f32 %v1423, %v1670
    %v1843 = vsub.f32 %v1428, %v1683
    %v1844 = vsub.f32 %v1431, %v1683
    %v1845 = vsub.f32 %v1436, %v1683
    %v1846 = vsub.f32 %v1439, %v1683
    %v1847 = vsub.f32 %v1444, %v1696
    %v1848 = vsub.f32 %v1447, %v1696
    %v1849 = vsub.f32 %v1452, %v1696
    %v1850 = vsub.f32 %v1455, %v1696
    %v1851 = vsub.f32 %v1460, %v1709
    %v1852 = vsub.f32 %v1463, %v1709
    %v1853 = vsub.f32 %v1468, %v1709
    %v1854 = vsub.f32 %v1471, %v1709
    %v1855 = vsub.f32 %v1476, %v1722
    %v1856 = vsub.f32 %v1479, %v1722
    %v1857 = vsub.f32 %v1484, %v1722
    %v1858 = vsub.f32 %v1487, %v1722
    %v1859 = vsub.f32 %v1492, %v1735
    %v1860 = vsub.f32 %v1495, %v1735
    %v1861 = vsub.f32 %v1500, %v1735
    %v1862 = vsub.f32 %v1503, %v1735
    %v1863 = vsub.f32 %v1508, %v1748
    %v1864 = vsub.f32 %v1511, %v1748
    %v1865 = vsub.f32 %v1516, %v1748
    %v1866 = vsub.f32 %v1519, %v1748
    %v1867 = vsub.f32 %v1524, %v1761
    %v1868 = vsub.f32 %v1527, %v1761
    %v1869 = vsub.f32 %v1532, %v1761
    %v1870 = vsub.f32 %v1535, %v1761
    %v1871 = vsub.f32 %v1540, %v1774
    %v1872 = vsub.f32 %v1543, %v1774
    %v1873 = vsub.f32 %v1548, %v1774
    %v1874 = vsub.f32 %v1551, %v1774
    %v1875 = vsub.f32 %v1556, %v1787
    %v1876 = vsub.f32 %v1559, %v1787
    %v1877 = vsub.f32 %v1564, %v1787
    %v1878 = vsub.f32 %v1567, %v1787
    %v1879 = vsub.f32 %v1572, %v1800
    %v1880 = vsub.f32 %v1575, %v1800
    %v1881 = vsub.f32 %v1580, %v1800
    %v1882 = vsub.f32 %v1583, %v1800
    %v1883 = vsub.f32 %v1588, %v1813
    %v1884 = vsub.f32 %v1591, %v1813
    %v1885 = vsub.f32 %v1596, %v1813
    %v1886 = vsub.f32 %v1599, %v1813
    %v1887 = vsub.f32 %v1604, %v1826
    %v1888 = vsub.f32 %v1607, %v1826
    %v1889 = vsub.f32 %v1612, %v1826
    %v1890 = vsub.f32 %v1615, %v1826
    %v1891 = vmul.f32 %v1827, 1.442695
    %v1892 = vpow.pop %v1891
    %v1893 = vmul.f32 %v1828, 1.442695
    %v1894 = vpow.pop %v1893
    %v1895 = vmul.f32 %v1829, 1.442695
    %v1896 = vpow.pop %v1895
    %v1897 = vmul.f32 %v1830, 1.442695
    %v1898 = vpow.pop %v1897
    %v1899 = vmul.f32 %v1831, 1.442695
    %v1900 = vpow.pop %v1899
    %v1901 = vmul.f32 %v1832, 1.442695
    %v1902 = vpow.pop %v1901
    %v1903 = vmul.f32 %v1833, 1.442695
    %v1904 = vpow.pop %v1903
    %v1905 = vmul.f32 %v1834, 1.442695
    %v1906 = vpow.pop %v1905
    %v1907 = vmul.f32 %v1835, 1.442695
    %v1908 = vpow.pop %v1907
    %v1909 = vmul.f32 %v1836, 1.442695
    %v1910 = vpow.pop %v1909
    %v1911 = vmul.f32 %v1837, 1.442695
    %v1912 = vpow.pop %v1911
    %v1913 = vmul.f32 %v1838, 1.442695
    %v1914 = vpow.pop %v1913
    %v1915 = vmul.f32 %v1839, 1.442695
    %v1916 = vpow.pop %v1915
    %v1917 = vmul.f32 %v1840, 1.442695
    %v1918 = vpow.pop %v1917
    %v1919 = vmul.f32 %v1841, 1.442695
    %v1920 = vpow.pop %v1919
    %v1921 = vmul.f32 %v1842, 1.442695
    %v1922 = vpow.pop %v1921
    %v1923 = vmul.f32 %v1843, 1.442695
    %v1924 = vpow.pop %v1923
    %v1925 = vmul.f32 %v1844, 1.442695
    %v1926 = vpow.pop %v1925
    %v1927 = vmul.f32 %v1845, 1.442695
    %v1928 = vpow.pop %v1927
    %v1929 = vmul.f32 %v1846, 1.442695
    %v1930 = vpow.pop %v1929
    %v1931 = vmul.f32 %v1847, 1.442695
    %v1932 = vpow.pop %v1931
    %v1933 = vmul.f32 %v1848, 1.442695
    %v1934 = vpow.pop %v1933
    %v1935 = vmul.f32 %v1849, 1.442695
    %v1936 = vpow.pop %v1935
    %v1937 = vmul.f32 %v1850, 1.442695
    %v1938 = vpow.pop %v1937
    %v1939 = vmul.f32 %v1851, 1.442695
    %v1940 = vpow.pop %v1939
    %v1941 = vmul.f32 %v1852, 1.442695
    %v1942 = vpow.pop %v1941
    %v1943 = vmul.f32 %v1853, 1.442695
    %v1944 = vpow.pop %v1943
    %v1945 = vmul.f32 %v1854, 1.442695
    %v1946 = vpow.pop %v1945
    %v1947 = vmul.f32 %v1855, 1.442695
    %v1948 = vpow.pop %v1947
    %v1949 = vmul.f32 %v1856, 1.442695
    %v1950 = vpow.pop %v1949
    %v1951 = vmul.f32 %v1857, 1.442695
    %v1952 = vpow.pop %v1951
    %v1953 = vmul.f32 %v1858, 1.442695
    %v1954 = vpow.pop %v1953
    %v1955 = vmul.f32 %v1859, 1.442695
    %v1956 = vpow.pop %v1955
    %v1957 = vmul.f32 %v1860, 1.442695
    %v1958 = vpow.pop %v1957
    %v1959 = vmul.f32 %v1861, 1.442695
    %v1960 = vpow.pop %v1959
    %v1961 = vmul.f32 %v1862, 1.442695
    %v1962 = vpow.pop %v1961
    %v1963 = vmul.f32 %v1863, 1.442695
    %v1964 = vpow.pop %v1963
    %v1965 = vmul.f32 %v1864, 1.442695
    %v1966 = vpow.pop %v1965
    %v1967 = vmul.f32 %v1865, 1.442695
    %v1968 = vpow.pop %v1967
    %v1969 = vmul.f32 %v1866, 1.442695
    %v1970 = vpow.pop %v1969
    %v1971 = vmul.f32 %v1867, 1.442695
    %v1972 = vpow.pop %v1971
    %v1973 = vmul.f32 %v1868, 1.442695
    %v1974 = vpow.pop %v1973
    %v1975 = vmul.f32 %v1869, 1.442695
    %v1976 = vpow.pop %v1975
    %v1977 = vmul.f32 %v1870, 1.442695
    %v1978 = vpow.pop %v1977
    %v1979 = vmul.f32 %v1871, 1.442695
    %v1980 = vpow.pop %v1979
    %v1981 = vmul.f32 %v1872, 1.442695
    %v1982 = vpow.pop %v1981
    %v1983 = vmul.f32 %v1873, 1.442695
    %v1984 = vpow.pop %v1983
    %v1985 = vmul.f32 %v1874, 1.442695
    %v1986 = vpow.pop %v1985
    %v1987 = vmul.f32 %v1875, 1.442695
    %v1988 = vpow.pop %v1987
    %v1989 = vmul.f32 %v1876, 1.442695
    %v1990 = vpow.pop %v1989
    %v1991 = vmul.f32 %v1877, 1.442695
    %v1992 = vpow.pop %v1991
    %v1993 = vmul.f32 %v1878, 1.442695
    %v1994 = vpow.pop %v1993
    %v1995 = vmul.f32 %v1879, 1.442695
    %v1996 = vpow.pop %v1995
    %v1997 = vmul.f32 %v1880, 1.442695
    %v1998 = vpow.pop %v1997
    %v1999 = vmul.f32 %v1881, 1.442695
    %v2000 = vpow.pop %v1999
    %v2001 = vmul.f32 %v1882, 1.442695
    %v2002 = vpow.pop %v2001
    %v2003 = vmul.f32 %v1883, 1.442695
    %v2004 = vpow.pop %v2003
    %v2005 = vmul.f32 %v1884, 1.442695
    %v2006 = vpow.pop %v2005
    %v2007 = vmul.f32 %v1885, 1.442695
    %v2008 = vpow.pop %v2007
    %v2009 = vmul.f32 %v1886, 1.442695
    %v2010 = vpow.pop %v2009
    %v2011 = vmul.f32 %v1887, 1.442695
    %v2012 = vpow.pop %v2011
    %v2013 = vmul.f32 %v1888, 1.442695
    %v2014 = vpow.pop %v2013
    %v2015 = vmul.f32 %v1889, 1.442695
    %v2016 = vpow.pop %v2015
    %v2017 = vmul.f32 %v1890, 1.442695
    %v2018 = vpow.pop %v2017
    %v2019 = vsel %vm1618, %v1892, 0.0
    %v2020 = vsel %vm1618, %v1894, 0.0
    %v2021 = vadd.f32 %v2019, %v2020
    %v2022 = vsel %vm1618, %v1896, 0.0
    %v2023 = vadd.f32 %v2021, %v2022
    %v2024 = vsel %vm1618, %v1898, 0.0
    %v2025 = vadd.f32 %v2023, %v2024
    %v2026 = vrot.slane %v2025, 4
    %v2027 = vadd.f32 %v2025, %v2026
    %v2028 = vrot.slane %v2027, 2
    %v2029 = vadd.f32 %v2027, %v2028
    %v2030 = vrot.slane %v2029, 1
    %v2031 = vadd.f32 %v2029, %v2030
    %v2032 = vsel %vm1618, %v1900, 0.0
    %v2033 = vsel %vm1618, %v1902, 0.0
    %v2034 = vadd.f32 %v2032, %v2033
    %v2035 = vsel %vm1618, %v1904, 0.0
    %v2036 = vadd.f32 %v2034, %v2035
    %v2037 = vsel %vm1618, %v1906, 0.0
    %v2038 = vadd.f32 %v2036, %v2037
    %v2039 = vrot.slane %v2038, 4
    %v2040 = vadd.f32 %v2038, %v2039
    %v2041 = vrot.slane %v2040, 2
    %v2042 = vadd.f32 %v2040, %v2041
    %v2043 = vrot.slane %v2042, 1
    %v2044 = vadd.f32 %v2042, %v2043
    %v2045 = vsel %vm1618, %v1908, 0.0
    %v2046 = vsel %vm1618, %v1910, 0.0
    %v2047 = vadd.f32 %v2045, %v2046
    %v2048 = vsel %vm1618, %v1912, 0.0
    %v2049 = vadd.f32 %v2047, %v2048
    %v2050 = vsel %vm1618, %v1914, 0.0
    %v2051 = vadd.f32 %v2049, %v2050
    %v2052 = vrot.slane %v2051, 4
    %v2053 = vadd.f32 %v2051, %v2052
    %v2054 = vrot.slane %v2053, 2
    %v2055 = vadd.f32 %v2053, %v2054
    %v2056 = vrot.slane %v2055, 1
    %v2057 = vadd.f32 %v2055, %v2056
    %v2058 = vsel %vm1618, %v1916, 0.0
    %v2059 = vsel %vm1618, %v1918, 0.0
    %v2060 = vadd.f32 %v2058, %v2059
    %v2061 = vsel %vm1618, %v1920, 0.0
    %v2062 = vadd.f32 %v2060, %v2061
    %v2063 = vsel %vm1618, %v1922, 0.0
    %v2064 = vadd.f32 %v2062, %v2063
    %v2065 = vrot.slane %v2064, 4
    %v2066 = vadd.f32 %v2064, %v2065
    %v2067 = vrot.slane %v2066, 2
    %v2068 = vadd.f32 %v2066, %v2067
    %v2069 = vrot.slane %v2068, 1
    %v2070 = vadd.f32 %v2068, %v2069
    %v2071 = vsel %vm1618, %v1924, 0.0
    %v2072 = vsel %vm1618, %v1926, 0.0
    %v2073 = vadd.f32 %v2071, %v2072
    %v2074 = vsel %vm1618, %v1928, 0.0
    %v2075 = vadd.f32 %v2073, %v2074
    %v2076 = vsel %vm1618, %v1930, 0.0
    %v2077 = vadd.f32 %v2075, %v2076
    %v2078 = vrot.slane %v2077, 4
    %v2079 = vadd.f32 %v2077, %v2078
    %v2080 = vrot.slane %v2079, 2
    %v2081 = vadd.f32 %v2079, %v2080
    %v2082 = vrot.slane %v2081, 1
    %v2083 = vadd.f32 %v2081, %v2082
    %v2084 = vsel %vm1618, %v1932, 0.0
    %v2085 = vsel %vm1618, %v1934, 0.0
    %v2086 = vadd.f32 %v2084, %v2085
    %v2087 = vsel %vm1618, %v1936, 0.0
    %v2088 = vadd.f32 %v2086, %v2087
    %v2089 = vsel %vm1618, %v1938, 0.0
    %v2090 = vadd.f32 %v2088, %v2089
    %v2091 = vrot.slane %v2090, 4
    %v2092 = vadd.f32 %v2090, %v2091
    %v2093 = vrot.slane %v2092, 2
    %v2094 = vadd.f32 %v2092, %v2093
    %v2095 = vrot.slane %v2094, 1
    %v2096 = vadd.f32 %v2094, %v2095
    %v2097 = vsel %vm1618, %v1940, 0.0
    %v2098 = vsel %vm1618, %v1942, 0.0
    %v2099 = vadd.f32 %v2097, %v2098
    %v2100 = vsel %vm1618, %v1944, 0.0
    %v2101 = vadd.f32 %v2099, %v2100
    %v2102 = vsel %vm1618, %v1946, 0.0
    %v2103 = vadd.f32 %v2101, %v2102
    %v2104 = vrot.slane %v2103, 4
    %v2105 = vadd.f32 %v2103, %v2104
    %v2106 = vrot.slane %v2105, 2
    %v2107 = vadd.f32 %v2105, %v2106
    %v2108 = vrot.slane %v2107, 1
    %v2109 = vadd.f32 %v2107, %v2108
    %v2110 = vsel %vm1618, %v1948, 0.0
    %v2111 = vsel %vm1618, %v1950, 0.0
    %v2112 = vadd.f32 %v2110, %v2111
    %v2113 = vsel %vm1618, %v1952, 0.0
    %v2114 = vadd.f32 %v2112, %v2113
    %v2115 = vsel %vm1618, %v1954, 0.0
    %v2116 = vadd.f32 %v2114, %v2115
    %v2117 = vrot.slane %v2116, 4
    %v2118 = vadd.f32 %v2116, %v2117
    %v2119 = vrot.slane %v2118, 2
    %v2120 = vadd.f32 %v2118, %v2119
    %v2121 = vrot.slane %v2120, 1
    %v2122 = vadd.f32 %v2120, %v2121
    %v2123 = vsel %vm1618, %v1956, 0.0
    %v2124 = vsel %vm1618, %v1958, 0.0
    %v2125 = vadd.f32 %v2123, %v2124
    %v2126 = vsel %vm1618, %v1960, 0.0
    %v2127 = vadd.f32 %v2125, %v2126
    %v2128 = vsel %vm1618, %v1962, 0.0
    %v2129 = vadd.f32 %v2127, %v2128
    %v2130 = vrot.slane %v2129, 4
    %v2131 = vadd.f32 %v2129, %v2130
    %v2132 = vrot.slane %v2131, 2
    %v2133 = vadd.f32 %v2131, %v2132
    %v2134 = vrot.slane %v2133, 1
    %v2135 = vadd.f32 %v2133, %v2134
    %v2136 = vsel %vm1618, %v1964, 0.0
    %v2137 = vsel %vm1618, %v1966, 0.0
    %v2138 = vadd.f32 %v2136, %v2137
    %v2139 = vsel %vm1618, %v1968, 0.0
    %v2140 = vadd.f32 %v2138, %v2139
    %v2141 = vsel %vm1618, %v1970, 0.0
    %v2142 = vadd.f32 %v2140, %v2141
    %v2143 = vrot.slane %v2142, 4
    %v2144 = vadd.f32 %v2142, %v2143
    %v2145 = vrot.slane %v2144, 2
    %v2146 = vadd.f32 %v2144, %v2145
    %v2147 = vrot.slane %v2146, 1
    %v2148 = vadd.f32 %v2146, %v2147
    %v2149 = vsel %vm1618, %v1972, 0.0
    %v2150 = vsel %vm1618, %v1974, 0.0
    %v2151 = vadd.f32 %v2149, %v2150
    %v2152 = vsel %vm1618, %v1976, 0.0
    %v2153 = vadd.f32 %v2151, %v2152
    %v2154 = vsel %vm1618, %v1978, 0.0
    %v2155 = vadd.f32 %v2153, %v2154
    %v2156 = vrot.slane %v2155, 4
    %v2157 = vadd.f32 %v2155, %v2156
    %v2158 = vrot.slane %v2157, 2
    %v2159 = vadd.f32 %v2157, %v2158
    %v2160 = vrot.slane %v2159, 1
    %v2161 = vadd.f32 %v2159, %v2160
    %v2162 = vsel %vm1618, %v1980, 0.0
    %v2163 = vsel %vm1618, %v1982, 0.0
    %v2164 = vadd.f32 %v2162, %v2163
    %v2165 = vsel %vm1618, %v1984, 0.0
    %v2166 = vadd.f32 %v2164, %v2165
    %v2167 = vsel %vm1618, %v1986, 0.0
    %v2168 = vadd.f32 %v2166, %v2167
    %v2169 = vrot.slane %v2168, 4
    %v2170 = vadd.f32 %v2168, %v2169
    %v2171 = vrot.slane %v2170, 2
    %v2172 = vadd.f32 %v2170, %v2171
    %v2173 = vrot.slane %v2172, 1
    %v2174 = vadd.f32 %v2172, %v2173
    %v2175 = vsel %vm1618, %v1988, 0.0
    %v2176 = vsel %vm1618, %v1990, 0.0
    %v2177 = vadd.f32 %v2175, %v2176
    %v2178 = vsel %vm1618, %v1992, 0.0
    %v2179 = vadd.f32 %v2177, %v2178
    %v2180 = vsel %vm1618, %v1994, 0.0
    %v2181 = vadd.f32 %v2179, %v2180
    %v2182 = vrot.slane %v2181, 4
    %v2183 = vadd.f32 %v2181, %v2182
    %v2184 = vrot.slane %v2183, 2
    %v2185 = vadd.f32 %v2183, %v2184
    %v2186 = vrot.slane %v2185, 1
    %v2187 = vadd.f32 %v2185, %v2186
    %v2188 = vsel %vm1618, %v1996, 0.0
    %v2189 = vsel %vm1618, %v1998, 0.0
    %v2190 = vadd.f32 %v2188, %v2189
    %v2191 = vsel %vm1618, %v2000, 0.0
    %v2192 = vadd.f32 %v2190, %v2191
    %v2193 = vsel %vm1618, %v2002, 0.0
    %v2194 = vadd.f32 %v2192, %v2193
    %v2195 = vrot.slane %v2194, 4
    %v2196 = vadd.f32 %v2194, %v2195
    %v2197 = vrot.slane %v2196, 2
    %v2198 = vadd.f32 %v2196, %v2197
    %v2199 = vrot.slane %v2198, 1
    %v2200 = vadd.f32 %v2198, %v2199
    %v2201 = vsel %vm1618, %v2004, 0.0
    %v2202 = vsel %vm1618, %v2006, 0.0
    %v2203 = vadd.f32 %v2201, %v2202
    %v2204 = vsel %vm1618, %v2008, 0.0
    %v2205 = vadd.f32 %v2203, %v2204
    %v2206 = vsel %vm1618, %v2010, 0.0
    %v2207 = vadd.f32 %v2205, %v2206
    %v2208 = vrot.slane %v2207, 4
    %v2209 = vadd.f32 %v2207, %v2208
    %v2210 = vrot.slane %v2209, 2
    %v2211 = vadd.f32 %v2209, %v2210
    %v2212 = vrot.slane %v2211, 1
    %v2213 = vadd.f32 %v2211, %v2212
    %v2214 = vsel %vm1618, %v2012, 0.0
    %v2215 = vsel %vm1618, %v2014, 0.0
    %v2216 = vadd.f32 %v2214, %v2215
    %v2217 = vsel %vm1618, %v2016, 0.0
    %v2218 = vadd.f32 %v2216, %v2217
    %v2219 = vsel %vm1618, %v2018, 0.0
    %v2220 = vadd.f32 %v2218, %v2219
    %v2221 = vrot.slane %v2220, 4
    %v2222 = vadd.f32 %v2220, %v2221
    %v2223 = vrot.slane %v2222, 2
    %v2224 = vadd.f32 %v2222, %v2223
    %v2225 = vrot.slane %v2224, 1
    %v2226 = vadd.f32 %v2224, %v2225
    %v2227 = vrcp.pop %v2031
    %v2228 = vrcp.pop %v2044
    %v2229 = vrcp.pop %v2057
    %v2230 = vrcp.pop %v2070
    %v2231 = vrcp.pop %v2083
    %v2232 = vrcp.pop %v2096
    %v2233 = vrcp.pop %v2109
    %v2234 = vrcp.pop %v2122
    %v2235 = vrcp.pop %v2135
    %v2236 = vrcp.pop %v2148
    %v2237 = vrcp.pop %v2161
    %v2238 = vrcp.pop %v2174
    %v2239 = vrcp.pop %v2187
    %v2240 = vrcp.pop %v2200
    %v2241 = vrcp.pop %v2213
    %v2242 = vrcp.pop %v2226
    %v2243 = vmul.f32 %v1892, %v2227
    %v2244 = vmul.f32 %v1894, %v2227
    %v2245 = vmul.f32 %v1896, %v2227
    %v2246 = vmul.f32 %v1898, %v2227
    %v2247 = vmul.f32 %v1900, %v2228
    %v2248 = vmul.f32 %v1902, %v2228
    %v2249 = vmul.f32 %v1904, %v2228
    %v2250 = vmul.f32 %v1906, %v2228
    %v2251 = vmul.f32 %v1908, %v2229
    %v2252 = vmul.f32 %v1910, %v2229
    %v2253 = vmul.f32 %v1912, %v2229
    %v2254 = vmul.f32 %v1914, %v2229
    %v2255 = vmul.f32 %v1916, %v2230
    %v2256 = vmul.f32 %v1918, %v2230
    %v2257 = vmul.f32 %v1920, %v2230
    %v2258 = vmul.f32 %v1922, %v2230
    %v2259 = vmul.f32 %v1924, %v2231
    %v2260 = vmul.f32 %v1926, %v2231
    %v2261 = vmul.f32 %v1928, %v2231
    %v2262 = vmul.f32 %v1930, %v2231
    %v2263 = vmul.f32 %v1932, %v2232
    %v2264 = vmul.f32 %v1934, %v2232
    %v2265 = vmul.f32 %v1936, %v2232
    %v2266 = vmul.f32 %v1938, %v2232
    %v2267 = vmul.f32 %v1940, %v2233
    %v2268 = vmul.f32 %v1942, %v2233
    %v2269 = vmul.f32 %v1944, %v2233
    %v2270 = vmul.f32 %v1946, %v2233
    %v2271 = vmul.f32 %v1948, %v2234
    %v2272 = vmul.f32 %v1950, %v2234
    %v2273 = vmul.f32 %v1952, %v2234
    %v2274 = vmul.f32 %v1954, %v2234
    %v2275 = vmul.f32 %v1956, %v2235
    %v2276 = vmul.f32 %v1958, %v2235
    %v2277 = vmul.f32 %v1960, %v2235
    %v2278 = vmul.f32 %v1962, %v2235
    %v2279 = vmul.f32 %v1964, %v2236
    %v2280 = vmul.f32 %v1966, %v2236
    %v2281 = vmul.f32 %v1968, %v2236
    %v2282 = vmul.f32 %v1970, %v2236
    %v2283 = vmul.f32 %v1972, %v2237
    %v2284 = vmul.f32 %v1974, %v2237
    %v2285 = vmul.f32 %v1976, %v2237
    %v2286 = vmul.f32 %v1978, %v2237
    %v2287 = vmul.f32 %v1980, %v2238
    %v2288 = vmul.f32 %v1982, %v2238
    %v2289 = vmul.f32 %v1984, %v2238
    %v2290 = vmul.f32 %v1986, %v2238
    %v2291 = vmul.f32 %v1988, %v2239
    %v2292 = vmul.f32 %v1990, %v2239
    %v2293 = vmul.f32 %v1992, %v2239
    %v2294 = vmul.f32 %v1994, %v2239
    %v2295 = vmul.f32 %v1996, %v2240
    %v2296 = vmul.f32 %v1998, %v2240
    %v2297 = vmul.f32 %v2000, %v2240
    %v2298 = vmul.f32 %v2002, %v2240
    %v2299 = vmul.f32 %v2004, %v2241
    %v2300 = vmul.f32 %v2006, %v2241
    %v2301 = vmul.f32 %v2008, %v2241
    %v2302 = vmul.f32 %v2010, %v2241
    %v2303 = vmul.f32 %v2012, %v2242
    %v2304 = vmul.f32 %v2014, %v2242
    %v2305 = vmul.f32 %v2016, %v2242
    %v2306 = vmul.f32 %v2018, %v2242
    %2308 = vset.pattern.permute.xlu0 0
    %2309 = vperm.xlu0 %2308, %v2243
    %v2310 = vpop.permute.xlu0 %2309
    %2313 = vset.pattern.permute.xlu0 0
    %2314 = vperm.xlu0 %2313, %v2244
    %v2315 = vpop.permute.xlu0 %2314
    %2318 = vset.pattern.permute.xlu0 0
    %2319 = vperm.xlu0 %2318, %v2245
    %v2320 = vpop.permute.xlu0 %2319
    %2323 = vset.pattern.permute.xlu0 0
    %2324 = vperm.xlu0 %2323, %v2246
    %v2325 = vpop.permute.xlu0 %2324
    %2328 = vset.pattern.permute.xlu0 0
    %2329 = vperm.xlu0 %2328, %v2247
    %v2330 = vpop.permute.xlu0 %2329
    %2333 = vset.pattern.permute.xlu0 0
    %2334 = vperm.xlu0 %2333, %v2248
    %v2335 = vpop.permute.xlu0 %2334
    %2338 = vset.pattern.permute.xlu0 0
    %2339 = vperm.xlu0 %2338, %v2249
    %v2340 = vpop.permute.xlu0 %2339
    %2343 = vset.pattern.permute.xlu0 0
    %2344 = vperm.xlu0 %2343, %v2250
    %v2345 = vpop.permute.xlu0 %2344
    %2348 = vset.pattern.permute.xlu0 0
    %2349 = vperm.xlu0 %2348, %v2251
    %v2350 = vpop.permute.xlu0 %2349
    %2353 = vset.pattern.permute.xlu0 0
    %2354 = vperm.xlu0 %2353, %v2252
    %v2355 = vpop.permute.xlu0 %2354
    %2358 = vset.pattern.permute.xlu0 0
    %2359 = vperm.xlu0 %2358, %v2253
    %v2360 = vpop.permute.xlu0 %2359
    %2363 = vset.pattern.permute.xlu0 0
    %2364 = vperm.xlu0 %2363, %v2254
    %v2365 = vpop.permute.xlu0 %2364
    %2368 = vset.pattern.permute.xlu0 0
    %2369 = vperm.xlu0 %2368, %v2255
    %v2370 = vpop.permute.xlu0 %2369
    %2373 = vset.pattern.permute.xlu0 0
    %2374 = vperm.xlu0 %2373, %v2256
    %v2375 = vpop.permute.xlu0 %2374
    %2378 = vset.pattern.permute.xlu0 0
    %2379 = vperm.xlu0 %2378, %v2257
    %v2380 = vpop.permute.xlu0 %2379
    %2383 = vset.pattern.permute.xlu0 0
    %2384 = vperm.xlu0 %2383, %v2258
    %v2385 = vpop.permute.xlu0 %2384
    %2388 = vset.pattern.permute.xlu0 0
    %2389 = vperm.xlu0 %2388, %v2259
    %v2390 = vpop.permute.xlu0 %2389
    %2393 = vset.pattern.permute.xlu0 0
    %2394 = vperm.xlu0 %2393, %v2260
    %v2395 = vpop.permute.xlu0 %2394
    %2398 = vset.pattern.permute.xlu0 0
    %2399 = vperm.xlu0 %2398, %v2261
    %v2400 = vpop.permute.xlu0 %2399
    %2403 = vset.pattern.permute.xlu0 0
    %2404 = vperm.xlu0 %2403, %v2262
    %v2405 = vpop.permute.xlu0 %2404
    %2408 = vset.pattern.permute.xlu0 0
    %2409 = vperm.xlu0 %2408, %v2263
    %v2410 = vpop.permute.xlu0 %2409
    %2413 = vset.pattern.permute.xlu0 0
    %2414 = vperm.xlu0 %2413, %v2264
    %v2415 = vpop.permute.xlu0 %2414
    %2418 = vset.pattern.permute.xlu0 0
    %2419 = vperm.xlu0 %2418, %v2265
    %v2420 = vpop.permute.xlu0 %2419
    %2423 = vset.pattern.permute.xlu0 0
    %2424 = vperm.xlu0 %2423, %v2266
    %v2425 = vpop.permute.xlu0 %2424
    %2428 = vset.pattern.permute.xlu0 0
    %2429 = vperm.xlu0 %2428, %v2267
    %v2430 = vpop.permute.xlu0 %2429
    %2433 = vset.pattern.permute.xlu0 0
    %2434 = vperm.xlu0 %2433, %v2268
    %v2435 = vpop.permute.xlu0 %2434
    %2438 = vset.pattern.permute.xlu0 0
    %2439 = vperm.xlu0 %2438, %v2269
    %v2440 = vpop.permute.xlu0 %2439
    %2443 = vset.pattern.permute.xlu0 0
    %2444 = vperm.xlu0 %2443, %v2270
    %v2445 = vpop.permute.xlu0 %2444
    %2448 = vset.pattern.permute.xlu0 0
    %2449 = vperm.xlu0 %2448, %v2271
    %v2450 = vpop.permute.xlu0 %2449
    %2453 = vset.pattern.permute.xlu0 0
    %2454 = vperm.xlu0 %2453, %v2272
    %v2455 = vpop.permute.xlu0 %2454
    %2458 = vset.pattern.permute.xlu0 0
    %2459 = vperm.xlu0 %2458, %v2273
    %v2460 = vpop.permute.xlu0 %2459
    %2463 = vset.pattern.permute.xlu0 0
    %2464 = vperm.xlu0 %2463, %v2274
    %v2465 = vpop.permute.xlu0 %2464
    %2468 = vset.pattern.permute.xlu0 0
    %2469 = vperm.xlu0 %2468, %v2275
    %v2470 = vpop.permute.xlu0 %2469
    %2473 = vset.pattern.permute.xlu0 0
    %2474 = vperm.xlu0 %2473, %v2276
    %v2475 = vpop.permute.xlu0 %2474
    %2478 = vset.pattern.permute.xlu0 0
    %2479 = vperm.xlu0 %2478, %v2277
    %v2480 = vpop.permute.xlu0 %2479
    %2483 = vset.pattern.permute.xlu0 0
    %2484 = vperm.xlu0 %2483, %v2278
    %v2485 = vpop.permute.xlu0 %2484
    %2488 = vset.pattern.permute.xlu0 0
    %2489 = vperm.xlu0 %2488, %v2279
    %v2490 = vpop.permute.xlu0 %2489
    %2493 = vset.pattern.permute.xlu0 0
    %2494 = vperm.xlu0 %2493, %v2280
    %v2495 = vpop.permute.xlu0 %2494
    %2498 = vset.pattern.permute.xlu0 0
    %2499 = vperm.xlu0 %2498, %v2281
    %v2500 = vpop.permute.xlu0 %2499
    %2503 = vset.pattern.permute.xlu0 0
    %2504 = vperm.xlu0 %2503, %v2282
    %v2505 = vpop.permute.xlu0 %2504
    %2508 = vset.pattern.permute.xlu0 0
    %2509 = vperm.xlu0 %2508, %v2283
    %v2510 = vpop.permute.xlu0 %2509
    %2513 = vset.pattern.permute.xlu0 0
    %2514 = vperm.xlu0 %2513, %v2284
    %v2515 = vpop.permute.xlu0 %2514
    %2518 = vset.pattern.permute.xlu0 0
    %2519 = vperm.xlu0 %2518, %v2285
    %v2520 = vpop.permute.xlu0 %2519
    %2523 = vset.pattern.permute.xlu0 0
    %2524 = vperm.xlu0 %2523, %v2286
    %v2525 = vpop.permute.xlu0 %2524
    %2528 = vset.pattern.permute.xlu0 0
    %2529 = vperm.xlu0 %2528, %v2287
    %v2530 = vpop.permute.xlu0 %2529
    %2533 = vset.pattern.permute.xlu0 0
    %2534 = vperm.xlu0 %2533, %v2288
    %v2535 = vpop.permute.xlu0 %2534
    %2538 = vset.pattern.permute.xlu0 0
    %2539 = vperm.xlu0 %2538, %v2289
    %v2540 = vpop.permute.xlu0 %2539
    %2543 = vset.pattern.permute.xlu0 0
    %2544 = vperm.xlu0 %2543, %v2290
    %v2545 = vpop.permute.xlu0 %2544
    %2548 = vset.pattern.permute.xlu0 0
    %2549 = vperm.xlu0 %2548, %v2291
    %v2550 = vpop.permute.xlu0 %2549
    %2553 = vset.pattern.permute.xlu0 0
    %2554 = vperm.xlu0 %2553, %v2292
    %v2555 = vpop.permute.xlu0 %2554
    %2558 = vset.pattern.permute.xlu0 0
    %2559 = vperm.xlu0 %2558, %v2293
    %v2560 = vpop.permute.xlu0 %2559
    %2563 = vset.pattern.permute.xlu0 0
    %2564 = vperm.xlu0 %2563, %v2294
    %v2565 = vpop.permute.xlu0 %2564
    %2568 = vset.pattern.permute.xlu0 0
    %2569 = vperm.xlu0 %2568, %v2295
    %v2570 = vpop.permute.xlu0 %2569
    %2573 = vset.pattern.permute.xlu0 0
    %2574 = vperm.xlu0 %2573, %v2296
    %v2575 = vpop.permute.xlu0 %2574
    %2578 = vset.pattern.permute.xlu0 0
    %2579 = vperm.xlu0 %2578, %v2297
    %v2580 = vpop.permute.xlu0 %2579
    %2583 = vset.pattern.permute.xlu0 0
    %2584 = vperm.xlu0 %2583, %v2298
    %v2585 = vpop.permute.xlu0 %2584
    %2588 = vset.pattern.permute.xlu0 0
    %2589 = vperm.xlu0 %2588, %v2299
    %v2590 = vpop.permute.xlu0 %2589
    %2593 = vset.pattern.permute.xlu0 0
    %2594 = vperm.xlu0 %2593, %v2300
    %v2595 = vpop.permute.xlu0 %2594
    %2598 = vset.pattern.permute.xlu0 0
    %2599 = vperm.xlu0 %2598, %v2301
    %v2600 = vpop.permute.xlu0 %2599
    %2603 = vset.pattern.permute.xlu0 0
    %2604 = vperm.xlu0 %2603, %v2302
    %v2605 = vpop.permute.xlu0 %2604
    %2608 = vset.pattern.permute.xlu0 0
    %2609 = vperm.xlu0 %2608, %v2303
    %v2610 = vpop.permute.xlu0 %2609
    %2613 = vset.pattern.permute.xlu0 0
    %2614 = vperm.xlu0 %2613, %v2304
    %v2615 = vpop.permute.xlu0 %2614
    %2618 = vset.pattern.permute.xlu0 0
    %2619 = vperm.xlu0 %2618, %v2305
    %v2620 = vpop.permute.xlu0 %2619
    %2623 = vset.pattern.permute.xlu0 0
    %2624 = vperm.xlu0 %2623, %v2306
    %v2625 = vpop.permute.xlu0 %2624
    %v2627 = vmul.f32 %v2310, %v947
    %v2628 = vmul.f32 %v2310, %v949
    %v2629 = vmul.f32 %v2315, %v951
    %v2630 = vmul.f32 %v2315, %v953
    %v2631 = vmul.f32 %v2320, %v957
    %v2632 = vmul.f32 %v2320, %v959
    %v2633 = vmul.f32 %v2325, %v961
    %v2634 = vmul.f32 %v2325, %v963
    %v2635 = vmul.f32 %v2330, %v967
    %v2636 = vmul.f32 %v2330, %v969
    %v2637 = vmul.f32 %v2335, %v971
    %v2638 = vmul.f32 %v2335, %v973
    %v2639 = vmul.f32 %v2340, %v977
    %v2640 = vmul.f32 %v2340, %v979
    %v2641 = vmul.f32 %v2345, %v981
    %v2642 = vmul.f32 %v2345, %v983
    %v2643 = vmul.f32 %v2350, %v987
    %v2644 = vmul.f32 %v2350, %v989
    %v2645 = vmul.f32 %v2355, %v991
    %v2646 = vmul.f32 %v2355, %v993
    %v2647 = vmul.f32 %v2360, %v997
    %v2648 = vmul.f32 %v2360, %v999
    %v2649 = vmul.f32 %v2365, %v1001
    %v2650 = vmul.f32 %v2365, %v1003
    %v2651 = vmul.f32 %v2370, %v1007
    %v2652 = vmul.f32 %v2370, %v1009
    %v2653 = vmul.f32 %v2375, %v1011
    %v2654 = vmul.f32 %v2375, %v1013
    %v2655 = vmul.f32 %v2380, %v1017
    %v2656 = vmul.f32 %v2380, %v1019
    %v2657 = vmul.f32 %v2385, %v1021
    %v2658 = vmul.f32 %v2385, %v1023
    %v2659 = vmul.f32 %v2390, %v1027
    %v2660 = vmul.f32 %v2390, %v1029
    %v2661 = vmul.f32 %v2395, %v1031
    %v2662 = vmul.f32 %v2395, %v1033
    %v2663 = vmul.f32 %v2400, %v1037
    %v2664 = vmul.f32 %v2400, %v1039
    %v2665 = vmul.f32 %v2405, %v1041
    %v2666 = vmul.f32 %v2405, %v1043
    %v2667 = vmul.f32 %v2410, %v1047
    %v2668 = vmul.f32 %v2410, %v1049
    %v2669 = vmul.f32 %v2415, %v1051
    %v2670 = vmul.f32 %v2415, %v1053
    %v2671 = vmul.f32 %v2420, %v1057
    %v2672 = vmul.f32 %v2420, %v1059
    %v2673 = vmul.f32 %v2425, %v1061
    %v2674 = vmul.f32 %v2425, %v1063
    %v2675 = vmul.f32 %v2430, %v1067
    %v2676 = vmul.f32 %v2430, %v1069
    %v2677 = vmul.f32 %v2435, %v1071
    %v2678 = vmul.f32 %v2435, %v1073
    %v2679 = vmul.f32 %v2440, %v1077
    %v2680 = vmul.f32 %v2440, %v1079
    %v2681 = vmul.f32 %v2445, %v1081
    %v2682 = vmul.f32 %v2445, %v1083
    %v2683 = vmul.f32 %v2450, %v1087
    %v2684 = vmul.f32 %v2450, %v1089
    %v2685 = vmul.f32 %v2455, %v1091
    %v2686 = vmul.f32 %v2455, %v1093
    %v2687 = vmul.f32 %v2460, %v1097
    %v2688 = vmul.f32 %v2460, %v1099
    %v2689 = vmul.f32 %v2465, %v1101
    %v2690 = vmul.f32 %v2465, %v1103
    %v2691 = vmul.f32 %v2470, %v1107
    %v2692 = vmul.f32 %v2470, %v1109
    %v2693 = vmul.f32 %v2475, %v1111
    %v2694 = vmul.f32 %v2475, %v1113
    %v2695 = vmul.f32 %v2480, %v1117
    %v2696 = vmul.f32 %v2480, %v1119
    %v2697 = vmul.f32 %v2485, %v1121
    %v2698 = vmul.f32 %v2485, %v1123
    %v2699 = vmul.f32 %v2490, %v1127
    %v2700 = vmul.f32 %v2490, %v1129
    %v2701 = vmul.f32 %v2495, %v1131
    %v2702 = vmul.f32 %v2495, %v1133
    %v2703 = vmul.f32 %v2500, %v1137
    %v2704 = vmul.f32 %v2500, %v1139
    %v2705 = vmul.f32 %v2505, %v1141
    %v2706 = vmul.f32 %v2505, %v1143
    %v2707 = vmul.f32 %v2510, %v1147
    %v2708 = vmul.f32 %v2510, %v1149
    %v2709 = vmul.f32 %v2515, %v1151
    %v2710 = vmul.f32 %v2515, %v1153
    %v2711 = vmul.f32 %v2520, %v1157
    %v2712 = vmul.f32 %v2520, %v1159
    %v2713 = vmul.f32 %v2525, %v1161
    %v2714 = vmul.f32 %v2525, %v1163
    %v2715 = vmul.f32 %v2530, %v1167
    %v2716 = vmul.f32 %v2530, %v1169
    %v2717 = vmul.f32 %v2535, %v1171
    %v2718 = vmul.f32 %v2535, %v1173
    %v2719 = vmul.f32 %v2540, %v1177
    %v2720 = vmul.f32 %v2540, %v1179
    %v2721 = vmul.f32 %v2545, %v1181
    %v2722 = vmul.f32 %v2545, %v1183
    %v2723 = vmul.f32 %v2550, %v1187
    %v2724 = vmul.f32 %v2550, %v1189
    %v2725 = vmul.f32 %v2555, %v1191
    %v2726 = vmul.f32 %v2555, %v1193
    %v2727 = vmul.f32 %v2560, %v1197
    %v2728 = vmul.f32 %v2560, %v1199
    %v2729 = vmul.f32 %v2565, %v1201
    %v2730 = vmul.f32 %v2565, %v1203
    %v2731 = vmul.f32 %v2570, %v1207
    %v2732 = vmul.f32 %v2570, %v1209
    %v2733 = vmul.f32 %v2575, %v1211
    %v2734 = vmul.f32 %v2575, %v1213
    %v2735 = vmul.f32 %v2580, %v1217
    %v2736 = vmul.f32 %v2580, %v1219
    %v2737 = vmul.f32 %v2585, %v1221
    %v2738 = vmul.f32 %v2585, %v1223
    %v2739 = vmul.f32 %v2590, %v1227
    %v2740 = vmul.f32 %v2590, %v1229
    %v2741 = vmul.f32 %v2595, %v1231
    %v2742 = vmul.f32 %v2595, %v1233
    %v2743 = vmul.f32 %v2600, %v1237
    %v2744 = vmul.f32 %v2600, %v1239
    %v2745 = vmul.f32 %v2605, %v1241
    %v2746 = vmul.f32 %v2605, %v1243
    %v2747 = vmul.f32 %v2610, %v1247
    %v2748 = vmul.f32 %v2610, %v1249
    %v2749 = vmul.f32 %v2615, %v1251
    %v2750 = vmul.f32 %v2615, %v1253
    %v2751 = vmul.f32 %v2620, %v1257
    %v2752 = vmul.f32 %v2620, %v1259
    %v2753 = vmul.f32 %v2625, %v1261
    %v2754 = vmul.f32 %v2625, %v1263
    %v2755 = vadd.f32 %v2627, %v2629
    %v2756 = vadd.f32 %v2755, %v2631
    %v2757 = vadd.f32 %v2756, %v2633
    %v2758 = vrot.slane %v2757, 4
    %v2759 = vadd.f32 %v2757, %v2758
    %v2760 = vrot.slane %v2759, 2
    %v2761 = vadd.f32 %v2759, %v2760
    %v2762 = vrot.slane %v2761, 1
    %v2763 = vadd.f32 %v2761, %v2762
    %v2764 = vadd.f32 %v2628, %v2630
    %v2765 = vadd.f32 %v2764, %v2632
    %v2766 = vadd.f32 %v2765, %v2634
    %v2767 = vrot.slane %v2766, 4
    %v2768 = vadd.f32 %v2766, %v2767
    %v2769 = vrot.slane %v2768, 2
    %v2770 = vadd.f32 %v2768, %v2769
    %v2771 = vrot.slane %v2770, 1
    %v2772 = vadd.f32 %v2770, %v2771
    %v2773 = vadd.f32 %v2635, %v2637
    %v2774 = vadd.f32 %v2773, %v2639
    %v2775 = vadd.f32 %v2774, %v2641
    %v2776 = vrot.slane %v2775, 4
    %v2777 = vadd.f32 %v2775, %v2776
    %v2778 = vrot.slane %v2777, 2
    %v2779 = vadd.f32 %v2777, %v2778
    %v2780 = vrot.slane %v2779, 1
    %v2781 = vadd.f32 %v2779, %v2780
    %v2782 = vadd.f32 %v2636, %v2638
    %v2783 = vadd.f32 %v2782, %v2640
    %v2784 = vadd.f32 %v2783, %v2642
    %v2785 = vrot.slane %v2784, 4
    %v2786 = vadd.f32 %v2784, %v2785
    %v2787 = vrot.slane %v2786, 2
    %v2788 = vadd.f32 %v2786, %v2787
    %v2789 = vrot.slane %v2788, 1
    %v2790 = vadd.f32 %v2788, %v2789
    %v2791 = vadd.f32 %v2643, %v2645
    %v2792 = vadd.f32 %v2791, %v2647
    %v2793 = vadd.f32 %v2792, %v2649
    %v2794 = vrot.slane %v2793, 4
    %v2795 = vadd.f32 %v2793, %v2794
    %v2796 = vrot.slane %v2795, 2
    %v2797 = vadd.f32 %v2795, %v2796
    %v2798 = vrot.slane %v2797, 1
    %v2799 = vadd.f32 %v2797, %v2798
    %v2800 = vadd.f32 %v2644, %v2646
    %v2801 = vadd.f32 %v2800, %v2648
    %v2802 = vadd.f32 %v2801, %v2650
    %v2803 = vrot.slane %v2802, 4
    %v2804 = vadd.f32 %v2802, %v2803
    %v2805 = vrot.slane %v2804, 2
    %v2806 = vadd.f32 %v2804, %v2805
    %v2807 = vrot.slane %v2806, 1
    %v2808 = vadd.f32 %v2806, %v2807
    %v2809 = vadd.f32 %v2651, %v2653
    %v2810 = vadd.f32 %v2809, %v2655
    %v2811 = vadd.f32 %v2810, %v2657
    %v2812 = vrot.slane %v2811, 4
    %v2813 = vadd.f32 %v2811, %v2812
    %v2814 = vrot.slane %v2813, 2
    %v2815 = vadd.f32 %v2813, %v2814
    %v2816 = vrot.slane %v2815, 1
    %v2817 = vadd.f32 %v2815, %v2816
    %v2818 = vadd.f32 %v2652, %v2654
    %v2819 = vadd.f32 %v2818, %v2656
    %v2820 = vadd.f32 %v2819, %v2658
    %v2821 = vrot.slane %v2820, 4
    %v2822 = vadd.f32 %v2820, %v2821
    %v2823 = vrot.slane %v2822, 2
    %v2824 = vadd.f32 %v2822, %v2823
    %v2825 = vrot.slane %v2824, 1
    %v2826 = vadd.f32 %v2824, %v2825
    %v2827 = vadd.f32 %v2659, %v2661
    %v2828 = vadd.f32 %v2827, %v2663
    %v2829 = vadd.f32 %v2828, %v2665
    %v2830 = vrot.slane %v2829, 4
    %v2831 = vadd.f32 %v2829, %v2830
    %v2832 = vrot.slane %v2831, 2
    %v2833 = vadd.f32 %v2831, %v2832
    %v2834 = vrot.slane %v2833, 1
    %v2835 = vadd.f32 %v2833, %v2834
    %v2836 = vadd.f32 %v2660, %v2662
    %v2837 = vadd.f32 %v2836, %v2664
    %v2838 = vadd.f32 %v2837, %v2666
    %v2839 = vrot.slane %v2838, 4
    %v2840 = vadd.f32 %v2838, %v2839
    %v2841 = vrot.slane %v2840, 2
    %v2842 = vadd.f32 %v2840, %v2841
    %v2843 = vrot.slane %v2842, 1
    %v2844 = vadd.f32 %v2842, %v2843
    %v2845 = vadd.f32 %v2667, %v2669
    %v2846 = vadd.f32 %v2845, %v2671
    %v2847 = vadd.f32 %v2846, %v2673
    %v2848 = vrot.slane %v2847, 4
    %v2849 = vadd.f32 %v2847, %v2848
    %v2850 = vrot.slane %v2849, 2
    %v2851 = vadd.f32 %v2849, %v2850
    %v2852 = vrot.slane %v2851, 1
    %v2853 = vadd.f32 %v2851, %v2852
    %v2854 = vadd.f32 %v2668, %v2670
    %v2855 = vadd.f32 %v2854, %v2672
    %v2856 = vadd.f32 %v2855, %v2674
    %v2857 = vrot.slane %v2856, 4
    %v2858 = vadd.f32 %v2856, %v2857
    %v2859 = vrot.slane %v2858, 2
    %v2860 = vadd.f32 %v2858, %v2859
    %v2861 = vrot.slane %v2860, 1
    %v2862 = vadd.f32 %v2860, %v2861
    %v2863 = vadd.f32 %v2675, %v2677
    %v2864 = vadd.f32 %v2863, %v2679
    %v2865 = vadd.f32 %v2864, %v2681
    %v2866 = vrot.slane %v2865, 4
    %v2867 = vadd.f32 %v2865, %v2866
    %v2868 = vrot.slane %v2867, 2
    %v2869 = vadd.f32 %v2867, %v2868
    %v2870 = vrot.slane %v2869, 1
    %v2871 = vadd.f32 %v2869, %v2870
    %v2872 = vadd.f32 %v2676, %v2678
    %v2873 = vadd.f32 %v2872, %v2680
    %v2874 = vadd.f32 %v2873, %v2682
    %v2875 = vrot.slane %v2874, 4
    %v2876 = vadd.f32 %v2874, %v2875
    %v2877 = vrot.slane %v2876, 2
    %v2878 = vadd.f32 %v2876, %v2877
    %v2879 = vrot.slane %v2878, 1
    %v2880 = vadd.f32 %v2878, %v2879
    %v2881 = vadd.f32 %v2683, %v2685
    %v2882 = vadd.f32 %v2881, %v2687
    %v2883 = vadd.f32 %v2882, %v2689
    %v2884 = vrot.slane %v2883, 4
    %v2885 = vadd.f32 %v2883, %v2884
    %v2886 = vrot.slane %v2885, 2
    %v2887 = vadd.f32 %v2885, %v2886
    %v2888 = vrot.slane %v2887, 1
    %v2889 = vadd.f32 %v2887, %v2888
    %v2890 = vadd.f32 %v2684, %v2686
    %v2891 = vadd.f32 %v2890, %v2688
    %v2892 = vadd.f32 %v2891, %v2690
    %v2893 = vrot.slane %v2892, 4
    %v2894 = vadd.f32 %v2892, %v2893
    %v2895 = vrot.slane %v2894, 2
    %v2896 = vadd.f32 %v2894, %v2895
    %v2897 = vrot.slane %v2896, 1
    %v2898 = vadd.f32 %v2896, %v2897
    %v2899 = vadd.f32 %v2691, %v2693
    %v2900 = vadd.f32 %v2899, %v2695
    %v2901 = vadd.f32 %v2900, %v2697
    %v2902 = vrot.slane %v2901, 4
    %v2903 = vadd.f32 %v2901, %v2902
    %v2904 = vrot.slane %v2903, 2
    %v2905 = vadd.f32 %v2903, %v2904
    %v2906 = vrot.slane %v2905, 1
    %v2907 = vadd.f32 %v2905, %v2906
    %v2908 = vadd.f32 %v2692, %v2694
    %v2909 = vadd.f32 %v2908, %v2696
    %v2910 = vadd.f32 %v2909, %v2698
    %v2911 = vrot.slane %v2910, 4
    %v2912 = vadd.f32 %v2910, %v2911
    %v2913 = vrot.slane %v2912, 2
    %v2914 = vadd.f32 %v2912, %v2913
    %v2915 = vrot.slane %v2914, 1
    %v2916 = vadd.f32 %v2914, %v2915
    %v2917 = vadd.f32 %v2699, %v2701
    %v2918 = vadd.f32 %v2917, %v2703
    %v2919 = vadd.f32 %v2918, %v2705
    %v2920 = vrot.slane %v2919, 4
    %v2921 = vadd.f32 %v2919, %v2920
    %v2922 = vrot.slane %v2921, 2
    %v2923 = vadd.f32 %v2921, %v2922
    %v2924 = vrot.slane %v2923, 1
    %v2925 = vadd.f32 %v2923, %v2924
    %v2926 = vadd.f32 %v2700, %v2702
    %v2927 = vadd.f32 %v2926, %v2704
    %v2928 = vadd.f32 %v2927, %v2706
    %v2929 = vrot.slane %v2928, 4
    %v2930 = vadd.f32 %v2928, %v2929
    %v2931 = vrot.slane %v2930, 2
    %v2932 = vadd.f32 %v2930, %v2931
    %v2933 = vrot.slane %v2932, 1
    %v2934 = vadd.f32 %v2932, %v2933
    %v2935 = vadd.f32 %v2707, %v2709
    %v2936 = vadd.f32 %v2935, %v2711
    %v2937 = vadd.f32 %v2936, %v2713
    %v2938 = vrot.slane %v2937, 4
    %v2939 = vadd.f32 %v2937, %v2938
    %v2940 = vrot.slane %v2939, 2
    %v2941 = vadd.f32 %v2939, %v2940
    %v2942 = vrot.slane %v2941, 1
    %v2943 = vadd.f32 %v2941, %v2942
    %v2944 = vadd.f32 %v2708, %v2710
    %v2945 = vadd.f32 %v2944, %v2712
    %v2946 = vadd.f32 %v2945, %v2714
    %v2947 = vrot.slane %v2946, 4
    %v2948 = vadd.f32 %v2946, %v2947
    %v2949 = vrot.slane %v2948, 2
    %v2950 = vadd.f32 %v2948, %v2949
    %v2951 = vrot.slane %v2950, 1
    %v2952 = vadd.f32 %v2950, %v2951
    %v2953 = vadd.f32 %v2715, %v2717
    %v2954 = vadd.f32 %v2953, %v2719
    %v2955 = vadd.f32 %v2954, %v2721
    %v2956 = vrot.slane %v2955, 4
    %v2957 = vadd.f32 %v2955, %v2956
    %v2958 = vrot.slane %v2957, 2
    %v2959 = vadd.f32 %v2957, %v2958
    %v2960 = vrot.slane %v2959, 1
    %v2961 = vadd.f32 %v2959, %v2960
    %v2962 = vadd.f32 %v2716, %v2718
    %v2963 = vadd.f32 %v2962, %v2720
    %v2964 = vadd.f32 %v2963, %v2722
    %v2965 = vrot.slane %v2964, 4
    %v2966 = vadd.f32 %v2964, %v2965
    %v2967 = vrot.slane %v2966, 2
    %v2968 = vadd.f32 %v2966, %v2967
    %v2969 = vrot.slane %v2968, 1
    %v2970 = vadd.f32 %v2968, %v2969
    %v2971 = vadd.f32 %v2723, %v2725
    %v2972 = vadd.f32 %v2971, %v2727
    %v2973 = vadd.f32 %v2972, %v2729
    %v2974 = vrot.slane %v2973, 4
    %v2975 = vadd.f32 %v2973, %v2974
    %v2976 = vrot.slane %v2975, 2
    %v2977 = vadd.f32 %v2975, %v2976
    %v2978 = vrot.slane %v2977, 1
    %v2979 = vadd.f32 %v2977, %v2978
    %v2980 = vadd.f32 %v2724, %v2726
    %v2981 = vadd.f32 %v2980, %v2728
    %v2982 = vadd.f32 %v2981, %v2730
    %v2983 = vrot.slane %v2982, 4
    %v2984 = vadd.f32 %v2982, %v2983
    %v2985 = vrot.slane %v2984, 2
    %v2986 = vadd.f32 %v2984, %v2985
    %v2987 = vrot.slane %v2986, 1
    %v2988 = vadd.f32 %v2986, %v2987
    %v2989 = vadd.f32 %v2731, %v2733
    %v2990 = vadd.f32 %v2989, %v2735
    %v2991 = vadd.f32 %v2990, %v2737
    %v2992 = vrot.slane %v2991, 4
    %v2993 = vadd.f32 %v2991, %v2992
    %v2994 = vrot.slane %v2993, 2
    %v2995 = vadd.f32 %v2993, %v2994
    %v2996 = vrot.slane %v2995, 1
    %v2997 = vadd.f32 %v2995, %v2996
    %v2998 = vadd.f32 %v2732, %v2734
    %v2999 = vadd.f32 %v2998, %v2736
    %v3000 = vadd.f32 %v2999, %v2738
    %v3001 = vrot.slane %v3000, 4
    %v3002 = vadd.f32 %v3000, %v3001
    %v3003 = vrot.slane %v3002, 2
    %v3004 = vadd.f32 %v3002, %v3003
    %v3005 = vrot.slane %v3004, 1
    %v3006 = vadd.f32 %v3004, %v3005
    %v3007 = vadd.f32 %v2739, %v2741
    %v3008 = vadd.f32 %v3007, %v2743
    %v3009 = vadd.f32 %v3008, %v2745
    %v3010 = vrot.slane %v3009, 4
    %v3011 = vadd.f32 %v3009, %v3010
    %v3012 = vrot.slane %v3011, 2
    %v3013 = vadd.f32 %v3011, %v3012
    %v3014 = vrot.slane %v3013, 1
    %v3015 = vadd.f32 %v3013, %v3014
    %v3016 = vadd.f32 %v2740, %v2742
    %v3017 = vadd.f32 %v3016, %v2744
    %v3018 = vadd.f32 %v3017, %v2746
    %v3019 = vrot.slane %v3018, 4
    %v3020 = vadd.f32 %v3018, %v3019
    %v3021 = vrot.slane %v3020, 2
    %v3022 = vadd.f32 %v3020, %v3021
    %v3023 = vrot.slane %v3022, 1
    %v3024 = vadd.f32 %v3022, %v3023
    %v3025 = vadd.f32 %v2747, %v2749
    %v3026 = vadd.f32 %v3025, %v2751
    %v3027 = vadd.f32 %v3026, %v2753
    %v3028 = vrot.slane %v3027, 4
    %v3029 = vadd.f32 %v3027, %v3028
    %v3030 = vrot.slane %v3029, 2
    %v3031 = vadd.f32 %v3029, %v3030
    %v3032 = vrot.slane %v3031, 1
    %v3033 = vadd.f32 %v3031, %v3032
    %v3034 = vadd.f32 %v2748, %v2750
    %v3035 = vadd.f32 %v3034, %v2752
    %v3036 = vadd.f32 %v3035, %v2754
    %v3037 = vrot.slane %v3036, 4
    %v3038 = vadd.f32 %v3036, %v3037
    %v3039 = vrot.slane %v3038, 2
    %v3040 = vadd.f32 %v3038, %v3039
    %v3041 = vrot.slane %v3040, 1
    %v3042 = vadd.f32 %v3040, %v3041
    %v3043 = vpack.c.bf16 %v2763, %v2763
    %v3044 = vpack.c.bf16 %v2772, %v2772
    %v3045 = vpack.c.bf16 %v2781, %v2781
    %v3046 = vpack.c.bf16 %v2790, %v2790
    %v3047 = vpack.c.bf16 %v2799, %v2799
    %v3048 = vpack.c.bf16 %v2808, %v2808
    %v3049 = vpack.c.bf16 %v2817, %v2817
    %v3050 = vpack.c.bf16 %v2826, %v2826
    %v3051 = vpack.c.bf16 %v2835, %v2835
    %v3052 = vpack.c.bf16 %v2844, %v2844
    %v3053 = vpack.c.bf16 %v2853, %v2853
    %v3054 = vpack.c.bf16 %v2862, %v2862
    %v3055 = vpack.c.bf16 %v2871, %v2871
    %v3056 = vpack.c.bf16 %v2880, %v2880
    %v3057 = vpack.c.bf16 %v2889, %v2889
    %v3058 = vpack.c.bf16 %v2898, %v2898
    %v3059 = vpack.c.bf16 %v2907, %v2907
    %v3060 = vpack.c.bf16 %v2916, %v2916
    %v3061 = vpack.c.bf16 %v2925, %v2925
    %v3062 = vpack.c.bf16 %v2934, %v2934
    %v3063 = vpack.c.bf16 %v2943, %v2943
    %v3064 = vpack.c.bf16 %v2952, %v2952
    %v3065 = vpack.c.bf16 %v2961, %v2961
    %v3066 = vpack.c.bf16 %v2970, %v2970
    %v3067 = vpack.c.bf16 %v2979, %v2979
    %v3068 = vpack.c.bf16 %v2988, %v2988
    %v3069 = vpack.c.bf16 %v2997, %v2997
    %v3070 = vpack.c.bf16 %v3006, %v3006
    %v3071 = vpack.c.bf16 %v3015, %v3015
    %v3072 = vpack.c.bf16 %v3024, %v3024
    %v3073 = vpack.c.bf16 %v3033, %v3033
    %v3074 = vpack.c.bf16 %v3042, %v3042
    %v3075 = vld [vmem:[#allocation8] sm:$0xff]
    %v3076 = vld [vmem:[#allocation8 + $0x8] sm:$0xff]
    %v3077 = vld [vmem:[#allocation8 + $0x10] sm:$0xff]
    %v3078 = vld [vmem:[#allocation8 + $0x18] sm:$0xff]
    %v3079 = vld [vmem:[#allocation8 + $0x20] sm:$0xff]
    %v3080 = vld [vmem:[#allocation8 + $0x28] sm:$0xff]
    %v3081 = vld [vmem:[#allocation8 + $0x30] sm:$0xff]
    %v3082 = vld [vmem:[#allocation8 + $0x38] sm:$0xff]
    %v3083 = vld [vmem:[#allocation8 + $0x40] sm:$0xff]
    %v3084 = vld [vmem:[#allocation8 + $0x48] sm:$0xff]
    %v3085 = vld [vmem:[#allocation8 + $0x50] sm:$0xff]
    %v3086 = vld [vmem:[#allocation8 + $0x58] sm:$0xff]
    %v3087 = vld [vmem:[#allocation8 + $0x60] sm:$0xff]
    %v3088 = vld [vmem:[#allocation8 + $0x68] sm:$0xff]
    %v3089 = vld [vmem:[#allocation8 + $0x70] sm:$0xff]
    %v3090 = vld [vmem:[#allocation8 + $0x78] sm:$0xff]
    %v3091 = vld [vmem:[#allocation8 + $0x80] sm:$0xff]
    %v3092 = vld [vmem:[#allocation8 + $0x88] sm:$0xff]
    %v3093 = vld [vmem:[#allocation8 + $0x90] sm:$0xff]
    %v3094 = vld [vmem:[#allocation8 + $0x98] sm:$0xff]
    %v3095 = vld [vmem:[#allocation8 + $0xa0] sm:$0xff]
    %v3096 = vld [vmem:[#allocation8 + $0xa8] sm:$0xff]
    %v3097 = vld [vmem:[#allocation8 + $0xb0] sm:$0xff]
    %v3098 = vld [vmem:[#allocation8 + $0xb8] sm:$0xff]
    %v3099 = vld [vmem:[#allocation8 + $0xc0] sm:$0xff]
    %v3100 = vld [vmem:[#allocation8 + $0xc8] sm:$0xff]
    %v3101 = vld [vmem:[#allocation8 + $0xd0] sm:$0xff]
    %v3102 = vld [vmem:[#allocation8 + $0xd8] sm:$0xff]
    %v3103 = vld [vmem:[#allocation8 + $0xe0] sm:$0xff]
    %v3104 = vld [vmem:[#allocation8 + $0xe8] sm:$0xff]
    %v3105 = vld [vmem:[#allocation8 + $0xf0] sm:$0xff]
    %v3106 = vld [vmem:[#allocation8 + $0xf8] sm:$0xff]
    %v3107 = vld [vmem:[%s7] sm:$0x3]
    %v3109 = vlaneseq
    %v3110 = vshrl.u32 %v3109, 7
    %v3111 = vsub.s32 0, %v3110
    %v3112 = vrot.slane %v3107, %v3111
    %v3113 = vlaneseq
    %v3114 = vshrl.u32 %v3113, 7
    %v3115 = vsub.s32 1, %v3114
    %v3116 = vrot.slane %v3107, %v3115
    %v3151 = vunpack.c.l.b16 %v3043
    %v3152 = vunpack.c.l.b16 %v3044
    %v3153 = vunpack.c.l.b16 %v3045
    %v3154 = vunpack.c.l.b16 %v3046
    %v3155 = vunpack.c.l.b16 %v3047
    %v3156 = vunpack.c.l.b16 %v3048
    %v3157 = vunpack.c.l.b16 %v3049
    %v3158 = vunpack.c.l.b16 %v3050
    %v3159 = vunpack.c.l.b16 %v3051
    %v3160 = vunpack.c.l.b16 %v3052
    %v3161 = vunpack.c.l.b16 %v3053
    %v3162 = vunpack.c.l.b16 %v3054
    %v3163 = vunpack.c.l.b16 %v3055
    %v3164 = vunpack.c.l.b16 %v3056
    %v3165 = vunpack.c.l.b16 %v3057
    %v3166 = vunpack.c.l.b16 %v3058
    %v3167 = vunpack.c.l.b16 %v3059
    %v3168 = vunpack.c.l.b16 %v3060
    %v3169 = vunpack.c.l.b16 %v3061
    %v3170 = vunpack.c.l.b16 %v3062
    %v3171 = vunpack.c.l.b16 %v3063
    %v3172 = vunpack.c.l.b16 %v3064
    %v3173 = vunpack.c.l.b16 %v3065
    %v3174 = vunpack.c.l.b16 %v3066
    %v3175 = vunpack.c.l.b16 %v3067
    %v3176 = vunpack.c.l.b16 %v3068
    %v3177 = vunpack.c.l.b16 %v3069
    %v3178 = vunpack.c.l.b16 %v3070
    %v3179 = vunpack.c.l.b16 %v3071
    %v3180 = vunpack.c.l.b16 %v3072
    %v3181 = vunpack.c.l.b16 %v3073
    %v3182 = vunpack.c.l.b16 %v3074
    %vm3183 = vcmask 1041409
    %v3184 = vsel %vm3183, %v3153, %v3151
    %vm3185 = vcmask 1042434
    %v3186 = vsel %vm3185, %v3155, %v3184
    %vm3187 = vcmask 1043459
    %v3188 = vsel %vm3187, %v3157, %v3186
    %vm3189 = vcmask 1044484
    %v3190 = vsel %vm3189, %v3159, %v3188
    %vm3191 = vcmask 1045509
    %v3192 = vsel %vm3191, %v3161, %v3190
    %vm3193 = vcmask 1046534
    %v3194 = vsel %vm3193, %v3163, %v3192
    %vm3195 = vcmask 1047559
    %v3196 = vsel %vm3195, %v3165, %v3194
    %v3197 = vsel %vm3183, %v3154, %v3152
    %v3198 = vsel %vm3185, %v3156, %v3197
    %v3199 = vsel %vm3187, %v3158, %v3198
    %v3200 = vsel %vm3189, %v3160, %v3199
    %v3201 = vsel %vm3191, %v3162, %v3200
    %v3202 = vsel %vm3193, %v3164, %v3201
    %v3203 = vsel %vm3195, %v3166, %v3202
    %v3204 = vsel %vm3183, %v3169, %v3167
    %v3205 = vsel %vm3185, %v3171, %v3204
    %v3206 = vsel %vm3187, %v3173, %v3205
    %v3207 = vsel %vm3189, %v3175, %v3206
    %v3208 = vsel %vm3191, %v3177, %v3207
    %v3209 = vsel %vm3193, %v3179, %v3208
    %v3210 = vsel %vm3195, %v3181, %v3209
    %v3211 = vsel %vm3183, %v3170, %v3168
    %v3212 = vsel %vm3185, %v3172, %v3211
    %v3213 = vsel %vm3187, %v3174, %v3212
    %v3214 = vsel %vm3189, %v3176, %v3213
    %v3215 = vsel %vm3191, %v3178, %v3214
    %v3216 = vsel %vm3193, %v3180, %v3215
    %v3217 = vsel %vm3195, %v3182, %v3216
    %v3218 = vpack.c.b16 %v3210, %v3196
    %v3219 = vpack.c.b16 %v3217, %v3203
    %v3254 = vunpack.c.l.b16 %v3075
    %v3255 = vunpack.c.h.b16 %v3075
    %v3256 = vunpack.c.l.b16 %v3076
    %v3257 = vunpack.c.h.b16 %v3076
    %v3258 = vunpack.c.l.b16 %v3077
    %v3259 = vunpack.c.h.b16 %v3077
    %v3260 = vunpack.c.l.b16 %v3078
    %v3261 = vunpack.c.h.b16 %v3078
    %v3262 = vunpack.c.l.b16 %v3079
    %v3263 = vunpack.c.h.b16 %v3079
    %v3264 = vunpack.c.l.b16 %v3080
    %v3265 = vunpack.c.h.b16 %v3080
    %v3266 = vunpack.c.l.b16 %v3081
    %v3267 = vunpack.c.h.b16 %v3081
    %v3268 = vunpack.c.l.b16 %v3082
    %v3269 = vunpack.c.h.b16 %v3082
    %v3270 = vunpack.c.l.b16 %v3083
    %v3271 = vunpack.c.h.b16 %v3083
    %v3272 = vunpack.c.l.b16 %v3084
    %v3273 = vunpack.c.h.b16 %v3084
    %v3274 = vunpack.c.l.b16 %v3085
    %v3275 = vunpack.c.h.b16 %v3085
    %v3276 = vunpack.c.l.b16 %v3086
    %v3277 = vunpack.c.h.b16 %v3086
    %v3278 = vunpack.c.l.b16 %v3087
    %v3279 = vunpack.c.h.b16 %v3087
    %v3280 = vunpack.c.l.b16 %v3088
    %v3281 = vunpack.c.h.b16 %v3088
    %v3282 = vunpack.c.l.b16 %v3089
    %v3283 = vunpack.c.h.b16 %v3089
    %v3284 = vunpack.c.l.b16 %v3090
    %v3285 = vunpack.c.h.b16 %v3090
    %v3286 = vunpack.c.l.b16 %v3091
    %v3287 = vunpack.c.h.b16 %v3091
    %v3288 = vunpack.c.l.b16 %v3092
    %v3289 = vunpack.c.h.b16 %v3092
    %v3290 = vunpack.c.l.b16 %v3093
    %v3291 = vunpack.c.h.b16 %v3093
    %v3292 = vunpack.c.l.b16 %v3094
    %v3293 = vunpack.c.h.b16 %v3094
    %v3294 = vunpack.c.l.b16 %v3095
    %v3295 = vunpack.c.h.b16 %v3095
    %v3296 = vunpack.c.l.b16 %v3096
    %v3297 = vunpack.c.h.b16 %v3096
    %v3298 = vunpack.c.l.b16 %v3097
    %v3299 = vunpack.c.h.b16 %v3097
    %v3300 = vunpack.c.l.b16 %v3098
    %v3301 = vunpack.c.h.b16 %v3098
    %v3302 = vunpack.c.l.b16 %v3099
    %v3303 = vunpack.c.h.b16 %v3099
    %v3304 = vunpack.c.l.b16 %v3100
    %v3305 = vunpack.c.h.b16 %v3100
    %v3306 = vunpack.c.l.b16 %v3101
    %v3307 = vunpack.c.h.b16 %v3101
    %v3308 = vunpack.c.l.b16 %v3102
    %v3309 = vunpack.c.h.b16 %v3102
    %v3310 = vunpack.c.l.b16 %v3103
    %v3311 = vunpack.c.h.b16 %v3103
    %v3312 = vunpack.c.l.b16 %v3104
    %v3313 = vunpack.c.h.b16 %v3104
    %v3314 = vunpack.c.l.b16 %v3105
    %v3315 = vunpack.c.h.b16 %v3105
    %v3316 = vunpack.c.l.b16 %v3106
    %v3317 = vunpack.c.h.b16 %v3106
    %v3318 = vpack.c.b16 %v3256, %v3254
    %v3319 = vpack.c.b16 %v3257, %v3255
    %v3320 = vpack.c.b16 %v3260, %v3258
    %v3321 = vpack.c.b16 %v3261, %v3259
    %v3322 = vpack.c.b16 %v3264, %v3262
    %v3323 = vpack.c.b16 %v3265, %v3263
    %v3324 = vpack.c.b16 %v3268, %v3266
    %v3325 = vpack.c.b16 %v3269, %v3267
    %v3326 = vpack.c.b16 %v3272, %v3270
    %v3327 = vpack.c.b16 %v3273, %v3271
    %v3328 = vpack.c.b16 %v3276, %v3274
    %v3329 = vpack.c.b16 %v3277, %v3275
    %v3330 = vpack.c.b16 %v3280, %v3278
    %v3331 = vpack.c.b16 %v3281, %v3279
    %v3332 = vpack.c.b16 %v3284, %v3282
    %v3333 = vpack.c.b16 %v3285, %v3283
    %v3334 = vpack.c.b16 %v3288, %v3286
    %v3335 = vpack.c.b16 %v3289, %v3287
    %v3336 = vpack.c.b16 %v3292, %v3290
    %v3337 = vpack.c.b16 %v3293, %v3291
    %v3338 = vpack.c.b16 %v3296, %v3294
    %v3339 = vpack.c.b16 %v3297, %v3295
    %v3340 = vpack.c.b16 %v3300, %v3298
    %v3341 = vpack.c.b16 %v3301, %v3299
    %v3342 = vpack.c.b16 %v3304, %v3302
    %v3343 = vpack.c.b16 %v3305, %v3303
    %v3344 = vpack.c.b16 %v3308, %v3306
    %v3345 = vpack.c.b16 %v3309, %v3307
    %v3346 = vpack.c.b16 %v3312, %v3310
    %v3347 = vpack.c.b16 %v3313, %v3311
    %v3348 = vpack.c.b16 %v3316, %v3314
    %v3349 = vpack.c.b16 %v3317, %v3315
    %3382 = vmatprep.subr.bf16.mxu0 %v3319
    %3383 = vmatpush1.bf16.msra.mxu0 %v3318
    %3384 = vmatprep.subr.bf16.mxu0 %v3321
    %3385 = vmatpush1.bf16.msra.mxu0 %v3320
    %3386 = vmatprep.subr.bf16.mxu0 %v3323
    %3387 = vmatpush1.bf16.msra.mxu0 %v3322
    %3388 = vmatprep.subr.bf16.mxu0 %v3325
    %3389 = vmatpush1.bf16.msra.mxu0 %v3324
    %3390 = vmatprep.subr.bf16.mxu0 %v3327
    %3391 = vmatpush1.bf16.msra.mxu0 %v3326
    %3392 = vmatprep.subr.bf16.mxu0 %v3329
    %3393 = vmatpush1.bf16.msra.mxu0 %v3328
    %3394 = vmatprep.subr.bf16.mxu0 %v3331
    %3395 = vmatpush1.bf16.msra.mxu0 %v3330
    %3396 = vmatprep.subr.bf16.mxu0 %v3333
    %3397 = vmatpush1.bf16.msra.mxu0 %v3332
    %3398 = vmatprep.subr.bf16.mxu0 %v3335
    %3399 = vmatpush1.bf16.msra.mxu0 %v3334
    %3400 = vmatprep.subr.bf16.mxu0 %v3337
    %3401 = vmatpush1.bf16.msra.mxu0 %v3336
    %3402 = vmatprep.subr.bf16.mxu0 %v3339
    %3403 = vmatpush1.bf16.msra.mxu0 %v3338
    %3404 = vmatprep.subr.bf16.mxu0 %v3341
    %3405 = vmatpush1.bf16.msra.mxu0 %v3340
    %3406 = vmatprep.subr.bf16.mxu0 %v3343
    %3407 = vmatpush1.bf16.msra.mxu0 %v3342
    %3408 = vmatprep.subr.bf16.mxu0 %v3345
    %3409 = vmatpush1.bf16.msra.mxu0 %v3344
    %3410 = vmatprep.subr.bf16.mxu0 %v3347
    %3411 = vmatpush1.bf16.msra.mxu0 %v3346
    %3412 = vmatprep.subr.bf16.mxu0 %v3349
    %3413 = vmatpush1.bf16.msra.mxu0 %v3348
    %3414 = vmatprep.mubr.bf16.mxu0 %v3219
    %3415 = vmatmul.mubr.bf16.gmra.mrb[0].mxu0 %v3218
    %v3416 = vpop.f32.mrb[0].mxu0
    %v3417 = vadd.f32 %v3112, %v3416
    %v3418 = vpop.f32.mrb[0].mxu0
    %v3419 = vadd.f32 %v3116, %v3418
    %v3420 = vpop.f32.mrb[0].mxu0
    %v3421 = vadd.f32 %v3112, %v3420
    %v3422 = vpop.f32.mrb[0].mxu0
    %v3423 = vadd.f32 %v3116, %v3422
    %3424 = vdwg.mxu0
    %v3425 = vpack.c.bf16 %v3421, %v3417
    %v3426 = vpack.c.bf16 %v3423, %v3419
    %v3427 = vld [vmem:[#allocation11] sm:$0xff]
    %v3428 = vld [vmem:[#allocation11 + $0x8] sm:$0xff]
    %v3429 = vld [vmem:[#allocation11 + $0x10] sm:$0xff]
    %v3430 = vld [vmem:[#allocation11 + $0x18] sm:$0xff]
    %v3431 = vld [vmem:[#allocation11 + $0x20] sm:$0xff]
    %v3432 = vld [vmem:[#allocation11 + $0x28] sm:$0xff]
    %v3433 = vld [vmem:[#allocation11 + $0x30] sm:$0xff]
    %v3434 = vld [vmem:[#allocation11 + $0x38] sm:$0xff]
    %v3435 = vld [vmem:[#allocation11 + $0x40] sm:$0xff]
    %v3436 = vld [vmem:[#allocation11 + $0x48] sm:$0xff]
    %v3437 = vld [vmem:[#allocation11 + $0x50] sm:$0xff]
    %v3438 = vld [vmem:[#allocation11 + $0x58] sm:$0xff]
    %v3439 = vld [vmem:[#allocation11 + $0x60] sm:$0xff]
    %v3440 = vld [vmem:[#allocation11 + $0x68] sm:$0xff]
    %v3441 = vld [vmem:[#allocation11 + $0x70] sm:$0xff]
    %v3442 = vld [vmem:[#allocation11 + $0x78] sm:$0xff]
    %v3443 = vld [vmem:[#allocation11 + $0x80] sm:$0xff]
    %v3444 = vld [vmem:[#allocation11 + $0x88] sm:$0xff]
    %v3445 = vld [vmem:[#allocation11 + $0x90] sm:$0xff]
    %v3446 = vld [vmem:[#allocation11 + $0x98] sm:$0xff]
    %v3447 = vld [vmem:[#allocation11 + $0xa0] sm:$0xff]
    %v3448 = vld [vmem:[#allocation11 + $0xa8] sm:$0xff]
    %v3449 = vld [vmem:[#allocation11 + $0xb0] sm:$0xff]
    %v3450 = vld [vmem:[#allocation11 + $0xb8] sm:$0xff]
    %v3451 = vld [vmem:[#allocation11 + $0xc0] sm:$0xff]
    %v3452 = vld [vmem:[#allocation11 + $0xc8] sm:$0xff]
    %v3453 = vld [vmem:[#allocation11 + $0xd0] sm:$0xff]
    %v3454 = vld [vmem:[#allocation11 + $0xd8] sm:$0xff]
    %v3455 = vld [vmem:[#allocation11 + $0xe0] sm:$0xff]
    %v3456 = vld [vmem:[#allocation11 + $0xe8] sm:$0xff]
    %v3457 = vld [vmem:[#allocation11 + $0xf0] sm:$0xff]
    %v3458 = vld [vmem:[#allocation11 + $0xf8] sm:$0xff]
    %v3459 = vld [vmem:[#allocation11 + $0x100] sm:$0xff]
    %v3460 = vld [vmem:[#allocation11 + $0x108] sm:$0xff]
    %v3461 = vld [vmem:[#allocation11 + $0x110] sm:$0xff]
    %v3462 = vld [vmem:[#allocation11 + $0x118] sm:$0xff]
    %v3463 = vld [vmem:[#allocation11 + $0x120] sm:$0xff]
    %v3464 = vld [vmem:[#allocation11 + $0x128] sm:$0xff]
    %v3465 = vld [vmem:[#allocation11 + $0x130] sm:$0xff]
    %v3466 = vld [vmem:[#allocation11 + $0x138] sm:$0xff]
    %v3467 = vld [vmem:[#allocation11 + $0x140] sm:$0xff]
    %v3468 = vld [vmem:[#allocation11 + $0x148] sm:$0xff]
    %v3469 = vld [vmem:[#allocation11 + $0x150] sm:$0xff]
    %v3470 = vld [vmem:[#allocation11 + $0x158] sm:$0xff]
    %v3471 = vld [vmem:[#allocation11 + $0x160] sm:$0xff]
    %v3472 = vld [vmem:[#allocation11 + $0x168] sm:$0xff]
    %v3473 = vld [vmem:[#allocation11 + $0x170] sm:$0xff]
    %v3474 = vld [vmem:[#allocation11 + $0x178] sm:$0xff]
    %v3475 = vld [vmem:[#allocation11 + $0x180] sm:$0xff]
    %v3476 = vld [vmem:[#allocation11 + $0x188] sm:$0xff]
    %v3477 = vld [vmem:[#allocation11 + $0x190] sm:$0xff]
    %v3478 = vld [vmem:[#allocation11 + $0x198] sm:$0xff]
    %v3479 = vld [vmem:[#allocation11 + $0x1a0] sm:$0xff]
    %v3480 = vld [vmem:[#allocation11 + $0x1a8] sm:$0xff]
    %v3481 = vld [vmem:[#allocation11 + $0x1b0] sm:$0xff]
    %v3482 = vld [vmem:[#allocation11 + $0x1b8] sm:$0xff]
    %v3483 = vld [vmem:[#allocation11 + $0x1c0] sm:$0xff]
    %v3484 = vld [vmem:[#allocation11 + $0x1c8] sm:$0xff]
    %v3485 = vld [vmem:[#allocation11 + $0x1d0] sm:$0xff]
    %v3486 = vld [vmem:[#allocation11 + $0x1d8] sm:$0xff]
    %v3487 = vld [vmem:[#allocation11 + $0x1e0] sm:$0xff]
    %v3488 = vld [vmem:[#allocation11 + $0x1e8] sm:$0xff]
    %v3489 = vld [vmem:[#allocation11 + $0x1f0] sm:$0xff]
    %v3490 = vld [vmem:[#allocation11 + $0x1f8] sm:$0xff]
    %v3555 = vunpack.c.l.b16 %v3427
    %v3556 = vunpack.c.h.b16 %v3427
    %v3557 = vunpack.c.l.b16 %v3428
    %v3558 = vunpack.c.h.b16 %v3428
    %v3559 = vunpack.c.l.b16 %v3429
    %v3560 = vunpack.c.h.b16 %v3429
    %v3561 = vunpack.c.l.b16 %v3430
    %v3562 = vunpack.c.h.b16 %v3430
    %v3563 = vunpack.c.l.b16 %v3431
    %v3564 = vunpack.c.h.b16 %v3431
    %v3565 = vunpack.c.l.b16 %v3432
    %v3566 = vunpack.c.h.b16 %v3432
    %v3567 = vunpack.c.l.b16 %v3433
    %v3568 = vunpack.c.h.b16 %v3433
    %v3569 = vunpack.c.l.b16 %v3434
    %v3570 = vunpack.c.h.b16 %v3434
    %v3571 = vunpack.c.l.b16 %v3435
    %v3572 = vunpack.c.h.b16 %v3435
    %v3573 = vunpack.c.l.b16 %v3436
    %v3574 = vunpack.c.h.b16 %v3436
    %v3575 = vunpack.c.l.b16 %v3437
    %v3576 = vunpack.c.h.b16 %v3437
    %v3577 = vunpack.c.l.b16 %v3438
    %v3578 = vunpack.c.h.b16 %v3438
    %v3579 = vunpack.c.l.b16 %v3439
    %v3580 = vunpack.c.h.b16 %v3439
    %v3581 = vunpack.c.l.b16 %v3440
    %v3582 = vunpack.c.h.b16 %v3440
    %v3583 = vunpack.c.l.b16 %v3441
    %v3584 = vunpack.c.h.b16 %v3441
    %v3585 = vunpack.c.l.b16 %v3442
    %v3586 = vunpack.c.h.b16 %v3442
    %v3587 = vunpack.c.l.b16 %v3443
    %v3588 = vunpack.c.h.b16 %v3443
    %v3589 = vunpack.c.l.b16 %v3444
    %v3590 = vunpack.c.h.b16 %v3444
    %v3591 = vunpack.c.l.b16 %v3445
    %v3592 = vunpack.c.h.b16 %v3445
    %v3593 = vunpack.c.l.b16 %v3446
    %v3594 = vunpack.c.h.b16 %v3446
    %v3595 = vunpack.c.l.b16 %v3447
    %v3596 = vunpack.c.h.b16 %v3447
    %v3597 = vunpack.c.l.b16 %v3448
    %v3598 = vunpack.c.h.b16 %v3448
    %v3599 = vunpack.c.l.b16 %v3449
    %v3600 = vunpack.c.h.b16 %v3449
    %v3601 = vunpack.c.l.b16 %v3450
    %v3602 = vunpack.c.h.b16 %v3450
    %v3603 = vunpack.c.l.b16 %v3451
    %v3604 = vunpack.c.h.b16 %v3451
    %v3605 = vunpack.c.l.b16 %v3452
    %v3606 = vunpack.c.h.b16 %v3452
    %v3607 = vunpack.c.l.b16 %v3453
    %v3608 = vunpack.c.h.b16 %v3453
    %v3609 = vunpack.c.l.b16 %v3454
    %v3610 = vunpack.c.h.b16 %v3454
    %v3611 = vunpack.c.l.b16 %v3455
    %v3612 = vunpack.c.h.b16 %v3455
    %v3613 = vunpack.c.l.b16 %v3456
    %v3614 = vunpack.c.h.b16 %v3456
    %v3615 = vunpack.c.l.b16 %v3457
    %v3616 = vunpack.c.h.b16 %v3457
    %v3617 = vunpack.c.l.b16 %v3458
    %v3618 = vunpack.c.h.b16 %v3458
    %v3619 = vunpack.c.l.b16 %v3459
    %v3620 = vunpack.c.h.b16 %v3459
    %v3621 = vunpack.c.l.b16 %v3460
    %v3622 = vunpack.c.h.b16 %v3460
    %v3623 = vunpack.c.l.b16 %v3461
    %v3624 = vunpack.c.h.b16 %v3461
    %v3625 = vunpack.c.l.b16 %v3462
    %v3626 = vunpack.c.h.b16 %v3462
    %v3627 = vunpack.c.l.b16 %v3463
    %v3628 = vunpack.c.h.b16 %v3463
    %v3629 = vunpack.c.l.b16 %v3464
    %v3630 = vunpack.c.h.b16 %v3464
    %v3631 = vunpack.c.l.b16 %v3465
    %v3632 = vunpack.c.h.b16 %v3465
    %v3633 = vunpack.c.l.b16 %v3466
    %v3634 = vunpack.c.h.b16 %v3466
    %v3635 = vunpack.c.l.b16 %v3467
    %v3636 = vunpack.c.h.b16 %v3467
    %v3637 = vunpack.c.l.b16 %v3468
    %v3638 = vunpack.c.h.b16 %v3468
    %v3639 = vunpack.c.l.b16 %v3469
    %v3640 = vunpack.c.h.b16 %v3469
    %v3641 = vunpack.c.l.b16 %v3470
    %v3642 = vunpack.c.h.b16 %v3470
    %v3643 = vunpack.c.l.b16 %v3471
    %v3644 = vunpack.c.h.b16 %v3471
    %v3645 = vunpack.c.l.b16 %v3472
    %v3646 = vunpack.c.h.b16 %v3472
    %v3647 = vunpack.c.l.b16 %v3473
    %v3648 = vunpack.c.h.b16 %v3473
    %v3649 = vunpack.c.l.b16 %v3474
    %v3650 = vunpack.c.h.b16 %v3474
    %v3651 = vunpack.c.l.b16 %v3475
    %v3652 = vunpack.c.h.b16 %v3475
    %v3653 = vunpack.c.l.b16 %v3476
    %v3654 = vunpack.c.h.b16 %v3476
    %v3655 = vunpack.c.l.b16 %v3477
    %v3656 = vunpack.c.h.b16 %v3477
    %v3657 = vunpack.c.l.b16 %v3478
    %v3658 = vunpack.c.h.b16 %v3478
    %v3659 = vunpack.c.l.b16 %v3479
    %v3660 = vunpack.c.h.b16 %v3479
    %v3661 = vunpack.c.l.b16 %v3480
    %v3662 = vunpack.c.h.b16 %v3480
    %v3663 = vunpack.c.l.b16 %v3481
    %v3664 = vunpack.c.h.b16 %v3481
    %v3665 = vunpack.c.l.b16 %v3482
    %v3666 = vunpack.c.h.b16 %v3482
    %v3667 = vunpack.c.l.b16 %v3483
    %v3668 = vunpack.c.h.b16 %v3483
    %v3669 = vunpack.c.l.b16 %v3484
    %v3670 = vunpack.c.h.b16 %v3484
    %v3671 = vunpack.c.l.b16 %v3485
    %v3672 = vunpack.c.h.b16 %v3485
    %v3673 = vunpack.c.l.b16 %v3486
    %v3674 = vunpack.c.h.b16 %v3486
    %v3675 = vunpack.c.l.b16 %v3487
    %v3676 = vunpack.c.h.b16 %v3487
    %v3677 = vunpack.c.l.b16 %v3488
    %v3678 = vunpack.c.h.b16 %v3488
    %v3679 = vunpack.c.l.b16 %v3489
    %v3680 = vunpack.c.h.b16 %v3489
    %v3681 = vunpack.c.l.b16 %v3490
    %v3682 = vunpack.c.h.b16 %v3490
    %v3683 = vpack.c.b16 %v3559, %v3555
    %v3684 = vpack.c.b16 %v3560, %v3556
    %v3685 = vpack.c.b16 %v3561, %v3557
    %v3686 = vpack.c.b16 %v3562, %v3558
    %v3687 = vpack.c.b16 %v3567, %v3563
    %v3688 = vpack.c.b16 %v3568, %v3564
    %v3689 = vpack.c.b16 %v3569, %v3565
    %v3690 = vpack.c.b16 %v3570, %v3566
    %v3691 = vpack.c.b16 %v3575, %v3571
    %v3692 = vpack.c.b16 %v3576, %v3572
    %v3693 = vpack.c.b16 %v3577, %v3573
    %v3694 = vpack.c.b16 %v3578, %v3574
    %v3695 = vpack.c.b16 %v3583, %v3579
    %v3696 = vpack.c.b16 %v3584, %v3580
    %v3697 = vpack.c.b16 %v3585, %v3581
    %v3698 = vpack.c.b16 %v3586, %v3582
    %v3699 = vpack.c.b16 %v3591, %v3587
    %v3700 = vpack.c.b16 %v3592, %v3588
    %v3701 = vpack.c.b16 %v3593, %v3589
    %v3702 = vpack.c.b16 %v3594, %v3590
    %v3703 = vpack.c.b16 %v3599, %v3595
    %v3704 = vpack.c.b16 %v3600, %v3596
    %v3705 = vpack.c.b16 %v3601, %v3597
    %v3706 = vpack.c.b16 %v3602, %v3598
    %v3707 = vpack.c.b16 %v3607, %v3603
    %v3708 = vpack.c.b16 %v3608, %v3604
    %v3709 = vpack.c.b16 %v3609, %v3605
    %v3710 = vpack.c.b16 %v3610, %v3606
    %v3711 = vpack.c.b16 %v3615, %v3611
    %v3712 = vpack.c.b16 %v3616, %v3612
    %v3713 = vpack.c.b16 %v3617, %v3613
    %v3714 = vpack.c.b16 %v3618, %v3614
    %v3715 = vpack.c.b16 %v3623, %v3619
    %v3716 = vpack.c.b16 %v3624, %v3620
    %v3717 = vpack.c.b16 %v3625, %v3621
    %v3718 = vpack.c.b16 %v3626, %v3622
    %v3719 = vpack.c.b16 %v3631, %v3627
    %v3720 = vpack.c.b16 %v3632, %v3628
    %v3721 = vpack.c.b16 %v3633, %v3629
    %v3722 = vpack.c.b16 %v3634, %v3630
    %v3723 = vpack.c.b16 %v3639, %v3635
    %v3724 = vpack.c.b16 %v3640, %v3636
    %v3725 = vpack.c.b16 %v3641, %v3637
    %v3726 = vpack.c.b16 %v3642, %v3638
    %v3727 = vpack.c.b16 %v3647, %v3643
    %v3728 = vpack.c.b16 %v3648, %v3644
    %v3729 = vpack.c.b16 %v3649, %v3645
    %v3730 = vpack.c.b16 %v3650, %v3646
    %v3731 = vpack.c.b16 %v3655, %v3651
    %v3732 = vpack.c.b16 %v3656, %v3652
    %v3733 = vpack.c.b16 %v3657, %v3653
    %v3734 = vpack.c.b16 %v3658, %v3654
    %v3735 = vpack.c.b16 %v3663, %v3659
    %v3736 = vpack.c.b16 %v3664, %v3660
    %v3737 = vpack.c.b16 %v3665, %v3661
    %v3738 = vpack.c.b16 %v3666, %v3662
    %v3739 = vpack.c.b16 %v3671, %v3667
    %v3740 = vpack.c.b16 %v3672, %v3668
    %v3741 = vpack.c.b16 %v3673, %v3669
    %v3742 = vpack.c.b16 %v3674, %v3670
    %v3743 = vpack.c.b16 %v3679, %v3675
    %v3744 = vpack.c.b16 %v3680, %v3676
    %v3745 = vpack.c.b16 %v3681, %v3677
    %v3746 = vpack.c.b16 %v3682, %v3678
    %3811 = vmatprep.subr.bf16.mxu0 %v3684
    %3812 = vmatpush1.bf16.msra.mxu0 %v3683
    %3813 = vmatprep.subr.bf16.mxu0 %v3688
    %3814 = vmatpush1.bf16.msra.mxu0 %v3687
    %3815 = vmatprep.subr.bf16.mxu0 %v3692
    %3816 = vmatpush1.bf16.msra.mxu0 %v3691
    %3817 = vmatprep.subr.bf16.mxu0 %v3696
    %3818 = vmatpush1.bf16.msra.mxu0 %v3695
    %3819 = vmatprep.subr.bf16.mxu0 %v3700
    %3820 = vmatpush1.bf16.msra.mxu0 %v3699
    %3821 = vmatprep.subr.bf16.mxu0 %v3704
    %3822 = vmatpush1.bf16.msra.mxu0 %v3703
    %3823 = vmatprep.subr.bf16.mxu0 %v3708
    %3824 = vmatpush1.bf16.msra.mxu0 %v3707
    %3825 = vmatprep.subr.bf16.mxu0 %v3712
    %3826 = vmatpush1.bf16.msra.mxu0 %v3711
    %3827 = vmatprep.subr.bf16.mxu0 %v3716
    %3828 = vmatpush1.bf16.msra.mxu0 %v3715
    %3829 = vmatprep.subr.bf16.mxu0 %v3720
    %3830 = vmatpush1.bf16.msra.mxu0 %v3719
    %3831 = vmatprep.subr.bf16.mxu0 %v3724
    %3832 = vmatpush1.bf16.msra.mxu0 %v3723
    %3833 = vmatprep.subr.bf16.mxu0 %v3728
    %3834 = vmatpush1.bf16.msra.mxu0 %v3727
    %3835 = vmatprep.subr.bf16.mxu0 %v3732
    %3836 = vmatpush1.bf16.msra.mxu0 %v3731
    %3837 = vmatprep.subr.bf16.mxu0 %v3736
    %3838 = vmatpush1.bf16.msra.mxu0 %v3735
    %3839 = vmatprep.subr.bf16.mxu0 %v3740
    %3840 = vmatpush1.bf16.msra.mxu0 %v3739
    %3841 = vmatprep.subr.bf16.mxu0 %v3744
    %3842 = vmatpush1.bf16.msra.mxu0 %v3743
    %3843 = vmatprep.mubr.bf16.mxu0 %v3426
    %3844 = vmatmul.mubr.bf16.gmra.mrb[0].mxu0 %v3425
    %v3845 = vpop.f32.mrb[0].mxu0
    %v3846 = vadd.f32 0.0, %v3845
    %v3847 = vpop.f32.mrb[0].mxu0
    %v3848 = vadd.f32 0.0, %v3847
    %v3849 = vpop.f32.mrb[0].mxu0
    %v3850 = vadd.f32 0.0, %v3849
    %v3851 = vpop.f32.mrb[0].mxu0
    %v3852 = vadd.f32 0.0, %v3851
    %3853 = vdwg.mxu0
    %3854 = vmatprep.subr.bf16.mxu0 %v3686
    %3855 = vmatpush1.bf16.msra.mxu0 %v3685
    %3856 = vmatprep.subr.bf16.mxu0 %v3690
    %3857 = vmatpush1.bf16.msra.mxu0 %v3689
    %3858 = vmatprep.subr.bf16.mxu0 %v3694
    %3859 = vmatpush1.bf16.msra.mxu0 %v3693
    %3860 = vmatprep.subr.bf16.mxu0 %v3698
    %3861 = vmatpush1.bf16.msra.mxu0 %v3697
    %3862 = vmatprep.subr.bf16.mxu0 %v3702
    %3863 = vmatpush1.bf16.msra.mxu0 %v3701
    %3864 = vmatprep.subr.bf16.mxu0 %v3706
    %3865 = vmatpush1.bf16.msra.mxu0 %v3705
    %3866 = vmatprep.subr.bf16.mxu0 %v3710
    %3867 = vmatpush1.bf16.msra.mxu0 %v3709
    %3868 = vmatprep.subr.bf16.mxu0 %v3714
    %3869 = vmatpush1.bf16.msra.mxu0 %v3713
    %3870 = vmatprep.subr.bf16.mxu0 %v3718
    %3871 = vmatpush1.bf16.msra.mxu0 %v3717
    %3872 = vmatprep.subr.bf16.mxu0 %v3722
    %3873 = vmatpush1.bf16.msra.mxu0 %v3721
    %3874 = vmatprep.subr.bf16.mxu0 %v3726
    %3875 = vmatpush1.bf16.msra.mxu0 %v3725
    %3876 = vmatprep.subr.bf16.mxu0 %v3730
    %3877 = vmatpush1.bf16.msra.mxu0 %v3729
    %3878 = vmatprep.subr.bf16.mxu0 %v3734
    %3879 = vmatpush1.bf16.msra.mxu0 %v3733
    %3880 = vmatprep.subr.bf16.mxu0 %v3738
    %3881 = vmatpush1.bf16.msra.mxu0 %v3737
    %3882 = vmatprep.subr.bf16.mxu0 %v3742
    %3883 = vmatpush1.bf16.msra.mxu0 %v3741
    %3884 = vmatprep.subr.bf16.mxu0 %v3746
    %3885 = vmatpush1.bf16.msra.mxu0 %v3745
    %3886 = vmatprep.mubr.bf16.mxu0 %v3426
    %3887 = vmatmul.mubr.bf16.gmra.mrb[0].mxu0 %v3425
    %v3888 = vpop.f32.mrb[0].mxu0
    %v3889 = vadd.f32 0.0, %v3888
    %v3890 = vpop.f32.mrb[0].mxu0
    %v3891 = vadd.f32 0.0, %v3890
    %v3892 = vpop.f32.mrb[0].mxu0
    %v3893 = vadd.f32 0.0, %v3892
    %v3894 = vpop.f32.mrb[0].mxu0
    %v3895 = vadd.f32 0.0, %v3894
    %3896 = vdwg.mxu0
    %v3897 = vld [vmem:[%s10] sm:$0xf]
    %v3899 = vlaneseq
    %v3900 = vshrl.u32 %v3899, 7
    %v3901 = vsub.s32 0, %v3900
    %v3902 = vrot.slane %v3897, %v3901
    %v3903 = vlaneseq
    %v3904 = vshrl.u32 %v3903, 7
    %v3905 = vsub.s32 1, %v3904
    %v3906 = vrot.slane %v3897, %v3905
    %v3907 = vlaneseq
    %v3908 = vshrl.u32 %v3907, 7
    %v3909 = vsub.s32 2, %v3908
    %v3910 = vrot.slane %v3897, %v3909
    %v3911 = vlaneseq
    %v3912 = vshrl.u32 %v3911, 7
    %v3913 = vsub.s32 3, %v3912
    %v3914 = vrot.slane %v3897, %v3913
    %v3919 = vmul.f32 %v3846, %v3902
    %v3920 = vmul.f32 %v3848, %v3906
    %v3921 = vmul.f32 %v3889, %v3910
    %v3922 = vmul.f32 %v3891, %v3914
    %v3923 = vmul.f32 %v3850, %v3902
    %v3924 = vmul.f32 %v3852, %v3906
    %v3925 = vmul.f32 %v3893, %v3910
    %v3926 = vmul.f32 %v3895, %v3914
    %v3927 = vld [vmem:[%s11] sm:$0xf]
    %v3929 = vlaneseq
    %v3930 = vshrl.u32 %v3929, 7
    %v3931 = vsub.s32 0, %v3930
    %v3932 = vrot.slane %v3927, %v3931
    %v3933 = vlaneseq
    %v3934 = vshrl.u32 %v3933, 7
    %v3935 = vsub.s32 1, %v3934
    %v3936 = vrot.slane %v3927, %v3935
    %v3937 = vlaneseq
    %v3938 = vshrl.u32 %v3937, 7
    %v3939 = vsub.s32 2, %v3938
    %v3940 = vrot.slane %v3927, %v3939
    %v3941 = vlaneseq
    %v3942 = vshrl.u32 %v3941, 7
    %v3943 = vsub.s32 3, %v3942
    %v3944 = vrot.slane %v3927, %v3943
    %v3949 = vadd.f32 %v3919, %v3932
    %v3950 = vadd.f32 %v3920, %v3936
    %v3951 = vadd.f32 %v3921, %v3940
    %v3952 = vadd.f32 %v3922, %v3944
    %v3953 = vadd.f32 %v3923, %v3932
    %v3954 = vadd.f32 %v3924, %v3936
    %v3955 = vadd.f32 %v3925, %v3940
    %v3956 = vadd.f32 %v3926, %v3944
    %v3957 = vpack.c.bf16 %v951, %v947
    %v3958 = vpack.c.bf16 %v953, %v949
    %v3959 = vpack.c.bf16 %v961, %v957
    %v3960 = vpack.c.bf16 %v963, %v959
    %v3961 = vpack.c.bf16 %v971, %v967
    %v3962 = vpack.c.bf16 %v973, %v969
    %v3963 = vpack.c.bf16 %v981, %v977
    %v3964 = vpack.c.bf16 %v983, %v979
    %v3965 = vpack.c.bf16 %v991, %v987
    %v3966 = vpack.c.bf16 %v993, %v989
    %v3967 = vpack.c.bf16 %v1001, %v997
    %v3968 = vpack.c.bf16 %v1003, %v999
    %v3969 = vpack.c.bf16 %v1011, %v1007
    %v3970 = vpack.c.bf16 %v1013, %v1009
    %v3971 = vpack.c.bf16 %v1021, %v1017
    %v3972 = vpack.c.bf16 %v1023, %v1019
    %v3973 = vpack.c.bf16 %v1031, %v1027
    %v3974 = vpack.c.bf16 %v1033, %v1029
    %v3975 = vpack.c.bf16 %v1041, %v1037
    %v3976 = vpack.c.bf16 %v1043, %v1039
    %v3977 = vpack.c.bf16 %v1051, %v1047
    %v3978 = vpack.c.bf16 %v1053, %v1049
    %v3979 = vpack.c.bf16 %v1061, %v1057
    %v3980 = vpack.c.bf16 %v1063, %v1059
    %v3981 = vpack.c.bf16 %v1071, %v1067
    %v3982 = vpack.c.bf16 %v1073, %v1069
    %v3983 = vpack.c.bf16 %v1081, %v1077
    %v3984 = vpack.c.bf16 %v1083, %v1079
    %v3985 = vpack.c.bf16 %v1091, %v1087
    %v3986 = vpack.c.bf16 %v1093, %v1089
    %v3987 = vpack.c.bf16 %v1101, %v1097
    %v3988 = vpack.c.bf16 %v1103, %v1099
    %v3989 = vpack.c.bf16 %v1111, %v1107
    %v3990 = vpack.c.bf16 %v1113, %v1109
    %v3991 = vpack.c.bf16 %v1121, %v1117
    %v3992 = vpack.c.bf16 %v1123, %v1119
    %v3993 = vpack.c.bf16 %v1131, %v1127
    %v3994 = vpack.c.bf16 %v1133, %v1129
    %v3995 = vpack.c.bf16 %v1141, %v1137
    %v3996 = vpack.c.bf16 %v1143, %v1139
    %v3997 = vpack.c.bf16 %v1151, %v1147
    %v3998 = vpack.c.bf16 %v1153, %v1149
    %v3999 = vpack.c.bf16 %v1161, %v1157
    %v4000 = vpack.c.bf16 %v1163, %v1159
    %v4001 = vpack.c.bf16 %v1171, %v1167
    %v4002 = vpack.c.bf16 %v1173, %v1169
    %v4003 = vpack.c.bf16 %v1181, %v1177
    %v4004 = vpack.c.bf16 %v1183, %v1179
    %v4005 = vpack.c.bf16 %v1191, %v1187
    %v4006 = vpack.c.bf16 %v1193, %v1189
    %v4007 = vpack.c.bf16 %v1201, %v1197
    %v4008 = vpack.c.bf16 %v1203, %v1199
    %v4009 = vpack.c.bf16 %v1211, %v1207
    %v4010 = vpack.c.bf16 %v1213, %v1209
    %v4011 = vpack.c.bf16 %v1221, %v1217
    %v4012 = vpack.c.bf16 %v1223, %v1219
    %v4013 = vpack.c.bf16 %v1231, %v1227
    %v4014 = vpack.c.bf16 %v1233, %v1229
    %v4015 = vpack.c.bf16 %v1241, %v1237
    %v4016 = vpack.c.bf16 %v1243, %v1239
    %v4017 = vpack.c.bf16 %v1251, %v1247
    %v4018 = vpack.c.bf16 %v1253, %v1249
    %v4019 = vpack.c.bf16 %v1261, %v1257
    %v4020 = vpack.c.bf16 %v1263, %v1259
    %v4021 = vld [vmem:[#allocation10] sm:$0xff]
    %v4022 = vld [vmem:[#allocation10 + $0x8] sm:$0xff]
    %v4023 = vld [vmem:[#allocation10 + $0x10] sm:$0xff]
    %v4024 = vld [vmem:[#allocation10 + $0x18] sm:$0xff]
    %v4025 = vld [vmem:[#allocation10 + $0x20] sm:$0xff]
    %v4026 = vld [vmem:[#allocation10 + $0x28] sm:$0xff]
    %v4027 = vld [vmem:[#allocation10 + $0x30] sm:$0xff]
    %v4028 = vld [vmem:[#allocation10 + $0x38] sm:$0xff]
    %v4029 = vld [vmem:[#allocation10 + $0x40] sm:$0xff]
    %v4030 = vld [vmem:[#allocation10 + $0x48] sm:$0xff]
    %v4031 = vld [vmem:[#allocation10 + $0x50] sm:$0xff]
    %v4032 = vld [vmem:[#allocation10 + $0x58] sm:$0xff]
    %v4033 = vld [vmem:[#allocation10 + $0x60] sm:$0xff]
    %v4034 = vld [vmem:[#allocation10 + $0x68] sm:$0xff]
    %v4035 = vld [vmem:[#allocation10 + $0x70] sm:$0xff]
    %v4036 = vld [vmem:[#allocation10 + $0x78] sm:$0xff]
    %v4037 = vld [vmem:[#allocation10 + $0x80] sm:$0xff]
    %v4038 = vld [vmem:[#allocation10 + $0x88] sm:$0xff]
    %v4039 = vld [vmem:[#allocation10 + $0x90] sm:$0xff]
    %v4040 = vld [vmem:[#allocation10 + $0x98] sm:$0xff]
    %v4041 = vld [vmem:[#allocation10 + $0xa0] sm:$0xff]
    %v4042 = vld [vmem:[#allocation10 + $0xa8] sm:$0xff]
    %v4043 = vld [vmem:[#allocation10 + $0xb0] sm:$0xff]
    %v4044 = vld [vmem:[#allocation10 + $0xb8] sm:$0xff]
    %v4045 = vld [vmem:[#allocation10 + $0xc0] sm:$0xff]
    %v4046 = vld [vmem:[#allocation10 + $0xc8] sm:$0xff]
    %v4047 = vld [vmem:[#allocation10 + $0xd0] sm:$0xff]
    %v4048 = vld [vmem:[#allocation10 + $0xd8] sm:$0xff]
    %v4049 = vld [vmem:[#allocation10 + $0xe0] sm:$0xff]
    %v4050 = vld [vmem:[#allocation10 + $0xe8] sm:$0xff]
    %v4051 = vld [vmem:[#allocation10 + $0xf0] sm:$0xff]
    %v4052 = vld [vmem:[#allocation10 + $0xf8] sm:$0xff]
    %v4053 = vld [vmem:[#allocation10 + $0x100] sm:$0xff]
    %v4054 = vld [vmem:[#allocation10 + $0x108] sm:$0xff]
    %v4055 = vld [vmem:[#allocation10 + $0x110] sm:$0xff]
    %v4056 = vld [vmem:[#allocation10 + $0x118] sm:$0xff]
    %v4057 = vld [vmem:[#allocation10 + $0x120] sm:$0xff]
    %v4058 = vld [vmem:[#allocation10 + $0x128] sm:$0xff]
    %v4059 = vld [vmem:[#allocation10 + $0x130] sm:$0xff]
    %v4060 = vld [vmem:[#allocation10 + $0x138] sm:$0xff]
    %v4061 = vld [vmem:[#allocation10 + $0x140] sm:$0xff]
    %v4062 = vld [vmem:[#allocation10 + $0x148] sm:$0xff]
    %v4063 = vld [vmem:[#allocation10 + $0x150] sm:$0xff]
    %v4064 = vld [vmem:[#allocation10 + $0x158] sm:$0xff]
    %v4065 = vld [vmem:[#allocation10 + $0x160] sm:$0xff]
    %v4066 = vld [vmem:[#allocation10 + $0x168] sm:$0xff]
    %v4067 = vld [vmem:[#allocation10 + $0x170] sm:$0xff]
    %v4068 = vld [vmem:[#allocation10 + $0x178] sm:$0xff]
    %v4069 = vld [vmem:[#allocation10 + $0x180] sm:$0xff]
    %v4070 = vld [vmem:[#allocation10 + $0x188] sm:$0xff]
    %v4071 = vld [vmem:[#allocation10 + $0x190] sm:$0xff]
    %v4072 = vld [vmem:[#allocation10 + $0x198] sm:$0xff]
    %v4073 = vld [vmem:[#allocation10 + $0x1a0] sm:$0xff]
    %v4074 = vld [vmem:[#allocation10 + $0x1a8] sm:$0xff]
    %v4075 = vld [vmem:[#allocation10 + $0x1b0] sm:$0xff]
    %v4076 = vld [vmem:[#allocation10 + $0x1b8] sm:$0xff]
    %v4077 = vld [vmem:[#allocation10 + $0x1c0] sm:$0xff]
    %v4078 = vld [vmem:[#allocation10 + $0x1c8] sm:$0xff]
    %v4079 = vld [vmem:[#allocation10 + $0x1d0] sm:$0xff]
    %v4080 = vld [vmem:[#allocation10 + $0x1d8] sm:$0xff]
    %v4081 = vld [vmem:[#allocation10 + $0x1e0] sm:$0xff]
    %v4082 = vld [vmem:[#allocation10 + $0x1e8] sm:$0xff]
    %v4083 = vld [vmem:[#allocation10 + $0x1f0] sm:$0xff]
    %v4084 = vld [vmem:[#allocation10 + $0x1f8] sm:$0xff]
    %v4149 = vunpack.c.l.b16 %v4021
    %v4150 = vunpack.c.h.b16 %v4021
    %v4151 = vunpack.c.l.b16 %v4022
    %v4152 = vunpack.c.h.b16 %v4022
    %v4153 = vunpack.c.l.b16 %v4023
    %v4154 = vunpack.c.h.b16 %v4023
    %v4155 = vunpack.c.l.b16 %v4024
    %v4156 = vunpack.c.h.b16 %v4024
    %v4157 = vunpack.c.l.b16 %v4025
    %v4158 = vunpack.c.h.b16 %v4025
    %v4159 = vunpack.c.l.b16 %v4026
    %v4160 = vunpack.c.h.b16 %v4026
    %v4161 = vunpack.c.l.b16 %v4027
    %v4162 = vunpack.c.h.b16 %v4027
    %v4163 = vunpack.c.l.b16 %v4028
    %v4164 = vunpack.c.h.b16 %v4028
    %v4165 = vunpack.c.l.b16 %v4029
    %v4166 = vunpack.c.h.b16 %v4029
    %v4167 = vunpack.c.l.b16 %v4030
    %v4168 = vunpack.c.h.b16 %v4030
    %v4169 = vunpack.c.l.b16 %v4031
    %v4170 = vunpack.c.h.b16 %v4031
    %v4171 = vunpack.c.l.b16 %v4032
    %v4172 = vunpack.c.h.b16 %v4032
    %v4173 = vunpack.c.l.b16 %v4033
    %v4174 = vunpack.c.h.b16 %v4033
    %v4175 = vunpack.c.l.b16 %v4034
    %v4176 = vunpack.c.h.b16 %v4034
    %v4177 = vunpack.c.l.b16 %v4035
    %v4178 = vunpack.c.h.b16 %v4035
    %v4179 = vunpack.c.l.b16 %v4036
    %v4180 = vunpack.c.h.b16 %v4036
    %v4181 = vunpack.c.l.b16 %v4037
    %v4182 = vunpack.c.h.b16 %v4037
    %v4183 = vunpack.c.l.b16 %v4038
    %v4184 = vunpack.c.h.b16 %v4038
    %v4185 = vunpack.c.l.b16 %v4039
    %v4186 = vunpack.c.h.b16 %v4039
    %v4187 = vunpack.c.l.b16 %v4040
    %v4188 = vunpack.c.h.b16 %v4040
    %v4189 = vunpack.c.l.b16 %v4041
    %v4190 = vunpack.c.h.b16 %v4041
    %v4191 = vunpack.c.l.b16 %v4042
    %v4192 = vunpack.c.h.b16 %v4042
    %v4193 = vunpack.c.l.b16 %v4043
    %v4194 = vunpack.c.h.b16 %v4043
    %v4195 = vunpack.c.l.b16 %v4044
    %v4196 = vunpack.c.h.b16 %v4044
    %v4197 = vunpack.c.l.b16 %v4045
    %v4198 = vunpack.c.h.b16 %v4045
    %v4199 = vunpack.c.l.b16 %v4046
    %v4200 = vunpack.c.h.b16 %v4046
    %v4201 = vunpack.c.l.b16 %v4047
    %v4202 = vunpack.c.h.b16 %v4047
    %v4203 = vunpack.c.l.b16 %v4048
    %v4204 = vunpack.c.h.b16 %v4048
    %v4205 = vunpack.c.l.b16 %v4049
    %v4206 = vunpack.c.h.b16 %v4049
    %v4207 = vunpack.c.l.b16 %v4050
    %v4208 = vunpack.c.h.b16 %v4050
    %v4209 = vunpack.c.l.b16 %v4051
    %v4210 = vunpack.c.h.b16 %v4051
    %v4211 = vunpack.c.l.b16 %v4052
    %v4212 = vunpack.c.h.b16 %v4052
    %v4213 = vunpack.c.l.b16 %v4053
    %v4214 = vunpack.c.h.b16 %v4053
    %v4215 = vunpack.c.l.b16 %v4054
    %v4216 = vunpack.c.h.b16 %v4054
    %v4217 = vunpack.c.l.b16 %v4055
    %v4218 = vunpack.c.h.b16 %v4055
    %v4219 = vunpack.c.l.b16 %v4056
    %v4220 = vunpack.c.h.b16 %v4056
    %v4221 = vunpack.c.l.b16 %v4057
    %v4222 = vunpack.c.h.b16 %v4057
    %v4223 = vunpack.c.l.b16 %v4058
    %v4224 = vunpack.c.h.b16 %v4058
    %v4225 = vunpack.c.l.b16 %v4059
    %v4226 = vunpack.c.h.b16 %v4059
    %v4227 = vunpack.c.l.b16 %v4060
    %v4228 = vunpack.c.h.b16 %v4060
    %v4229 = vunpack.c.l.b16 %v4061
    %v4230 = vunpack.c.h.b16 %v4061
    %v4231 = vunpack.c.l.b16 %v4062
    %v4232 = vunpack.c.h.b16 %v4062
    %v4233 = vunpack.c.l.b16 %v4063
    %v4234 = vunpack.c.h.b16 %v4063
    %v4235 = vunpack.c.l.b16 %v4064
    %v4236 = vunpack.c.h.b16 %v4064
    %v4237 = vunpack.c.l.b16 %v4065
    %v4238 = vunpack.c.h.b16 %v4065
    %v4239 = vunpack.c.l.b16 %v4066
    %v4240 = vunpack.c.h.b16 %v4066
    %v4241 = vunpack.c.l.b16 %v4067
    %v4242 = vunpack.c.h.b16 %v4067
    %v4243 = vunpack.c.l.b16 %v4068
    %v4244 = vunpack.c.h.b16 %v4068
    %v4245 = vunpack.c.l.b16 %v4069
    %v4246 = vunpack.c.h.b16 %v4069
    %v4247 = vunpack.c.l.b16 %v4070
    %v4248 = vunpack.c.h.b16 %v4070
    %v4249 = vunpack.c.l.b16 %v4071
    %v4250 = vunpack.c.h.b16 %v4071
    %v4251 = vunpack.c.l.b16 %v4072
    %v4252 = vunpack.c.h.b16 %v4072
    %v4253 = vunpack.c.l.b16 %v4073
    %v4254 = vunpack.c.h.b16 %v4073
    %v4255 = vunpack.c.l.b16 %v4074
    %v4256 = vunpack.c.h.b16 %v4074
    %v4257 = vunpack.c.l.b16 %v4075
    %v4258 = vunpack.c.h.b16 %v4075
    %v4259 = vunpack.c.l.b16 %v4076
    %v4260 = vunpack.c.h.b16 %v4076
    %v4261 = vunpack.c.l.b16 %v4077
    %v4262 = vunpack.c.h.b16 %v4077
    %v4263 = vunpack.c.l.b16 %v4078
    %v4264 = vunpack.c.h.b16 %v4078
    %v4265 = vunpack.c.l.b16 %v4079
    %v4266 = vunpack.c.h.b16 %v4079
    %v4267 = vunpack.c.l.b16 %v4080
    %v4268 = vunpack.c.h.b16 %v4080
    %v4269 = vunpack.c.l.b16 %v4081
    %v4270 = vunpack.c.h.b16 %v4081
    %v4271 = vunpack.c.l.b16 %v4082
    %v4272 = vunpack.c.h.b16 %v4082
    %v4273 = vunpack.c.l.b16 %v4083
    %v4274 = vunpack.c.h.b16 %v4083
    %v4275 = vunpack.c.l.b16 %v4084
    %v4276 = vunpack.c.h.b16 %v4084
    %v4277 = vpack.c.b16 %v4153, %v4149
    %v4278 = vpack.c.b16 %v4154, %v4150
    %v4279 = vpack.c.b16 %v4155, %v4151
    %v4280 = vpack.c.b16 %v4156, %v4152
    %v4281 = vpack.c.b16 %v4161, %v4157
    %v4282 = vpack.c.b16 %v4162, %v4158
    %v4283 = vpack.c.b16 %v4163, %v4159
    %v4284 = vpack.c.b16 %v4164, %v4160
    %v4285 = vpack.c.b16 %v4169, %v4165
    %v4286 = vpack.c.b16 %v4170, %v4166
    %v4287 = vpack.c.b16 %v4171, %v4167
    %v4288 = vpack.c.b16 %v4172, %v4168
    %v4289 = vpack.c.b16 %v4177, %v4173
    %v4290 = vpack.c.b16 %v4178, %v4174
    %v4291 = vpack.c.b16 %v4179, %v4175
    %v4292 = vpack.c.b16 %v4180, %v4176
    %v4293 = vpack.c.b16 %v4185, %v4181
    %v4294 = vpack.c.b16 %v4186, %v4182
    %v4295 = vpack.c.b16 %v4187, %v4183
    %v4296 = vpack.c.b16 %v4188, %v4184
    %v4297 = vpack.c.b16 %v4193, %v4189
    %v4298 = vpack.c.b16 %v4194, %v4190
    %v4299 = vpack.c.b16 %v4195, %v4191
    %v4300 = vpack.c.b16 %v4196, %v4192
    %v4301 = vpack.c.b16 %v4201, %v4197
    %v4302 = vpack.c.b16 %v4202, %v4198
    %v4303 = vpack.c.b16 %v4203, %v4199
    %v4304 = vpack.c.b16 %v4204, %v4200
    %v4305 = vpack.c.b16 %v4209, %v4205
    %v4306 = vpack.c.b16 %v4210, %v4206
    %v4307 = vpack.c.b16 %v4211, %v4207
    %v4308 = vpack.c.b16 %v4212, %v4208
    %v4309 = vpack.c.b16 %v4217, %v4213
    %v4310 = vpack.c.b16 %v4218, %v4214
    %v4311 = vpack.c.b16 %v4219, %v4215
    %v4312 = vpack.c.b16 %v4220, %v4216
    %v4313 = vpack.c.b16 %v4225, %v4221
    %v4314 = vpack.c.b16 %v4226, %v4222
    %v4315 = vpack.c.b16 %v4227, %v4223
    %v4316 = vpack.c.b16 %v4228, %v4224
    %v4317 = vpack.c.b16 %v4233, %v4229
    %v4318 = vpack.c.b16 %v4234, %v4230
    %v4319 = vpack.c.b16 %v4235, %v4231
    %v4320 = vpack.c.b16 %v4236, %v4232
    %v4321 = vpack.c.b16 %v4241, %v4237
    %v4322 = vpack.c.b16 %v4242, %v4238
    %v4323 = vpack.c.b16 %v4243, %v4239
    %v4324 = vpack.c.b16 %v4244, %v4240
    %v4325 = vpack.c.b16 %v4249, %v4245
    %v4326 = vpack.c.b16 %v4250, %v4246
    %v4327 = vpack.c.b16 %v4251, %v4247
    %v4328 = vpack.c.b16 %v4252, %v4248
    %v4329 = vpack.c.b16 %v4257, %v4253
    %v4330 = vpack.c.b16 %v4258, %v4254
    %v4331 = vpack.c.b16 %v4259, %v4255
    %v4332 = vpack.c.b16 %v4260, %v4256
    %v4333 = vpack.c.b16 %v4265, %v4261
    %v4334 = vpack.c.b16 %v4266, %v4262
    %v4335 = vpack.c.b16 %v4267, %v4263
    %v4336 = vpack.c.b16 %v4268, %v4264
    %v4337 = vpack.c.b16 %v4273, %v4269
    %v4338 = vpack.c.b16 %v4274, %v4270
    %v4339 = vpack.c.b16 %v4275, %v4271
    %v4340 = vpack.c.b16 %v4276, %v4272
    %4405 = vmatprep.subr.bf16.mxu0 %v4278
    %4406 = vmatpush1.bf16.msra.mxu0 %v4277
    %4407 = vmatprep.subr.bf16.mxu0 %v4282
    %4408 = vmatpush1.bf16.msra.mxu0 %v4281
    %4409 = vmatprep.subr.bf16.mxu0 %v4286
    %4410 = vmatpush1.bf16.msra.mxu0 %v4285
    %4411 = vmatprep.subr.bf16.mxu0 %v4290
    %4412 = vmatpush1.bf16.msra.mxu0 %v4289
    %4413 = vmatprep.subr.bf16.mxu0 %v4294
    %4414 = vmatpush1.bf16.msra.mxu0 %v4293
    %4415 = vmatprep.subr.bf16.mxu0 %v4298
    %4416 = vmatpush1.bf16.msra.mxu0 %v4297
    %4417 = vmatprep.subr.bf16.mxu0 %v4302
    %4418 = vmatpush1.bf16.msra.mxu0 %v4301
    %4419 = vmatprep.subr.bf16.mxu0 %v4306
    %4420 = vmatpush1.bf16.msra.mxu0 %v4305
    %4421 = vmatprep.subr.bf16.mxu0 %v4310
    %4422 = vmatpush1.bf16.msra.mxu0 %v4309
    %4423 = vmatprep.subr.bf16.mxu0 %v4314
    %4424 = vmatpush1.bf16.msra.mxu0 %v4313
    %4425 = vmatprep.subr.bf16.mxu0 %v4318
    %4426 = vmatpush1.bf16.msra.mxu0 %v4317
    %4427 = vmatprep.subr.bf16.mxu0 %v4322
    %4428 = vmatpush1.bf16.msra.mxu0 %v4321
    %4429 = vmatprep.subr.bf16.mxu0 %v4326
    %4430 = vmatpush1.bf16.msra.mxu0 %v4325
    %4431 = vmatprep.subr.bf16.mxu0 %v4330
    %4432 = vmatpush1.bf16.msra.mxu0 %v4329
    %4433 = vmatprep.subr.bf16.mxu0 %v4334
    %4434 = vmatpush1.bf16.msra.mxu0 %v4333
    %4435 = vmatprep.subr.bf16.mxu0 %v4338
    %4436 = vmatpush1.bf16.msra.mxu0 %v4337
    %4437 = vmatprep.mubr.bf16.mxu0 %v3958
    %4438 = vmatmul.mubr.bf16.gmra.mrb[0].mxu0 %v3957
    %v4439 = vpop.f32.mrb[0].mxu0
    %v4440 = vadd.f32 0.0, %v4439
    %v4441 = vpop.f32.mrb[0].mxu0
    %v4442 = vadd.f32 0.0, %v4441
    %v4443 = vpop.f32.mrb[0].mxu0
    %v4444 = vadd.f32 0.0, %v4443
    %v4445 = vpop.f32.mrb[0].mxu0
    %v4446 = vadd.f32 0.0, %v4445
    %4447 = vmatprep.mubr.bf16.mxu0 %v3960
    %4448 = vmatmul.mubr.bf16.gmra.mrb[0].mxu0 %v3959
    %v4449 = vpop.f32.mrb[0].mxu0
    %v4450 = vadd.f32 0.0, %v4449
    %v4451 = vpop.f32.mrb[0].mxu0
    %v4452 = vadd.f32 0.0, %v4451
    %v4453 = vpop.f32.mrb[0].mxu0
    %v4454 = vadd.f32 0.0, %v4453
    %v4455 = vpop.f32.mrb[0].mxu0
    %v4456 = vadd.f32 0.0, %v4455
    %4457 = vmatprep.mubr.bf16.mxu0 %v3962
    %4458 = vmatmul.mubr.bf16.gmra.mrb[0].mxu0 %v3961
    %v4459 = vpop.f32.mrb[0].mxu0
    %v4460 = vadd.f32 0.0, %v4459
    %v4461 = vpop.f32.mrb[0].mxu0
    %v4462 = vadd.f32 0.0, %v4461
    %v4463 = vpop.f32.mrb[0].mxu0
    %v4464 = vadd.f32 0.0, %v4463
    %v4465 = vpop.f32.mrb[0].mxu0
    %v4466 = vadd.f32 0.0, %v4465
    %4467 = vmatprep.mubr.bf16.mxu0 %v3964
    %4468 = vmatmul.mubr.bf16.gmra.mrb[0].mxu0 %v3963
    %v4469 = vpop.f32.mrb[0].mxu0
    %v4470 = vadd.f32 0.0, %v4469
    %v4471 = vpop.f32.mrb[0].mxu0
    %v4472 = vadd.f32 0.0, %v4471
    %v4473 = vpop.f32.mrb[0].mxu0
    %v4474 = vadd.f32 0.0, %v4473
    %v4475 = vpop.f32.mrb[0].mxu0
    %v4476 = vadd.f32 0.0, %v4475
    %4477 = vmatprep.mubr.bf16.mxu0 %v3966
    %4478 = vmatmul.mubr.bf16.gmra.mrb[0].mxu0 %v3965
    %v4479 = vpop.f32.mrb[0].mxu0
    %v4480 = vadd.f32 0.0, %v4479
    %v4481 = vpop.f32.mrb[0].mxu0
    %v4482 = vadd.f32 0.0, %v4481
    %v4483 = vpop.f32.mrb[0].mxu0
    %v4484 = vadd.f32 0.0, %v4483
    %v4485 = vpop.f32.mrb[0].mxu0
    %v4486 = vadd.f32 0.0, %v4485
    %4487 = vmatprep.mubr.bf16.mxu0 %v3968
    %4488 = vmatmul.mubr.bf16.gmra.mrb[0].mxu0 %v3967
    %v4489 = vpop.f32.mrb[0].mxu0
    %v4490 = vadd.f32 0.0, %v4489
    %v4491 = vpop.f32.mrb[0].mxu0
    %v4492 = vadd.f32 0.0, %v4491
    %v4493 = vpop.f32.mrb[0].mxu0
    %v4494 = vadd.f32 0.0, %v4493
    %v4495 = vpop.f32.mrb[0].mxu0
    %v4496 = vadd.f32 0.0, %v4495
    %4497 = vmatprep.mubr.bf16.mxu0 %v3970
    %4498 = vmatmul.mubr.bf16.gmra.mrb[0].mxu0 %v3969
    %v4499 = vpop.f32.mrb[0].mxu0
    %v4500 = vadd.f32 0.0, %v4499
    %v4501 = vpop.f32.mrb[0].mxu0
    %v4502 = vadd.f32 0.0, %v4501
    %v4503 = vpop.f32.mrb[0].mxu0
    %v4504 = vadd.f32 0.0, %v4503
    %v4505 = vpop.f32.mrb[0].mxu0
    %v4506 = vadd.f32 0.0, %v4505
    %4507 = vmatprep.mubr.bf16.mxu0 %v3972
    %4508 = vmatmul.mubr.bf16.gmra.mrb[0].mxu0 %v3971
    %v4509 = vpop.f32.mrb[0].mxu0
    %v4510 = vadd.f32 0.0, %v4509
    %v4511 = vpop.f32.mrb[0].mxu0
    %v4512 = vadd.f32 0.0, %v4511
    %v4513 = vpop.f32.mrb[0].mxu0
    %v4514 = vadd.f32 0.0, %v4513
    %v4515 = vpop.f32.mrb[0].mxu0
    %v4516 = vadd.f32 0.0, %v4515
    %4517 = vmatprep.mubr.bf16.mxu0 %v3974
    %4518 = vmatmul.mubr.bf16.gmra.mrb[0].mxu0 %v3973
    %v4519 = vpop.f32.mrb[0].mxu0
    %v4520 = vadd.f32 0.0, %v4519
    %v4521 = vpop.f32.mrb[0].mxu0
    %v4522 = vadd.f32 0.0, %v4521
    %v4523 = vpop.f32.mrb[0].mxu0
    %v4524 = vadd.f32 0.0, %v4523
    %v4525 = vpop.f32.mrb[0].mxu0
    %v4526 = vadd.f32 0.0, %v4525
    %4527 = vmatprep.mubr.bf16.mxu0 %v3976
    %4528 = vmatmul.mubr.bf16.gmra.mrb[0].mxu0 %v3975
    %v4529 = vpop.f32.mrb[0].mxu0
    %v4530 = vadd.f32 0.0, %v4529
    %v4531 = vpop.f32.mrb[0].mxu0
    %v4532 = vadd.f32 0.0, %v4531
    %v4533 = vpop.f32.mrb[0].mxu0
    %v4534 = vadd.f32 0.0, %v4533
    %v4535 = vpop.f32.mrb[0].mxu0
    %v4536 = vadd.f32 0.0, %v4535
    %4537 = vmatprep.mubr.bf16.mxu0 %v3978
    %4538 = vmatmul.mubr.bf16.gmra.mrb[0].mxu0 %v3977
    %v4539 = vpop.f32.mrb[0].mxu0
    %v4540 = vadd.f32 0.0, %v4539
    %v4541 = vpop.f32.mrb[0].mxu0
    %v4542 = vadd.f32 0.0, %v4541
    %v4543 = vpop.f32.mrb[0].mxu0
    %v4544 = vadd.f32 0.0, %v4543
    %v4545 = vpop.f32.mrb[0].mxu0
    %v4546 = vadd.f32 0.0, %v4545
    %4547 = vmatprep.mubr.bf16.mxu0 %v3980
    %4548 = vmatmul.mubr.bf16.gmra.mrb[0].mxu0 %v3979
    %v4549 = vpop.f32.mrb[0].mxu0
    %v4550 = vadd.f32 0.0, %v4549
    %v4551 = vpop.f32.mrb[0].mxu0
    %v4552 = vadd.f32 0.0, %v4551
    %v4553 = vpop.f32.mrb[0].mxu0
    %v4554 = vadd.f32 0.0, %v4553
    %v4555 = vpop.f32.mrb[0].mxu0
    %v4556 = vadd.f32 0.0, %v4555
    %4557 = vmatprep.mubr.bf16.mxu0 %v3982
    %4558 = vmatmul.mubr.bf16.gmra.mrb[0].mxu0 %v3981
    %v4559 = vpop.f32.mrb[0].mxu0
    %v4560 = vadd.f32 0.0, %v4559
    %v4561 = vpop.f32.mrb[0].mxu0
    %v4562 = vadd.f32 0.0, %v4561
    %v4563 = vpop.f32.mrb[0].mxu0
    %v4564 = vadd.f32 0.0, %v4563
    %v4565 = vpop.f32.mrb[0].mxu0
    %v4566 = vadd.f32 0.0, %v4565
    %4567 = vmatprep.mubr.bf16.mxu0 %v3984
    %4568 = vmatmul.mubr.bf16.gmra.mrb[0].mxu0 %v3983
    %v4569 = vpop.f32.mrb[0].mxu0
    %v4570 = vadd.f32 0.0, %v4569
    %v4571 = vpop.f32.mrb[0].mxu0
    %v4572 = vadd.f32 0.0, %v4571
    %v4573 = vpop.f32.mrb[0].mxu0
    %v4574 = vadd.f32 0.0, %v4573
    %v4575 = vpop.f32.mrb[0].mxu0
    %v4576 = vadd.f32 0.0, %v4575
    %4577 = vmatprep.mubr.bf16.mxu0 %v3986
    %4578 = vmatmul.mubr.bf16.gmra.mrb[0].mxu0 %v3985
    %v4579 = vpop.f32.mrb[0].mxu0
    %v4580 = vadd.f32 0.0, %v4579
    %v4581 = vpop.f32.mrb[0].mxu0
    %v4582 = vadd.f32 0.0, %v4581
    %v4583 = vpop.f32.mrb[0].mxu0
    %v4584 = vadd.f32 0.0, %v4583
    %v4585 = vpop.f32.mrb[0].mxu0
    %v4586 = vadd.f32 0.0, %v4585
    %4587 = vmatprep.mubr.bf16.mxu0 %v3988
    %4588 = vmatmul.mubr.bf16.gmra.mrb[0].mxu0 %v3987
    %v4589 = vpop.f32.mrb[0].mxu0
    %v4590 = vadd.f32 0.0, %v4589
    %v4591 = vpop.f32.mrb[0].mxu0
    %v4592 = vadd.f32 0.0, %v4591
    %v4593 = vpop.f32.mrb[0].mxu0
    %v4594 = vadd.f32 0.0, %v4593
    %v4595 = vpop.f32.mrb[0].mxu0
    %v4596 = vadd.f32 0.0, %v4595
    %4597 = vmatprep.mubr.bf16.mxu0 %v3990
    %4598 = vmatmul.mubr.bf16.gmra.mrb[0].mxu0 %v3989
    %v4599 = vpop.f32.mrb[0].mxu0
    %v4600 = vadd.f32 0.0, %v4599
    %v4601 = vpop.f32.mrb[0].mxu0
    %v4602 = vadd.f32 0.0, %v4601
    %v4603 = vpop.f32.mrb[0].mxu0
    %v4604 = vadd.f32 0.0, %v4603
    %v4605 = vpop.f32.mrb[0].mxu0
    %v4606 = vadd.f32 0.0, %v4605
    %4607 = vmatprep.mubr.bf16.mxu0 %v3992
    %4608 = vmatmul.mubr.bf16.gmra.mrb[0].mxu0 %v3991
    %v4609 = vpop.f32.mrb[0].mxu0
    %v4610 = vadd.f32 0.0, %v4609
    %v4611 = vpop.f32.mrb[0].mxu0
    %v4612 = vadd.f32 0.0, %v4611
    %v4613 = vpop.f32.mrb[0].mxu0
    %v4614 = vadd.f32 0.0, %v4613
    %v4615 = vpop.f32.mrb[0].mxu0
    %v4616 = vadd.f32 0.0, %v4615
    %4617 = vmatprep.mubr.bf16.mxu0 %v3994
    %4618 = vmatmul.mubr.bf16.gmra.mrb[0].mxu0 %v3993
    %v4619 = vpop.f32.mrb[0].mxu0
    %v4620 = vadd.f32 0.0, %v4619
    %v4621 = vpop.f32.mrb[0].mxu0
    %v4622 = vadd.f32 0.0, %v4621
    %v4623 = vpop.f32.mrb[0].mxu0
    %v4624 = vadd.f32 0.0, %v4623
    %v4625 = vpop.f32.mrb[0].mxu0
    %v4626 = vadd.f32 0.0, %v4625
    %4627 = vmatprep.mubr.bf16.mxu0 %v3996
    %4628 = vmatmul.mubr.bf16.gmra.mrb[0].mxu0 %v3995
    %v4629 = vpop.f32.mrb[0].mxu0
    %v4630 = vadd.f32 0.0, %v4629
    %v4631 = vpop.f32.mrb[0].mxu0
    %v4632 = vadd.f32 0.0, %v4631
    %v4633 = vpop.f32.mrb[0].mxu0
    %v4634 = vadd.f32 0.0, %v4633
    %v4635 = vpop.f32.mrb[0].mxu0
    %v4636 = vadd.f32 0.0, %v4635
    %4637 = vmatprep.mubr.bf16.mxu0 %v3998
    %4638 = vmatmul.mubr.bf16.gmra.mrb[0].mxu0 %v3997
    %v4639 = vpop.f32.mrb[0].mxu0
    %v4640 = vadd.f32 0.0, %v4639
    %v4641 = vpop.f32.mrb[0].mxu0
    %v4642 = vadd.f32 0.0, %v4641
    %v4643 = vpop.f32.mrb[0].mxu0
    %v4644 = vadd.f32 0.0, %v4643
    %v4645 = vpop.f32.mrb[0].mxu0
    %v4646 = vadd.f32 0.0, %v4645
    %4647 = vmatprep.mubr.bf16.mxu0 %v4000
    %4648 = vmatmul.mubr.bf16.gmra.mrb[0].mxu0 %v3999
    %v4649 = vpop.f32.mrb[0].mxu0
    %v4650 = vadd.f32 0.0, %v4649
    %v4651 = vpop.f32.mrb[0].mxu0
    %v4652 = vadd.f32 0.0, %v4651
    %v4653 = vpop.f32.mrb[0].mxu0
    %v4654 = vadd.f32 0.0, %v4653
    %v4655 = vpop.f32.mrb[0].mxu0
    %v4656 = vadd.f32 0.0, %v4655
    %4657 = vmatprep.mubr.bf16.mxu0 %v4002
    %4658 = vmatmul.mubr.bf16.gmra.mrb[0].mxu0 %v4001
    %v4659 = vpop.f32.mrb[0].mxu0
    %v4660 = vadd.f32 0.0, %v4659
    %v4661 = vpop.f32.mrb[0].mxu0
    %v4662 = vadd.f32 0.0, %v4661
    %v4663 = vpop.f32.mrb[0].mxu0
    %v4664 = vadd.f32 0.0, %v4663
    %v4665 = vpop.f32.mrb[0].mxu0
    %v4666 = vadd.f32 0.0, %v4665
    %4667 = vmatprep.mubr.bf16.mxu0 %v4004
    %4668 = vmatmul.mubr.bf16.gmra.mrb[0].mxu0 %v4003
    %v4669 = vpop.f32.mrb[0].mxu0
    %v4670 = vadd.f32 0.0, %v4669
    %v4671 = vpop.f32.mrb[0].mxu0
    %v4672 = vadd.f32 0.0, %v4671
    %v4673 = vpop.f32.mrb[0].mxu0
    %v4674 = vadd.f32 0.0, %v4673
    %v4675 = vpop.f32.mrb[0].mxu0
    %v4676 = vadd.f32 0.0, %v4675
    %4677 = vmatprep.mubr.bf16.mxu0 %v4006
    %4678 = vmatmul.mubr.bf16.gmra.mrb[0].mxu0 %v4005
    %v4679 = vpop.f32.mrb[0].mxu0
    %v4680 = vadd.f32 0.0, %v4679
    %v4681 = vpop.f32.mrb[0].mxu0
    %v4682 = vadd.f32 0.0, %v4681
    %v4683 = vpop.f32.mrb[0].mxu0
    %v4684 = vadd.f32 0.0, %v4683
    %v4685 = vpop.f32.mrb[0].mxu0
    %v4686 = vadd.f32 0.0, %v4685
    %4687 = vmatprep.mubr.bf16.mxu0 %v4008
    %4688 = vmatmul.mubr.bf16.gmra.mrb[0].mxu0 %v4007
    %v4689 = vpop.f32.mrb[0].mxu0
    %v4690 = vadd.f32 0.0, %v4689
    %v4691 = vpop.f32.mrb[0].mxu0
    %v4692 = vadd.f32 0.0, %v4691
    %v4693 = vpop.f32.mrb[0].mxu0
    %v4694 = vadd.f32 0.0, %v4693
    %v4695 = vpop.f32.mrb[0].mxu0
    %v4696 = vadd.f32 0.0, %v4695
    %4697 = vmatprep.mubr.bf16.mxu0 %v4010
    %4698 = vmatmul.mubr.bf16.gmra.mrb[0].mxu0 %v4009
    %v4699 = vpop.f32.mrb[0].mxu0
    %v4700 = vadd.f32 0.0, %v4699
    %v4701 = vpop.f32.mrb[0].mxu0
    %v4702 = vadd.f32 0.0, %v4701
    %v4703 = vpop.f32.mrb[0].mxu0
    %v4704 = vadd.f32 0.0, %v4703
    %v4705 = vpop.f32.mrb[0].mxu0
    %v4706 = vadd.f32 0.0, %v4705
    %4707 = vmatprep.mubr.bf16.mxu0 %v4012
    %4708 = vmatmul.mubr.bf16.gmra.mrb[0].mxu0 %v4011
    %v4709 = vpop.f32.mrb[0].mxu0
    %v4710 = vadd.f32 0.0, %v4709
    %v4711 = vpop.f32.mrb[0].mxu0
    %v4712 = vadd.f32 0.0, %v4711
    %v4713 = vpop.f32.mrb[0].mxu0
    %v4714 = vadd.f32 0.0, %v4713
    %v4715 = vpop.f32.mrb[0].mxu0
    %v4716 = vadd.f32 0.0, %v4715
    %4717 = vmatprep.mubr.bf16.mxu0 %v4014
    %4718 = vmatmul.mubr.bf16.gmra.mrb[0].mxu0 %v4013
    %v4719 = vpop.f32.mrb[0].mxu0
    %v4720 = vadd.f32 0.0, %v4719
    %v4721 = vpop.f32.mrb[0].mxu0
    %v4722 = vadd.f32 0.0, %v4721
    %v4723 = vpop.f32.mrb[0].mxu0
    %v4724 = vadd.f32 0.0, %v4723
    %v4725 = vpop.f32.mrb[0].mxu0
    %v4726 = vadd.f32 0.0, %v4725
    %4727 = vmatprep.mubr.bf16.mxu0 %v4016
    %4728 = vmatmul.mubr.bf16.gmra.mrb[0].mxu0 %v4015
    %v4729 = vpop.f32.mrb[0].mxu0
    %v4730 = vadd.f32 0.0, %v4729
    %v4731 = vpop.f32.mrb[0].mxu0
    %v4732 = vadd.f32 0.0, %v4731
    %v4733 = vpop.f32.mrb[0].mxu0
    %v4734 = vadd.f32 0.0, %v4733
    %v4735 = vpop.f32.mrb[0].mxu0
    %v4736 = vadd.f32 0.0, %v4735
    %4737 = vmatprep.mubr.bf16.mxu0 %v4018
    %4738 = vmatmul.mubr.bf16.gmra.mrb[0].mxu0 %v4017
    %v4739 = vpop.f32.mrb[0].mxu0
    %v4740 = vadd.f32 0.0, %v4739
    %v4741 = vpop.f32.mrb[0].mxu0
    %v4742 = vadd.f32 0.0, %v4741
    %v4743 = vpop.f32.mrb[0].mxu0
    %v4744 = vadd.f32 0.0, %v4743
    %v4745 = vpop.f32.mrb[0].mxu0
    %v4746 = vadd.f32 0.0, %v4745
    %4747 = vmatprep.mubr.bf16.mxu0 %v4020
    %4748 = vmatmul.mubr.bf16.gmra.mrb[0].mxu0 %v4019
    %v4749 = vpop.f32.mrb[0].mxu0
    %v4750 = vadd.f32 0.0, %v4749
    %v4751 = vpop.f32.mrb[0].mxu0
    %v4752 = vadd.f32 0.0, %v4751
    %v4753 = vpop.f32.mrb[0].mxu0
    %v4754 = vadd.f32 0.0, %v4753
    %v4755 = vpop.f32.mrb[0].mxu0
    %v4756 = vadd.f32 0.0, %v4755
    %4757 = vdwg.mxu0
    %4758 = vmatprep.subr.bf16.mxu0 %v4280
    %4759 = vmatpush1.bf16.msra.mxu0 %v4279
    %4760 = vmatprep.subr.bf16.mxu0 %v4284
    %4761 = vmatpush1.bf16.msra.mxu0 %v4283
    %4762 = vmatprep.subr.bf16.mxu0 %v4288
    %4763 = vmatpush1.bf16.msra.mxu0 %v4287
    %4764 = vmatprep.subr.bf16.mxu0 %v4292
    %4765 = vmatpush1.bf16.msra.mxu0 %v4291
    %4766 = vmatprep.subr.bf16.mxu0 %v4296
    %4767 = vmatpush1.bf16.msra.mxu0 %v4295
    %4768 = vmatprep.subr.bf16.mxu0 %v4300
    %4769 = vmatpush1.bf16.msra.mxu0 %v4299
    %4770 = vmatprep.subr.bf16.mxu0 %v4304
    %4771 = vmatpush1.bf16.msra.mxu0 %v4303
    %4772 = vmatprep.subr.bf16.mxu0 %v4308
    %4773 = vmatpush1.bf16.msra.mxu0 %v4307
    %4774 = vmatprep.subr.bf16.mxu0 %v4312
    %4775 = vmatpush1.bf16.msra.mxu0 %v4311
    %4776 = vmatprep.subr.bf16.mxu0 %v4316
    %4777 = vmatpush1.bf16.msra.mxu0 %v4315
    %4778 = vmatprep.subr.bf16.mxu0 %v4320
    %4779 = vmatpush1.bf16.msra.mxu0 %v4319
    %4780 = vmatprep.subr.bf16.mxu0 %v4324
    %4781 = vmatpush1.bf16.msra.mxu0 %v4323
    %4782 = vmatprep.subr.bf16.mxu0 %v4328
    %4783 = vmatpush1.bf16.msra.mxu0 %v4327
    %4784 = vmatprep.subr.bf16.mxu0 %v4332
    %4785 = vmatpush1.bf16.msra.mxu0 %v4331
    %4786 = vmatprep.subr.bf16.mxu0 %v4336
    %4787 = vmatpush1.bf16.msra.mxu0 %v4335
    %4788 = vmatprep.subr.bf16.mxu0 %v4340
    %4789 = vmatpush1.bf16.msra.mxu0 %v4339
    %4790 = vmatprep.mubr.bf16.mxu0 %v3958
    %4791 = vmatmul.mubr.bf16.gmra.mrb[0].mxu0 %v3957
    %v4792 = vpop.f32.mrb[0].mxu0
    %v4793 = vadd.f32 0.0, %v4792
    %v4794 = vpop.f32.mrb[0].mxu0
    %v4795 = vadd.f32 0.0, %v4794
    %v4796 = vpop.f32.mrb[0].mxu0
    %v4797 = vadd.f32 0.0, %v4796
    %v4798 = vpop.f32.mrb[0].mxu0
    %v4799 = vadd.f32 0.0, %v4798
    %4800 = vmatprep.mubr.bf16.mxu0 %v3960
    %4801 = vmatmul.mubr.bf16.gmra.mrb[0].mxu0 %v3959
    %v4802 = vpop.f32.mrb[0].mxu0
    %v4803 = vadd.f32 0.0, %v4802
    %v4804 = vpop.f32.mrb[0].mxu0
    %v4805 = vadd.f32 0.0, %v4804
    %v4806 = vpop.f32.mrb[0].mxu0
    %v4807 = vadd.f32 0.0, %v4806
    %v4808 = vpop.f32.mrb[0].mxu0
    %v4809 = vadd.f32 0.0, %v4808
    %4810 = vmatprep.mubr.bf16.mxu0 %v3962
    %4811 = vmatmul.mubr.bf16.gmra.mrb[0].mxu0 %v3961
    %v4812 = vpop.f32.mrb[0].mxu0
    %v4813 = vadd.f32 0.0, %v4812
    %v4814 = vpop.f32.mrb[0].mxu0
    %v4815 = vadd.f32 0.0, %v4814
    %v4816 = vpop.f32.mrb[0].mxu0
    %v4817 = vadd.f32 0.0, %v4816
    %v4818 = vpop.f32.mrb[0].mxu0
    %v4819 = vadd.f32 0.0, %v4818
    %4820 = vmatprep.mubr.bf16.mxu0 %v3964
    %4821 = vmatmul.mubr.bf16.gmra.mrb[0].mxu0 %v3963
    %v4822 = vpop.f32.mrb[0].mxu0
    %v4823 = vadd.f32 0.0, %v4822
    %v4824 = vpop.f32.mrb[0].mxu0
    %v4825 = vadd.f32 0.0, %v4824
    %v4826 = vpop.f32.mrb[0].mxu0
    %v4827 = vadd.f32 0.0, %v4826
    %v4828 = vpop.f32.mrb[0].mxu0
    %v4829 = vadd.f32 0.0, %v4828
    %4830 = vmatprep.mubr.bf16.mxu0 %v3966
    %4831 = vmatmul.mubr.bf16.gmra.mrb[0].mxu0 %v3965
    %v4832 = vpop.f32.mrb[0].mxu0
    %v4833 = vadd.f32 0.0, %v4832
    %v4834 = vpop.f32.mrb[0].mxu0
    %v4835 = vadd.f32 0.0, %v4834
    %v4836 = vpop.f32.mrb[0].mxu0
    %v4837 = vadd.f32 0.0, %v4836
    %v4838 = vpop.f32.mrb[0].mxu0
    %v4839 = vadd.f32 0.0, %v4838
    %4840 = vmatprep.mubr.bf16.mxu0 %v3968
    %4841 = vmatmul.mubr.bf16.gmra.mrb[0].mxu0 %v3967
    %v4842 = vpop.f32.mrb[0].mxu0
    %v4843 = vadd.f32 0.0, %v4842
    %v4844 = vpop.f32.mrb[0].mxu0
    %v4845 = vadd.f32 0.0, %v4844
    %v4846 = vpop.f32.mrb[0].mxu0
    %v4847 = vadd.f32 0.0, %v4846
    %v4848 = vpop.f32.mrb[0].mxu0
    %v4849 = vadd.f32 0.0, %v4848
    %4850 = vmatprep.mubr.bf16.mxu0 %v3970
    %4851 = vmatmul.mubr.bf16.gmra.mrb[0].mxu0 %v3969
    %v4852 = vpop.f32.mrb[0].mxu0
    %v4853 = vadd.f32 0.0, %v4852
    %v4854 = vpop.f32.mrb[0].mxu0
    %v4855 = vadd.f32 0.0, %v4854
    %v4856 = vpop.f32.mrb[0].mxu0
    %v4857 = vadd.f32 0.0, %v4856
    %v4858 = vpop.f32.mrb[0].mxu0
    %v4859 = vadd.f32 0.0, %v4858
    %4860 = vmatprep.mubr.bf16.mxu0 %v3972
    %4861 = vmatmul.mubr.bf16.gmra.mrb[0].mxu0 %v3971
    %v4862 = vpop.f32.mrb[0].mxu0
    %v4863 = vadd.f32 0.0, %v4862
    %v4864 = vpop.f32.mrb[0].mxu0
    %v4865 = vadd.f32 0.0, %v4864
    %v4866 = vpop.f32.mrb[0].mxu0
    %v4867 = vadd.f32 0.0, %v4866
    %v4868 = vpop.f32.mrb[0].mxu0
    %v4869 = vadd.f32 0.0, %v4868
    %4870 = vmatprep.mubr.bf16.mxu0 %v3974
    %4871 = vmatmul.mubr.bf16.gmra.mrb[0].mxu0 %v3973
    %v4872 = vpop.f32.mrb[0].mxu0
    %v4873 = vadd.f32 0.0, %v4872
    %v4874 = vpop.f32.mrb[0].mxu0
    %v4875 = vadd.f32 0.0, %v4874
    %v4876 = vpop.f32.mrb[0].mxu0
    %v4877 = vadd.f32 0.0, %v4876
    %v4878 = vpop.f32.mrb[0].mxu0
    %v4879 = vadd.f32 0.0, %v4878
    %4880 = vmatprep.mubr.bf16.mxu0 %v3976
    %4881 = vmatmul.mubr.bf16.gmra.mrb[0].mxu0 %v3975
    %v4882 = vpop.f32.mrb[0].mxu0
    %v4883 = vadd.f32 0.0, %v4882
    %v4884 = vpop.f32.mrb[0].mxu0
    %v4885 = vadd.f32 0.0, %v4884
    %v4886 = vpop.f32.mrb[0].mxu0
    %v4887 = vadd.f32 0.0, %v4886
    %v4888 = vpop.f32.mrb[0].mxu0
    %v4889 = vadd.f32 0.0, %v4888
    %4890 = vmatprep.mubr.bf16.mxu0 %v3978
    %4891 = vmatmul.mubr.bf16.gmra.mrb[0].mxu0 %v3977
    %v4892 = vpop.f32.mrb[0].mxu0
    %v4893 = vadd.f32 0.0, %v4892
    %v4894 = vpop.f32.mrb[0].mxu0
    %v4895 = vadd.f32 0.0, %v4894
    %v4896 = vpop.f32.mrb[0].mxu0
    %v4897 = vadd.f32 0.0, %v4896
    %v4898 = vpop.f32.mrb[0].mxu0
    %v4899 = vadd.f32 0.0, %v4898
    %4900 = vmatprep.mubr.bf16.mxu0 %v3980
    %4901 = vmatmul.mubr.bf16.gmra.mrb[0].mxu0 %v3979
    %v4902 = vpop.f32.mrb[0].mxu0
    %v4903 = vadd.f32 0.0, %v4902
    %v4904 = vpop.f32.mrb[0].mxu0
    %v4905 = vadd.f32 0.0, %v4904
    %v4906 = vpop.f32.mrb[0].mxu0
    %v4907 = vadd.f32 0.0, %v4906
    %v4908 = vpop.f32.mrb[0].mxu0
    %v4909 = vadd.f32 0.0, %v4908
    %4910 = vmatprep.mubr.bf16.mxu0 %v3982
    %4911 = vmatmul.mubr.bf16.gmra.mrb[0].mxu0 %v3981
    %v4912 = vpop.f32.mrb[0].mxu0
    %v4913 = vadd.f32 0.0, %v4912
    %v4914 = vpop.f32.mrb[0].mxu0
    %v4915 = vadd.f32 0.0, %v4914
    %v4916 = vpop.f32.mrb[0].mxu0
    %v4917 = vadd.f32 0.0, %v4916
    %v4918 = vpop.f32.mrb[0].mxu0
    %v4919 = vadd.f32 0.0, %v4918
    %4920 = vmatprep.mubr.bf16.mxu0 %v3984
    %4921 = vmatmul.mubr.bf16.gmra.mrb[0].mxu0 %v3983
    %v4922 = vpop.f32.mrb[0].mxu0
    %v4923 = vadd.f32 0.0, %v4922
    %v4924 = vpop.f32.mrb[0].mxu0
    %v4925 = vadd.f32 0.0, %v4924
    %v4926 = vpop.f32.mrb[0].mxu0
    %v4927 = vadd.f32 0.0, %v4926
    %v4928 = vpop.f32.mrb[0].mxu0
    %v4929 = vadd.f32 0.0, %v4928
    %4930 = vmatprep.mubr.bf16.mxu0 %v3986
    %4931 = vmatmul.mubr.bf16.gmra.mrb[0].mxu0 %v3985
    %v4932 = vpop.f32.mrb[0].mxu0
    %v4933 = vadd.f32 0.0, %v4932
    %v4934 = vpop.f32.mrb[0].mxu0
    %v4935 = vadd.f32 0.0, %v4934
    %v4936 = vpop.f32.mrb[0].mxu0
    %v4937 = vadd.f32 0.0, %v4936
    %v4938 = vpop.f32.mrb[0].mxu0
    %v4939 = vadd.f32 0.0, %v4938
    %4940 = vmatprep.mubr.bf16.mxu0 %v3988
    %4941 = vmatmul.mubr.bf16.gmra.mrb[0].mxu0 %v3987
    %v4942 = vpop.f32.mrb[0].mxu0
    %v4943 = vadd.f32 0.0, %v4942
    %v4944 = vpop.f32.mrb[0].mxu0
    %v4945 = vadd.f32 0.0, %v4944
    %v4946 = vpop.f32.mrb[0].mxu0
    %v4947 = vadd.f32 0.0, %v4946
    %v4948 = vpop.f32.mrb[0].mxu0
    %v4949 = vadd.f32 0.0, %v4948
    %4950 = vmatprep.mubr.bf16.mxu0 %v3990
    %4951 = vmatmul.mubr.bf16.gmra.mrb[0].mxu0 %v3989
    %v4952 = vpop.f32.mrb[0].mxu0
    %v4953 = vadd.f32 0.0, %v4952
    %v4954 = vpop.f32.mrb[0].mxu0
    %v4955 = vadd.f32 0.0, %v4954
    %v4956 = vpop.f32.mrb[0].mxu0
    %v4957 = vadd.f32 0.0, %v4956
    %v4958 = vpop.f32.mrb[0].mxu0
    %v4959 = vadd.f32 0.0, %v4958
    %4960 = vmatprep.mubr.bf16.mxu0 %v3992
    %4961 = vmatmul.mubr.bf16.gmra.mrb[0].mxu0 %v3991
    %v4962 = vpop.f32.mrb[0].mxu0
    %v4963 = vadd.f32 0.0, %v4962
    %v4964 = vpop.f32.mrb[0].mxu0
    %v4965 = vadd.f32 0.0, %v4964
    %v4966 = vpop.f32.mrb[0].mxu0
    %v4967 = vadd.f32 0.0, %v4966
    %v4968 = vpop.f32.mrb[0].mxu0
    %v4969 = vadd.f32 0.0, %v4968
    %4970 = vmatprep.mubr.bf16.mxu0 %v3994
    %4971 = vmatmul.mubr.bf16.gmra.mrb[0].mxu0 %v3993
    %v4972 = vpop.f32.mrb[0].mxu0
    %v4973 = vadd.f32 0.0, %v4972
    %v4974 = vpop.f32.mrb[0].mxu0
    %v4975 = vadd.f32 0.0, %v4974
    %v4976 = vpop.f32.mrb[0].mxu0
    %v4977 = vadd.f32 0.0, %v4976
    %v4978 = vpop.f32.mrb[0].mxu0
    %v4979 = vadd.f32 0.0, %v4978
    %4980 = vmatprep.mubr.bf16.mxu0 %v3996
    %4981 = vmatmul.mubr.bf16.gmra.mrb[0].mxu0 %v3995
    %v4982 = vpop.f32.mrb[0].mxu0
    %v4983 = vadd.f32 0.0, %v4982
    %v4984 = vpop.f32.mrb[0].mxu0
    %v4985 = vadd.f32 0.0, %v4984
    %v4986 = vpop.f32.mrb[0].mxu0
    %v4987 = vadd.f32 0.0, %v4986
    %v4988 = vpop.f32.mrb[0].mxu0
    %v4989 = vadd.f32 0.0, %v4988
    %4990 = vmatprep.mubr.bf16.mxu0 %v3998
    %4991 = vmatmul.mubr.bf16.gmra.mrb[0].mxu0 %v3997
    %v4992 = vpop.f32.mrb[0].mxu0
    %v4993 = vadd.f32 0.0, %v4992
    %v4994 = vpop.f32.mrb[0].mxu0
    %v4995 = vadd.f32 0.0, %v4994
    %v4996 = vpop.f32.mrb[0].mxu0
    %v4997 = vadd.f32 0.0, %v4996
    %v4998 = vpop.f32.mrb[0].mxu0
    %v4999 = vadd.f32 0.0, %v4998
    %5000 = vmatprep.mubr.bf16.mxu0 %v4000
    %5001 = vmatmul.mubr.bf16.gmra.mrb[0].mxu0 %v3999
    %v5002 = vpop.f32.mrb[0].mxu0
    %v5003 = vadd.f32 0.0, %v5002
    %v5004 = vpop.f32.mrb[0].mxu0
    %v5005 = vadd.f32 0.0, %v5004
    %v5006 = vpop.f32.mrb[0].mxu0
    %v5007 = vadd.f32 0.0, %v5006
    %v5008 = vpop.f32.mrb[0].mxu0
    %v5009 = vadd.f32 0.0, %v5008
    %5010 = vmatprep.mubr.bf16.mxu0 %v4002
    %5011 = vmatmul.mubr.bf16.gmra.mrb[0].mxu0 %v4001
    %v5012 = vpop.f32.mrb[0].mxu0
    %v5013 = vadd.f32 0.0, %v5012
    %v5014 = vpop.f32.mrb[0].mxu0
    %v5015 = vadd.f32 0.0, %v5014
    %v5016 = vpop.f32.mrb[0].mxu0
    %v5017 = vadd.f32 0.0, %v5016
    %v5018 = vpop.f32.mrb[0].mxu0
    %v5019 = vadd.f32 0.0, %v5018
    %5020 = vmatprep.mubr.bf16.mxu0 %v4004
    %5021 = vmatmul.mubr.bf16.gmra.mrb[0].mxu0 %v4003
    %v5022 = vpop.f32.mrb[0].mxu0
    %v5023 = vadd.f32 0.0, %v5022
    %v5024 = vpop.f32.mrb[0].mxu0
    %v5025 = vadd.f32 0.0, %v5024
    %v5026 = vpop.f32.mrb[0].mxu0
    %v5027 = vadd.f32 0.0, %v5026
    %v5028 = vpop.f32.mrb[0].mxu0
    %v5029 = vadd.f32 0.0, %v5028
    %5030 = vmatprep.mubr.bf16.mxu0 %v4006
    %5031 = vmatmul.mubr.bf16.gmra.mrb[0].mxu0 %v4005
    %v5032 = vpop.f32.mrb[0].mxu0
    %v5033 = vadd.f32 0.0, %v5032
    %v5034 = vpop.f32.mrb[0].mxu0
    %v5035 = vadd.f32 0.0, %v5034
    %v5036 = vpop.f32.mrb[0].mxu0
    %v5037 = vadd.f32 0.0, %v5036
    %v5038 = vpop.f32.mrb[0].mxu0
    %v5039 = vadd.f32 0.0, %v5038
    %5040 = vmatprep.mubr.bf16.mxu0 %v4008
    %5041 = vmatmul.mubr.bf16.gmra.mrb[0].mxu0 %v4007
    %v5042 = vpop.f32.mrb[0].mxu0
    %v5043 = vadd.f32 0.0, %v5042
    %v5044 = vpop.f32.mrb[0].mxu0
    %v5045 = vadd.f32 0.0, %v5044
    %v5046 = vpop.f32.mrb[0].mxu0
    %v5047 = vadd.f32 0.0, %v5046
    %v5048 = vpop.f32.mrb[0].mxu0
    %v5049 = vadd.f32 0.0, %v5048
    %5050 = vmatprep.mubr.bf16.mxu0 %v4010
    %5051 = vmatmul.mubr.bf16.gmra.mrb[0].mxu0 %v4009
    %v5052 = vpop.f32.mrb[0].mxu0
    %v5053 = vadd.f32 0.0, %v5052
    %v5054 = vpop.f32.mrb[0].mxu0
    %v5055 = vadd.f32 0.0, %v5054
    %v5056 = vpop.f32.mrb[0].mxu0
    %v5057 = vadd.f32 0.0, %v5056
    %v5058 = vpop.f32.mrb[0].mxu0
    %v5059 = vadd.f32 0.0, %v5058
    %5060 = vmatprep.mubr.bf16.mxu0 %v4012
    %5061 = vmatmul.mubr.bf16.gmra.mrb[0].mxu0 %v4011
    %v5062 = vpop.f32.mrb[0].mxu0
    %v5063 = vadd.f32 0.0, %v5062
    %v5064 = vpop.f32.mrb[0].mxu0
    %v5065 = vadd.f32 0.0, %v5064
    %v5066 = vpop.f32.mrb[0].mxu0
    %v5067 = vadd.f32 0.0, %v5066
    %v5068 = vpop.f32.mrb[0].mxu0
    %v5069 = vadd.f32 0.0, %v5068
    %5070 = vmatprep.mubr.bf16.mxu0 %v4014
    %5071 = vmatmul.mubr.bf16.gmra.mrb[0].mxu0 %v4013
    %v5072 = vpop.f32.mrb[0].mxu0
    %v5073 = vadd.f32 0.0, %v5072
    %v5074 = vpop.f32.mrb[0].mxu0
    %v5075 = vadd.f32 0.0, %v5074
    %v5076 = vpop.f32.mrb[0].mxu0
    %v5077 = vadd.f32 0.0, %v5076
    %v5078 = vpop.f32.mrb[0].mxu0
    %v5079 = vadd.f32 0.0, %v5078
    %5080 = vmatprep.mubr.bf16.mxu0 %v4016
    %5081 = vmatmul.mubr.bf16.gmra.mrb[0].mxu0 %v4015
    %v5082 = vpop.f32.mrb[0].mxu0
    %v5083 = vadd.f32 0.0, %v5082
    %v5084 = vpop.f32.mrb[0].mxu0
    %v5085 = vadd.f32 0.0, %v5084
    %v5086 = vpop.f32.mrb[0].mxu0
    %v5087 = vadd.f32 0.0, %v5086
    %v5088 = vpop.f32.mrb[0].mxu0
    %v5089 = vadd.f32 0.0, %v5088
    %5090 = vmatprep.mubr.bf16.mxu0 %v4018
    %5091 = vmatmul.mubr.bf16.gmra.mrb[0].mxu0 %v4017
    %v5092 = vpop.f32.mrb[0].mxu0
    %v5093 = vadd.f32 0.0, %v5092
    %v5094 = vpop.f32.mrb[0].mxu0
    %v5095 = vadd.f32 0.0, %v5094
    %v5096 = vpop.f32.mrb[0].mxu0
    %v5097 = vadd.f32 0.0, %v5096
    %v5098 = vpop.f32.mrb[0].mxu0
    %v5099 = vadd.f32 0.0, %v5098
    %5100 = vmatprep.mubr.bf16.mxu0 %v4020
    %5101 = vmatmul.mubr.bf16.gmra.mrb[0].mxu0 %v4019
    %v5102 = vpop.f32.mrb[0].mxu0
    %v5103 = vadd.f32 0.0, %v5102
    %v5104 = vpop.f32.mrb[0].mxu0
    %v5105 = vadd.f32 0.0, %v5104
    %v5106 = vpop.f32.mrb[0].mxu0
    %v5107 = vadd.f32 0.0, %v5106
    %v5108 = vpop.f32.mrb[0].mxu0
    %v5109 = vadd.f32 0.0, %v5108
    %5110 = vdwg.mxu0
    %v5111 = vpack.c.bf16 %v4444, %v4440
    %v5112 = vpack.c.bf16 %v4446, %v4442
    %v5113 = vpack.c.bf16 %v4797, %v4793
    %v5114 = vpack.c.bf16 %v4799, %v4795
    %v5115 = vpack.c.bf16 %v4454, %v4450
    %v5116 = vpack.c.bf16 %v4456, %v4452
    %v5117 = vpack.c.bf16 %v4807, %v4803
    %v5118 = vpack.c.bf16 %v4809, %v4805
    %v5119 = vpack.c.bf16 %v4464, %v4460
    %v5120 = vpack.c.bf16 %v4466, %v4462
    %v5121 = vpack.c.bf16 %v4817, %v4813
    %v5122 = vpack.c.bf16 %v4819, %v4815
    %v5123 = vpack.c.bf16 %v4474, %v4470
    %v5124 = vpack.c.bf16 %v4476, %v4472
    %v5125 = vpack.c.bf16 %v4827, %v4823
    %v5126 = vpack.c.bf16 %v4829, %v4825
    %v5127 = vpack.c.bf16 %v4484, %v4480
    %v5128 = vpack.c.bf16 %v4486, %v4482
    %v5129 = vpack.c.bf16 %v4837, %v4833
    %v5130 = vpack.c.bf16 %v4839, %v4835
    %v5131 = vpack.c.bf16 %v4494, %v4490
    %v5132 = vpack.c.bf16 %v4496, %v4492
    %v5133 = vpack.c.bf16 %v4847, %v4843
    %v5134 = vpack.c.bf16 %v4849, %v4845
    %v5135 = vpack.c.bf16 %v4504, %v4500
    %v5136 = vpack.c.bf16 %v4506, %v4502
    %v5137 = vpack.c.bf16 %v4857, %v4853
    %v5138 = vpack.c.bf16 %v4859, %v4855
    %v5139 = vpack.c.bf16 %v4514, %v4510
    %v5140 = vpack.c.bf16 %v4516, %v4512
    %v5141 = vpack.c.bf16 %v4867, %v4863
    %v5142 = vpack.c.bf16 %v4869, %v4865
    %v5143 = vpack.c.bf16 %v4524, %v4520
    %v5144 = vpack.c.bf16 %v4526, %v4522
    %v5145 = vpack.c.bf16 %v4877, %v4873
    %v5146 = vpack.c.bf16 %v4879, %v4875
    %v5147 = vpack.c.bf16 %v4534, %v4530
    %v5148 = vpack.c.bf16 %v4536, %v4532
    %v5149 = vpack.c.bf16 %v4887, %v4883
    %v5150 = vpack.c.bf16 %v4889, %v4885
    %v5151 = vpack.c.bf16 %v4544, %v4540
    %v5152 = vpack.c.bf16 %v4546, %v4542
    %v5153 = vpack.c.bf16 %v4897, %v4893
    %v5154 = vpack.c.bf16 %v4899, %v4895
    %v5155 = vpack.c.bf16 %v4554, %v4550
    %v5156 = vpack.c.bf16 %v4556, %v4552
    %v5157 = vpack.c.bf16 %v4907, %v4903
    %v5158 = vpack.c.bf16 %v4909, %v4905
    %v5159 = vpack.c.bf16 %v4564, %v4560
    %v5160 = vpack.c.bf16 %v4566, %v4562
    %v5161 = vpack.c.bf16 %v4917, %v4913
    %v5162 = vpack.c.bf16 %v4919, %v4915
    %v5163 = vpack.c.bf16 %v4574, %v4570
    %v5164 = vpack.c.bf16 %v4576, %v4572
    %v5165 = vpack.c.bf16 %v4927, %v4923
    %v5166 = vpack.c.bf16 %v4929, %v4925
    %v5167 = vpack.c.bf16 %v4584, %v4580
    %v5168 = vpack.c.bf16 %v4586, %v4582
    %v5169 = vpack.c.bf16 %v4937, %v4933
    %v5170 = vpack.c.bf16 %v4939, %v4935
    %v5171 = vpack.c.bf16 %v4594, %v4590
    %v5172 = vpack.c.bf16 %v4596, %v4592
    %v5173 = vpack.c.bf16 %v4947, %v4943
    %v5174 = vpack.c.bf16 %v4949, %v4945
    %v5175 = vpack.c.bf16 %v4604, %v4600
    %v5176 = vpack.c.bf16 %v4606, %v4602
    %v5177 = vpack.c.bf16 %v4957, %v4953
    %v5178 = vpack.c.bf16 %v4959, %v4955
    %v5179 = vpack.c.bf16 %v4614, %v4610
    %v5180 = vpack.c.bf16 %v4616, %v4612
    %v5181 = vpack.c.bf16 %v4967, %v4963
    %v5182 = vpack.c.bf16 %v4969, %v4965
    %v5183 = vpack.c.bf16 %v4624, %v4620
    %v5184 = vpack.c.bf16 %v4626, %v4622
    %v5185 = vpack.c.bf16 %v4977, %v4973
    %v5186 = vpack.c.bf16 %v4979, %v4975
    %v5187 = vpack.c.bf16 %v4634, %v4630
    %v5188 = vpack.c.bf16 %v4636, %v4632
    %v5189 = vpack.c.bf16 %v4987, %v4983
    %v5190 = vpack.c.bf16 %v4989, %v4985
    %v5191 = vpack.c.bf16 %v4644, %v4640
    %v5192 = vpack.c.bf16 %v4646, %v4642
    %v5193 = vpack.c.bf16 %v4997, %v4993
    %v5194 = vpack.c.bf16 %v4999, %v4995
    %v5195 = vpack.c.bf16 %v4654, %v4650
    %v5196 = vpack.c.bf16 %v4656, %v4652
    %v5197 = vpack.c.bf16 %v5007, %v5003
    %v5198 = vpack.c.bf16 %v5009, %v5005
    %v5199 = vpack.c.bf16 %v4664, %v4660
    %v5200 = vpack.c.bf16 %v4666, %v4662
    %v5201 = vpack.c.bf16 %v5017, %v5013
    %v5202 = vpack.c.bf16 %v5019, %v5015
    %v5203 = vpack.c.bf16 %v4674, %v4670
    %v5204 = vpack.c.bf16 %v4676, %v4672
    %v5205 = vpack.c.bf16 %v5027, %v5023
    %v5206 = vpack.c.bf16 %v5029, %v5025
    %v5207 = vpack.c.bf16 %v4684, %v4680
    %v5208 = vpack.c.bf16 %v4686, %v4682
    %v5209 = vpack.c.bf16 %v5037, %v5033
    %v5210 = vpack.c.bf16 %v5039, %v5035
    %v5211 = vpack.c.bf16 %v4694, %v4690
    %v5212 = vpack.c.bf16 %v4696, %v4692
    %v5213 = vpack.c.bf16 %v5047, %v5043
    %v5214 = vpack.c.bf16 %v5049, %v5045
    %v5215 = vpack.c.bf16 %v4704, %v4700
    %v5216 = vpack.c.bf16 %v4706, %v4702
    %v5217 = vpack.c.bf16 %v5057, %v5053
    %v5218 = vpack.c.bf16 %v5059, %v5055
    %v5219 = vpack.c.bf16 %v4714, %v4710
    %v5220 = vpack.c.bf16 %v4716, %v4712
    %v5221 = vpack.c.bf16 %v5067, %v5063
    %v5222 = vpack.c.bf16 %v5069, %v5065
    %v5223 = vpack.c.bf16 %v4724, %v4720
    %v5224 = vpack.c.bf16 %v4726, %v4722
    %v5225 = vpack.c.bf16 %v5077, %v5073
    %v5226 = vpack.c.bf16 %v5079, %v5075
    %v5227 = vpack.c.bf16 %v4734, %v4730
    %v5228 = vpack.c.bf16 %v4736, %v4732
    %v5229 = vpack.c.bf16 %v5087, %v5083
    %v5230 = vpack.c.bf16 %v5089, %v5085
    %v5231 = vpack.c.bf16 %v4744, %v4740
    %v5232 = vpack.c.bf16 %v4746, %v4742
    %v5233 = vpack.c.bf16 %v5097, %v5093
    %v5234 = vpack.c.bf16 %v5099, %v5095
    %v5235 = vpack.c.bf16 %v4754, %v4750
    %v5236 = vpack.c.bf16 %v4756, %v4752
    %v5237 = vpack.c.bf16 %v5107, %v5103
    %v5238 = vpack.c.bf16 %v5109, %v5105
    %v5239 = vpack.c.bf16 %v3902, %v3902
    %v5240 = vpack.c.bf16 %v3906, %v3906
    %v5241 = vpack.c.bf16 %v3910, %v3910
    %v5242 = vpack.c.bf16 %v3914, %v3914
    %v5244 = vpack.i.b16 %v5239, %v5239
    %v5246 = vlaneseq
    %v5247 = vshrl.u32 %v5246, 7
    %v5248 = vsub.s32 0, %v5247
    %v5249 = vrot.slane %v5244, %v5248
    %v5251 = vpack.i.b16 %v5240, %v5240
    %v5253 = vlaneseq
    %v5254 = vshrl.u32 %v5253, 7
    %v5255 = vsub.s32 0, %v5254
    %v5256 = vrot.slane %v5251, %v5255
    %v5258 = vpack.i.b16 %v5241, %v5241
    %v5260 = vlaneseq
    %v5261 = vshrl.u32 %v5260, 7
    %v5262 = vsub.s32 0, %v5261
    %v5263 = vrot.slane %v5258, %v5262
    %v5265 = vpack.i.b16 %v5242, %v5242
    %v5267 = vlaneseq
    %v5268 = vshrl.u32 %v5267, 7
    %v5269 = vsub.s32 0, %v5268
    %v5270 = vrot.slane %v5265, %v5269
    %v5271 = vmul.bf16 %v5111, %v5249
    %v5272 = vmul.bf16 %v5112, %v5256
    %v5273 = vmul.bf16 %v5113, %v5263
    %v5274 = vmul.bf16 %v5114, %v5270
    %v5275 = vmul.bf16 %v5115, %v5249
    %v5276 = vmul.bf16 %v5116, %v5256
    %v5277 = vmul.bf16 %v5117, %v5263
    %v5278 = vmul.bf16 %v5118, %v5270
    %v5279 = vmul.bf16 %v5119, %v5249
    %v5280 = vmul.bf16 %v5120, %v5256
    %v5281 = vmul.bf16 %v5121, %v5263
    %v5282 = vmul.bf16 %v5122, %v5270
    %v5283 = vmul.bf16 %v5123, %v5249
    %v5284 = vmul.bf16 %v5124, %v5256
    %v5285 = vmul.bf16 %v5125, %v5263
    %v5286 = vmul.bf16 %v5126, %v5270
    %v5287 = vmul.bf16 %v5127, %v5249
    %v5288 = vmul.bf16 %v5128, %v5256
    %v5289 = vmul.bf16 %v5129, %v5263
    %v5290 = vmul.bf16 %v5130, %v5270
    %v5291 = vmul.bf16 %v5131, %v5249
    %v5292 = vmul.bf16 %v5132, %v5256
    %v5293 = vmul.bf16 %v5133, %v5263
    %v5294 = vmul.bf16 %v5134, %v5270
    %v5295 = vmul.bf16 %v5135, %v5249
    %v5296 = vmul.bf16 %v5136, %v5256
    %v5297 = vmul.bf16 %v5137, %v5263
    %v5298 = vmul.bf16 %v5138, %v5270
    %v5299 = vmul.bf16 %v5139, %v5249
    %v5300 = vmul.bf16 %v5140, %v5256
    %v5301 = vmul.bf16 %v5141, %v5263
    %v5302 = vmul.bf16 %v5142, %v5270
    %v5303 = vmul.bf16 %v5143, %v5249
    %v5304 = vmul.bf16 %v5144, %v5256
    %v5305 = vmul.bf16 %v5145, %v5263
    %v5306 = vmul.bf16 %v5146, %v5270
    %v5307 = vmul.bf16 %v5147, %v5249
    %v5308 = vmul.bf16 %v5148, %v5256
    %v5309 = vmul.bf16 %v5149, %v5263
    %v5310 = vmul.bf16 %v5150, %v5270
    %v5311 = vmul.bf16 %v5151, %v5249
    %v5312 = vmul.bf16 %v5152, %v5256
    %v5313 = vmul.bf16 %v5153, %v5263
    %v5314 = vmul.bf16 %v5154, %v5270
    %v5315 = vmul.bf16 %v5155, %v5249
    %v5316 = vmul.bf16 %v5156, %v5256
    %v5317 = vmul.bf16 %v5157, %v5263
    %v5318 = vmul.bf16 %v5158, %v5270
    %v5319 = vmul.bf16 %v5159, %v5249
    %v5320 = vmul.bf16 %v5160, %v5256
    %v5321 = vmul.bf16 %v5161, %v5263
    %v5322 = vmul.bf16 %v5162, %v5270
    %v5323 = vmul.bf16 %v5163, %v5249
    %v5324 = vmul.bf16 %v5164, %v5256
    %v5325 = vmul.bf16 %v5165, %v5263
    %v5326 = vmul.bf16 %v5166, %v5270
    %v5327 = vmul.bf16 %v5167, %v5249
    %v5328 = vmul.bf16 %v5168, %v5256
    %v5329 = vmul.bf16 %v5169, %v5263
    %v5330 = vmul.bf16 %v5170, %v5270
    %v5331 = vmul.bf16 %v5171, %v5249
    %v5332 = vmul.bf16 %v5172, %v5256
    %v5333 = vmul.bf16 %v5173, %v5263
    %v5334 = vmul.bf16 %v5174, %v5270
    %v5335 = vmul.bf16 %v5175, %v5249
    %v5336 = vmul.bf16 %v5176, %v5256
    %v5337 = vmul.bf16 %v5177, %v5263
    %v5338 = vmul.bf16 %v5178, %v5270
    %v5339 = vmul.bf16 %v5179, %v5249
    %v5340 = vmul.bf16 %v5180, %v5256
    %v5341 = vmul.bf16 %v5181, %v5263
    %v5342 = vmul.bf16 %v5182, %v5270
    %v5343 = vmul.bf16 %v5183, %v5249
    %v5344 = vmul.bf16 %v5184, %v5256
    %v5345 = vmul.bf16 %v5185, %v5263
    %v5346 = vmul.bf16 %v5186, %v5270
    %v5347 = vmul.bf16 %v5187, %v5249
    %v5348 = vmul.bf16 %v5188, %v5256
    %v5349 = vmul.bf16 %v5189, %v5263
    %v5350 = vmul.bf16 %v5190, %v5270
    %v5351 = vmul.bf16 %v5191, %v5249
    %v5352 = vmul.bf16 %v5192, %v5256
    %v5353 = vmul.bf16 %v5193, %v5263
    %v5354 = vmul.bf16 %v5194, %v5270
    %v5355 = vmul.bf16 %v5195, %v5249
    %v5356 = vmul.bf16 %v5196, %v5256
    %v5357 = vmul.bf16 %v5197, %v5263
    %v5358 = vmul.bf16 %v5198, %v5270
    %v5359 = vmul.bf16 %v5199, %v5249
    %v5360 = vmul.bf16 %v5200, %v5256
    %v5361 = vmul.bf16 %v5201, %v5263
    %v5362 = vmul.bf16 %v5202, %v5270
    %v5363 = vmul.bf16 %v5203, %v5249
    %v5364 = vmul.bf16 %v5204, %v5256
    %v5365 = vmul.bf16 %v5205, %v5263
    %v5366 = vmul.bf16 %v5206, %v5270
    %v5367 = vmul.bf16 %v5207, %v5249
    %v5368 = vmul.bf16 %v5208, %v5256
    %v5369 = vmul.bf16 %v5209, %v5263
    %v5370 = vmul.bf16 %v5210, %v5270
    %v5371 = vmul.bf16 %v5211, %v5249
    %v5372 = vmul.bf16 %v5212, %v5256
    %v5373 = vmul.bf16 %v5213, %v5263
    %v5374 = vmul.bf16 %v5214, %v5270
    %v5375 = vmul.bf16 %v5215, %v5249
    %v5376 = vmul.bf16 %v5216, %v5256
    %v5377 = vmul.bf16 %v5217, %v5263
    %v5378 = vmul.bf16 %v5218, %v5270
    %v5379 = vmul.bf16 %v5219, %v5249
    %v5380 = vmul.bf16 %v5220, %v5256
    %v5381 = vmul.bf16 %v5221, %v5263
    %v5382 = vmul.bf16 %v5222, %v5270
    %v5383 = vmul.bf16 %v5223, %v5249
    %v5384 = vmul.bf16 %v5224, %v5256
    %v5385 = vmul.bf16 %v5225, %v5263
    %v5386 = vmul.bf16 %v5226, %v5270
    %v5387 = vmul.bf16 %v5227, %v5249
    %v5388 = vmul.bf16 %v5228, %v5256
    %v5389 = vmul.bf16 %v5229, %v5263
    %v5390 = vmul.bf16 %v5230, %v5270
    %v5391 = vmul.bf16 %v5231, %v5249
    %v5392 = vmul.bf16 %v5232, %v5256
    %v5393 = vmul.bf16 %v5233, %v5263
    %v5394 = vmul.bf16 %v5234, %v5270
    %v5395 = vmul.bf16 %v5235, %v5249
    %v5396 = vmul.bf16 %v5236, %v5256
    %v5397 = vmul.bf16 %v5237, %v5263
    %v5398 = vmul.bf16 %v5238, %v5270
    %v5399 = vpack.c.bf16 %v3953, %v3949
    %v5400 = vpack.c.bf16 %v3954, %v3950
    %v5401 = vpack.c.bf16 %v3955, %v3951
    %v5402 = vpack.c.bf16 %v3956, %v3952
    %v5407 = vcombine.low %v5399, %v5400
    %v5408 = vcombine.high %v5399, %v5400
    %v5409 = vcombine.low %v5401, %v5402
    %v5410 = vcombine.high %v5401, %v5402
    %v5412 = vunpack.c.l.s4 1966171168
    %v5413 = vunpack.c.0.s8 %v5412
    %v5414 = vlaneseq
    %v5415 = vshrl.u32 %v5414, 7
    %v5416 = vsub.s32 %v5413, %v5415
    %v5417 = vrot.slane %v5407, %v5416
    %v5419 = vunpack.c.l.s4 1966171168
    %v5420 = vunpack.c.0.s8 %v5419
    %v5421 = vlaneseq
    %v5422 = vshrl.u32 %v5421, 7
    %v5423 = vsub.s32 %v5420, %v5422
    %v5424 = vrot.slane %v5408, %v5423
    %v5426 = vunpack.c.l.s4 1966171168
    %v5427 = vunpack.c.0.s8 %v5426
    %v5428 = vlaneseq
    %v5429 = vshrl.u32 %v5428, 7
    %v5430 = vsub.s32 %v5427, %v5429
    %v5431 = vrot.slane %v5409, %v5430
    %v5433 = vunpack.c.l.s4 1966171168
    %v5434 = vunpack.c.0.s8 %v5433
    %v5435 = vlaneseq
    %v5436 = vshrl.u32 %v5435, 7
    %v5437 = vsub.s32 %v5434, %v5436
    %v5438 = vrot.slane %v5410, %v5437
    %v5439 = vcombine.low %v5417, %v5431
    %v5440 = vcombine.high %v5417, %v5431
    %v5441 = vcombine.low %v5424, %v5438
    %v5442 = vcombine.high %v5424, %v5438
    %v5444 = vunpack.c.l.s4 1966171168
    %v5445 = vunpack.c.0.s8 %v5444
    %v5446 = vlaneseq
    %v5447 = vshrl.u32 %v5446, 7
    %v5448 = vsub.s32 %v5445, %v5447
    %v5449 = vrot.slane %v5439, %v5448
    %v5451 = vunpack.c.l.s4 1966171168
    %v5452 = vunpack.c.0.s8 %v5451
    %v5453 = vlaneseq
    %v5454 = vshrl.u32 %v5453, 7
    %v5455 = vsub.s32 %v5452, %v5454
    %v5456 = vrot.slane %v5441, %v5455
    %v5458 = vunpack.c.l.s4 1966171168
    %v5459 = vunpack.c.0.s8 %v5458
    %v5460 = vlaneseq
    %v5461 = vshrl.u32 %v5460, 7
    %v5462 = vsub.s32 %v5459, %v5461
    %v5463 = vrot.slane %v5440, %v5462
    %v5465 = vunpack.c.l.s4 1966171168
    %v5466 = vunpack.c.0.s8 %v5465
    %v5467 = vlaneseq
    %v5468 = vshrl.u32 %v5467, 7
    %v5469 = vsub.s32 %v5466, %v5468
    %v5470 = vrot.slane %v5442, %v5469
    %v5471 = vcombine.high %v5449, %v5449
    %v5472 = vcombine.high %v5456, %v5456
    %v5473 = vcombine.high %v5463, %v5463
    %v5474 = vcombine.high %v5470, %v5470
    %v5475 = vunpack.i.l.s16 %v5449
    %v5476 = vunpack.i.h.s16 %v5449
    %v5477 = vunpack.i.l.s16 %v5463
    %v5478 = vunpack.i.h.s16 %v5463
    %v5479 = vunpack.i.l.s16 %v5471
    %v5480 = vunpack.i.h.s16 %v5471
    %v5481 = vunpack.i.l.s16 %v5473
    %v5482 = vunpack.i.h.s16 %v5473
    %v5483 = vunpack.i.l.s16 %v5456
    %v5484 = vunpack.i.h.s16 %v5456
    %v5485 = vunpack.i.l.s16 %v5470
    %v5486 = vunpack.i.h.s16 %v5470
    %v5487 = vunpack.i.l.s16 %v5472
    %v5488 = vunpack.i.h.s16 %v5472
    %v5489 = vunpack.i.l.s16 %v5474
    %v5490 = vunpack.i.h.s16 %v5474
    %v5491 = vpack.i.b16 %v5475, %v5475
    %v5492 = vpack.i.b16 %v5476, %v5476
    %v5493 = vpack.i.b16 %v5477, %v5477
    %v5494 = vpack.i.b16 %v5478, %v5478
    %v5495 = vpack.i.b16 %v5479, %v5479
    %v5496 = vpack.i.b16 %v5480, %v5480
    %v5497 = vpack.i.b16 %v5481, %v5481
    %v5498 = vpack.i.b16 %v5482, %v5482
    %v5499 = vpack.i.b16 %v5483, %v5483
    %v5500 = vpack.i.b16 %v5484, %v5484
    %v5501 = vpack.i.b16 %v5485, %v5485
    %v5502 = vpack.i.b16 %v5486, %v5486
    %v5503 = vpack.i.b16 %v5487, %v5487
    %v5504 = vpack.i.b16 %v5488, %v5488
    %v5505 = vpack.i.b16 %v5489, %v5489
    %v5506 = vpack.i.b16 %v5490, %v5490
    %v5507 = vlaneseq
    %v5508 = vshrl.u32 %v5507, 7
    %v5509 = vsub.s32 0, %v5508
    %v5510 = vrot.slane %v5491, %v5509
    %v5511 = vlaneseq
    %v5512 = vshrl.u32 %v5511, 7
    %v5513 = vsub.s32 1, %v5512
    %v5514 = vrot.slane %v5491, %v5513
    %v5515 = vlaneseq
    %v5516 = vshrl.u32 %v5515, 7
    %v5517 = vsub.s32 2, %v5516
    %v5518 = vrot.slane %v5491, %v5517
    %v5519 = vlaneseq
    %v5520 = vshrl.u32 %v5519, 7
    %v5521 = vsub.s32 3, %v5520
    %v5522 = vrot.slane %v5491, %v5521
    %v5523 = vlaneseq
    %v5524 = vshrl.u32 %v5523, 7
    %v5525 = vsub.s32 0, %v5524
    %v5526 = vrot.slane %v5492, %v5525
    %v5527 = vlaneseq
    %v5528 = vshrl.u32 %v5527, 7
    %v5529 = vsub.s32 1, %v5528
    %v5530 = vrot.slane %v5492, %v5529
    %v5531 = vlaneseq
    %v5532 = vshrl.u32 %v5531, 7
    %v5533 = vsub.s32 2, %v5532
    %v5534 = vrot.slane %v5492, %v5533
    %v5535 = vlaneseq
    %v5536 = vshrl.u32 %v5535, 7
    %v5537 = vsub.s32 3, %v5536
    %v5538 = vrot.slane %v5492, %v5537
    %v5539 = vlaneseq
    %v5540 = vshrl.u32 %v5539, 7
    %v5541 = vsub.s32 0, %v5540
    %v5542 = vrot.slane %v5493, %v5541
    %v5543 = vlaneseq
    %v5544 = vshrl.u32 %v5543, 7
    %v5545 = vsub.s32 1, %v5544
    %v5546 = vrot.slane %v5493, %v5545
    %v5547 = vlaneseq
    %v5548 = vshrl.u32 %v5547, 7
    %v5549 = vsub.s32 2, %v5548
    %v5550 = vrot.slane %v5493, %v5549
    %v5551 = vlaneseq
    %v5552 = vshrl.u32 %v5551, 7
    %v5553 = vsub.s32 3, %v5552
    %v5554 = vrot.slane %v5493, %v5553
    %v5555 = vlaneseq
    %v5556 = vshrl.u32 %v5555, 7
    %v5557 = vsub.s32 0, %v5556
    %v5558 = vrot.slane %v5494, %v5557
    %v5559 = vlaneseq
    %v5560 = vshrl.u32 %v5559, 7
    %v5561 = vsub.s32 1, %v5560
    %v5562 = vrot.slane %v5494, %v5561
    %v5563 = vlaneseq
    %v5564 = vshrl.u32 %v5563, 7
    %v5565 = vsub.s32 2, %v5564
    %v5566 = vrot.slane %v5494, %v5565
    %v5567 = vlaneseq
    %v5568 = vshrl.u32 %v5567, 7
    %v5569 = vsub.s32 3, %v5568
    %v5570 = vrot.slane %v5494, %v5569
    %v5571 = vlaneseq
    %v5572 = vshrl.u32 %v5571, 7
    %v5573 = vsub.s32 0, %v5572
    %v5574 = vrot.slane %v5495, %v5573
    %v5575 = vlaneseq
    %v5576 = vshrl.u32 %v5575, 7
    %v5577 = vsub.s32 1, %v5576
    %v5578 = vrot.slane %v5495, %v5577
    %v5579 = vlaneseq
    %v5580 = vshrl.u32 %v5579, 7
    %v5581 = vsub.s32 2, %v5580
    %v5582 = vrot.slane %v5495, %v5581
    %v5583 = vlaneseq
    %v5584 = vshrl.u32 %v5583, 7
    %v5585 = vsub.s32 3, %v5584
    %v5586 = vrot.slane %v5495, %v5585
    %v5587 = vlaneseq
    %v5588 = vshrl.u32 %v5587, 7
    %v5589 = vsub.s32 0, %v5588
    %v5590 = vrot.slane %v5496, %v5589
    %v5591 = vlaneseq
    %v5592 = vshrl.u32 %v5591, 7
    %v5593 = vsub.s32 1, %v5592
    %v5594 = vrot.slane %v5496, %v5593
    %v5595 = vlaneseq
    %v5596 = vshrl.u32 %v5595, 7
    %v5597 = vsub.s32 2, %v5596
    %v5598 = vrot.slane %v5496, %v5597
    %v5599 = vlaneseq
    %v5600 = vshrl.u32 %v5599, 7
    %v5601 = vsub.s32 3, %v5600
    %v5602 = vrot.slane %v5496, %v5601
    %v5603 = vlaneseq
    %v5604 = vshrl.u32 %v5603, 7
    %v5605 = vsub.s32 0, %v5604
    %v5606 = vrot.slane %v5497, %v5605
    %v5607 = vlaneseq
    %v5608 = vshrl.u32 %v5607, 7
    %v5609 = vsub.s32 1, %v5608
    %v5610 = vrot.slane %v5497, %v5609
    %v5611 = vlaneseq
    %v5612 = vshrl.u32 %v5611, 7
    %v5613 = vsub.s32 2, %v5612
    %v5614 = vrot.slane %v5497, %v5613
    %v5615 = vlaneseq
    %v5616 = vshrl.u32 %v5615, 7
    %v5617 = vsub.s32 3, %v5616
    %v5618 = vrot.slane %v5497, %v5617
    %v5619 = vlaneseq
    %v5620 = vshrl.u32 %v5619, 7
    %v5621 = vsub.s32 0, %v5620
    %v5622 = vrot.slane %v5498, %v5621
    %v5623 = vlaneseq
    %v5624 = vshrl.u32 %v5623, 7
    %v5625 = vsub.s32 1, %v5624
    %v5626 = vrot.slane %v5498, %v5625
    %v5627 = vlaneseq
    %v5628 = vshrl.u32 %v5627, 7
    %v5629 = vsub.s32 2, %v5628
    %v5630 = vrot.slane %v5498, %v5629
    %v5631 = vlaneseq
    %v5632 = vshrl.u32 %v5631, 7
    %v5633 = vsub.s32 3, %v5632
    %v5634 = vrot.slane %v5498, %v5633
    %v5635 = vlaneseq
    %v5636 = vshrl.u32 %v5635, 7
    %v5637 = vsub.s32 0, %v5636
    %v5638 = vrot.slane %v5499, %v5637
    %v5639 = vlaneseq
    %v5640 = vshrl.u32 %v5639, 7
    %v5641 = vsub.s32 1, %v5640
    %v5642 = vrot.slane %v5499, %v5641
    %v5643 = vlaneseq
    %v5644 = vshrl.u32 %v5643, 7
    %v5645 = vsub.s32 2, %v5644
    %v5646 = vrot.slane %v5499, %v5645
    %v5647 = vlaneseq
    %v5648 = vshrl.u32 %v5647, 7
    %v5649 = vsub.s32 3, %v5648
    %v5650 = vrot.slane %v5499, %v5649
    %v5651 = vlaneseq
    %v5652 = vshrl.u32 %v5651, 7
    %v5653 = vsub.s32 0, %v5652
    %v5654 = vrot.slane %v5500, %v5653
    %v5655 = vlaneseq
    %v5656 = vshrl.u32 %v5655, 7
    %v5657 = vsub.s32 1, %v5656
    %v5658 = vrot.slane %v5500, %v5657
    %v5659 = vlaneseq
    %v5660 = vshrl.u32 %v5659, 7
    %v5661 = vsub.s32 2, %v5660
    %v5662 = vrot.slane %v5500, %v5661
    %v5663 = vlaneseq
    %v5664 = vshrl.u32 %v5663, 7
    %v5665 = vsub.s32 3, %v5664
    %v5666 = vrot.slane %v5500, %v5665
    %v5667 = vlaneseq
    %v5668 = vshrl.u32 %v5667, 7
    %v5669 = vsub.s32 0, %v5668
    %v5670 = vrot.slane %v5501, %v5669
    %v5671 = vlaneseq
    %v5672 = vshrl.u32 %v5671, 7
    %v5673 = vsub.s32 1, %v5672
    %v5674 = vrot.slane %v5501, %v5673
    %v5675 = vlaneseq
    %v5676 = vshrl.u32 %v5675, 7
    %v5677 = vsub.s32 2, %v5676
    %v5678 = vrot.slane %v5501, %v5677
    %v5679 = vlaneseq
    %v5680 = vshrl.u32 %v5679, 7
    %v5681 = vsub.s32 3, %v5680
    %v5682 = vrot.slane %v5501, %v5681
    %v5683 = vlaneseq
    %v5684 = vshrl.u32 %v5683, 7
    %v5685 = vsub.s32 0, %v5684
    %v5686 = vrot.slane %v5502, %v5685
    %v5687 = vlaneseq
    %v5688 = vshrl.u32 %v5687, 7
    %v5689 = vsub.s32 1, %v5688
    %v5690 = vrot.slane %v5502, %v5689
    %v5691 = vlaneseq
    %v5692 = vshrl.u32 %v5691, 7
    %v5693 = vsub.s32 2, %v5692
    %v5694 = vrot.slane %v5502, %v5693
    %v5695 = vlaneseq
    %v5696 = vshrl.u32 %v5695, 7
    %v5697 = vsub.s32 3, %v5696
    %v5698 = vrot.slane %v5502, %v5697
    %v5699 = vlaneseq
    %v5700 = vshrl.u32 %v5699, 7
    %v5701 = vsub.s32 0, %v5700
    %v5702 = vrot.slane %v5503, %v5701
    %v5703 = vlaneseq
    %v5704 = vshrl.u32 %v5703, 7
    %v5705 = vsub.s32 1, %v5704
    %v5706 = vrot.slane %v5503, %v5705
    %v5707 = vlaneseq
    %v5708 = vshrl.u32 %v5707, 7
    %v5709 = vsub.s32 2, %v5708
    %v5710 = vrot.slane %v5503, %v5709
    %v5711 = vlaneseq
    %v5712 = vshrl.u32 %v5711, 7
    %v5713 = vsub.s32 3, %v5712
    %v5714 = vrot.slane %v5503, %v5713
    %v5715 = vlaneseq
    %v5716 = vshrl.u32 %v5715, 7
    %v5717 = vsub.s32 0, %v5716
    %v5718 = vrot.slane %v5504, %v5717
    %v5719 = vlaneseq
    %v5720 = vshrl.u32 %v5719, 7
    %v5721 = vsub.s32 1, %v5720
    %v5722 = vrot.slane %v5504, %v5721
    %v5723 = vlaneseq
    %v5724 = vshrl.u32 %v5723, 7
    %v5725 = vsub.s32 2, %v5724
    %v5726 = vrot.slane %v5504, %v5725
    %v5727 = vlaneseq
    %v5728 = vshrl.u32 %v5727, 7
    %v5729 = vsub.s32 3, %v5728
    %v5730 = vrot.slane %v5504, %v5729
    %v5731 = vlaneseq
    %v5732 = vshrl.u32 %v5731, 7
    %v5733 = vsub.s32 0, %v5732
    %v5734 = vrot.slane %v5505, %v5733
    %v5735 = vlaneseq
    %v5736 = vshrl.u32 %v5735, 7
    %v5737 = vsub.s32 1, %v5736
    %v5738 = vrot.slane %v5505, %v5737
    %v5739 = vlaneseq
    %v5740 = vshrl.u32 %v5739, 7
    %v5741 = vsub.s32 2, %v5740
    %v5742 = vrot.slane %v5505, %v5741
    %v5743 = vlaneseq
    %v5744 = vshrl.u32 %v5743, 7
    %v5745 = vsub.s32 3, %v5744
    %v5746 = vrot.slane %v5505, %v5745
    %v5747 = vlaneseq
    %v5748 = vshrl.u32 %v5747, 7
    %v5749 = vsub.s32 0, %v5748
    %v5750 = vrot.slane %v5506, %v5749
    %v5751 = vlaneseq
    %v5752 = vshrl.u32 %v5751, 7
    %v5753 = vsub.s32 1, %v5752
    %v5754 = vrot.slane %v5506, %v5753
    %v5755 = vlaneseq
    %v5756 = vshrl.u32 %v5755, 7
    %v5757 = vsub.s32 2, %v5756
    %v5758 = vrot.slane %v5506, %v5757
    %v5759 = vlaneseq
    %v5760 = vshrl.u32 %v5759, 7
    %v5761 = vsub.s32 3, %v5760
    %v5762 = vrot.slane %v5506, %v5761
    %v5764 = vpack.i.b16 %v5510, %v5510
    %v5766 = vlaneseq
    %v5767 = vshrl.u32 %v5766, 7
    %v5768 = vsub.s32 0, %v5767
    %v5769 = vrot.slane %v5764, %v5768
    %v5771 = vpack.i.b16 %v5514, %v5514
    %v5773 = vlaneseq
    %v5774 = vshrl.u32 %v5773, 7
    %v5775 = vsub.s32 0, %v5774
    %v5776 = vrot.slane %v5771, %v5775
    %v5778 = vpack.i.b16 %v5518, %v5518
    %v5780 = vlaneseq
    %v5781 = vshrl.u32 %v5780, 7
    %v5782 = vsub.s32 0, %v5781
    %v5783 = vrot.slane %v5778, %v5782
    %v5785 = vpack.i.b16 %v5522, %v5522
    %v5787 = vlaneseq
    %v5788 = vshrl.u32 %v5787, 7
    %v5789 = vsub.s32 0, %v5788
    %v5790 = vrot.slane %v5785, %v5789
    %v5792 = vpack.i.b16 %v5526, %v5526
    %v5794 = vlaneseq
    %v5795 = vshrl.u32 %v5794, 7
    %v5796 = vsub.s32 0, %v5795
    %v5797 = vrot.slane %v5792, %v5796
    %v5799 = vpack.i.b16 %v5530, %v5530
    %v5801 = vlaneseq
    %v5802 = vshrl.u32 %v5801, 7
    %v5803 = vsub.s32 0, %v5802
    %v5804 = vrot.slane %v5799, %v5803
    %v5806 = vpack.i.b16 %v5534, %v5534
    %v5808 = vlaneseq
    %v5809 = vshrl.u32 %v5808, 7
    %v5810 = vsub.s32 0, %v5809
    %v5811 = vrot.slane %v5806, %v5810
    %v5813 = vpack.i.b16 %v5538, %v5538
    %v5815 = vlaneseq
    %v5816 = vshrl.u32 %v5815, 7
    %v5817 = vsub.s32 0, %v5816
    %v5818 = vrot.slane %v5813, %v5817
    %v5820 = vpack.i.b16 %v5542, %v5542
    %v5822 = vlaneseq
    %v5823 = vshrl.u32 %v5822, 7
    %v5824 = vsub.s32 0, %v5823
    %v5825 = vrot.slane %v5820, %v5824
    %v5827 = vpack.i.b16 %v5546, %v5546
    %v5829 = vlaneseq
    %v5830 = vshrl.u32 %v5829, 7
    %v5831 = vsub.s32 0, %v5830
    %v5832 = vrot.slane %v5827, %v5831
    %v5834 = vpack.i.b16 %v5550, %v5550
    %v5836 = vlaneseq
    %v5837 = vshrl.u32 %v5836, 7
    %v5838 = vsub.s32 0, %v5837
    %v5839 = vrot.slane %v5834, %v5838
    %v5841 = vpack.i.b16 %v5554, %v5554
    %v5843 = vlaneseq
    %v5844 = vshrl.u32 %v5843, 7
    %v5845 = vsub.s32 0, %v5844
    %v5846 = vrot.slane %v5841, %v5845
    %v5848 = vpack.i.b16 %v5558, %v5558
    %v5850 = vlaneseq
    %v5851 = vshrl.u32 %v5850, 7
    %v5852 = vsub.s32 0, %v5851
    %v5853 = vrot.slane %v5848, %v5852
    %v5855 = vpack.i.b16 %v5562, %v5562
    %v5857 = vlaneseq
    %v5858 = vshrl.u32 %v5857, 7
    %v5859 = vsub.s32 0, %v5858
    %v5860 = vrot.slane %v5855, %v5859
    %v5862 = vpack.i.b16 %v5566, %v5566
    %v5864 = vlaneseq
    %v5865 = vshrl.u32 %v5864, 7
    %v5866 = vsub.s32 0, %v5865
    %v5867 = vrot.slane %v5862, %v5866
    %v5869 = vpack.i.b16 %v5570, %v5570
    %v5871 = vlaneseq
    %v5872 = vshrl.u32 %v5871, 7
    %v5873 = vsub.s32 0, %v5872
    %v5874 = vrot.slane %v5869, %v5873
    %v5876 = vpack.i.b16 %v5574, %v5574
    %v5878 = vlaneseq
    %v5879 = vshrl.u32 %v5878, 7
    %v5880 = vsub.s32 0, %v5879
    %v5881 = vrot.slane %v5876, %v5880
    %v5883 = vpack.i.b16 %v5578, %v5578
    %v5885 = vlaneseq
    %v5886 = vshrl.u32 %v5885, 7
    %v5887 = vsub.s32 0, %v5886
    %v5888 = vrot.slane %v5883, %v5887
    %v5890 = vpack.i.b16 %v5582, %v5582
    %v5892 = vlaneseq
    %v5893 = vshrl.u32 %v5892, 7
    %v5894 = vsub.s32 0, %v5893
    %v5895 = vrot.slane %v5890, %v5894
    %v5897 = vpack.i.b16 %v5586, %v5586
    %v5899 = vlaneseq
    %v5900 = vshrl.u32 %v5899, 7
    %v5901 = vsub.s32 0, %v5900
    %v5902 = vrot.slane %v5897, %v5901
    %v5904 = vpack.i.b16 %v5590, %v5590
    %v5906 = vlaneseq
    %v5907 = vshrl.u32 %v5906, 7
    %v5908 = vsub.s32 0, %v5907
    %v5909 = vrot.slane %v5904, %v5908
    %v5911 = vpack.i.b16 %v5594, %v5594
    %v5913 = vlaneseq
    %v5914 = vshrl.u32 %v5913, 7
    %v5915 = vsub.s32 0, %v5914
    %v5916 = vrot.slane %v5911, %v5915
    %v5918 = vpack.i.b16 %v5598, %v5598
    %v5920 = vlaneseq
    %v5921 = vshrl.u32 %v5920, 7
    %v5922 = vsub.s32 0, %v5921
    %v5923 = vrot.slane %v5918, %v5922
    %v5925 = vpack.i.b16 %v5602, %v5602
    %v5927 = vlaneseq
    %v5928 = vshrl.u32 %v5927, 7
    %v5929 = vsub.s32 0, %v5928
    %v5930 = vrot.slane %v5925, %v5929
    %v5932 = vpack.i.b16 %v5606, %v5606
    %v5934 = vlaneseq
    %v5935 = vshrl.u32 %v5934, 7
    %v5936 = vsub.s32 0, %v5935
    %v5937 = vrot.slane %v5932, %v5936
    %v5939 = vpack.i.b16 %v5610, %v5610
    %v5941 = vlaneseq
    %v5942 = vshrl.u32 %v5941, 7
    %v5943 = vsub.s32 0, %v5942
    %v5944 = vrot.slane %v5939, %v5943
    %v5946 = vpack.i.b16 %v5614, %v5614
    %v5948 = vlaneseq
    %v5949 = vshrl.u32 %v5948, 7
    %v5950 = vsub.s32 0, %v5949
    %v5951 = vrot.slane %v5946, %v5950
    %v5953 = vpack.i.b16 %v5618, %v5618
    %v5955 = vlaneseq
    %v5956 = vshrl.u32 %v5955, 7
    %v5957 = vsub.s32 0, %v5956
    %v5958 = vrot.slane %v5953, %v5957
    %v5960 = vpack.i.b16 %v5622, %v5622
    %v5962 = vlaneseq
    %v5963 = vshrl.u32 %v5962, 7
    %v5964 = vsub.s32 0, %v5963
    %v5965 = vrot.slane %v5960, %v5964
    %v5967 = vpack.i.b16 %v5626, %v5626
    %v5969 = vlaneseq
    %v5970 = vshrl.u32 %v5969, 7
    %v5971 = vsub.s32 0, %v5970
    %v5972 = vrot.slane %v5967, %v5971
    %v5974 = vpack.i.b16 %v5630, %v5630
    %v5976 = vlaneseq
    %v5977 = vshrl.u32 %v5976, 7
    %v5978 = vsub.s32 0, %v5977
    %v5979 = vrot.slane %v5974, %v5978
    %v5981 = vpack.i.b16 %v5634, %v5634
    %v5983 = vlaneseq
    %v5984 = vshrl.u32 %v5983, 7
    %v5985 = vsub.s32 0, %v5984
    %v5986 = vrot.slane %v5981, %v5985
    %v5988 = vpack.i.b16 %v5638, %v5638
    %v5990 = vlaneseq
    %v5991 = vshrl.u32 %v5990, 7
    %v5992 = vsub.s32 0, %v5991
    %v5993 = vrot.slane %v5988, %v5992
    %v5995 = vpack.i.b16 %v5642, %v5642
    %v5997 = vlaneseq
    %v5998 = vshrl.u32 %v5997, 7
    %v5999 = vsub.s32 0, %v5998
    %v6000 = vrot.slane %v5995, %v5999
    %v6002 = vpack.i.b16 %v5646, %v5646
    %v6004 = vlaneseq
    %v6005 = vshrl.u32 %v6004, 7
    %v6006 = vsub.s32 0, %v6005
    %v6007 = vrot.slane %v6002, %v6006
    %v6009 = vpack.i.b16 %v5650, %v5650
    %v6011 = vlaneseq
    %v6012 = vshrl.u32 %v6011, 7
    %v6013 = vsub.s32 0, %v6012
    %v6014 = vrot.slane %v6009, %v6013
    %v6016 = vpack.i.b16 %v5654, %v5654
    %v6018 = vlaneseq
    %v6019 = vshrl.u32 %v6018, 7
    %v6020 = vsub.s32 0, %v6019
    %v6021 = vrot.slane %v6016, %v6020
    %v6023 = vpack.i.b16 %v5658, %v5658
    %v6025 = vlaneseq
    %v6026 = vshrl.u32 %v6025, 7
    %v6027 = vsub.s32 0, %v6026
    %v6028 = vrot.slane %v6023, %v6027
    %v6030 = vpack.i.b16 %v5662, %v5662
    %v6032 = vlaneseq
    %v6033 = vshrl.u32 %v6032, 7
    %v6034 = vsub.s32 0, %v6033
    %v6035 = vrot.slane %v6030, %v6034
    %v6037 = vpack.i.b16 %v5666, %v5666
    %v6039 = vlaneseq
    %v6040 = vshrl.u32 %v6039, 7
    %v6041 = vsub.s32 0, %v6040
    %v6042 = vrot.slane %v6037, %v6041
    %v6044 = vpack.i.b16 %v5670, %v5670
    %v6046 = vlaneseq
    %v6047 = vshrl.u32 %v6046, 7
    %v6048 = vsub.s32 0, %v6047
    %v6049 = vrot.slane %v6044, %v6048
    %v6051 = vpack.i.b16 %v5674, %v5674
    %v6053 = vlaneseq
    %v6054 = vshrl.u32 %v6053, 7
    %v6055 = vsub.s32 0, %v6054
    %v6056 = vrot.slane %v6051, %v6055
    %v6058 = vpack.i.b16 %v5678, %v5678
    %v6060 = vlaneseq
    %v6061 = vshrl.u32 %v6060, 7
    %v6062 = vsub.s32 0, %v6061
    %v6063 = vrot.slane %v6058, %v6062
    %v6065 = vpack.i.b16 %v5682, %v5682
    %v6067 = vlaneseq
    %v6068 = vshrl.u32 %v6067, 7
    %v6069 = vsub.s32 0, %v6068
    %v6070 = vrot.slane %v6065, %v6069
    %v6072 = vpack.i.b16 %v5686, %v5686
    %v6074 = vlaneseq
    %v6075 = vshrl.u32 %v6074, 7
    %v6076 = vsub.s32 0, %v6075
    %v6077 = vrot.slane %v6072, %v6076
    %v6079 = vpack.i.b16 %v5690, %v5690
    %v6081 = vlaneseq
    %v6082 = vshrl.u32 %v6081, 7
    %v6083 = vsub.s32 0, %v6082
    %v6084 = vrot.slane %v6079, %v6083
    %v6086 = vpack.i.b16 %v5694, %v5694
    %v6088 = vlaneseq
    %v6089 = vshrl.u32 %v6088, 7
    %v6090 = vsub.s32 0, %v6089
    %v6091 = vrot.slane %v6086, %v6090
    %v6093 = vpack.i.b16 %v5698, %v5698
    %v6095 = vlaneseq
    %v6096 = vshrl.u32 %v6095, 7
    %v6097 = vsub.s32 0, %v6096
    %v6098 = vrot.slane %v6093, %v6097
    %v6100 = vpack.i.b16 %v5702, %v5702
    %v6102 = vlaneseq
    %v6103 = vshrl.u32 %v6102, 7
    %v6104 = vsub.s32 0, %v6103
    %v6105 = vrot.slane %v6100, %v6104
    %v6107 = vpack.i.b16 %v5706, %v5706
    %v6109 = vlaneseq
    %v6110 = vshrl.u32 %v6109, 7
    %v6111 = vsub.s32 0, %v6110
    %v6112 = vrot.slane %v6107, %v6111
    %v6114 = vpack.i.b16 %v5710, %v5710
    %v6116 = vlaneseq
    %v6117 = vshrl.u32 %v6116, 7
    %v6118 = vsub.s32 0, %v6117
    %v6119 = vrot.slane %v6114, %v6118
    %v6121 = vpack.i.b16 %v5714, %v5714
    %v6123 = vlaneseq
    %v6124 = vshrl.u32 %v6123, 7
    %v6125 = vsub.s32 0, %v6124
    %v6126 = vrot.slane %v6121, %v6125
    %v6128 = vpack.i.b16 %v5718, %v5718
    %v6130 = vlaneseq
    %v6131 = vshrl.u32 %v6130, 7
    %v6132 = vsub.s32 0, %v6131
    %v6133 = vrot.slane %v6128, %v6132
    %v6135 = vpack.i.b16 %v5722, %v5722
    %v6137 = vlaneseq
    %v6138 = vshrl.u32 %v6137, 7
    %v6139 = vsub.s32 0, %v6138
    %v6140 = vrot.slane %v6135, %v6139
    %v6142 = vpack.i.b16 %v5726, %v5726
    %v6144 = vlaneseq
    %v6145 = vshrl.u32 %v6144, 7
    %v6146 = vsub.s32 0, %v6145
    %v6147 = vrot.slane %v6142, %v6146
    %v6149 = vpack.i.b16 %v5730, %v5730
    %v6151 = vlaneseq
    %v6152 = vshrl.u32 %v6151, 7
    %v6153 = vsub.s32 0, %v6152
    %v6154 = vrot.slane %v6149, %v6153
    %v6156 = vpack.i.b16 %v5734, %v5734
    %v6158 = vlaneseq
    %v6159 = vshrl.u32 %v6158, 7
    %v6160 = vsub.s32 0, %v6159
    %v6161 = vrot.slane %v6156, %v6160
    %v6163 = vpack.i.b16 %v5738, %v5738
    %v6165 = vlaneseq
    %v6166 = vshrl.u32 %v6165, 7
    %v6167 = vsub.s32 0, %v6166
    %v6168 = vrot.slane %v6163, %v6167
    %v6170 = vpack.i.b16 %v5742, %v5742
    %v6172 = vlaneseq
    %v6173 = vshrl.u32 %v6172, 7
    %v6174 = vsub.s32 0, %v6173
    %v6175 = vrot.slane %v6170, %v6174
    %v6177 = vpack.i.b16 %v5746, %v5746
    %v6179 = vlaneseq
    %v6180 = vshrl.u32 %v6179, 7
    %v6181 = vsub.s32 0, %v6180
    %v6182 = vrot.slane %v6177, %v6181
    %v6184 = vpack.i.b16 %v5750, %v5750
    %v6186 = vlaneseq
    %v6187 = vshrl.u32 %v6186, 7
    %v6188 = vsub.s32 0, %v6187
    %v6189 = vrot.slane %v6184, %v6188
    %v6191 = vpack.i.b16 %v5754, %v5754
    %v6193 = vlaneseq
    %v6194 = vshrl.u32 %v6193, 7
    %v6195 = vsub.s32 0, %v6194
    %v6196 = vrot.slane %v6191, %v6195
    %v6198 = vpack.i.b16 %v5758, %v5758
    %v6200 = vlaneseq
    %v6201 = vshrl.u32 %v6200, 7
    %v6202 = vsub.s32 0, %v6201
    %v6203 = vrot.slane %v6198, %v6202
    %v6205 = vpack.i.b16 %v5762, %v5762
    %v6207 = vlaneseq
    %v6208 = vshrl.u32 %v6207, 7
    %v6209 = vsub.s32 0, %v6208
    %v6210 = vrot.slane %v6205, %v6209
    %v6211 = vadd.bf16 %v5271, %v5769
    %v6212 = vadd.bf16 %v5272, %v5776
    %v6213 = vadd.bf16 %v5273, %v5783
    %v6214 = vadd.bf16 %v5274, %v5790
    %v6215 = vadd.bf16 %v5275, %v5769
    %v6216 = vadd.bf16 %v5276, %v5776
    %v6217 = vadd.bf16 %v5277, %v5783
    %v6218 = vadd.bf16 %v5278, %v5790
    %v6219 = vadd.bf16 %v5279, %v5797
    %v6220 = vadd.bf16 %v5280, %v5804
    %v6221 = vadd.bf16 %v5281, %v5811
    %v6222 = vadd.bf16 %v5282, %v5818
    %v6223 = vadd.bf16 %v5283, %v5797
    %v6224 = vadd.bf16 %v5284, %v5804
    %v6225 = vadd.bf16 %v5285, %v5811
    %v6226 = vadd.bf16 %v5286, %v5818
    %v6227 = vadd.bf16 %v5287, %v5825
    %v6228 = vadd.bf16 %v5288, %v5832
    %v6229 = vadd.bf16 %v5289, %v5839
    %v6230 = vadd.bf16 %v5290, %v5846
    %v6231 = vadd.bf16 %v5291, %v5825
    %v6232 = vadd.bf16 %v5292, %v5832
    %v6233 = vadd.bf16 %v5293, %v5839
    %v6234 = vadd.bf16 %v5294, %v5846
    %v6235 = vadd.bf16 %v5295, %v5853
    %v6236 = vadd.bf16 %v5296, %v5860
    %v6237 = vadd.bf16 %v5297, %v5867
    %v6238 = vadd.bf16 %v5298, %v5874
    %v6239 = vadd.bf16 %v5299, %v5853
    %v6240 = vadd.bf16 %v5300, %v5860
    %v6241 = vadd.bf16 %v5301, %v5867
    %v6242 = vadd.bf16 %v5302, %v5874
    %v6243 = vadd.bf16 %v5303, %v5881
    %v6244 = vadd.bf16 %v5304, %v5888
    %v6245 = vadd.bf16 %v5305, %v5895
    %v6246 = vadd.bf16 %v5306, %v5902
    %v6247 = vadd.bf16 %v5307, %v5881
    %v6248 = vadd.bf16 %v5308, %v5888
    %v6249 = vadd.bf16 %v5309, %v5895
    %v6250 = vadd.bf16 %v5310, %v5902
    %v6251 = vadd.bf16 %v5311, %v5909
    %v6252 = vadd.bf16 %v5312, %v5916
    %v6253 = vadd.bf16 %v5313, %v5923
    %v6254 = vadd.bf16 %v5314, %v5930
    %v6255 = vadd.bf16 %v5315, %v5909
    %v6256 = vadd.bf16 %v5316, %v5916
    %v6257 = vadd.bf16 %v5317, %v5923
    %v6258 = vadd.bf16 %v5318, %v5930
    %v6259 = vadd.bf16 %v5319, %v5937
    %v6260 = vadd.bf16 %v5320, %v5944
    %v6261 = vadd.bf16 %v5321, %v5951
    %v6262 = vadd.bf16 %v5322, %v5958
    %v6263 = vadd.bf16 %v5323, %v5937
    %v6264 = vadd.bf16 %v5324, %v5944
    %v6265 = vadd.bf16 %v5325, %v5951
    %v6266 = vadd.bf16 %v5326, %v5958
    %v6267 = vadd.bf16 %v5327, %v5965
    %v6268 = vadd.bf16 %v5328, %v5972
    %v6269 = vadd.bf16 %v5329, %v5979
    %v6270 = vadd.bf16 %v5330, %v5986
    %v6271 = vadd.bf16 %v5331, %v5965
    %v6272 = vadd.bf16 %v5332, %v5972
    %v6273 = vadd.bf16 %v5333, %v5979
    %v6274 = vadd.bf16 %v5334, %v5986
    %v6275 = vadd.bf16 %v5335, %v5993
    %v6276 = vadd.bf16 %v5336, %v6000
    %v6277 = vadd.bf16 %v5337, %v6007
    %v6278 = vadd.bf16 %v5338, %v6014
    %v6279 = vadd.bf16 %v5339, %v5993
    %v6280 = vadd.bf16 %v5340, %v6000
    %v6281 = vadd.bf16 %v5341, %v6007
    %v6282 = vadd.bf16 %v5342, %v6014
    %v6283 = vadd.bf16 %v5343, %v6021
    %v6284 = vadd.bf16 %v5344, %v6028
    %v6285 = vadd.bf16 %v5345, %v6035
    %v6286 = vadd.bf16 %v5346, %v6042
    %v6287 = vadd.bf16 %v5347, %v6021
    %v6288 = vadd.bf16 %v5348, %v6028
    %v6289 = vadd.bf16 %v5349, %v6035
    %v6290 = vadd.bf16 %v5350, %v6042
    %v6291 = vadd.bf16 %v5351, %v6049
    %v6292 = vadd.bf16 %v5352, %v6056
    %v6293 = vadd.bf16 %v5353, %v6063
    %v6294 = vadd.bf16 %v5354, %v6070
    %v6295 = vadd.bf16 %v5355, %v6049
    %v6296 = vadd.bf16 %v5356, %v6056
    %v6297 = vadd.bf16 %v5357, %v6063
    %v6298 = vadd.bf16 %v5358, %v6070
    %v6299 = vadd.bf16 %v5359, %v6077
    %v6300 = vadd.bf16 %v5360, %v6084
    %v6301 = vadd.bf16 %v5361, %v6091
    %v6302 = vadd.bf16 %v5362, %v6098
    %v6303 = vadd.bf16 %v5363, %v6077
    %v6304 = vadd.bf16 %v5364, %v6084
    %v6305 = vadd.bf16 %v5365, %v6091
    %v6306 = vadd.bf16 %v5366, %v6098
    %v6307 = vadd.bf16 %v5367, %v6105
    %v6308 = vadd.bf16 %v5368, %v6112
    %v6309 = vadd.bf16 %v5369, %v6119
    %v6310 = vadd.bf16 %v5370, %v6126
    %v6311 = vadd.bf16 %v5371, %v6105
    %v6312 = vadd.bf16 %v5372, %v6112
    %v6313 = vadd.bf16 %v5373, %v6119
    %v6314 = vadd.bf16 %v5374, %v6126
    %v6315 = vadd.bf16 %v5375, %v6133
    %v6316 = vadd.bf16 %v5376, %v6140
    %v6317 = vadd.bf16 %v5377, %v6147
    %v6318 = vadd.bf16 %v5378, %v6154
    %v6319 = vadd.bf16 %v5379, %v6133
    %v6320 = vadd.bf16 %v5380, %v6140
    %v6321 = vadd.bf16 %v5381, %v6147
    %v6322 = vadd.bf16 %v5382, %v6154
    %v6323 = vadd.bf16 %v5383, %v6161
    %v6324 = vadd.bf16 %v5384, %v6168
    %v6325 = vadd.bf16 %v5385, %v6175
    %v6326 = vadd.bf16 %v5386, %v6182
    %v6327 = vadd.bf16 %v5387, %v6161
    %v6328 = vadd.bf16 %v5388, %v6168
    %v6329 = vadd.bf16 %v5389, %v6175
    %v6330 = vadd.bf16 %v5390, %v6182
    %v6331 = vadd.bf16 %v5391, %v6189
    %v6332 = vadd.bf16 %v5392, %v6196
    %v6333 = vadd.bf16 %v5393, %v6203
    %v6334 = vadd.bf16 %v5394, %v6210
    %v6335 = vadd.bf16 %v5395, %v6189
    %v6336 = vadd.bf16 %v5396, %v6196
    %v6337 = vadd.bf16 %v5397, %v6203
    %v6338 = vadd.bf16 %v5398, %v6210
    %v6339 = vmax.bf16 %v6211, 0
    %v6340 = vmax.bf16 %v6212, 0
    %v6341 = vmax.bf16 %v6213, 0
    %v6342 = vmax.bf16 %v6214, 0
    %v6343 = vmax.bf16 %v6215, 0
    %v6344 = vmax.bf16 %v6216, 0
    %v6345 = vmax.bf16 %v6217, 0
    %v6346 = vmax.bf16 %v6218, 0
    %v6347 = vmax.bf16 %v6219, 0
    %v6348 = vmax.bf16 %v6220, 0
    %v6349 = vmax.bf16 %v6221, 0
    %v6350 = vmax.bf16 %v6222, 0
    %v6351 = vmax.bf16 %v6223, 0
    %v6352 = vmax.bf16 %v6224, 0
    %v6353 = vmax.bf16 %v6225, 0
    %v6354 = vmax.bf16 %v6226, 0
    %v6355 = vmax.bf16 %v6227, 0
    %v6356 = vmax.bf16 %v6228, 0
    %v6357 = vmax.bf16 %v6229, 0
    %v6358 = vmax.bf16 %v6230, 0
    %v6359 = vmax.bf16 %v6231, 0
    %v6360 = vmax.bf16 %v6232, 0
    %v6361 = vmax.bf16 %v6233, 0
    %v6362 = vmax.bf16 %v6234, 0
    %v6363 = vmax.bf16 %v6235, 0
    %v6364 = vmax.bf16 %v6236, 0
    %v6365 = vmax.bf16 %v6237, 0
    %v6366 = vmax.bf16 %v6238, 0
    %v6367 = vmax.bf16 %v6239, 0
    %v6368 = vmax.bf16 %v6240, 0
    %v6369 = vmax.bf16 %v6241, 0
    %v6370 = vmax.bf16 %v6242, 0
    %v6371 = vmax.bf16 %v6243, 0
    %v6372 = vmax.bf16 %v6244, 0
    %v6373 = vmax.bf16 %v6245, 0
    %v6374 = vmax.bf16 %v6246, 0
    %v6375 = vmax.bf16 %v6247, 0
    %v6376 = vmax.bf16 %v6248, 0
    %v6377 = vmax.bf16 %v6249, 0
    %v6378 = vmax.bf16 %v6250, 0
    %v6379 = vmax.bf16 %v6251, 0
    %v6380 = vmax.bf16 %v6252, 0
    %v6381 = vmax.bf16 %v6253, 0
    %v6382 = vmax.bf16 %v6254, 0
    %v6383 = vmax.bf16 %v6255, 0
    %v6384 = vmax.bf16 %v6256, 0
    %v6385 = vmax.bf16 %v6257, 0
    %v6386 = vmax.bf16 %v6258, 0
    %v6387 = vmax.bf16 %v6259, 0
    %v6388 = vmax.bf16 %v6260, 0
    %v6389 = vmax.bf16 %v6261, 0
    %v6390 = vmax.bf16 %v6262, 0
    %v6391 = vmax.bf16 %v6263, 0
    %v6392 = vmax.bf16 %v6264, 0
    %v6393 = vmax.bf16 %v6265, 0
    %v6394 = vmax.bf16 %v6266, 0
    %v6395 = vmax.bf16 %v6267, 0
    %v6396 = vmax.bf16 %v6268, 0
    %v6397 = vmax.bf16 %v6269, 0
    %v6398 = vmax.bf16 %v6270, 0
    %v6399 = vmax.bf16 %v6271, 0
    %v6400 = vmax.bf16 %v6272, 0
    %v6401 = vmax.bf16 %v6273, 0
    %v6402 = vmax.bf16 %v6274, 0
    %v6403 = vmax.bf16 %v6275, 0
    %v6404 = vmax.bf16 %v6276, 0
    %v6405 = vmax.bf16 %v6277, 0
    %v6406 = vmax.bf16 %v6278, 0
    %v6407 = vmax.bf16 %v6279, 0
    %v6408 = vmax.bf16 %v6280, 0
    %v6409 = vmax.bf16 %v6281, 0
    %v6410 = vmax.bf16 %v6282, 0
    %v6411 = vmax.bf16 %v6283, 0
    %v6412 = vmax.bf16 %v6284, 0
    %v6413 = vmax.bf16 %v6285, 0
    %v6414 = vmax.bf16 %v6286, 0
    %v6415 = vmax.bf16 %v6287, 0
    %v6416 = vmax.bf16 %v6288, 0
    %v6417 = vmax.bf16 %v6289, 0
    %v6418 = vmax.bf16 %v6290, 0
    %v6419 = vmax.bf16 %v6291, 0
    %v6420 = vmax.bf16 %v6292, 0
    %v6421 = vmax.bf16 %v6293, 0
    %v6422 = vmax.bf16 %v6294, 0
    %v6423 = vmax.bf16 %v6295, 0
    %v6424 = vmax.bf16 %v6296, 0
    %v6425 = vmax.bf16 %v6297, 0
    %v6426 = vmax.bf16 %v6298, 0
    %v6427 = vmax.bf16 %v6299, 0
    %v6428 = vmax.bf16 %v6300, 0
    %v6429 = vmax.bf16 %v6301, 0
    %v6430 = vmax.bf16 %v6302, 0
    %v6431 = vmax.bf16 %v6303, 0
    %v6432 = vmax.bf16 %v6304, 0
    %v6433 = vmax.bf16 %v6305, 0
    %v6434 = vmax.bf16 %v6306, 0
    %v6435 = vmax.bf16 %v6307, 0
    %v6436 = vmax.bf16 %v6308, 0
    %v6437 = vmax.bf16 %v6309, 0
    %v6438 = vmax.bf16 %v6310, 0
    %v6439 = vmax.bf16 %v6311, 0
    %v6440 = vmax.bf16 %v6312, 0
    %v6441 = vmax.bf16 %v6313, 0
    %v6442 = vmax.bf16 %v6314, 0
    %v6443 = vmax.bf16 %v6315, 0
    %v6444 = vmax.bf16 %v6316, 0
    %v6445 = vmax.bf16 %v6317, 0
    %v6446 = vmax.bf16 %v6318, 0
    %v6447 = vmax.bf16 %v6319, 0
    %v6448 = vmax.bf16 %v6320, 0
    %v6449 = vmax.bf16 %v6321, 0
    %v6450 = vmax.bf16 %v6322, 0
    %v6451 = vmax.bf16 %v6323, 0
    %v6452 = vmax.bf16 %v6324, 0
    %v6453 = vmax.bf16 %v6325, 0
    %v6454 = vmax.bf16 %v6326, 0
    %v6455 = vmax.bf16 %v6327, 0
    %v6456 = vmax.bf16 %v6328, 0
    %v6457 = vmax.bf16 %v6329, 0
    %v6458 = vmax.bf16 %v6330, 0
    %v6459 = vmax.bf16 %v6331, 0
    %v6460 = vmax.bf16 %v6332, 0
    %v6461 = vmax.bf16 %v6333, 0
    %v6462 = vmax.bf16 %v6334, 0
    %v6463 = vmax.bf16 %v6335, 0
    %v6464 = vmax.bf16 %v6336, 0
    %v6465 = vmax.bf16 %v6337, 0
    %v6466 = vmax.bf16 %v6338, 0
    %v6467 = vld [vmem:[%s12] sm:$0xff]
    %v6468 = vld [vmem:[%s12 + $0x8] sm:$0xff]
    %v6469 = vld [vmem:[%s12 + $0x10] sm:$0xff]
    %v6470 = vld [vmem:[%s12 + $0x18] sm:$0xff]
    %v6471 = vld [vmem:[%s12 + $0x20] sm:$0xff]
    %v6472 = vld [vmem:[%s12 + $0x28] sm:$0xff]
    %v6473 = vld [vmem:[%s12 + $0x30] sm:$0xff]
    %v6474 = vld [vmem:[%s12 + $0x38] sm:$0xff]
    %v6475 = vld [vmem:[%s12 + $0x40] sm:$0xff]
    %v6476 = vld [vmem:[%s12 + $0x48] sm:$0xff]
    %v6477 = vld [vmem:[%s12 + $0x50] sm:$0xff]
    %v6478 = vld [vmem:[%s12 + $0x58] sm:$0xff]
    %v6479 = vld [vmem:[%s12 + $0x60] sm:$0xff]
    %v6480 = vld [vmem:[%s12 + $0x68] sm:$0xff]
    %v6481 = vld [vmem:[%s12 + $0x70] sm:$0xff]
    %v6482 = vld [vmem:[%s12 + $0x78] sm:$0xff]
    %v6483 = vld [vmem:[%s12 + $0x80] sm:$0xff]
    %v6484 = vld [vmem:[%s12 + $0x88] sm:$0xff]
    %v6485 = vld [vmem:[%s12 + $0x90] sm:$0xff]
    %v6486 = vld [vmem:[%s12 + $0x98] sm:$0xff]
    %v6487 = vld [vmem:[%s12 + $0xa0] sm:$0xff]
    %v6488 = vld [vmem:[%s12 + $0xa8] sm:$0xff]
    %v6489 = vld [vmem:[%s12 + $0xb0] sm:$0xff]
    %v6490 = vld [vmem:[%s12 + $0xb8] sm:$0xff]
    %v6491 = vld [vmem:[%s12 + $0xc0] sm:$0xff]
    %v6492 = vld [vmem:[%s12 + $0xc8] sm:$0xff]
    %v6493 = vld [vmem:[%s12 + $0xd0] sm:$0xff]
    %v6494 = vld [vmem:[%s12 + $0xd8] sm:$0xff]
    %v6495 = vld [vmem:[%s12 + $0xe0] sm:$0xff]
    %v6496 = vld [vmem:[%s12 + $0xe8] sm:$0xff]
    %v6497 = vld [vmem:[%s12 + $0xf0] sm:$0xff]
    %v6498 = vld [vmem:[%s12 + $0xf8] sm:$0xff]
    %v6499 = vld [vmem:[%s12 + $0x100] sm:$0xff]
    %v6500 = vld [vmem:[%s12 + $0x108] sm:$0xff]
    %v6501 = vld [vmem:[%s12 + $0x110] sm:$0xff]
    %v6502 = vld [vmem:[%s12 + $0x118] sm:$0xff]
    %v6503 = vld [vmem:[%s12 + $0x120] sm:$0xff]
    %v6504 = vld [vmem:[%s12 + $0x128] sm:$0xff]
    %v6505 = vld [vmem:[%s12 + $0x130] sm:$0xff]
    %v6506 = vld [vmem:[%s12 + $0x138] sm:$0xff]
    %v6507 = vld [vmem:[%s12 + $0x140] sm:$0xff]
    %v6508 = vld [vmem:[%s12 + $0x148] sm:$0xff]
    %v6509 = vld [vmem:[%s12 + $0x150] sm:$0xff]
    %v6510 = vld [vmem:[%s12 + $0x158] sm:$0xff]
    %v6511 = vld [vmem:[%s12 + $0x160] sm:$0xff]
    %v6512 = vld [vmem:[%s12 + $0x168] sm:$0xff]
    %v6513 = vld [vmem:[%s12 + $0x170] sm:$0xff]
    %v6514 = vld [vmem:[%s12 + $0x178] sm:$0xff]
    %v6515 = vld [vmem:[%s12 + $0x180] sm:$0xff]
    %v6516 = vld [vmem:[%s12 + $0x188] sm:$0xff]
    %v6517 = vld [vmem:[%s12 + $0x190] sm:$0xff]
    %v6518 = vld [vmem:[%s12 + $0x198] sm:$0xff]
    %v6519 = vld [vmem:[%s12 + $0x1a0] sm:$0xff]
    %v6520 = vld [vmem:[%s12 + $0x1a8] sm:$0xff]
    %v6521 = vld [vmem:[%s12 + $0x1b0] sm:$0xff]
    %v6522 = vld [vmem:[%s12 + $0x1b8] sm:$0xff]
    %v6523 = vld [vmem:[%s12 + $0x1c0] sm:$0xff]
    %v6524 = vld [vmem:[%s12 + $0x1c8] sm:$0xff]
    %v6525 = vld [vmem:[%s12 + $0x1d0] sm:$0xff]
    %v6526 = vld [vmem:[%s12 + $0x1d8] sm:$0xff]
    %v6527 = vld [vmem:[%s12 + $0x1e0] sm:$0xff]
    %v6528 = vld [vmem:[%s12 + $0x1e8] sm:$0xff]
    %v6529 = vld [vmem:[%s12 + $0x1f0] sm:$0xff]
    %v6530 = vld [vmem:[%s12 + $0x1f8] sm:$0xff]
    %v6531 = vld [vmem:[%s12 + $0x200] sm:$0xff]
    %v6532 = vld [vmem:[%s12 + $0x208] sm:$0xff]
    %v6533 = vld [vmem:[%s12 + $0x210] sm:$0xff]
    %v6534 = vld [vmem:[%s12 + $0x218] sm:$0xff]
    %v6535 = vld [vmem:[%s12 + $0x220] sm:$0xff]
    %v6536 = vld [vmem:[%s12 + $0x228] sm:$0xff]
    %v6537 = vld [vmem:[%s12 + $0x230] sm:$0xff]
    %v6538 = vld [vmem:[%s12 + $0x238] sm:$0xff]
    %v6539 = vld [vmem:[%s12 + $0x240] sm:$0xff]
    %v6540 = vld [vmem:[%s12 + $0x248] sm:$0xff]
    %v6541 = vld [vmem:[%s12 + $0x250] sm:$0xff]
    %v6542 = vld [vmem:[%s12 + $0x258] sm:$0xff]
    %v6543 = vld [vmem:[%s12 + $0x260] sm:$0xff]
    %v6544 = vld [vmem:[%s12 + $0x268] sm:$0xff]
    %v6545 = vld [vmem:[%s12 + $0x270] sm:$0xff]
    %v6546 = vld [vmem:[%s12 + $0x278] sm:$0xff]
    %v6547 = vld [vmem:[%s12 + $0x280] sm:$0xff]
    %v6548 = vld [vmem:[%s12 + $0x288] sm:$0xff]
    %v6549 = vld [vmem:[%s12 + $0x290] sm:$0xff]
    %v6550 = vld [vmem:[%s12 + $0x298] sm:$0xff]
    %v6551 = vld [vmem:[%s12 + $0x2a0] sm:$0xff]
    %v6552 = vld [vmem:[%s12 + $0x2a8] sm:$0xff]
    %v6553 = vld [vmem:[%s12 + $0x2b0] sm:$0xff]
    %v6554 = vld [vmem:[%s12 + $0x2b8] sm:$0xff]
    %v6555 = vld [vmem:[%s12 + $0x2c0] sm:$0xff]
    %v6556 = vld [vmem:[%s12 + $0x2c8] sm:$0xff]
    %v6557 = vld [vmem:[%s12 + $0x2d0] sm:$0xff]
    %v6558 = vld [vmem:[%s12 + $0x2d8] sm:$0xff]
    %v6559 = vld [vmem:[%s12 + $0x2e0] sm:$0xff]
    %v6560 = vld [vmem:[%s12 + $0x2e8] sm:$0xff]
    %v6561 = vld [vmem:[%s12 + $0x2f0] sm:$0xff]
    %v6562 = vld [vmem:[%s12 + $0x2f8] sm:$0xff]
    %v6563 = vld [vmem:[%s12 + $0x300] sm:$0xff]
    %v6564 = vld [vmem:[%s12 + $0x308] sm:$0xff]
    %v6565 = vld [vmem:[%s12 + $0x310] sm:$0xff]
    %v6566 = vld [vmem:[%s12 + $0x318] sm:$0xff]
    %v6567 = vld [vmem:[%s12 + $0x320] sm:$0xff]
    %v6568 = vld [vmem:[%s12 + $0x328] sm:$0xff]
    %v6569 = vld [vmem:[%s12 + $0x330] sm:$0xff]
    %v6570 = vld [vmem:[%s12 + $0x338] sm:$0xff]
    %v6571 = vld [vmem:[%s12 + $0x340] sm:$0xff]
    %v6572 = vld [vmem:[%s12 + $0x348] sm:$0xff]
    %v6573 = vld [vmem:[%s12 + $0x350] sm:$0xff]
    %v6574 = vld [vmem:[%s12 + $0x358] sm:$0xff]
    %v6575 = vld [vmem:[%s12 + $0x360] sm:$0xff]
    %v6576 = vld [vmem:[%s12 + $0x368] sm:$0xff]
    %v6577 = vld [vmem:[%s12 + $0x370] sm:$0xff]
    %v6578 = vld [vmem:[%s12 + $0x378] sm:$0xff]
    %v6579 = vld [vmem:[%s12 + $0x380] sm:$0xff]
    %v6580 = vld [vmem:[%s12 + $0x388] sm:$0xff]
    %v6581 = vld [vmem:[%s12 + $0x390] sm:$0xff]
    %v6582 = vld [vmem:[%s12 + $0x398] sm:$0xff]
    %v6583 = vld [vmem:[%s12 + $0x3a0] sm:$0xff]
    %v6584 = vld [vmem:[%s12 + $0x3a8] sm:$0xff]
    %v6585 = vld [vmem:[%s12 + $0x3b0] sm:$0xff]
    %v6586 = vld [vmem:[%s12 + $0x3b8] sm:$0xff]
    %v6587 = vld [vmem:[%s12 + $0x3c0] sm:$0xff]
    %v6588 = vld [vmem:[%s12 + $0x3c8] sm:$0xff]
    %v6589 = vld [vmem:[%s12 + $0x3d0] sm:$0xff]
    %v6590 = vld [vmem:[%s12 + $0x3d8] sm:$0xff]
    %v6591 = vld [vmem:[%s12 + $0x3e0] sm:$0xff]
    %v6592 = vld [vmem:[%s12 + $0x3e8] sm:$0xff]
    %v6593 = vld [vmem:[%s12 + $0x3f0] sm:$0xff]
    %v6594 = vld [vmem:[%s12 + $0x3f8] sm:$0xff]
    %v6723 = vunpack.c.l.b16 %v6467
    %v6724 = vunpack.c.h.b16 %v6467
    %v6725 = vunpack.c.l.b16 %v6468
    %v6726 = vunpack.c.h.b16 %v6468
    %v6727 = vunpack.c.l.b16 %v6469
    %v6728 = vunpack.c.h.b16 %v6469
    %v6729 = vunpack.c.l.b16 %v6470
    %v6730 = vunpack.c.h.b16 %v6470
    %v6731 = vunpack.c.l.b16 %v6471
    %v6732 = vunpack.c.h.b16 %v6471
    %v6733 = vunpack.c.l.b16 %v6472
    %v6734 = vunpack.c.h.b16 %v6472
    %v6735 = vunpack.c.l.b16 %v6473
    %v6736 = vunpack.c.h.b16 %v6473
    %v6737 = vunpack.c.l.b16 %v6474
    %v6738 = vunpack.c.h.b16 %v6474
    %v6739 = vunpack.c.l.b16 %v6475
    %v6740 = vunpack.c.h.b16 %v6475
    %v6741 = vunpack.c.l.b16 %v6476
    %v6742 = vunpack.c.h.b16 %v6476
    %v6743 = vunpack.c.l.b16 %v6477
    %v6744 = vunpack.c.h.b16 %v6477
    %v6745 = vunpack.c.l.b16 %v6478
    %v6746 = vunpack.c.h.b16 %v6478
    %v6747 = vunpack.c.l.b16 %v6479
    %v6748 = vunpack.c.h.b16 %v6479
    %v6749 = vunpack.c.l.b16 %v6480
    %v6750 = vunpack.c.h.b16 %v6480
    %v6751 = vunpack.c.l.b16 %v6481
    %v6752 = vunpack.c.h.b16 %v6481
    %v6753 = vunpack.c.l.b16 %v6482
    %v6754 = vunpack.c.h.b16 %v6482
    %v6755 = vunpack.c.l.b16 %v6483
    %v6756 = vunpack.c.h.b16 %v6483
    %v6757 = vunpack.c.l.b16 %v6484
    %v6758 = vunpack.c.h.b16 %v6484
    %v6759 = vunpack.c.l.b16 %v6485
    %v6760 = vunpack.c.h.b16 %v6485
    %v6761 = vunpack.c.l.b16 %v6486
    %v6762 = vunpack.c.h.b16 %v6486
    %v6763 = vunpack.c.l.b16 %v6487
    %v6764 = vunpack.c.h.b16 %v6487
    %v6765 = vunpack.c.l.b16 %v6488
    %v6766 = vunpack.c.h.b16 %v6488
    %v6767 = vunpack.c.l.b16 %v6489
    %v6768 = vunpack.c.h.b16 %v6489
    %v6769 = vunpack.c.l.b16 %v6490
    %v6770 = vunpack.c.h.b16 %v6490
    %v6771 = vunpack.c.l.b16 %v6491
    %v6772 = vunpack.c.h.b16 %v6491
    %v6773 = vunpack.c.l.b16 %v6492
    %v6774 = vunpack.c.h.b16 %v6492
    %v6775 = vunpack.c.l.b16 %v6493
    %v6776 = vunpack.c.h.b16 %v6493
    %v6777 = vunpack.c.l.b16 %v6494
    %v6778 = vunpack.c.h.b16 %v6494
    %v6779 = vunpack.c.l.b16 %v6495
    %v6780 = vunpack.c.h.b16 %v6495
    %v6781 = vunpack.c.l.b16 %v6496
    %v6782 = vunpack.c.h.b16 %v6496
    %v6783 = vunpack.c.l.b16 %v6497
    %v6784 = vunpack.c.h.b16 %v6497
    %v6785 = vunpack.c.l.b16 %v6498
    %v6786 = vunpack.c.h.b16 %v6498
    %v6787 = vunpack.c.l.b16 %v6499
    %v6788 = vunpack.c.h.b16 %v6499
    %v6789 = vunpack.c.l.b16 %v6500
    %v6790 = vunpack.c.h.b16 %v6500
    %v6791 = vunpack.c.l.b16 %v6501
    %v6792 = vunpack.c.h.b16 %v6501
    %v6793 = vunpack.c.l.b16 %v6502
    %v6794 = vunpack.c.h.b16 %v6502
    %v6795 = vunpack.c.l.b16 %v6503
    %v6796 = vunpack.c.h.b16 %v6503
    %v6797 = vunpack.c.l.b16 %v6504
    %v6798 = vunpack.c.h.b16 %v6504
    %v6799 = vunpack.c.l.b16 %v6505
    %v6800 = vunpack.c.h.b16 %v6505
    %v6801 = vunpack.c.l.b16 %v6506
    %v6802 = vunpack.c.h.b16 %v6506
    %v6803 = vunpack.c.l.b16 %v6507
    %v6804 = vunpack.c.h.b16 %v6507
    %v6805 = vunpack.c.l.b16 %v6508
    %v6806 = vunpack.c.h.b16 %v6508
    %v6807 = vunpack.c.l.b16 %v6509
    %v6808 = vunpack.c.h.b16 %v6509
    %v6809 = vunpack.c.l.b16 %v6510
    %v6810 = vunpack.c.h.b16 %v6510
    %v6811 = vunpack.c.l.b16 %v6511
    %v6812 = vunpack.c.h.b16 %v6511
    %v6813 = vunpack.c.l.b16 %v6512
    %v6814 = vunpack.c.h.b16 %v6512
    %v6815 = vunpack.c.l.b16 %v6513
    %v6816 = vunpack.c.h.b16 %v6513
    %v6817 = vunpack.c.l.b16 %v6514
    %v6818 = vunpack.c.h.b16 %v6514
    %v6819 = vunpack.c.l.b16 %v6515
    %v6820 = vunpack.c.h.b16 %v6515
    %v6821 = vunpack.c.l.b16 %v6516
    %v6822 = vunpack.c.h.b16 %v6516
    %v6823 = vunpack.c.l.b16 %v6517
    %v6824 = vunpack.c.h.b16 %v6517
    %v6825 = vunpack.c.l.b16 %v6518
    %v6826 = vunpack.c.h.b16 %v6518
    %v6827 = vunpack.c.l.b16 %v6519
    %v6828 = vunpack.c.h.b16 %v6519
    %v6829 = vunpack.c.l.b16 %v6520
    %v6830 = vunpack.c.h.b16 %v6520
    %v6831 = vunpack.c.l.b16 %v6521
    %v6832 = vunpack.c.h.b16 %v6521
    %v6833 = vunpack.c.l.b16 %v6522
    %v6834 = vunpack.c.h.b16 %v6522
    %v6835 = vunpack.c.l.b16 %v6523
    %v6836 = vunpack.c.h.b16 %v6523
    %v6837 = vunpack.c.l.b16 %v6524
    %v6838 = vunpack.c.h.b16 %v6524
    %v6839 = vunpack.c.l.b16 %v6525
    %v6840 = vunpack.c.h.b16 %v6525
    %v6841 = vunpack.c.l.b16 %v6526
    %v6842 = vunpack.c.h.b16 %v6526
    %v6843 = vunpack.c.l.b16 %v6527
    %v6844 = vunpack.c.h.b16 %v6527
    %v6845 = vunpack.c.l.b16 %v6528
    %v6846 = vunpack.c.h.b16 %v6528
    %v6847 = vunpack.c.l.b16 %v6529
    %v6848 = vunpack.c.h.b16 %v6529
    %v6849 = vunpack.c.l.b16 %v6530
    %v6850 = vunpack.c.h.b16 %v6530
    %v6851 = vunpack.c.l.b16 %v6531
    %v6852 = vunpack.c.h.b16 %v6531
    %v6853 = vunpack.c.l.b16 %v6532
    %v6854 = vunpack.c.h.b16 %v6532
    %v6855 = vunpack.c.l.b16 %v6533
    %v6856 = vunpack.c.h.b16 %v6533
    %v6857 = vunpack.c.l.b16 %v6534
    %v6858 = vunpack.c.h.b16 %v6534
    %v6859 = vunpack.c.l.b16 %v6535
    %v6860 = vunpack.c.h.b16 %v6535
    %v6861 = vunpack.c.l.b16 %v6536
    %v6862 = vunpack.c.h.b16 %v6536
    %v6863 = vunpack.c.l.b16 %v6537
    %v6864 = vunpack.c.h.b16 %v6537
    %v6865 = vunpack.c.l.b16 %v6538
    %v6866 = vunpack.c.h.b16 %v6538
    %v6867 = vunpack.c.l.b16 %v6539
    %v6868 = vunpack.c.h.b16 %v6539
    %v6869 = vunpack.c.l.b16 %v6540
    %v6870 = vunpack.c.h.b16 %v6540
    %v6871 = vunpack.c.l.b16 %v6541
    %v6872 = vunpack.c.h.b16 %v6541
    %v6873 = vunpack.c.l.b16 %v6542
    %v6874 = vunpack.c.h.b16 %v6542
    %v6875 = vunpack.c.l.b16 %v6543
    %v6876 = vunpack.c.h.b16 %v6543
    %v6877 = vunpack.c.l.b16 %v6544
    %v6878 = vunpack.c.h.b16 %v6544
    %v6879 = vunpack.c.l.b16 %v6545
    %v6880 = vunpack.c.h.b16 %v6545
    %v6881 = vunpack.c.l.b16 %v6546
    %v6882 = vunpack.c.h.b16 %v6546
    %v6883 = vunpack.c.l.b16 %v6547
    %v6884 = vunpack.c.h.b16 %v6547
    %v6885 = vunpack.c.l.b16 %v6548
    %v6886 = vunpack.c.h.b16 %v6548
    %v6887 = vunpack.c.l.b16 %v6549
    %v6888 = vunpack.c.h.b16 %v6549
    %v6889 = vunpack.c.l.b16 %v6550
    %v6890 = vunpack.c.h.b16 %v6550
    %v6891 = vunpack.c.l.b16 %v6551
    %v6892 = vunpack.c.h.b16 %v6551
    %v6893 = vunpack.c.l.b16 %v6552
    %v6894 = vunpack.c.h.b16 %v6552
    %v6895 = vunpack.c.l.b16 %v6553
    %v6896 = vunpack.c.h.b16 %v6553
    %v6897 = vunpack.c.l.b16 %v6554
    %v6898 = vunpack.c.h.b16 %v6554
    %v6899 = vunpack.c.l.b16 %v6555
    %v6900 = vunpack.c.h.b16 %v6555
    %v6901 = vunpack.c.l.b16 %v6556
    %v6902 = vunpack.c.h.b16 %v6556
    %v6903 = vunpack.c.l.b16 %v6557
    %v6904 = vunpack.c.h.b16 %v6557
    %v6905 = vunpack.c.l.b16 %v6558
    %v6906 = vunpack.c.h.b16 %v6558
    %v6907 = vunpack.c.l.b16 %v6559
    %v6908 = vunpack.c.h.b16 %v6559
    %v6909 = vunpack.c.l.b16 %v6560
    %v6910 = vunpack.c.h.b16 %v6560
    %v6911 = vunpack.c.l.b16 %v6561
    %v6912 = vunpack.c.h.b16 %v6561
    %v6913 = vunpack.c.l.b16 %v6562
    %v6914 = vunpack.c.h.b16 %v6562
    %v6915 = vunpack.c.l.b16 %v6563
    %v6916 = vunpack.c.h.b16 %v6563
    %v6917 = vunpack.c.l.b16 %v6564
    %v6918 = vunpack.c.h.b16 %v6564
    %v6919 = vunpack.c.l.b16 %v6565
    %v6920 = vunpack.c.h.b16 %v6565
    %v6921 = vunpack.c.l.b16 %v6566
    %v6922 = vunpack.c.h.b16 %v6566
    %v6923 = vunpack.c.l.b16 %v6567
    %v6924 = vunpack.c.h.b16 %v6567
    %v6925 = vunpack.c.l.b16 %v6568
    %v6926 = vunpack.c.h.b16 %v6568
    %v6927 = vunpack.c.l.b16 %v6569
    %v6928 = vunpack.c.h.b16 %v6569
    %v6929 = vunpack.c.l.b16 %v6570
    %v6930 = vunpack.c.h.b16 %v6570
    %v6931 = vunpack.c.l.b16 %v6571
    %v6932 = vunpack.c.h.b16 %v6571
    %v6933 = vunpack.c.l.b16 %v6572
    %v6934 = vunpack.c.h.b16 %v6572
    %v6935 = vunpack.c.l.b16 %v6573
    %v6936 = vunpack.c.h.b16 %v6573
    %v6937 = vunpack.c.l.b16 %v6574
    %v6938 = vunpack.c.h.b16 %v6574
    %v6939 = vunpack.c.l.b16 %v6575
    %v6940 = vunpack.c.h.b16 %v6575
    %v6941 = vunpack.c.l.b16 %v6576
    %v6942 = vunpack.c.h.b16 %v6576
    %v6943 = vunpack.c.l.b16 %v6577
    %v6944 = vunpack.c.h.b16 %v6577
    %v6945 = vunpack.c.l.b16 %v6578
    %v6946 = vunpack.c.h.b16 %v6578
    %v6947 = vunpack.c.l.b16 %v6579
    %v6948 = vunpack.c.h.b16 %v6579
    %v6949 = vunpack.c.l.b16 %v6580
    %v6950 = vunpack.c.h.b16 %v6580
    %v6951 = vunpack.c.l.b16 %v6581
    %v6952 = vunpack.c.h.b16 %v6581
    %v6953 = vunpack.c.l.b16 %v6582
    %v6954 = vunpack.c.h.b16 %v6582
    %v6955 = vunpack.c.l.b16 %v6583
    %v6956 = vunpack.c.h.b16 %v6583
    %v6957 = vunpack.c.l.b16 %v6584
    %v6958 = vunpack.c.h.b16 %v6584
    %v6959 = vunpack.c.l.b16 %v6585
    %v6960 = vunpack.c.h.b16 %v6585
    %v6961 = vunpack.c.l.b16 %v6586
    %v6962 = vunpack.c.h.b16 %v6586
    %v6963 = vunpack.c.l.b16 %v6587
    %v6964 = vunpack.c.h.b16 %v6587
    %v6965 = vunpack.c.l.b16 %v6588
    %v6966 = vunpack.c.h.b16 %v6588
    %v6967 = vunpack.c.l.b16 %v6589
    %v6968 = vunpack.c.h.b16 %v6589
    %v6969 = vunpack.c.l.b16 %v6590
    %v6970 = vunpack.c.h.b16 %v6590
    %v6971 = vunpack.c.l.b16 %v6591
    %v6972 = vunpack.c.h.b16 %v6591
    %v6973 = vunpack.c.l.b16 %v6592
    %v6974 = vunpack.c.h.b16 %v6592
    %v6975 = vunpack.c.l.b16 %v6593
    %v6976 = vunpack.c.h.b16 %v6593
    %v6977 = vunpack.c.l.b16 %v6594
    %v6978 = vunpack.c.h.b16 %v6594
    %v6979 = vpack.c.b16 %v6727, %v6723
    %v6980 = vpack.c.b16 %v6728, %v6724
    %v6981 = vpack.c.b16 %v6729, %v6725
    %v6982 = vpack.c.b16 %v6730, %v6726
    %v6983 = vpack.c.b16 %v6735, %v6731
    %v6984 = vpack.c.b16 %v6736, %v6732
    %v6985 = vpack.c.b16 %v6737, %v6733
    %v6986 = vpack.c.b16 %v6738, %v6734
    %v6987 = vpack.c.b16 %v6743, %v6739
    %v6988 = vpack.c.b16 %v6744, %v6740
    %v6989 = vpack.c.b16 %v6745, %v6741
    %v6990 = vpack.c.b16 %v6746, %v6742
    %v6991 = vpack.c.b16 %v6751, %v6747
    %v6992 = vpack.c.b16 %v6752, %v6748
    %v6993 = vpack.c.b16 %v6753, %v6749
    %v6994 = vpack.c.b16 %v6754, %v6750
    %v6995 = vpack.c.b16 %v6759, %v6755
    %v6996 = vpack.c.b16 %v6760, %v6756
    %v6997 = vpack.c.b16 %v6761, %v6757
    %v6998 = vpack.c.b16 %v6762, %v6758
    %v6999 = vpack.c.b16 %v6767, %v6763
    %v7000 = vpack.c.b16 %v6768, %v6764
    %v7001 = vpack.c.b16 %v6769, %v6765
    %v7002 = vpack.c.b16 %v6770, %v6766
    %v7003 = vpack.c.b16 %v6775, %v6771
    %v7004 = vpack.c.b16 %v6776, %v6772
    %v7005 = vpack.c.b16 %v6777, %v6773
    %v7006 = vpack.c.b16 %v6778, %v6774
    %v7007 = vpack.c.b16 %v6783, %v6779
    %v7008 = vpack.c.b16 %v6784, %v6780
    %v7009 = vpack.c.b16 %v6785, %v6781
    %v7010 = vpack.c.b16 %v6786, %v6782
    %v7011 = vpack.c.b16 %v6791, %v6787
    %v7012 = vpack.c.b16 %v6792, %v6788
    %v7013 = vpack.c.b16 %v6793, %v6789
    %v7014 = vpack.c.b16 %v6794, %v6790
    %v7015 = vpack.c.b16 %v6799, %v6795
    %v7016 = vpack.c.b16 %v6800, %v6796
    %v7017 = vpack.c.b16 %v6801, %v6797
    %v7018 = vpack.c.b16 %v6802, %v6798
    %v7019 = vpack.c.b16 %v6807, %v6803
    %v7020 = vpack.c.b16 %v6808, %v6804
    %v7021 = vpack.c.b16 %v6809, %v6805
    %v7022 = vpack.c.b16 %v6810, %v6806
    %v7023 = vpack.c.b16 %v6815, %v6811
    %v7024 = vpack.c.b16 %v6816, %v6812
    %v7025 = vpack.c.b16 %v6817, %v6813
    %v7026 = vpack.c.b16 %v6818, %v6814
    %v7027 = vpack.c.b16 %v6823, %v6819
    %v7028 = vpack.c.b16 %v6824, %v6820
    %v7029 = vpack.c.b16 %v6825, %v6821
    %v7030 = vpack.c.b16 %v6826, %v6822
    %v7031 = vpack.c.b16 %v6831, %v6827
    %v7032 = vpack.c.b16 %v6832, %v6828
    %v7033 = vpack.c.b16 %v6833, %v6829
    %v7034 = vpack.c.b16 %v6834, %v6830
    %v7035 = vpack.c.b16 %v6839, %v6835
    %v7036 = vpack.c.b16 %v6840, %v6836
    %v7037 = vpack.c.b16 %v6841, %v6837
    %v7038 = vpack.c.b16 %v6842, %v6838
    %v7039 = vpack.c.b16 %v6847, %v6843
    %v7040 = vpack.c.b16 %v6848, %v6844
    %v7041 = vpack.c.b16 %v6849, %v6845
    %v7042 = vpack.c.b16 %v6850, %v6846
    %v7043 = vpack.c.b16 %v6855, %v6851
    %v7044 = vpack.c.b16 %v6856, %v6852
    %v7045 = vpack.c.b16 %v6857, %v6853
    %v7046 = vpack.c.b16 %v6858, %v6854
    %v7047 = vpack.c.b16 %v6863, %v6859
    %v7048 = vpack.c.b16 %v6864, %v6860
    %v7049 = vpack.c.b16 %v6865, %v6861
    %v7050 = vpack.c.b16 %v6866, %v6862
    %v7051 = vpack.c.b16 %v6871, %v6867
    %v7052 = vpack.c.b16 %v6872, %v6868
    %v7053 = vpack.c.b16 %v6873, %v6869
    %v7054 = vpack.c.b16 %v6874, %v6870
    %v7055 = vpack.c.b16 %v6879, %v6875
    %v7056 = vpack.c.b16 %v6880, %v6876
    %v7057 = vpack.c.b16 %v6881, %v6877
    %v7058 = vpack.c.b16 %v6882, %v6878
    %v7059 = vpack.c.b16 %v6887, %v6883
    %v7060 = vpack.c.b16 %v6888, %v6884
    %v7061 = vpack.c.b16 %v6889, %v6885
    %v7062 = vpack.c.b16 %v6890, %v6886
    %v7063 = vpack.c.b16 %v6895, %v6891
    %v7064 = vpack.c.b16 %v6896, %v6892
    %v7065 = vpack.c.b16 %v6897, %v6893
    %v7066 = vpack.c.b16 %v6898, %v6894
    %v7067 = vpack.c.b16 %v6903, %v6899
    %v7068 = vpack.c.b16 %v6904, %v6900
    %v7069 = vpack.c.b16 %v6905, %v6901
    %v7070 = vpack.c.b16 %v6906, %v6902
    %v7071 = vpack.c.b16 %v6911, %v6907
    %v7072 = vpack.c.b16 %v6912, %v6908
    %v7073 = vpack.c.b16 %v6913, %v6909
    %v7074 = vpack.c.b16 %v6914, %v6910
    %v7075 = vpack.c.b16 %v6919, %v6915
    %v7076 = vpack.c.b16 %v6920, %v6916
    %v7077 = vpack.c.b16 %v6921, %v6917
    %v7078 = vpack.c.b16 %v6922, %v6918
    %v7079 = vpack.c.b16 %v6927, %v6923
    %v7080 = vpack.c.b16 %v6928, %v6924
    %v7081 = vpack.c.b16 %v6929, %v6925
    %v7082 = vpack.c.b16 %v6930, %v6926
    %v7083 = vpack.c.b16 %v6935, %v6931
    %v7084 = vpack.c.b16 %v6936, %v6932
    %v7085 = vpack.c.b16 %v6937, %v6933
    %v7086 = vpack.c.b16 %v6938, %v6934
    %v7087 = vpack.c.b16 %v6943, %v6939
    %v7088 = vpack.c.b16 %v6944, %v6940
    %v7089 = vpack.c.b16 %v6945, %v6941
    %v7090 = vpack.c.b16 %v6946, %v6942
    %v7091 = vpack.c.b16 %v6951, %v6947
    %v7092 = vpack.c.b16 %v6952, %v6948
    %v7093 = vpack.c.b16 %v6953, %v6949
    %v7094 = vpack.c.b16 %v6954, %v6950
    %v7095 = vpack.c.b16 %v6959, %v6955
    %v7096 = vpack.c.b16 %v6960, %v6956
    %v7097 = vpack.c.b16 %v6961, %v6957
    %v7098 = vpack.c.b16 %v6962, %v6958
    %v7099 = vpack.c.b16 %v6967, %v6963
    %v7100 = vpack.c.b16 %v6968, %v6964
    %v7101 = vpack.c.b16 %v6969, %v6965
    %v7102 = vpack.c.b16 %v6970, %v6966
    %v7103 = vpack.c.b16 %v6975, %v6971
    %v7104 = vpack.c.b16 %v6976, %v6972
    %v7105 = vpack.c.b16 %v6977, %v6973
    %v7106 = vpack.c.b16 %v6978, %v6974
    %7235 = vmatprep.subr.bf16.mxu0 %v6980
    %7236 = vmatpush1.bf16.msra.mxu0 %v6979
    %7237 = vmatprep.subr.bf16.mxu0 %v6984
    %7238 = vmatpush1.bf16.msra.mxu0 %v6983
    %7239 = vmatprep.subr.bf16.mxu0 %v6988
    %7240 = vmatpush1.bf16.msra.mxu0 %v6987
    %7241 = vmatprep.subr.bf16.mxu0 %v6992
    %7242 = vmatpush1.bf16.msra.mxu0 %v6991
    %7243 = vmatprep.subr.bf16.mxu0 %v6996
    %7244 = vmatpush1.bf16.msra.mxu0 %v6995
    %7245 = vmatprep.subr.bf16.mxu0 %v7000
    %7246 = vmatpush1.bf16.msra.mxu0 %v6999
    %7247 = vmatprep.subr.bf16.mxu0 %v7004
    %7248 = vmatpush1.bf16.msra.mxu0 %v7003
    %7249 = vmatprep.subr.bf16.mxu0 %v7008
    %7250 = vmatpush1.bf16.msra.mxu0 %v7007
    %7251 = vmatprep.subr.bf16.mxu0 %v7012
    %7252 = vmatpush1.bf16.msra.mxu0 %v7011
    %7253 = vmatprep.subr.bf16.mxu0 %v7016
    %7254 = vmatpush1.bf16.msra.mxu0 %v7015
    %7255 = vmatprep.subr.bf16.mxu0 %v7020
    %7256 = vmatpush1.bf16.msra.mxu0 %v7019
    %7257 = vmatprep.subr.bf16.mxu0 %v7024
    %7258 = vmatpush1.bf16.msra.mxu0 %v7023
    %7259 = vmatprep.subr.bf16.mxu0 %v7028
    %7260 = vmatpush1.bf16.msra.mxu0 %v7027
    %7261 = vmatprep.subr.bf16.mxu0 %v7032
    %7262 = vmatpush1.bf16.msra.mxu0 %v7031
    %7263 = vmatprep.subr.bf16.mxu0 %v7036
    %7264 = vmatpush1.bf16.msra.mxu0 %v7035
    %7265 = vmatprep.subr.bf16.mxu0 %v7040
    %7266 = vmatpush1.bf16.msra.mxu0 %v7039
    %7267 = vmatprep.mubr.bf16.mxu0 %v6340
    %7268 = vmatmul.mubr.bf16.gmra.mrb[0].mxu0 %v6339
    %v7269 = vpop.f32.mrb[0].mxu0
    %v7270 = vadd.f32 0.0, %v7269
    %v7271 = vpop.f32.mrb[0].mxu0
    %v7272 = vadd.f32 0.0, %v7271
    %v7273 = vpop.f32.mrb[0].mxu0
    %v7274 = vadd.f32 0.0, %v7273
    %v7275 = vpop.f32.mrb[0].mxu0
    %v7276 = vadd.f32 0.0, %v7275
    %7277 = vmatprep.mubr.bf16.mxu0 %v6344
    %7278 = vmatmul.mubr.bf16.gmra.mrb[0].mxu0 %v6343
    %v7279 = vpop.f32.mrb[0].mxu0
    %v7280 = vadd.f32 0.0, %v7279
    %v7281 = vpop.f32.mrb[0].mxu0
    %v7282 = vadd.f32 0.0, %v7281
    %v7283 = vpop.f32.mrb[0].mxu0
    %v7284 = vadd.f32 0.0, %v7283
    %v7285 = vpop.f32.mrb[0].mxu0
    %v7286 = vadd.f32 0.0, %v7285
    %7287 = vmatprep.mubr.bf16.mxu0 %v6348
    %7288 = vmatmul.mubr.bf16.gmra.mrb[0].mxu0 %v6347
    %v7289 = vpop.f32.mrb[0].mxu0
    %v7290 = vadd.f32 0.0, %v7289
    %v7291 = vpop.f32.mrb[0].mxu0
    %v7292 = vadd.f32 0.0, %v7291
    %v7293 = vpop.f32.mrb[0].mxu0
    %v7294 = vadd.f32 0.0, %v7293
    %v7295 = vpop.f32.mrb[0].mxu0
    %v7296 = vadd.f32 0.0, %v7295
    %7297 = vmatprep.mubr.bf16.mxu0 %v6352
    %7298 = vmatmul.mubr.bf16.gmra.mrb[0].mxu0 %v6351
    %v7299 = vpop.f32.mrb[0].mxu0
    %v7300 = vadd.f32 0.0, %v7299
    %v7301 = vpop.f32.mrb[0].mxu0
    %v7302 = vadd.f32 0.0, %v7301
    %v7303 = vpop.f32.mrb[0].mxu0
    %v7304 = vadd.f32 0.0, %v7303
    %v7305 = vpop.f32.mrb[0].mxu0
    %v7306 = vadd.f32 0.0, %v7305
    %7307 = vmatprep.mubr.bf16.mxu0 %v6356
    %7308 = vmatmul.mubr.bf16.gmra.mrb[0].mxu0 %v6355
    %v7309 = vpop.f32.mrb[0].mxu0
    %v7310 = vadd.f32 0.0, %v7309
    %v7311 = vpop.f32.mrb[0].mxu0
    %v7312 = vadd.f32 0.0, %v7311
    %v7313 = vpop.f32.mrb[0].mxu0
    %v7314 = vadd.f32 0.0, %v7313
    %v7315 = vpop.f32.mrb[0].mxu0
    %v7316 = vadd.f32 0.0, %v7315
    %7317 = vmatprep.mubr.bf16.mxu0 %v6360
    %7318 = vmatmul.mubr.bf16.gmra.mrb[0].mxu0 %v6359
    %v7319 = vpop.f32.mrb[0].mxu0
    %v7320 = vadd.f32 0.0, %v7319
    %v7321 = vpop.f32.mrb[0].mxu0
    %v7322 = vadd.f32 0.0, %v7321
    %v7323 = vpop.f32.mrb[0].mxu0
    %v7324 = vadd.f32 0.0, %v7323
    %v7325 = vpop.f32.mrb[0].mxu0
    %v7326 = vadd.f32 0.0, %v7325
    %7327 = vmatprep.mubr.bf16.mxu0 %v6364
    %7328 = vmatmul.mubr.bf16.gmra.mrb[0].mxu0 %v6363
    %v7329 = vpop.f32.mrb[0].mxu0
    %v7330 = vadd.f32 0.0, %v7329
    %v7331 = vpop.f32.mrb[0].mxu0
    %v7332 = vadd.f32 0.0, %v7331
    %v7333 = vpop.f32.mrb[0].mxu0
    %v7334 = vadd.f32 0.0, %v7333
    %v7335 = vpop.f32.mrb[0].mxu0
    %v7336 = vadd.f32 0.0, %v7335
    %7337 = vmatprep.mubr.bf16.mxu0 %v6368
    %7338 = vmatmul.mubr.bf16.gmra.mrb[0].mxu0 %v6367
    %v7339 = vpop.f32.mrb[0].mxu0
    %v7340 = vadd.f32 0.0, %v7339
    %v7341 = vpop.f32.mrb[0].mxu0
    %v7342 = vadd.f32 0.0, %v7341
    %v7343 = vpop.f32.mrb[0].mxu0
    %v7344 = vadd.f32 0.0, %v7343
    %v7345 = vpop.f32.mrb[0].mxu0
    %v7346 = vadd.f32 0.0, %v7345
    %7347 = vmatprep.mubr.bf16.mxu0 %v6372
    %7348 = vmatmul.mubr.bf16.gmra.mrb[0].mxu0 %v6371
    %v7349 = vpop.f32.mrb[0].mxu0
    %v7350 = vadd.f32 0.0, %v7349
    %v7351 = vpop.f32.mrb[0].mxu0
    %v7352 = vadd.f32 0.0, %v7351
    %v7353 = vpop.f32.mrb[0].mxu0
    %v7354 = vadd.f32 0.0, %v7353
    %v7355 = vpop.f32.mrb[0].mxu0
    %v7356 = vadd.f32 0.0, %v7355
    %7357 = vmatprep.mubr.bf16.mxu0 %v6376
    %7358 = vmatmul.mubr.bf16.gmra.mrb[0].mxu0 %v6375
    %v7359 = vpop.f32.mrb[0].mxu0
    %v7360 = vadd.f32 0.0, %v7359
    %v7361 = vpop.f32.mrb[0].mxu0
    %v7362 = vadd.f32 0.0, %v7361
    %v7363 = vpop.f32.mrb[0].mxu0
    %v7364 = vadd.f32 0.0, %v7363
    %v7365 = vpop.f32.mrb[0].mxu0
    %v7366 = vadd.f32 0.0, %v7365
    %7367 = vmatprep.mubr.bf16.mxu0 %v6380
    %7368 = vmatmul.mubr.bf16.gmra.mrb[0].mxu0 %v6379
    %v7369 = vpop.f32.mrb[0].mxu0
    %v7370 = vadd.f32 0.0, %v7369
    %v7371 = vpop.f32.mrb[0].mxu0
    %v7372 = vadd.f32 0.0, %v7371
    %v7373 = vpop.f32.mrb[0].mxu0
    %v7374 = vadd.f32 0.0, %v7373
    %v7375 = vpop.f32.mrb[0].mxu0
    %v7376 = vadd.f32 0.0, %v7375
    %7377 = vmatprep.mubr.bf16.mxu0 %v6384
    %7378 = vmatmul.mubr.bf16.gmra.mrb[0].mxu0 %v6383
    %v7379 = vpop.f32.mrb[0].mxu0
    %v7380 = vadd.f32 0.0, %v7379
    %v7381 = vpop.f32.mrb[0].mxu0
    %v7382 = vadd.f32 0.0, %v7381
    %v7383 = vpop.f32.mrb[0].mxu0
    %v7384 = vadd.f32 0.0, %v7383
    %v7385 = vpop.f32.mrb[0].mxu0
    %v7386 = vadd.f32 0.0, %v7385
    %7387 = vmatprep.mubr.bf16.mxu0 %v6388
    %7388 = vmatmul.mubr.bf16.gmra.mrb[0].mxu0 %v6387
    %v7389 = vpop.f32.mrb[0].mxu0
    %v7390 = vadd.f32 0.0, %v7389
    %v7391 = vpop.f32.mrb[0].mxu0
    %v7392 = vadd.f32 0.0, %v7391
    %v7393 = vpop.f32.mrb[0].mxu0
    %v7394 = vadd.f32 0.0, %v7393
    %v7395 = vpop.f32.mrb[0].mxu0
    %v7396 = vadd.f32 0.0, %v7395
    %7397 = vmatprep.mubr.bf16.mxu0 %v6392
    %7398 = vmatmul.mubr.bf16.gmra.mrb[0].mxu0 %v6391
    %v7399 = vpop.f32.mrb[0].mxu0
    %v7400 = vadd.f32 0.0, %v7399
    %v7401 = vpop.f32.mrb[0].mxu0
    %v7402 = vadd.f32 0.0, %v7401
    %v7403 = vpop.f32.mrb[0].mxu0
    %v7404 = vadd.f32 0.0, %v7403
    %v7405 = vpop.f32.mrb[0].mxu0
    %v7406 = vadd.f32 0.0, %v7405
    %7407 = vmatprep.mubr.bf16.mxu0 %v6396
    %7408 = vmatmul.mubr.bf16.gmra.mrb[0].mxu0 %v6395
    %v7409 = vpop.f32.mrb[0].mxu0
    %v7410 = vadd.f32 0.0, %v7409
    %v7411 = vpop.f32.mrb[0].mxu0
    %v7412 = vadd.f32 0.0, %v7411
    %v7413 = vpop.f32.mrb[0].mxu0
    %v7414 = vadd.f32 0.0, %v7413
    %v7415 = vpop.f32.mrb[0].mxu0
    %v7416 = vadd.f32 0.0, %v7415
    %7417 = vmatprep.mubr.bf16.mxu0 %v6400
    %7418 = vmatmul.mubr.bf16.gmra.mrb[0].mxu0 %v6399
    %v7419 = vpop.f32.mrb[0].mxu0
    %v7420 = vadd.f32 0.0, %v7419
    %v7421 = vpop.f32.mrb[0].mxu0
    %v7422 = vadd.f32 0.0, %v7421
    %v7423 = vpop.f32.mrb[0].mxu0
    %v7424 = vadd.f32 0.0, %v7423
    %v7425 = vpop.f32.mrb[0].mxu0
    %v7426 = vadd.f32 0.0, %v7425
    %7427 = vmatprep.mubr.bf16.mxu0 %v6404
    %7428 = vmatmul.mubr.bf16.gmra.mrb[0].mxu0 %v6403
    %v7429 = vpop.f32.mrb[0].mxu0
    %v7430 = vadd.f32 0.0, %v7429
    %v7431 = vpop.f32.mrb[0].mxu0
    %v7432 = vadd.f32 0.0, %v7431
    %v7433 = vpop.f32.mrb[0].mxu0
    %v7434 = vadd.f32 0.0, %v7433
    %v7435 = vpop.f32.mrb[0].mxu0
    %v7436 = vadd.f32 0.0, %v7435
    %7437 = vmatprep.mubr.bf16.mxu0 %v6408
    %7438 = vmatmul.mubr.bf16.gmra.mrb[0].mxu0 %v6407
    %v7439 = vpop.f32.mrb[0].mxu0
    %v7440 = vadd.f32 0.0, %v7439
    %v7441 = vpop.f32.mrb[0].mxu0
    %v7442 = vadd.f32 0.0, %v7441
    %v7443 = vpop.f32.mrb[0].mxu0
    %v7444 = vadd.f32 0.0, %v7443
    %v7445 = vpop.f32.mrb[0].mxu0
    %v7446 = vadd.f32 0.0, %v7445
    %7447 = vmatprep.mubr.bf16.mxu0 %v6412
    %7448 = vmatmul.mubr.bf16.gmra.mrb[0].mxu0 %v6411
    %v7449 = vpop.f32.mrb[0].mxu0
    %v7450 = vadd.f32 0.0, %v7449
    %v7451 = vpop.f32.mrb[0].mxu0
    %v7452 = vadd.f32 0.0, %v7451
    %v7453 = vpop.f32.mrb[0].mxu0
    %v7454 = vadd.f32 0.0, %v7453
    %v7455 = vpop.f32.mrb[0].mxu0
    %v7456 = vadd.f32 0.0, %v7455
    %7457 = vmatprep.mubr.bf16.mxu0 %v6416
    %7458 = vmatmul.mubr.bf16.gmra.mrb[0].mxu0 %v6415
    %v7459 = vpop.f32.mrb[0].mxu0
    %v7460 = vadd.f32 0.0, %v7459
    %v7461 = vpop.f32.mrb[0].mxu0
    %v7462 = vadd.f32 0.0, %v7461
    %v7463 = vpop.f32.mrb[0].mxu0
    %v7464 = vadd.f32 0.0, %v7463
    %v7465 = vpop.f32.mrb[0].mxu0
    %v7466 = vadd.f32 0.0, %v7465
    %7467 = vmatprep.mubr.bf16.mxu0 %v6420
    %7468 = vmatmul.mubr.bf16.gmra.mrb[0].mxu0 %v6419
    %v7469 = vpop.f32.mrb[0].mxu0
    %v7470 = vadd.f32 0.0, %v7469
    %v7471 = vpop.f32.mrb[0].mxu0
    %v7472 = vadd.f32 0.0, %v7471
    %v7473 = vpop.f32.mrb[0].mxu0
    %v7474 = vadd.f32 0.0, %v7473
    %v7475 = vpop.f32.mrb[0].mxu0
    %v7476 = vadd.f32 0.0, %v7475
    %7477 = vmatprep.mubr.bf16.mxu0 %v6424
    %7478 = vmatmul.mubr.bf16.gmra.mrb[0].mxu0 %v6423
    %v7479 = vpop.f32.mrb[0].mxu0
    %v7480 = vadd.f32 0.0, %v7479
    %v7481 = vpop.f32.mrb[0].mxu0
    %v7482 = vadd.f32 0.0, %v7481
    %v7483 = vpop.f32.mrb[0].mxu0
    %v7484 = vadd.f32 0.0, %v7483
    %v7485 = vpop.f32.mrb[0].mxu0
    %v7486 = vadd.f32 0.0, %v7485
    %7487 = vmatprep.mubr.bf16.mxu0 %v6428
    %7488 = vmatmul.mubr.bf16.gmra.mrb[0].mxu0 %v6427
    %v7489 = vpop.f32.mrb[0].mxu0
    %v7490 = vadd.f32 0.0, %v7489
    %v7491 = vpop.f32.mrb[0].mxu0
    %v7492 = vadd.f32 0.0, %v7491
    %v7493 = vpop.f32.mrb[0].mxu0
    %v7494 = vadd.f32 0.0, %v7493
    %v7495 = vpop.f32.mrb[0].mxu0
    %v7496 = vadd.f32 0.0, %v7495
    %7497 = vmatprep.mubr.bf16.mxu0 %v6432
    %7498 = vmatmul.mubr.bf16.gmra.mrb[0].mxu0 %v6431
    %v7499 = vpop.f32.mrb[0].mxu0
    %v7500 = vadd.f32 0.0, %v7499
    %v7501 = vpop.f32.mrb[0].mxu0
    %v7502 = vadd.f32 0.0, %v7501
    %v7503 = vpop.f32.mrb[0].mxu0
    %v7504 = vadd.f32 0.0, %v7503
    %v7505 = vpop.f32.mrb[0].mxu0
    %v7506 = vadd.f32 0.0, %v7505
    %7507 = vmatprep.mubr.bf16.mxu0 %v6436
    %7508 = vmatmul.mubr.bf16.gmra.mrb[0].mxu0 %v6435
    %v7509 = vpop.f32.mrb[0].mxu0
    %v7510 = vadd.f32 0.0, %v7509
    %v7511 = vpop.f32.mrb[0].mxu0
    %v7512 = vadd.f32 0.0, %v7511
    %v7513 = vpop.f32.mrb[0].mxu0
    %v7514 = vadd.f32 0.0, %v7513
    %v7515 = vpop.f32.mrb[0].mxu0
    %v7516 = vadd.f32 0.0, %v7515
    %7517 = vmatprep.mubr.bf16.mxu0 %v6440
    %7518 = vmatmul.mubr.bf16.gmra.mrb[0].mxu0 %v6439
    %v7519 = vpop.f32.mrb[0].mxu0
    %v7520 = vadd.f32 0.0, %v7519
    %v7521 = vpop.f32.mrb[0].mxu0
    %v7522 = vadd.f32 0.0, %v7521
    %v7523 = vpop.f32.mrb[0].mxu0
    %v7524 = vadd.f32 0.0, %v7523
    %v7525 = vpop.f32.mrb[0].mxu0
    %v7526 = vadd.f32 0.0, %v7525
    %7527 = vmatprep.mubr.bf16.mxu0 %v6444
    %7528 = vmatmul.mubr.bf16.gmra.mrb[0].mxu0 %v6443
    %v7529 = vpop.f32.mrb[0].mxu0
    %v7530 = vadd.f32 0.0, %v7529
    %v7531 = vpop.f32.mrb[0].mxu0
    %v7532 = vadd.f32 0.0, %v7531
    %v7533 = vpop.f32.mrb[0].mxu0
    %v7534 = vadd.f32 0.0, %v7533
    %v7535 = vpop.f32.mrb[0].mxu0
    %v7536 = vadd.f32 0.0, %v7535
    %7537 = vmatprep.mubr.bf16.mxu0 %v6448
    %7538 = vmatmul.mubr.bf16.gmra.mrb[0].mxu0 %v6447
    %v7539 = vpop.f32.mrb[0].mxu0
    %v7540 = vadd.f32 0.0, %v7539
    %v7541 = vpop.f32.mrb[0].mxu0
    %v7542 = vadd.f32 0.0, %v7541
    %v7543 = vpop.f32.mrb[0].mxu0
    %v7544 = vadd.f32 0.0, %v7543
    %v7545 = vpop.f32.mrb[0].mxu0
    %v7546 = vadd.f32 0.0, %v7545
    %7547 = vmatprep.mubr.bf16.mxu0 %v6452
    %7548 = vmatmul.mubr.bf16.gmra.mrb[0].mxu0 %v6451
    %v7549 = vpop.f32.mrb[0].mxu0
    %v7550 = vadd.f32 0.0, %v7549
    %v7551 = vpop.f32.mrb[0].mxu0
    %v7552 = vadd.f32 0.0, %v7551
    %v7553 = vpop.f32.mrb[0].mxu0
    %v7554 = vadd.f32 0.0, %v7553
    %v7555 = vpop.f32.mrb[0].mxu0
    %v7556 = vadd.f32 0.0, %v7555
    %7557 = vmatprep.mubr.bf16.mxu0 %v6456
    %7558 = vmatmul.mubr.bf16.gmra.mrb[0].mxu0 %v6455
    %v7559 = vpop.f32.mrb[0].mxu0
    %v7560 = vadd.f32 0.0, %v7559
    %v7561 = vpop.f32.mrb[0].mxu0
    %v7562 = vadd.f32 0.0, %v7561
    %v7563 = vpop.f32.mrb[0].mxu0
    %v7564 = vadd.f32 0.0, %v7563
    %v7565 = vpop.f32.mrb[0].mxu0
    %v7566 = vadd.f32 0.0, %v7565
    %7567 = vmatprep.mubr.bf16.mxu0 %v6460
    %7568 = vmatmul.mubr.bf16.gmra.mrb[0].mxu0 %v6459
    %v7569 = vpop.f32.mrb[0].mxu0
    %v7570 = vadd.f32 0.0, %v7569
    %v7571 = vpop.f32.mrb[0].mxu0
    %v7572 = vadd.f32 0.0, %v7571
    %v7573 = vpop.f32.mrb[0].mxu0
    %v7574 = vadd.f32 0.0, %v7573
    %v7575 = vpop.f32.mrb[0].mxu0
    %v7576 = vadd.f32 0.0, %v7575
    %7577 = vmatprep.mubr.bf16.mxu0 %v6464
    %7578 = vmatmul.mubr.bf16.gmra.mrb[0].mxu0 %v6463
    %v7579 = vpop.f32.mrb[0].mxu0
    %v7580 = vadd.f32 0.0, %v7579
    %v7581 = vpop.f32.mrb[0].mxu0
    %v7582 = vadd.f32 0.0, %v7581
    %v7583 = vpop.f32.mrb[0].mxu0
    %v7584 = vadd.f32 0.0, %v7583
    %v7585 = vpop.f32.mrb[0].mxu0
    %v7586 = vadd.f32 0.0, %v7585
    %7587 = vdwg.mxu0
    %7588 = vmatprep.subr.bf16.mxu0 %v7044
    %7589 = vmatpush1.bf16.msra.mxu0 %v7043
    %7590 = vmatprep.subr.bf16.mxu0 %v7048
    %7591 = vmatpush1.bf16.msra.mxu0 %v7047
    %7592 = vmatprep.subr.bf16.mxu0 %v7052
    %7593 = vmatpush1.bf16.msra.mxu0 %v7051
    %7594 = vmatprep.subr.bf16.mxu0 %v7056
    %7595 = vmatpush1.bf16.msra.mxu0 %v7055
    %7596 = vmatprep.subr.bf16.mxu0 %v7060
    %7597 = vmatpush1.bf16.msra.mxu0 %v7059
    %7598 = vmatprep.subr.bf16.mxu0 %v7064
    %7599 = vmatpush1.bf16.msra.mxu0 %v7063
    %7600 = vmatprep.subr.bf16.mxu0 %v7068
    %7601 = vmatpush1.bf16.msra.mxu0 %v7067
    %7602 = vmatprep.subr.bf16.mxu0 %v7072
    %7603 = vmatpush1.bf16.msra.mxu0 %v7071
    %7604 = vmatprep.subr.bf16.mxu0 %v7076
    %7605 = vmatpush1.bf16.msra.mxu0 %v7075
    %7606 = vmatprep.subr.bf16.mxu0 %v7080
    %7607 = vmatpush1.bf16.msra.mxu0 %v7079
    %7608 = vmatprep.subr.bf16.mxu0 %v7084
    %7609 = vmatpush1.bf16.msra.mxu0 %v7083
    %7610 = vmatprep.subr.bf16.mxu0 %v7088
    %7611 = vmatpush1.bf16.msra.mxu0 %v7087
    %7612 = vmatprep.subr.bf16.mxu0 %v7092
    %7613 = vmatpush1.bf16.msra.mxu0 %v7091
    %7614 = vmatprep.subr.bf16.mxu0 %v7096
    %7615 = vmatpush1.bf16.msra.mxu0 %v7095
    %7616 = vmatprep.subr.bf16.mxu0 %v7100
    %7617 = vmatpush1.bf16.msra.mxu0 %v7099
    %7618 = vmatprep.subr.bf16.mxu0 %v7104
    %7619 = vmatpush1.bf16.msra.mxu0 %v7103
    %7620 = vmatprep.mubr.bf16.mxu0 %v6342
    %7621 = vmatmul.mubr.bf16.gmra.mrb[0].mxu0 %v6341
    %v7622 = vpop.f32.mrb[0].mxu0
    %v7623 = vadd.f32 %v7270, %v7622
    %v7624 = vpop.f32.mrb[0].mxu0
    %v7625 = vadd.f32 %v7272, %v7624
    %v7626 = vpop.f32.mrb[0].mxu0
    %v7627 = vadd.f32 %v7274, %v7626
    %v7628 = vpop.f32.mrb[0].mxu0
    %v7629 = vadd.f32 %v7276, %v7628
    %7630 = vmatprep.mubr.bf16.mxu0 %v6346
    %7631 = vmatmul.mubr.bf16.gmra.mrb[0].mxu0 %v6345
    %v7632 = vpop.f32.mrb[0].mxu0
    %v7633 = vadd.f32 %v7280, %v7632
    %v7634 = vpop.f32.mrb[0].mxu0
    %v7635 = vadd.f32 %v7282, %v7634
    %v7636 = vpop.f32.mrb[0].mxu0
    %v7637 = vadd.f32 %v7284, %v7636
    %v7638 = vpop.f32.mrb[0].mxu0
    %v7639 = vadd.f32 %v7286, %v7638
    %7640 = vmatprep.mubr.bf16.mxu0 %v6350
    %7641 = vmatmul.mubr.bf16.gmra.mrb[0].mxu0 %v6349
    %v7642 = vpop.f32.mrb[0].mxu0
    %v7643 = vadd.f32 %v7290, %v7642
    %v7644 = vpop.f32.mrb[0].mxu0
    %v7645 = vadd.f32 %v7292, %v7644
    %v7646 = vpop.f32.mrb[0].mxu0
    %v7647 = vadd.f32 %v7294, %v7646
    %v7648 = vpop.f32.mrb[0].mxu0
    %v7649 = vadd.f32 %v7296, %v7648
    %7650 = vmatprep.mubr.bf16.mxu0 %v6354
    %7651 = vmatmul.mubr.bf16.gmra.mrb[0].mxu0 %v6353
    %v7652 = vpop.f32.mrb[0].mxu0
    %v7653 = vadd.f32 %v7300, %v7652
    %v7654 = vpop.f32.mrb[0].mxu0
    %v7655 = vadd.f32 %v7302, %v7654
    %v7656 = vpop.f32.mrb[0].mxu0
    %v7657 = vadd.f32 %v7304, %v7656
    %v7658 = vpop.f32.mrb[0].mxu0
    %v7659 = vadd.f32 %v7306, %v7658
    %7660 = vmatprep.mubr.bf16.mxu0 %v6358
    %7661 = vmatmul.mubr.bf16.gmra.mrb[0].mxu0 %v6357
    %v7662 = vpop.f32.mrb[0].mxu0
    %v7663 = vadd.f32 %v7310, %v7662
    %v7664 = vpop.f32.mrb[0].mxu0
    %v7665 = vadd.f32 %v7312, %v7664
    %v7666 = vpop.f32.mrb[0].mxu0
    %v7667 = vadd.f32 %v7314, %v7666
    %v7668 = vpop.f32.mrb[0].mxu0
    %v7669 = vadd.f32 %v7316, %v7668
    %7670 = vmatprep.mubr.bf16.mxu0 %v6362
    %7671 = vmatmul.mubr.bf16.gmra.mrb[0].mxu0 %v6361
    %v7672 = vpop.f32.mrb[0].mxu0
    %v7673 = vadd.f32 %v7320, %v7672
    %v7674 = vpop.f32.mrb[0].mxu0
    %v7675 = vadd.f32 %v7322, %v7674
    %v7676 = vpop.f32.mrb[0].mxu0
    %v7677 = vadd.f32 %v7324, %v7676
    %v7678 = vpop.f32.mrb[0].mxu0
    %v7679 = vadd.f32 %v7326, %v7678
    %7680 = vmatprep.mubr.bf16.mxu0 %v6366
    %7681 = vmatmul.mubr.bf16.gmra.mrb[0].mxu0 %v6365
    %v7682 = vpop.f32.mrb[0].mxu0
    %v7683 = vadd.f32 %v7330, %v7682
    %v7684 = vpop.f32.mrb[0].mxu0
    %v7685 = vadd.f32 %v7332, %v7684
    %v7686 = vpop.f32.mrb[0].mxu0
    %v7687 = vadd.f32 %v7334, %v7686
    %v7688 = vpop.f32.mrb[0].mxu0
    %v7689 = vadd.f32 %v7336, %v7688
    %7690 = vmatprep.mubr.bf16.mxu0 %v6370
    %7691 = vmatmul.mubr.bf16.gmra.mrb[0].mxu0 %v6369
    %v7692 = vpop.f32.mrb[0].mxu0
    %v7693 = vadd.f32 %v7340, %v7692
    %v7694 = vpop.f32.mrb[0].mxu0
    %v7695 = vadd.f32 %v7342, %v7694
    %v7696 = vpop.f32.mrb[0].mxu0
    %v7697 = vadd.f32 %v7344, %v7696
    %v7698 = vpop.f32.mrb[0].mxu0
    %v7699 = vadd.f32 %v7346, %v7698
    %7700 = vmatprep.mubr.bf16.mxu0 %v6374
    %7701 = vmatmul.mubr.bf16.gmra.mrb[0].mxu0 %v6373
    %v7702 = vpop.f32.mrb[0].mxu0
    %v7703 = vadd.f32 %v7350, %v7702
    %v7704 = vpop.f32.mrb[0].mxu0
    %v7705 = vadd.f32 %v7352, %v7704
    %v7706 = vpop.f32.mrb[0].mxu0
    %v7707 = vadd.f32 %v7354, %v7706
    %v7708 = vpop.f32.mrb[0].mxu0
    %v7709 = vadd.f32 %v7356, %v7708
    %7710 = vmatprep.mubr.bf16.mxu0 %v6378
    %7711 = vmatmul.mubr.bf16.gmra.mrb[0].mxu0 %v6377
    %v7712 = vpop.f32.mrb[0].mxu0
    %v7713 = vadd.f32 %v7360, %v7712
    %v7714 = vpop.f32.mrb[0].mxu0
    %v7715 = vadd.f32 %v7362, %v7714
    %v7716 = vpop.f32.mrb[0].mxu0
    %v7717 = vadd.f32 %v7364, %v7716
    %v7718 = vpop.f32.mrb[0].mxu0
    %v7719 = vadd.f32 %v7366, %v7718
    %7720 = vmatprep.mubr.bf16.mxu0 %v6382
    %7721 = vmatmul.mubr.bf16.gmra.mrb[0].mxu0 %v6381
    %v7722 = vpop.f32.mrb[0].mxu0
    %v7723 = vadd.f32 %v7370, %v7722
    %v7724 = vpop.f32.mrb[0].mxu0
    %v7725 = vadd.f32 %v7372, %v7724
    %v7726 = vpop.f32.mrb[0].mxu0
    %v7727 = vadd.f32 %v7374, %v7726
    %v7728 = vpop.f32.mrb[0].mxu0
    %v7729 = vadd.f32 %v7376, %v7728
    %7730 = vmatprep.mubr.bf16.mxu0 %v6386
    %7731 = vmatmul.mubr.bf16.gmra.mrb[0].mxu0 %v6385
    %v7732 = vpop.f32.mrb[0].mxu0
    %v7733 = vadd.f32 %v7380, %v7732
    %v7734 = vpop.f32.mrb[0].mxu0
    %v7735 = vadd.f32 %v7382, %v7734
    %v7736 = vpop.f32.mrb[0].mxu0
    %v7737 = vadd.f32 %v7384, %v7736
    %v7738 = vpop.f32.mrb[0].mxu0
    %v7739 = vadd.f32 %v7386, %v7738
    %7740 = vmatprep.mubr.bf16.mxu0 %v6390
    %7741 = vmatmul.mubr.bf16.gmra.mrb[0].mxu0 %v6389
    %v7742 = vpop.f32.mrb[0].mxu0
    %v7743 = vadd.f32 %v7390, %v7742
    %v7744 = vpop.f32.mrb[0].mxu0
    %v7745 = vadd.f32 %v7392, %v7744
    %v7746 = vpop.f32.mrb[0].mxu0
    %v7747 = vadd.f32 %v7394, %v7746
    %v7748 = vpop.f32.mrb[0].mxu0
    %v7749 = vadd.f32 %v7396, %v7748
    %7750 = vmatprep.mubr.bf16.mxu0 %v6394
    %7751 = vmatmul.mubr.bf16.gmra.mrb[0].mxu0 %v6393
    %v7752 = vpop.f32.mrb[0].mxu0
    %v7753 = vadd.f32 %v7400, %v7752
    %v7754 = vpop.f32.mrb[0].mxu0
    %v7755 = vadd.f32 %v7402, %v7754
    %v7756 = vpop.f32.mrb[0].mxu0
    %v7757 = vadd.f32 %v7404, %v7756
    %v7758 = vpop.f32.mrb[0].mxu0
    %v7759 = vadd.f32 %v7406, %v7758
    %7760 = vmatprep.mubr.bf16.mxu0 %v6398
    %7761 = vmatmul.mubr.bf16.gmra.mrb[0].mxu0 %v6397
    %v7762 = vpop.f32.mrb[0].mxu0
    %v7763 = vadd.f32 %v7410, %v7762
    %v7764 = vpop.f32.mrb[0].mxu0
    %v7765 = vadd.f32 %v7412, %v7764
    %v7766 = vpop.f32.mrb[0].mxu0
    %v7767 = vadd.f32 %v7414, %v7766
    %v7768 = vpop.f32.mrb[0].mxu0
    %v7769 = vadd.f32 %v7416, %v7768
    %7770 = vmatprep.mubr.bf16.mxu0 %v6402
    %7771 = vmatmul.mubr.bf16.gmra.mrb[0].mxu0 %v6401
    %v7772 = vpop.f32.mrb[0].mxu0
    %v7773 = vadd.f32 %v7420, %v7772
    %v7774 = vpop.f32.mrb[0].mxu0
    %v7775 = vadd.f32 %v7422, %v7774
    %v7776 = vpop.f32.mrb[0].mxu0
    %v7777 = vadd.f32 %v7424, %v7776
    %v7778 = vpop.f32.mrb[0].mxu0
    %v7779 = vadd.f32 %v7426, %v7778
    %7780 = vmatprep.mubr.bf16.mxu0 %v6406
    %7781 = vmatmul.mubr.bf16.gmra.mrb[0].mxu0 %v6405
    %v7782 = vpop.f32.mrb[0].mxu0
    %v7783 = vadd.f32 %v7430, %v7782
    %v7784 = vpop.f32.mrb[0].mxu0
    %v7785 = vadd.f32 %v7432, %v7784
    %v7786 = vpop.f32.mrb[0].mxu0
    %v7787 = vadd.f32 %v7434, %v7786
    %v7788 = vpop.f32.mrb[0].mxu0
    %v7789 = vadd.f32 %v7436, %v7788
    %7790 = vmatprep.mubr.bf16.mxu0 %v6410
    %7791 = vmatmul.mubr.bf16.gmra.mrb[0].mxu0 %v6409
    %v7792 = vpop.f32.mrb[0].mxu0
    %v7793 = vadd.f32 %v7440, %v7792
    %v7794 = vpop.f32.mrb[0].mxu0
    %v7795 = vadd.f32 %v7442, %v7794
    %v7796 = vpop.f32.mrb[0].mxu0
    %v7797 = vadd.f32 %v7444, %v7796
    %v7798 = vpop.f32.mrb[0].mxu0
    %v7799 = vadd.f32 %v7446, %v7798
    %7800 = vmatprep.mubr.bf16.mxu0 %v6414
    %7801 = vmatmul.mubr.bf16.gmra.mrb[0].mxu0 %v6413
    %v7802 = vpop.f32.mrb[0].mxu0
    %v7803 = vadd.f32 %v7450, %v7802
    %v7804 = vpop.f32.mrb[0].mxu0
    %v7805 = vadd.f32 %v7452, %v7804
    %v7806 = vpop.f32.mrb[0].mxu0
    %v7807 = vadd.f32 %v7454, %v7806
    %v7808 = vpop.f32.mrb[0].mxu0
    %v7809 = vadd.f32 %v7456, %v7808
    %7810 = vmatprep.mubr.bf16.mxu0 %v6418
    %7811 = vmatmul.mubr.bf16.gmra.mrb[0].mxu0 %v6417
    %v7812 = vpop.f32.mrb[0].mxu0
    %v7813 = vadd.f32 %v7460, %v7812
    %v7814 = vpop.f32.mrb[0].mxu0
    %v7815 = vadd.f32 %v7462, %v7814
    %v7816 = vpop.f32.mrb[0].mxu0
    %v7817 = vadd.f32 %v7464, %v7816
    %v7818 = vpop.f32.mrb[0].mxu0
    %v7819 = vadd.f32 %v7466, %v7818
    %7820 = vmatprep.mubr.bf16.mxu0 %v6422
    %7821 = vmatmul.mubr.bf16.gmra.mrb[0].mxu0 %v6421
    %v7822 = vpop.f32.mrb[0].mxu0
    %v7823 = vadd.f32 %v7470, %v7822
    %v7824 = vpop.f32.mrb[0].mxu0
    %v7825 = vadd.f32 %v7472, %v7824
    %v7826 = vpop.f32.mrb[0].mxu0
    %v7827 = vadd.f32 %v7474, %v7826
    %v7828 = vpop.f32.mrb[0].mxu0
    %v7829 = vadd.f32 %v7476, %v7828
    %7830 = vmatprep.mubr.bf16.mxu0 %v6426
    %7831 = vmatmul.mubr.bf16.gmra.mrb[0].mxu0 %v6425
    %v7832 = vpop.f32.mrb[0].mxu0
    %v7833 = vadd.f32 %v7480, %v7832
    %v7834 = vpop.f32.mrb[0].mxu0
    %v7835 = vadd.f32 %v7482, %v7834
    %v7836 = vpop.f32.mrb[0].mxu0
    %v7837 = vadd.f32 %v7484, %v7836
    %v7838 = vpop.f32.mrb[0].mxu0
    %v7839 = vadd.f32 %v7486, %v7838
    %7840 = vmatprep.mubr.bf16.mxu0 %v6430
    %7841 = vmatmul.mubr.bf16.gmra.mrb[0].mxu0 %v6429
    %v7842 = vpop.f32.mrb[0].mxu0
    %v7843 = vadd.f32 %v7490, %v7842
    %v7844 = vpop.f32.mrb[0].mxu0
    %v7845 = vadd.f32 %v7492, %v7844
    %v7846 = vpop.f32.mrb[0].mxu0
    %v7847 = vadd.f32 %v7494, %v7846
    %v7848 = vpop.f32.mrb[0].mxu0
    %v7849 = vadd.f32 %v7496, %v7848
    %7850 = vmatprep.mubr.bf16.mxu0 %v6434
    %7851 = vmatmul.mubr.bf16.gmra.mrb[0].mxu0 %v6433
    %v7852 = vpop.f32.mrb[0].mxu0
    %v7853 = vadd.f32 %v7500, %v7852
    %v7854 = vpop.f32.mrb[0].mxu0
    %v7855 = vadd.f32 %v7502, %v7854
    %v7856 = vpop.f32.mrb[0].mxu0
    %v7857 = vadd.f32 %v7504, %v7856
    %v7858 = vpop.f32.mrb[0].mxu0
    %v7859 = vadd.f32 %v7506, %v7858
    %7860 = vmatprep.mubr.bf16.mxu0 %v6438
    %7861 = vmatmul.mubr.bf16.gmra.mrb[0].mxu0 %v6437
    %v7862 = vpop.f32.mrb[0].mxu0
    %v7863 = vadd.f32 %v7510, %v7862
    %v7864 = vpop.f32.mrb[0].mxu0
    %v7865 = vadd.f32 %v7512, %v7864
    %v7866 = vpop.f32.mrb[0].mxu0
    %v7867 = vadd.f32 %v7514, %v7866
    %v7868 = vpop.f32.mrb[0].mxu0
    %v7869 = vadd.f32 %v7516, %v7868
    %7870 = vmatprep.mubr.bf16.mxu0 %v6442
    %7871 = vmatmul.mubr.bf16.gmra.mrb[0].mxu0 %v6441
    %v7872 = vpop.f32.mrb[0].mxu0
    %v7873 = vadd.f32 %v7520, %v7872
    %v7874 = vpop.f32.mrb[0].mxu0
    %v7875 = vadd.f32 %v7522, %v7874
    %v7876 = vpop.f32.mrb[0].mxu0
    %v7877 = vadd.f32 %v7524, %v7876
    %v7878 = vpop.f32.mrb[0].mxu0
    %v7879 = vadd.f32 %v7526, %v7878
    %7880 = vmatprep.mubr.bf16.mxu0 %v6446
    %7881 = vmatmul.mubr.bf16.gmra.mrb[0].mxu0 %v6445
    %v7882 = vpop.f32.mrb[0].mxu0
    %v7883 = vadd.f32 %v7530, %v7882
    %v7884 = vpop.f32.mrb[0].mxu0
    %v7885 = vadd.f32 %v7532, %v7884
    %v7886 = vpop.f32.mrb[0].mxu0
    %v7887 = vadd.f32 %v7534, %v7886
    %v7888 = vpop.f32.mrb[0].mxu0
    %v7889 = vadd.f32 %v7536, %v7888
    %7890 = vmatprep.mubr.bf16.mxu0 %v6450
    %7891 = vmatmul.mubr.bf16.gmra.mrb[0].mxu0 %v6449
    %v7892 = vpop.f32.mrb[0].mxu0
    %v7893 = vadd.f32 %v7540, %v7892
    %v7894 = vpop.f32.mrb[0].mxu0
    %v7895 = vadd.f32 %v7542, %v7894
    %v7896 = vpop.f32.mrb[0].mxu0
    %v7897 = vadd.f32 %v7544, %v7896
    %v7898 = vpop.f32.mrb[0].mxu0
    %v7899 = vadd.f32 %v7546, %v7898
    %7900 = vmatprep.mubr.bf16.mxu0 %v6454
    %7901 = vmatmul.mubr.bf16.gmra.mrb[0].mxu0 %v6453
    %v7902 = vpop.f32.mrb[0].mxu0
    %v7903 = vadd.f32 %v7550, %v7902
    %v7904 = vpop.f32.mrb[0].mxu0
    %v7905 = vadd.f32 %v7552, %v7904
    %v7906 = vpop.f32.mrb[0].mxu0
    %v7907 = vadd.f32 %v7554, %v7906
    %v7908 = vpop.f32.mrb[0].mxu0
    %v7909 = vadd.f32 %v7556, %v7908
    %7910 = vmatprep.mubr.bf16.mxu0 %v6458
    %7911 = vmatmul.mubr.bf16.gmra.mrb[0].mxu0 %v6457
    %v7912 = vpop.f32.mrb[0].mxu0
    %v7913 = vadd.f32 %v7560, %v7912
    %v7914 = vpop.f32.mrb[0].mxu0
    %v7915 = vadd.f32 %v7562, %v7914
    %v7916 = vpop.f32.mrb[0].mxu0
    %v7917 = vadd.f32 %v7564, %v7916
    %v7918 = vpop.f32.mrb[0].mxu0
    %v7919 = vadd.f32 %v7566, %v7918
    %7920 = vmatprep.mubr.bf16.mxu0 %v6462
    %7921 = vmatmul.mubr.bf16.gmra.mrb[0].mxu0 %v6461
    %v7922 = vpop.f32.mrb[0].mxu0
    %v7923 = vadd.f32 %v7570, %v7922
    %v7924 = vpop.f32.mrb[0].mxu0
    %v7925 = vadd.f32 %v7572, %v7924
    %v7926 = vpop.f32.mrb[0].mxu0
    %v7927 = vadd.f32 %v7574, %v7926
    %v7928 = vpop.f32.mrb[0].mxu0
    %v7929 = vadd.f32 %v7576, %v7928
    %7930 = vmatprep.mubr.bf16.mxu0 %v6466
    %7931 = vmatmul.mubr.bf16.gmra.mrb[0].mxu0 %v6465
    %v7932 = vpop.f32.mrb[0].mxu0
    %v7933 = vadd.f32 %v7580, %v7932
    %v7934 = vpop.f32.mrb[0].mxu0
    %v7935 = vadd.f32 %v7582, %v7934
    %v7936 = vpop.f32.mrb[0].mxu0
    %v7937 = vadd.f32 %v7584, %v7936
    %v7938 = vpop.f32.mrb[0].mxu0
    %v7939 = vadd.f32 %v7586, %v7938
    %7940 = vdwg.mxu0
    %7941 = vmatprep.subr.bf16.mxu0 %v6982
    %7942 = vmatpush1.bf16.msra.mxu0 %v6981
    %7943 = vmatprep.subr.bf16.mxu0 %v6986
    %7944 = vmatpush1.bf16.msra.mxu0 %v6985
    %7945 = vmatprep.subr.bf16.mxu0 %v6990
    %7946 = vmatpush1.bf16.msra.mxu0 %v6989
    %7947 = vmatprep.subr.bf16.mxu0 %v6994
    %7948 = vmatpush1.bf16.msra.mxu0 %v6993
    %7949 = vmatprep.subr.bf16.mxu0 %v6998
    %7950 = vmatpush1.bf16.msra.mxu0 %v6997
    %7951 = vmatprep.subr.bf16.mxu0 %v7002
    %7952 = vmatpush1.bf16.msra.mxu0 %v7001
    %7953 = vmatprep.subr.bf16.mxu0 %v7006
    %7954 = vmatpush1.bf16.msra.mxu0 %v7005
    %7955 = vmatprep.subr.bf16.mxu0 %v7010
    %7956 = vmatpush1.bf16.msra.mxu0 %v7009
    %7957 = vmatprep.subr.bf16.mxu0 %v7014
    %7958 = vmatpush1.bf16.msra.mxu0 %v7013
    %7959 = vmatprep.subr.bf16.mxu0 %v7018
    %7960 = vmatpush1.bf16.msra.mxu0 %v7017
    %7961 = vmatprep.subr.bf16.mxu0 %v7022
    %7962 = vmatpush1.bf16.msra.mxu0 %v7021
    %7963 = vmatprep.subr.bf16.mxu0 %v7026
    %7964 = vmatpush1.bf16.msra.mxu0 %v7025
    %7965 = vmatprep.subr.bf16.mxu0 %v7030
    %7966 = vmatpush1.bf16.msra.mxu0 %v7029
    %7967 = vmatprep.subr.bf16.mxu0 %v7034
    %7968 = vmatpush1.bf16.msra.mxu0 %v7033
    %7969 = vmatprep.subr.bf16.mxu0 %v7038
    %7970 = vmatpush1.bf16.msra.mxu0 %v7037
    %7971 = vmatprep.subr.bf16.mxu0 %v7042
    %7972 = vmatpush1.bf16.msra.mxu0 %v7041
    %7973 = vmatprep.mubr.bf16.mxu0 %v6340
    %7974 = vmatmul.mubr.bf16.gmra.mrb[0].mxu0 %v6339
    %v7975 = vpop.f32.mrb[0].mxu0
    %v7976 = vadd.f32 0.0, %v7975
    %v7977 = vpop.f32.mrb[0].mxu0
    %v7978 = vadd.f32 0.0, %v7977
    %v7979 = vpop.f32.mrb[0].mxu0
    %v7980 = vadd.f32 0.0, %v7979
    %v7981 = vpop.f32.mrb[0].mxu0
    %v7982 = vadd.f32 0.0, %v7981
    %7983 = vmatprep.mubr.bf16.mxu0 %v6344
    %7984 = vmatmul.mubr.bf16.gmra.mrb[0].mxu0 %v6343
    %v7985 = vpop.f32.mrb[0].mxu0
    %v7986 = vadd.f32 0.0, %v7985
    %v7987 = vpop.f32.mrb[0].mxu0
    %v7988 = vadd.f32 0.0, %v7987
    %v7989 = vpop.f32.mrb[0].mxu0
    %v7990 = vadd.f32 0.0, %v7989
    %v7991 = vpop.f32.mrb[0].mxu0
    %v7992 = vadd.f32 0.0, %v7991
    %7993 = vmatprep.mubr.bf16.mxu0 %v6348
    %7994 = vmatmul.mubr.bf16.gmra.mrb[0].mxu0 %v6347
    %v7995 = vpop.f32.mrb[0].mxu0
    %v7996 = vadd.f32 0.0, %v7995
    %v7997 = vpop.f32.mrb[0].mxu0
    %v7998 = vadd.f32 0.0, %v7997
    %v7999 = vpop.f32.mrb[0].mxu0
    %v8000 = vadd.f32 0.0, %v7999
    %v8001 = vpop.f32.mrb[0].mxu0
    %v8002 = vadd.f32 0.0, %v8001
    %8003 = vmatprep.mubr.bf16.mxu0 %v6352
    %8004 = vmatmul.mubr.bf16.gmra.mrb[0].mxu0 %v6351
    %v8005 = vpop.f32.mrb[0].mxu0
    %v8006 = vadd.f32 0.0, %v8005
    %v8007 = vpop.f32.mrb[0].mxu0
    %v8008 = vadd.f32 0.0, %v8007
    %v8009 = vpop.f32.mrb[0].mxu0
    %v8010 = vadd.f32 0.0, %v8009
    %v8011 = vpop.f32.mrb[0].mxu0
    %v8012 = vadd.f32 0.0, %v8011
    %8013 = vmatprep.mubr.bf16.mxu0 %v6356
    %8014 = vmatmul.mubr.bf16.gmra.mrb[0].mxu0 %v6355
    %v8015 = vpop.f32.mrb[0].mxu0
    %v8016 = vadd.f32 0.0, %v8015
    %v8017 = vpop.f32.mrb[0].mxu0
    %v8018 = vadd.f32 0.0, %v8017
    %v8019 = vpop.f32.mrb[0].mxu0
    %v8020 = vadd.f32 0.0, %v8019
    %v8021 = vpop.f32.mrb[0].mxu0
    %v8022 = vadd.f32 0.0, %v8021
    %8023 = vmatprep.mubr.bf16.mxu0 %v6360
    %8024 = vmatmul.mubr.bf16.gmra.mrb[0].mxu0 %v6359
    %v8025 = vpop.f32.mrb[0].mxu0
    %v8026 = vadd.f32 0.0, %v8025
    %v8027 = vpop.f32.mrb[0].mxu0
    %v8028 = vadd.f32 0.0, %v8027
    %v8029 = vpop.f32.mrb[0].mxu0
    %v8030 = vadd.f32 0.0, %v8029
    %v8031 = vpop.f32.mrb[0].mxu0
    %v8032 = vadd.f32 0.0, %v8031
    %8033 = vmatprep.mubr.bf16.mxu0 %v6364
    %8034 = vmatmul.mubr.bf16.gmra.mrb[0].mxu0 %v6363
    %v8035 = vpop.f32.mrb[0].mxu0
    %v8036 = vadd.f32 0.0, %v8035
    %v8037 = vpop.f32.mrb[0].mxu0
    %v8038 = vadd.f32 0.0, %v8037
    %v8039 = vpop.f32.mrb[0].mxu0
    %v8040 = vadd.f32 0.0, %v8039
    %v8041 = vpop.f32.mrb[0].mxu0
    %v8042 = vadd.f32 0.0, %v8041
    %8043 = vmatprep.mubr.bf16.mxu0 %v6368
    %8044 = vmatmul.mubr.bf16.gmra.mrb[0].mxu0 %v6367
    %v8045 = vpop.f32.mrb[0].mxu0
    %v8046 = vadd.f32 0.0, %v8045
    %v8047 = vpop.f32.mrb[0].mxu0
    %v8048 = vadd.f32 0.0, %v8047
    %v8049 = vpop.f32.mrb[0].mxu0
    %v8050 = vadd.f32 0.0, %v8049
    %v8051 = vpop.f32.mrb[0].mxu0
    %v8052 = vadd.f32 0.0, %v8051
    %8053 = vmatprep.mubr.bf16.mxu0 %v6372
    %8054 = vmatmul.mubr.bf16.gmra.mrb[0].mxu0 %v6371
    %v8055 = vpop.f32.mrb[0].mxu0
    %v8056 = vadd.f32 0.0, %v8055
    %v8057 = vpop.f32.mrb[0].mxu0
    %v8058 = vadd.f32 0.0, %v8057
    %v8059 = vpop.f32.mrb[0].mxu0
    %v8060 = vadd.f32 0.0, %v8059
    %v8061 = vpop.f32.mrb[0].mxu0
    %v8062 = vadd.f32 0.0, %v8061
    %8063 = vmatprep.mubr.bf16.mxu0 %v6376
    %8064 = vmatmul.mubr.bf16.gmra.mrb[0].mxu0 %v6375
    %v8065 = vpop.f32.mrb[0].mxu0
    %v8066 = vadd.f32 0.0, %v8065
    %v8067 = vpop.f32.mrb[0].mxu0
    %v8068 = vadd.f32 0.0, %v8067
    %v8069 = vpop.f32.mrb[0].mxu0
    %v8070 = vadd.f32 0.0, %v8069
    %v8071 = vpop.f32.mrb[0].mxu0
    %v8072 = vadd.f32 0.0, %v8071
    %8073 = vmatprep.mubr.bf16.mxu0 %v6380
    %8074 = vmatmul.mubr.bf16.gmra.mrb[0].mxu0 %v6379
    %v8075 = vpop.f32.mrb[0].mxu0
    %v8076 = vadd.f32 0.0, %v8075
    %v8077 = vpop.f32.mrb[0].mxu0
    %v8078 = vadd.f32 0.0, %v8077
    %v8079 = vpop.f32.mrb[0].mxu0
    %v8080 = vadd.f32 0.0, %v8079
    %v8081 = vpop.f32.mrb[0].mxu0
    %v8082 = vadd.f32 0.0, %v8081
    %8083 = vmatprep.mubr.bf16.mxu0 %v6384
    %8084 = vmatmul.mubr.bf16.gmra.mrb[0].mxu0 %v6383
    %v8085 = vpop.f32.mrb[0].mxu0
    %v8086 = vadd.f32 0.0, %v8085
    %v8087 = vpop.f32.mrb[0].mxu0
    %v8088 = vadd.f32 0.0, %v8087
    %v8089 = vpop.f32.mrb[0].mxu0
    %v8090 = vadd.f32 0.0, %v8089
    %v8091 = vpop.f32.mrb[0].mxu0
    %v8092 = vadd.f32 0.0, %v8091
    %8093 = vmatprep.mubr.bf16.mxu0 %v6388
    %8094 = vmatmul.mubr.bf16.gmra.mrb[0].mxu0 %v6387
    %v8095 = vpop.f32.mrb[0].mxu0
    %v8096 = vadd.f32 0.0, %v8095
    %v8097 = vpop.f32.mrb[0].mxu0
    %v8098 = vadd.f32 0.0, %v8097
    %v8099 = vpop.f32.mrb[0].mxu0
    %v8100 = vadd.f32 0.0, %v8099
    %v8101 = vpop.f32.mrb[0].mxu0
    %v8102 = vadd.f32 0.0, %v8101
    %8103 = vmatprep.mubr.bf16.mxu0 %v6392
    %8104 = vmatmul.mubr.bf16.gmra.mrb[0].mxu0 %v6391
    %v8105 = vpop.f32.mrb[0].mxu0
    %v8106 = vadd.f32 0.0, %v8105
    %v8107 = vpop.f32.mrb[0].mxu0
    %v8108 = vadd.f32 0.0, %v8107
    %v8109 = vpop.f32.mrb[0].mxu0
    %v8110 = vadd.f32 0.0, %v8109
    %v8111 = vpop.f32.mrb[0].mxu0
    %v8112 = vadd.f32 0.0, %v8111
    %8113 = vmatprep.mubr.bf16.mxu0 %v6396
    %8114 = vmatmul.mubr.bf16.gmra.mrb[0].mxu0 %v6395
    %v8115 = vpop.f32.mrb[0].mxu0
    %v8116 = vadd.f32 0.0, %v8115
    %v8117 = vpop.f32.mrb[0].mxu0
    %v8118 = vadd.f32 0.0, %v8117
    %v8119 = vpop.f32.mrb[0].mxu0
    %v8120 = vadd.f32 0.0, %v8119
    %v8121 = vpop.f32.mrb[0].mxu0
    %v8122 = vadd.f32 0.0, %v8121
    %8123 = vmatprep.mubr.bf16.mxu0 %v6400
    %8124 = vmatmul.mubr.bf16.gmra.mrb[0].mxu0 %v6399
    %v8125 = vpop.f32.mrb[0].mxu0
    %v8126 = vadd.f32 0.0, %v8125
    %v8127 = vpop.f32.mrb[0].mxu0
    %v8128 = vadd.f32 0.0, %v8127
    %v8129 = vpop.f32.mrb[0].mxu0
    %v8130 = vadd.f32 0.0, %v8129
    %v8131 = vpop.f32.mrb[0].mxu0
    %v8132 = vadd.f32 0.0, %v8131
    %8133 = vmatprep.mubr.bf16.mxu0 %v6404
    %8134 = vmatmul.mubr.bf16.gmra.mrb[0].mxu0 %v6403
    %v8135 = vpop.f32.mrb[0].mxu0
    %v8136 = vadd.f32 0.0, %v8135
    %v8137 = vpop.f32.mrb[0].mxu0
    %v8138 = vadd.f32 0.0, %v8137
    %v8139 = vpop.f32.mrb[0].mxu0
    %v8140 = vadd.f32 0.0, %v8139
    %v8141 = vpop.f32.mrb[0].mxu0
    %v8142 = vadd.f32 0.0, %v8141
    %8143 = vmatprep.mubr.bf16.mxu0 %v6408
    %8144 = vmatmul.mubr.bf16.gmra.mrb[0].mxu0 %v6407
    %v8145 = vpop.f32.mrb[0].mxu0
    %v8146 = vadd.f32 0.0, %v8145
    %v8147 = vpop.f32.mrb[0].mxu0
    %v8148 = vadd.f32 0.0, %v8147
    %v8149 = vpop.f32.mrb[0].mxu0
    %v8150 = vadd.f32 0.0, %v8149
    %v8151 = vpop.f32.mrb[0].mxu0
    %v8152 = vadd.f32 0.0, %v8151
    %8153 = vmatprep.mubr.bf16.mxu0 %v6412
    %8154 = vmatmul.mubr.bf16.gmra.mrb[0].mxu0 %v6411
    %v8155 = vpop.f32.mrb[0].mxu0
    %v8156 = vadd.f32 0.0, %v8155
    %v8157 = vpop.f32.mrb[0].mxu0
    %v8158 = vadd.f32 0.0, %v8157
    %v8159 = vpop.f32.mrb[0].mxu0
    %v8160 = vadd.f32 0.0, %v8159
    %v8161 = vpop.f32.mrb[0].mxu0
    %v8162 = vadd.f32 0.0, %v8161
    %8163 = vmatprep.mubr.bf16.mxu0 %v6416
    %8164 = vmatmul.mubr.bf16.gmra.mrb[0].mxu0 %v6415
    %v8165 = vpop.f32.mrb[0].mxu0
    %v8166 = vadd.f32 0.0, %v8165
    %v8167 = vpop.f32.mrb[0].mxu0
    %v8168 = vadd.f32 0.0, %v8167
    %v8169 = vpop.f32.mrb[0].mxu0
    %v8170 = vadd.f32 0.0, %v8169
    %v8171 = vpop.f32.mrb[0].mxu0
    %v8172 = vadd.f32 0.0, %v8171
    %8173 = vmatprep.mubr.bf16.mxu0 %v6420
    %8174 = vmatmul.mubr.bf16.gmra.mrb[0].mxu0 %v6419
    %v8175 = vpop.f32.mrb[0].mxu0
    %v8176 = vadd.f32 0.0, %v8175
    %v8177 = vpop.f32.mrb[0].mxu0
    %v8178 = vadd.f32 0.0, %v8177
    %v8179 = vpop.f32.mrb[0].mxu0
    %v8180 = vadd.f32 0.0, %v8179
    %v8181 = vpop.f32.mrb[0].mxu0
    %v8182 = vadd.f32 0.0, %v8181
    %8183 = vmatprep.mubr.bf16.mxu0 %v6424
    %8184 = vmatmul.mubr.bf16.gmra.mrb[0].mxu0 %v6423
    %v8185 = vpop.f32.mrb[0].mxu0
    %v8186 = vadd.f32 0.0, %v8185
    %v8187 = vpop.f32.mrb[0].mxu0
    %v8188 = vadd.f32 0.0, %v8187
    %v8189 = vpop.f32.mrb[0].mxu0
    %v8190 = vadd.f32 0.0, %v8189
    %v8191 = vpop.f32.mrb[0].mxu0
    %v8192 = vadd.f32 0.0, %v8191
    %8193 = vmatprep.mubr.bf16.mxu0 %v6428
    %8194 = vmatmul.mubr.bf16.gmra.mrb[0].mxu0 %v6427
    %v8195 = vpop.f32.mrb[0].mxu0
    %v8196 = vadd.f32 0.0, %v8195
    %v8197 = vpop.f32.mrb[0].mxu0
    %v8198 = vadd.f32 0.0, %v8197
    %v8199 = vpop.f32.mrb[0].mxu0
    %v8200 = vadd.f32 0.0, %v8199
    %v8201 = vpop.f32.mrb[0].mxu0
    %v8202 = vadd.f32 0.0, %v8201
    %8203 = vmatprep.mubr.bf16.mxu0 %v6432
    %8204 = vmatmul.mubr.bf16.gmra.mrb[0].mxu0 %v6431
    %v8205 = vpop.f32.mrb[0].mxu0
    %v8206 = vadd.f32 0.0, %v8205
    %v8207 = vpop.f32.mrb[0].mxu0
    %v8208 = vadd.f32 0.0, %v8207
    %v8209 = vpop.f32.mrb[0].mxu0
    %v8210 = vadd.f32 0.0, %v8209
    %v8211 = vpop.f32.mrb[0].mxu0
    %v8212 = vadd.f32 0.0, %v8211
    %8213 = vmatprep.mubr.bf16.mxu0 %v6436
    %8214 = vmatmul.mubr.bf16.gmra.mrb[0].mxu0 %v6435
    %v8215 = vpop.f32.mrb[0].mxu0
    %v8216 = vadd.f32 0.0, %v8215
    %v8217 = vpop.f32.mrb[0].mxu0
    %v8218 = vadd.f32 0.0, %v8217
    %v8219 = vpop.f32.mrb[0].mxu0
    %v8220 = vadd.f32 0.0, %v8219
    %v8221 = vpop.f32.mrb[0].mxu0
    %v8222 = vadd.f32 0.0, %v8221
    %8223 = vmatprep.mubr.bf16.mxu0 %v6440
    %8224 = vmatmul.mubr.bf16.gmra.mrb[0].mxu0 %v6439
    %v8225 = vpop.f32.mrb[0].mxu0
    %v8226 = vadd.f32 0.0, %v8225
    %v8227 = vpop.f32.mrb[0].mxu0
    %v8228 = vadd.f32 0.0, %v8227
    %v8229 = vpop.f32.mrb[0].mxu0
    %v8230 = vadd.f32 0.0, %v8229
    %v8231 = vpop.f32.mrb[0].mxu0
    %v8232 = vadd.f32 0.0, %v8231
    %8233 = vmatprep.mubr.bf16.mxu0 %v6444
    %8234 = vmatmul.mubr.bf16.gmra.mrb[0].mxu0 %v6443
    %v8235 = vpop.f32.mrb[0].mxu0
    %v8236 = vadd.f32 0.0, %v8235
    %v8237 = vpop.f32.mrb[0].mxu0
    %v8238 = vadd.f32 0.0, %v8237
    %v8239 = vpop.f32.mrb[0].mxu0
    %v8240 = vadd.f32 0.0, %v8239
    %v8241 = vpop.f32.mrb[0].mxu0
    %v8242 = vadd.f32 0.0, %v8241
    %8243 = vmatprep.mubr.bf16.mxu0 %v6448
    %8244 = vmatmul.mubr.bf16.gmra.mrb[0].mxu0 %v6447
    %v8245 = vpop.f32.mrb[0].mxu0
    %v8246 = vadd.f32 0.0, %v8245
    %v8247 = vpop.f32.mrb[0].mxu0
    %v8248 = vadd.f32 0.0, %v8247
    %v8249 = vpop.f32.mrb[0].mxu0
    %v8250 = vadd.f32 0.0, %v8249
    %v8251 = vpop.f32.mrb[0].mxu0
    %v8252 = vadd.f32 0.0, %v8251
    %8253 = vmatprep.mubr.bf16.mxu0 %v6452
    %8254 = vmatmul.mubr.bf16.gmra.mrb[0].mxu0 %v6451
    %v8255 = vpop.f32.mrb[0].mxu0
    %v8256 = vadd.f32 0.0, %v8255
    %v8257 = vpop.f32.mrb[0].mxu0
    %v8258 = vadd.f32 0.0, %v8257
    %v8259 = vpop.f32.mrb[0].mxu0
    %v8260 = vadd.f32 0.0, %v8259
    %v8261 = vpop.f32.mrb[0].mxu0
    %v8262 = vadd.f32 0.0, %v8261
    %8263 = vmatprep.mubr.bf16.mxu0 %v6456
    %8264 = vmatmul.mubr.bf16.gmra.mrb[0].mxu0 %v6455
    %v8265 = vpop.f32.mrb[0].mxu0
    %v8266 = vadd.f32 0.0, %v8265
    %v8267 = vpop.f32.mrb[0].mxu0
    %v8268 = vadd.f32 0.0, %v8267
    %v8269 = vpop.f32.mrb[0].mxu0
    %v8270 = vadd.f32 0.0, %v8269
    %v8271 = vpop.f32.mrb[0].mxu0
    %v8272 = vadd.f32 0.0, %v8271
    %8273 = vmatprep.mubr.bf16.mxu0 %v6460
    %8274 = vmatmul.mubr.bf16.gmra.mrb[0].mxu0 %v6459
    %v8275 = vpop.f32.mrb[0].mxu0
    %v8276 = vadd.f32 0.0, %v8275
    %v8277 = vpop.f32.mrb[0].mxu0
    %v8278 = vadd.f32 0.0, %v8277
    %v8279 = vpop.f32.mrb[0].mxu0
    %v8280 = vadd.f32 0.0, %v8279
    %v8281 = vpop.f32.mrb[0].mxu0
    %v8282 = vadd.f32 0.0, %v8281
    %8283 = vmatprep.mubr.bf16.mxu0 %v6464
    %8284 = vmatmul.mubr.bf16.gmra.mrb[0].mxu0 %v6463
    %v8285 = vpop.f32.mrb[0].mxu0
    %v8286 = vadd.f32 0.0, %v8285
    %v8287 = vpop.f32.mrb[0].mxu0
    %v8288 = vadd.f32 0.0, %v8287
    %v8289 = vpop.f32.mrb[0].mxu0
    %v8290 = vadd.f32 0.0, %v8289
    %v8291 = vpop.f32.mrb[0].mxu0
    %v8292 = vadd.f32 0.0, %v8291
    %8293 = vdwg.mxu0
    %8294 = vmatprep.subr.bf16.mxu0 %v7046
    %8295 = vmatpush1.bf16.msra.mxu0 %v7045
    %8296 = vmatprep.subr.bf16.mxu0 %v7050
    %8297 = vmatpush1.bf16.msra.mxu0 %v7049
    %8298 = vmatprep.subr.bf16.mxu0 %v7054
    %8299 = vmatpush1.bf16.msra.mxu0 %v7053
    %8300 = vmatprep.subr.bf16.mxu0 %v7058
    %8301 = vmatpush1.bf16.msra.mxu0 %v7057
    %8302 = vmatprep.subr.bf16.mxu0 %v7062
    %8303 = vmatpush1.bf16.msra.mxu0 %v7061
    %8304 = vmatprep.subr.bf16.mxu0 %v7066
    %8305 = vmatpush1.bf16.msra.mxu0 %v7065
    %8306 = vmatprep.subr.bf16.mxu0 %v7070
    %8307 = vmatpush1.bf16.msra.mxu0 %v7069
    %8308 = vmatprep.subr.bf16.mxu0 %v7074
    %8309 = vmatpush1.bf16.msra.mxu0 %v7073
    %8310 = vmatprep.subr.bf16.mxu0 %v7078
    %8311 = vmatpush1.bf16.msra.mxu0 %v7077
    %8312 = vmatprep.subr.bf16.mxu0 %v7082
    %8313 = vmatpush1.bf16.msra.mxu0 %v7081
    %8314 = vmatprep.subr.bf16.mxu0 %v7086
    %8315 = vmatpush1.bf16.msra.mxu0 %v7085
    %8316 = vmatprep.subr.bf16.mxu0 %v7090
    %8317 = vmatpush1.bf16.msra.mxu0 %v7089
    %8318 = vmatprep.subr.bf16.mxu0 %v7094
    %8319 = vmatpush1.bf16.msra.mxu0 %v7093
    %8320 = vmatprep.subr.bf16.mxu0 %v7098
    %8321 = vmatpush1.bf16.msra.mxu0 %v7097
    %8322 = vmatprep.subr.bf16.mxu0 %v7102
    %8323 = vmatpush1.bf16.msra.mxu0 %v7101
    %8324 = vmatprep.subr.bf16.mxu0 %v7106
    %8325 = vmatpush1.bf16.msra.mxu0 %v7105
    %8326 = vmatprep.mubr.bf16.mxu0 %v6342
    %8327 = vmatmul.mubr.bf16.gmra.mrb[0].mxu0 %v6341
    %v8328 = vpop.f32.mrb[0].mxu0
    %v8329 = vadd.f32 %v7976, %v8328
    %v8330 = vpop.f32.mrb[0].mxu0
    %v8331 = vadd.f32 %v7978, %v8330
    %v8332 = vpop.f32.mrb[0].mxu0
    %v8333 = vadd.f32 %v7980, %v8332
    %v8334 = vpop.f32.mrb[0].mxu0
    %v8335 = vadd.f32 %v7982, %v8334
    %8336 = vmatprep.mubr.bf16.mxu0 %v6346
    %8337 = vmatmul.mubr.bf16.gmra.mrb[0].mxu0 %v6345
    %v8338 = vpop.f32.mrb[0].mxu0
    %v8339 = vadd.f32 %v7986, %v8338
    %v8340 = vpop.f32.mrb[0].mxu0
    %v8341 = vadd.f32 %v7988, %v8340
    %v8342 = vpop.f32.mrb[0].mxu0
    %v8343 = vadd.f32 %v7990, %v8342
    %v8344 = vpop.f32.mrb[0].mxu0
    %v8345 = vadd.f32 %v7992, %v8344
    %8346 = vmatprep.mubr.bf16.mxu0 %v6350
    %8347 = vmatmul.mubr.bf16.gmra.mrb[0].mxu0 %v6349
    %v8348 = vpop.f32.mrb[0].mxu0
    %v8349 = vadd.f32 %v7996, %v8348
    %v8350 = vpop.f32.mrb[0].mxu0
    %v8351 = vadd.f32 %v7998, %v8350
    %v8352 = vpop.f32.mrb[0].mxu0
    %v8353 = vadd.f32 %v8000, %v8352
    %v8354 = vpop.f32.mrb[0].mxu0
    %v8355 = vadd.f32 %v8002, %v8354
    %8356 = vmatprep.mubr.bf16.mxu0 %v6354
    %8357 = vmatmul.mubr.bf16.gmra.mrb[0].mxu0 %v6353
    %v8358 = vpop.f32.mrb[0].mxu0
    %v8359 = vadd.f32 %v8006, %v8358
    %v8360 = vpop.f32.mrb[0].mxu0
    %v8361 = vadd.f32 %v8008, %v8360
    %v8362 = vpop.f32.mrb[0].mxu0
    %v8363 = vadd.f32 %v8010, %v8362
    %v8364 = vpop.f32.mrb[0].mxu0
    %v8365 = vadd.f32 %v8012, %v8364
    %8366 = vmatprep.mubr.bf16.mxu0 %v6358
    %8367 = vmatmul.mubr.bf16.gmra.mrb[0].mxu0 %v6357
    %v8368 = vpop.f32.mrb[0].mxu0
    %v8369 = vadd.f32 %v8016, %v8368
    %v8370 = vpop.f32.mrb[0].mxu0
    %v8371 = vadd.f32 %v8018, %v8370
    %v8372 = vpop.f32.mrb[0].mxu0
    %v8373 = vadd.f32 %v8020, %v8372
    %v8374 = vpop.f32.mrb[0].mxu0
    %v8375 = vadd.f32 %v8022, %v8374
    %8376 = vmatprep.mubr.bf16.mxu0 %v6362
    %8377 = vmatmul.mubr.bf16.gmra.mrb[0].mxu0 %v6361
    %v8378 = vpop.f32.mrb[0].mxu0
    %v8379 = vadd.f32 %v8026, %v8378
    %v8380 = vpop.f32.mrb[0].mxu0
    %v8381 = vadd.f32 %v8028, %v8380
    %v8382 = vpop.f32.mrb[0].mxu0
    %v8383 = vadd.f32 %v8030, %v8382
    %v8384 = vpop.f32.mrb[0].mxu0
    %v8385 = vadd.f32 %v8032, %v8384
    %8386 = vmatprep.mubr.bf16.mxu0 %v6366
    %8387 = vmatmul.mubr.bf16.gmra.mrb[0].mxu0 %v6365
    %v8388 = vpop.f32.mrb[0].mxu0
    %v8389 = vadd.f32 %v8036, %v8388
    %v8390 = vpop.f32.mrb[0].mxu0
    %v8391 = vadd.f32 %v8038, %v8390
    %v8392 = vpop.f32.mrb[0].mxu0
    %v8393 = vadd.f32 %v8040, %v8392
    %v8394 = vpop.f32.mrb[0].mxu0
    %v8395 = vadd.f32 %v8042, %v8394
    %8396 = vmatprep.mubr.bf16.mxu0 %v6370
    %8397 = vmatmul.mubr.bf16.gmra.mrb[0].mxu0 %v6369
    %v8398 = vpop.f32.mrb[0].mxu0
    %v8399 = vadd.f32 %v8046, %v8398
    %v8400 = vpop.f32.mrb[0].mxu0
    %v8401 = vadd.f32 %v8048, %v8400
    %v8402 = vpop.f32.mrb[0].mxu0
    %v8403 = vadd.f32 %v8050, %v8402
    %v8404 = vpop.f32.mrb[0].mxu0
    %v8405 = vadd.f32 %v8052, %v8404
    %8406 = vmatprep.mubr.bf16.mxu0 %v6374
    %8407 = vmatmul.mubr.bf16.gmra.mrb[0].mxu0 %v6373
    %v8408 = vpop.f32.mrb[0].mxu0
    %v8409 = vadd.f32 %v8056, %v8408
    %v8410 = vpop.f32.mrb[0].mxu0
    %v8411 = vadd.f32 %v8058, %v8410
    %v8412 = vpop.f32.mrb[0].mxu0
    %v8413 = vadd.f32 %v8060, %v8412
    %v8414 = vpop.f32.mrb[0].mxu0
    %v8415 = vadd.f32 %v8062, %v8414
    %8416 = vmatprep.mubr.bf16.mxu0 %v6378
    %8417 = vmatmul.mubr.bf16.gmra.mrb[0].mxu0 %v6377
    %v8418 = vpop.f32.mrb[0].mxu0
    %v8419 = vadd.f32 %v8066, %v8418
    %v8420 = vpop.f32.mrb[0].mxu0
    %v8421 = vadd.f32 %v8068, %v8420
    %v8422 = vpop.f32.mrb[0].mxu0
    %v8423 = vadd.f32 %v8070, %v8422
    %v8424 = vpop.f32.mrb[0].mxu0
    %v8425 = vadd.f32 %v8072, %v8424
    %8426 = vmatprep.mubr.bf16.mxu0 %v6382
    %8427 = vmatmul.mubr.bf16.gmra.mrb[0].mxu0 %v6381
    %v8428 = vpop.f32.mrb[0].mxu0
    %v8429 = vadd.f32 %v8076, %v8428
    %v8430 = vpop.f32.mrb[0].mxu0
    %v8431 = vadd.f32 %v8078, %v8430
    %v8432 = vpop.f32.mrb[0].mxu0
    %v8433 = vadd.f32 %v8080, %v8432
    %v8434 = vpop.f32.mrb[0].mxu0
    %v8435 = vadd.f32 %v8082, %v8434
    %8436 = vmatprep.mubr.bf16.mxu0 %v6386
    %8437 = vmatmul.mubr.bf16.gmra.mrb[0].mxu0 %v6385
    %v8438 = vpop.f32.mrb[0].mxu0
    %v8439 = vadd.f32 %v8086, %v8438
    %v8440 = vpop.f32.mrb[0].mxu0
    %v8441 = vadd.f32 %v8088, %v8440
    %v8442 = vpop.f32.mrb[0].mxu0
    %v8443 = vadd.f32 %v8090, %v8442
    %v8444 = vpop.f32.mrb[0].mxu0
    %v8445 = vadd.f32 %v8092, %v8444
    %8446 = vmatprep.mubr.bf16.mxu0 %v6390
    %8447 = vmatmul.mubr.bf16.gmra.mrb[0].mxu0 %v6389
    %v8448 = vpop.f32.mrb[0].mxu0
    %v8449 = vadd.f32 %v8096, %v8448
    %v8450 = vpop.f32.mrb[0].mxu0
    %v8451 = vadd.f32 %v8098, %v8450
    %v8452 = vpop.f32.mrb[0].mxu0
    %v8453 = vadd.f32 %v8100, %v8452
    %v8454 = vpop.f32.mrb[0].mxu0
    %v8455 = vadd.f32 %v8102, %v8454
    %8456 = vmatprep.mubr.bf16.mxu0 %v6394
    %8457 = vmatmul.mubr.bf16.gmra.mrb[0].mxu0 %v6393
    %v8458 = vpop.f32.mrb[0].mxu0
    %v8459 = vadd.f32 %v8106, %v8458
    %v8460 = vpop.f32.mrb[0].mxu0
    %v8461 = vadd.f32 %v8108, %v8460
    %v8462 = vpop.f32.mrb[0].mxu0
    %v8463 = vadd.f32 %v8110, %v8462
    %v8464 = vpop.f32.mrb[0].mxu0
    %v8465 = vadd.f32 %v8112, %v8464
    %8466 = vmatprep.mubr.bf16.mxu0 %v6398
    %8467 = vmatmul.mubr.bf16.gmra.mrb[0].mxu0 %v6397
    %v8468 = vpop.f32.mrb[0].mxu0
    %v8469 = vadd.f32 %v8116, %v8468
    %v8470 = vpop.f32.mrb[0].mxu0
    %v8471 = vadd.f32 %v8118, %v8470
    %v8472 = vpop.f32.mrb[0].mxu0
    %v8473 = vadd.f32 %v8120, %v8472
    %v8474 = vpop.f32.mrb[0].mxu0
    %v8475 = vadd.f32 %v8122, %v8474
    %8476 = vmatprep.mubr.bf16.mxu0 %v6402
    %8477 = vmatmul.mubr.bf16.gmra.mrb[0].mxu0 %v6401
    %v8478 = vpop.f32.mrb[0].mxu0
    %v8479 = vadd.f32 %v8126, %v8478
    %v8480 = vpop.f32.mrb[0].mxu0
    %v8481 = vadd.f32 %v8128, %v8480
    %v8482 = vpop.f32.mrb[0].mxu0
    %v8483 = vadd.f32 %v8130, %v8482
    %v8484 = vpop.f32.mrb[0].mxu0
    %v8485 = vadd.f32 %v8132, %v8484
    %8486 = vmatprep.mubr.bf16.mxu0 %v6406
    %8487 = vmatmul.mubr.bf16.gmra.mrb[0].mxu0 %v6405
    %v8488 = vpop.f32.mrb[0].mxu0
    %v8489 = vadd.f32 %v8136, %v8488
    %v8490 = vpop.f32.mrb[0].mxu0
    %v8491 = vadd.f32 %v8138, %v8490
    %v8492 = vpop.f32.mrb[0].mxu0
    %v8493 = vadd.f32 %v8140, %v8492
    %v8494 = vpop.f32.mrb[0].mxu0
    %v8495 = vadd.f32 %v8142, %v8494
    %8496 = vmatprep.mubr.bf16.mxu0 %v6410
    %8497 = vmatmul.mubr.bf16.gmra.mrb[0].mxu0 %v6409
    %v8498 = vpop.f32.mrb[0].mxu0
    %v8499 = vadd.f32 %v8146, %v8498
    %v8500 = vpop.f32.mrb[0].mxu0
    %v8501 = vadd.f32 %v8148, %v8500
    %v8502 = vpop.f32.mrb[0].mxu0
    %v8503 = vadd.f32 %v8150, %v8502
    %v8504 = vpop.f32.mrb[0].mxu0
    %v8505 = vadd.f32 %v8152, %v8504
    %8506 = vmatprep.mubr.bf16.mxu0 %v6414
    %8507 = vmatmul.mubr.bf16.gmra.mrb[0].mxu0 %v6413
    %v8508 = vpop.f32.mrb[0].mxu0
    %v8509 = vadd.f32 %v8156, %v8508
    %v8510 = vpop.f32.mrb[0].mxu0
    %v8511 = vadd.f32 %v8158, %v8510
    %v8512 = vpop.f32.mrb[0].mxu0
    %v8513 = vadd.f32 %v8160, %v8512
    %v8514 = vpop.f32.mrb[0].mxu0
    %v8515 = vadd.f32 %v8162, %v8514
    %8516 = vmatprep.mubr.bf16.mxu0 %v6418
    %8517 = vmatmul.mubr.bf16.gmra.mrb[0].mxu0 %v6417
    %v8518 = vpop.f32.mrb[0].mxu0
    %v8519 = vadd.f32 %v8166, %v8518
    %v8520 = vpop.f32.mrb[0].mxu0
    %v8521 = vadd.f32 %v8168, %v8520
    %v8522 = vpop.f32.mrb[0].mxu0
    %v8523 = vadd.f32 %v8170, %v8522
    %v8524 = vpop.f32.mrb[0].mxu0
    %v8525 = vadd.f32 %v8172, %v8524
    %8526 = vmatprep.mubr.bf16.mxu0 %v6422
    %8527 = vmatmul.mubr.bf16.gmra.mrb[0].mxu0 %v6421
    %v8528 = vpop.f32.mrb[0].mxu0
    %v8529 = vadd.f32 %v8176, %v8528
    %v8530 = vpop.f32.mrb[0].mxu0
    %v8531 = vadd.f32 %v8178, %v8530
    %v8532 = vpop.f32.mrb[0].mxu0
    %v8533 = vadd.f32 %v8180, %v8532
    %v8534 = vpop.f32.mrb[0].mxu0
    %v8535 = vadd.f32 %v8182, %v8534
    %8536 = vmatprep.mubr.bf16.mxu0 %v6426
    %8537 = vmatmul.mubr.bf16.gmra.mrb[0].mxu0 %v6425
    %v8538 = vpop.f32.mrb[0].mxu0
    %v8539 = vadd.f32 %v8186, %v8538
    %v8540 = vpop.f32.mrb[0].mxu0
    %v8541 = vadd.f32 %v8188, %v8540
    %v8542 = vpop.f32.mrb[0].mxu0
    %v8543 = vadd.f32 %v8190, %v8542
    %v8544 = vpop.f32.mrb[0].mxu0
    %v8545 = vadd.f32 %v8192, %v8544
    %8546 = vmatprep.mubr.bf16.mxu0 %v6430
    %8547 = vmatmul.mubr.bf16.gmra.mrb[0].mxu0 %v6429
    %v8548 = vpop.f32.mrb[0].mxu0
    %v8549 = vadd.f32 %v8196, %v8548
    %v8550 = vpop.f32.mrb[0].mxu0
    %v8551 = vadd.f32 %v8198, %v8550
    %v8552 = vpop.f32.mrb[0].mxu0
    %v8553 = vadd.f32 %v8200, %v8552
    %v8554 = vpop.f32.mrb[0].mxu0
    %v8555 = vadd.f32 %v8202, %v8554
    %8556 = vmatprep.mubr.bf16.mxu0 %v6434
    %8557 = vmatmul.mubr.bf16.gmra.mrb[0].mxu0 %v6433
    %v8558 = vpop.f32.mrb[0].mxu0
    %v8559 = vadd.f32 %v8206, %v8558
    %v8560 = vpop.f32.mrb[0].mxu0
    %v8561 = vadd.f32 %v8208, %v8560
    %v8562 = vpop.f32.mrb[0].mxu0
    %v8563 = vadd.f32 %v8210, %v8562
    %v8564 = vpop.f32.mrb[0].mxu0
    %v8565 = vadd.f32 %v8212, %v8564
    %8566 = vmatprep.mubr.bf16.mxu0 %v6438
    %8567 = vmatmul.mubr.bf16.gmra.mrb[0].mxu0 %v6437
    %v8568 = vpop.f32.mrb[0].mxu0
    %v8569 = vadd.f32 %v8216, %v8568
    %v8570 = vpop.f32.mrb[0].mxu0
    %v8571 = vadd.f32 %v8218, %v8570
    %v8572 = vpop.f32.mrb[0].mxu0
    %v8573 = vadd.f32 %v8220, %v8572
    %v8574 = vpop.f32.mrb[0].mxu0
    %v8575 = vadd.f32 %v8222, %v8574
    %8576 = vmatprep.mubr.bf16.mxu0 %v6442
    %8577 = vmatmul.mubr.bf16.gmra.mrb[0].mxu0 %v6441
    %v8578 = vpop.f32.mrb[0].mxu0
    %v8579 = vadd.f32 %v8226, %v8578
    %v8580 = vpop.f32.mrb[0].mxu0
    %v8581 = vadd.f32 %v8228, %v8580
    %v8582 = vpop.f32.mrb[0].mxu0
    %v8583 = vadd.f32 %v8230, %v8582
    %v8584 = vpop.f32.mrb[0].mxu0
    %v8585 = vadd.f32 %v8232, %v8584
    %8586 = vmatprep.mubr.bf16.mxu0 %v6446
    %8587 = vmatmul.mubr.bf16.gmra.mrb[0].mxu0 %v6445
    %v8588 = vpop.f32.mrb[0].mxu0
    %v8589 = vadd.f32 %v8236, %v8588
    %v8590 = vpop.f32.mrb[0].mxu0
    %v8591 = vadd.f32 %v8238, %v8590
    %v8592 = vpop.f32.mrb[0].mxu0
    %v8593 = vadd.f32 %v8240, %v8592
    %v8594 = vpop.f32.mrb[0].mxu0
    %v8595 = vadd.f32 %v8242, %v8594
    %8596 = vmatprep.mubr.bf16.mxu0 %v6450
    %8597 = vmatmul.mubr.bf16.gmra.mrb[0].mxu0 %v6449
    %v8598 = vpop.f32.mrb[0].mxu0
    %v8599 = vadd.f32 %v8246, %v8598
    %v8600 = vpop.f32.mrb[0].mxu0
    %v8601 = vadd.f32 %v8248, %v8600
    %v8602 = vpop.f32.mrb[0].mxu0
    %v8603 = vadd.f32 %v8250, %v8602
    %v8604 = vpop.f32.mrb[0].mxu0
    %v8605 = vadd.f32 %v8252, %v8604
    %8606 = vmatprep.mubr.bf16.mxu0 %v6454
    %8607 = vmatmul.mubr.bf16.gmra.mrb[0].mxu0 %v6453
    %v8608 = vpop.f32.mrb[0].mxu0
    %v8609 = vadd.f32 %v8256, %v8608
    %v8610 = vpop.f32.mrb[0].mxu0
    %v8611 = vadd.f32 %v8258, %v8610
    %v8612 = vpop.f32.mrb[0].mxu0
    %v8613 = vadd.f32 %v8260, %v8612
    %v8614 = vpop.f32.mrb[0].mxu0
    %v8615 = vadd.f32 %v8262, %v8614
    %8616 = vmatprep.mubr.bf16.mxu0 %v6458
    %8617 = vmatmul.mubr.bf16.gmra.mrb[0].mxu0 %v6457
    %v8618 = vpop.f32.mrb[0].mxu0
    %v8619 = vadd.f32 %v8266, %v8618
    %v8620 = vpop.f32.mrb[0].mxu0
    %v8621 = vadd.f32 %v8268, %v8620
    %v8622 = vpop.f32.mrb[0].mxu0
    %v8623 = vadd.f32 %v8270, %v8622
    %v8624 = vpop.f32.mrb[0].mxu0
    %v8625 = vadd.f32 %v8272, %v8624
    %8626 = vmatprep.mubr.bf16.mxu0 %v6462
    %8627 = vmatmul.mubr.bf16.gmra.mrb[0].mxu0 %v6461
    %v8628 = vpop.f32.mrb[0].mxu0
    %v8629 = vadd.f32 %v8276, %v8628
    %v8630 = vpop.f32.mrb[0].mxu0
    %v8631 = vadd.f32 %v8278, %v8630
    %v8632 = vpop.f32.mrb[0].mxu0
    %v8633 = vadd.f32 %v8280, %v8632
    %v8634 = vpop.f32.mrb[0].mxu0
    %v8635 = vadd.f32 %v8282, %v8634
    %8636 = vmatprep.mubr.bf16.mxu0 %v6466
    %8637 = vmatmul.mubr.bf16.gmra.mrb[0].mxu0 %v6465
    %v8638 = vpop.f32.mrb[0].mxu0
    %v8639 = vadd.f32 %v8286, %v8638
    %v8640 = vpop.f32.mrb[0].mxu0
    %v8641 = vadd.f32 %v8288, %v8640
    %v8642 = vpop.f32.mrb[0].mxu0
    %v8643 = vadd.f32 %v8290, %v8642
    %v8644 = vpop.f32.mrb[0].mxu0
    %v8645 = vadd.f32 %v8292, %v8644
    %8646 = vdwg.mxu0
    %v8647 = vld [vmem:[%s13] sm:$0xf]
    %v8648 = vld [vmem:[%s13 + $0x4] sm:$0xf]
    %v8649 = vld [vmem:[%s13 + $0x8] sm:$0xf]
    %v8650 = vld [vmem:[%s13 + $0xc] sm:$0xf]
    %v8651 = vld [vmem:[%s13 + $0x10] sm:$0xf]
    %v8652 = vld [vmem:[%s13 + $0x14] sm:$0xf]
    %v8653 = vld [vmem:[%s13 + $0x18] sm:$0xf]
    %v8654 = vld [vmem:[%s13 + $0x1c] sm:$0xf]
    %v8655 = vld [vmem:[%s13 + $0x20] sm:$0xf]
    %v8656 = vld [vmem:[%s13 + $0x24] sm:$0xf]
    %v8657 = vld [vmem:[%s13 + $0x28] sm:$0xf]
    %v8658 = vld [vmem:[%s13 + $0x2c] sm:$0xf]
    %v8659 = vld [vmem:[%s13 + $0x30] sm:$0xf]
    %v8660 = vld [vmem:[%s13 + $0x34] sm:$0xf]
    %v8661 = vld [vmem:[%s13 + $0x38] sm:$0xf]
    %v8662 = vld [vmem:[%s13 + $0x3c] sm:$0xf]
    %v8663 = vld [vmem:[%s13 + $0x40] sm:$0xf]
    %v8664 = vld [vmem:[%s13 + $0x44] sm:$0xf]
    %v8665 = vld [vmem:[%s13 + $0x48] sm:$0xf]
    %v8666 = vld [vmem:[%s13 + $0x4c] sm:$0xf]
    %v8667 = vld [vmem:[%s13 + $0x50] sm:$0xf]
    %v8668 = vld [vmem:[%s13 + $0x54] sm:$0xf]
    %v8669 = vld [vmem:[%s13 + $0x58] sm:$0xf]
    %v8670 = vld [vmem:[%s13 + $0x5c] sm:$0xf]
    %v8671 = vld [vmem:[%s13 + $0x60] sm:$0xf]
    %v8672 = vld [vmem:[%s13 + $0x64] sm:$0xf]
    %v8673 = vld [vmem:[%s13 + $0x68] sm:$0xf]
    %v8674 = vld [vmem:[%s13 + $0x6c] sm:$0xf]
    %v8675 = vld [vmem:[%s13 + $0x70] sm:$0xf]
    %v8676 = vld [vmem:[%s13 + $0x74] sm:$0xf]
    %v8677 = vld [vmem:[%s13 + $0x78] sm:$0xf]
    %v8678 = vld [vmem:[%s13 + $0x7c] sm:$0xf]
    %v8679 = vld [vmem:[%s13 + $0x80] sm:$0xf]
    %v8680 = vld [vmem:[%s13 + $0x84] sm:$0xf]
    %v8681 = vld [vmem:[%s13 + $0x88] sm:$0xf]
    %v8682 = vld [vmem:[%s13 + $0x8c] sm:$0xf]
    %v8683 = vld [vmem:[%s13 + $0x90] sm:$0xf]
    %v8684 = vld [vmem:[%s13 + $0x94] sm:$0xf]
    %v8685 = vld [vmem:[%s13 + $0x98] sm:$0xf]
    %v8686 = vld [vmem:[%s13 + $0x9c] sm:$0xf]
    %v8687 = vld [vmem:[%s13 + $0xa0] sm:$0xf]
    %v8688 = vld [vmem:[%s13 + $0xa4] sm:$0xf]
    %v8689 = vld [vmem:[%s13 + $0xa8] sm:$0xf]
    %v8690 = vld [vmem:[%s13 + $0xac] sm:$0xf]
    %v8691 = vld [vmem:[%s13 + $0xb0] sm:$0xf]
    %v8692 = vld [vmem:[%s13 + $0xb4] sm:$0xf]
    %v8693 = vld [vmem:[%s13 + $0xb8] sm:$0xf]
    %v8694 = vld [vmem:[%s13 + $0xbc] sm:$0xf]
    %v8695 = vld [vmem:[%s13 + $0xc0] sm:$0xf]
    %v8696 = vld [vmem:[%s13 + $0xc4] sm:$0xf]
    %v8697 = vld [vmem:[%s13 + $0xc8] sm:$0xf]
    %v8698 = vld [vmem:[%s13 + $0xcc] sm:$0xf]
    %v8699 = vld [vmem:[%s13 + $0xd0] sm:$0xf]
    %v8700 = vld [vmem:[%s13 + $0xd4] sm:$0xf]
    %v8701 = vld [vmem:[%s13 + $0xd8] sm:$0xf]
    %v8702 = vld [vmem:[%s13 + $0xdc] sm:$0xf]
    %v8703 = vld [vmem:[%s13 + $0xe0] sm:$0xf]
    %v8704 = vld [vmem:[%s13 + $0xe4] sm:$0xf]
    %v8705 = vld [vmem:[%s13 + $0xe8] sm:$0xf]
    %v8706 = vld [vmem:[%s13 + $0xec] sm:$0xf]
    %v8707 = vld [vmem:[%s13 + $0xf0] sm:$0xf]
    %v8708 = vld [vmem:[%s13 + $0xf4] sm:$0xf]
    %v8709 = vld [vmem:[%s13 + $0xf8] sm:$0xf]
    %v8710 = vld [vmem:[%s13 + $0xfc] sm:$0xf]
    %v8775 = vunpack.c.l.b16 %v8647
    %v8776 = vunpack.c.l.b16 %v8648
    %v8777 = vunpack.c.l.b16 %v8649
    %v8778 = vunpack.c.l.b16 %v8650
    %v8779 = vunpack.c.l.b16 %v8651
    %v8780 = vunpack.c.l.b16 %v8652
    %v8781 = vunpack.c.l.b16 %v8653
    %v8782 = vunpack.c.l.b16 %v8654
    %v8783 = vunpack.c.l.b16 %v8655
    %v8784 = vunpack.c.l.b16 %v8656
    %v8785 = vunpack.c.l.b16 %v8657
    %v8786 = vunpack.c.l.b16 %v8658
    %v8787 = vunpack.c.l.b16 %v8659
    %v8788 = vunpack.c.l.b16 %v8660
    %v8789 = vunpack.c.l.b16 %v8661
    %v8790 = vunpack.c.l.b16 %v8662
    %v8791 = vunpack.c.l.b16 %v8663
    %v8792 = vunpack.c.l.b16 %v8664
    %v8793 = vunpack.c.l.b16 %v8665
    %v8794 = vunpack.c.l.b16 %v8666
    %v8795 = vunpack.c.l.b16 %v8667
    %v8796 = vunpack.c.l.b16 %v8668
    %v8797 = vunpack.c.l.b16 %v8669
    %v8798 = vunpack.c.l.b16 %v8670
    %v8799 = vunpack.c.l.b16 %v8671
    %v8800 = vunpack.c.l.b16 %v8672
    %v8801 = vunpack.c.l.b16 %v8673
    %v8802 = vunpack.c.l.b16 %v8674
    %v8803 = vunpack.c.l.b16 %v8675
    %v8804 = vunpack.c.l.b16 %v8676
    %v8805 = vunpack.c.l.b16 %v8677
    %v8806 = vunpack.c.l.b16 %v8678
    %v8807 = vunpack.c.l.b16 %v8679
    %v8808 = vunpack.c.l.b16 %v8680
    %v8809 = vunpack.c.l.b16 %v8681
    %v8810 = vunpack.c.l.b16 %v8682
    %v8811 = vunpack.c.l.b16 %v8683
    %v8812 = vunpack.c.l.b16 %v8684
    %v8813 = vunpack.c.l.b16 %v8685
    %v8814 = vunpack.c.l.b16 %v8686
    %v8815 = vunpack.c.l.b16 %v8687
    %v8816 = vunpack.c.l.b16 %v8688
    %v8817 = vunpack.c.l.b16 %v8689
    %v8818 = vunpack.c.l.b16 %v8690
    %v8819 = vunpack.c.l.b16 %v8691
    %v8820 = vunpack.c.l.b16 %v8692
    %v8821 = vunpack.c.l.b16 %v8693
    %v8822 = vunpack.c.l.b16 %v8694
    %v8823 = vunpack.c.l.b16 %v8695
    %v8824 = vunpack.c.l.b16 %v8696
    %v8825 = vunpack.c.l.b16 %v8697
    %v8826 = vunpack.c.l.b16 %v8698
    %v8827 = vunpack.c.l.b16 %v8699
    %v8828 = vunpack.c.l.b16 %v8700
    %v8829 = vunpack.c.l.b16 %v8701
    %v8830 = vunpack.c.l.b16 %v8702
    %v8831 = vunpack.c.l.b16 %v8703
    %v8832 = vunpack.c.l.b16 %v8704
    %v8833 = vunpack.c.l.b16 %v8705
    %v8834 = vunpack.c.l.b16 %v8706
    %v8835 = vunpack.c.l.b16 %v8707
    %v8836 = vunpack.c.l.b16 %v8708
    %v8837 = vunpack.c.l.b16 %v8709
    %v8838 = vunpack.c.l.b16 %v8710
    %v8839 = vpack.c.b16 %v8776, %v8775
    %v8840 = vpack.c.b16 %v8778, %v8777
    %v8841 = vpack.c.b16 %v8780, %v8779
    %v8842 = vpack.c.b16 %v8782, %v8781
    %v8843 = vpack.c.b16 %v8784, %v8783
    %v8844 = vpack.c.b16 %v8786, %v8785
    %v8845 = vpack.c.b16 %v8788, %v8787
    %v8846 = vpack.c.b16 %v8790, %v8789
    %v8847 = vpack.c.b16 %v8792, %v8791
    %v8848 = vpack.c.b16 %v8794, %v8793
    %v8849 = vpack.c.b16 %v8796, %v8795
    %v8850 = vpack.c.b16 %v8798, %v8797
    %v8851 = vpack.c.b16 %v8800, %v8799
    %v8852 = vpack.c.b16 %v8802, %v8801
    %v8853 = vpack.c.b16 %v8804, %v8803
    %v8854 = vpack.c.b16 %v8806, %v8805
    %v8855 = vpack.c.b16 %v8808, %v8807
    %v8856 = vpack.c.b16 %v8810, %v8809
    %v8857 = vpack.c.b16 %v8812, %v8811
    %v8858 = vpack.c.b16 %v8814, %v8813
    %v8859 = vpack.c.b16 %v8816, %v8815
    %v8860 = vpack.c.b16 %v8818, %v8817
    %v8861 = vpack.c.b16 %v8820, %v8819
    %v8862 = vpack.c.b16 %v8822, %v8821
    %v8863 = vpack.c.b16 %v8824, %v8823
    %v8864 = vpack.c.b16 %v8826, %v8825
    %v8865 = vpack.c.b16 %v8828, %v8827
    %v8866 = vpack.c.b16 %v8830, %v8829
    %v8867 = vpack.c.b16 %v8832, %v8831
    %v8868 = vpack.c.b16 %v8834, %v8833
    %v8869 = vpack.c.b16 %v8836, %v8835
    %v8870 = vpack.c.b16 %v8838, %v8837
    %8903 = vmatprep.subr.bf16.mxu0 0
    %8904 = vmatpush1.bf16.msra.mxu0 %v8839
    %8905 = vmatprep.subr.bf16.mxu0 0
    %8906 = vmatpush1.bf16.msra.mxu0 %v8840
    %8907 = vmatprep.subr.bf16.mxu0 0
    %8908 = vmatpush1.bf16.msra.mxu0 %v8841
    %8909 = vmatprep.subr.bf16.mxu0 0
    %8910 = vmatpush1.bf16.msra.mxu0 %v8842
    %8911 = vmatprep.subr.bf16.mxu0 0
    %8912 = vmatpush1.bf16.msra.mxu0 %v8843
    %8913 = vmatprep.subr.bf16.mxu0 0
    %8914 = vmatpush1.bf16.msra.mxu0 %v8844
    %8915 = vmatprep.subr.bf16.mxu0 0
    %8916 = vmatpush1.bf16.msra.mxu0 %v8845
    %8917 = vmatprep.subr.bf16.mxu0 0
    %8918 = vmatpush1.bf16.msra.mxu0 %v8846
    %8919 = vmatprep.subr.bf16.mxu0 0
    %8920 = vmatpush1.bf16.msra.mxu0 %v8847
    %8921 = vmatprep.subr.bf16.mxu0 0
    %8922 = vmatpush1.bf16.msra.mxu0 %v8848
    %8923 = vmatprep.subr.bf16.mxu0 0
    %8924 = vmatpush1.bf16.msra.mxu0 %v8849
    %8925 = vmatprep.subr.bf16.mxu0 0
    %8926 = vmatpush1.bf16.msra.mxu0 %v8850
    %8927 = vmatprep.subr.bf16.mxu0 0
    %8928 = vmatpush1.bf16.msra.mxu0 %v8851
    %8929 = vmatprep.subr.bf16.mxu0 0
    %8930 = vmatpush1.bf16.msra.mxu0 %v8852
    %8931 = vmatprep.subr.bf16.mxu0 0
    %8932 = vmatpush1.bf16.msra.mxu0 %v8853
    %8933 = vmatprep.subr.bf16.mxu0 0
    %8934 = vmatpush1.bf16.msra.mxu0 %v8854
    %8935 = vmatprep.mubr.bf16.mxu0 %v6340
    %8936 = vmatmul.mubr.bf16.gmra.mrb[0].mxu0 %v6339
    %v8937 = vpop.f32.mrb[0].mxu0
    %v8938 = vadd.f32 0.0, %v8937
    %v8939 = vpop.f32.mrb[0].mxu0
    %v8940 = vpop.f32.mrb[0].mxu0
    %v8941 = vadd.f32 0.0, %v8940
    %v8942 = vpop.f32.mrb[0].mxu0
    %8943 = vmatprep.mubr.bf16.mxu0 %v6344
    %8944 = vmatmul.mubr.bf16.gmra.mrb[0].mxu0 %v6343
    %v8945 = vpop.f32.mrb[0].mxu0
    %v8946 = vadd.f32 0.0, %v8945
    %v8947 = vpop.f32.mrb[0].mxu0
    %v8948 = vpop.f32.mrb[0].mxu0
    %v8949 = vadd.f32 0.0, %v8948
    %v8950 = vpop.f32.mrb[0].mxu0
    %8951 = vmatprep.mubr.bf16.mxu0 %v6348
    %8952 = vmatmul.mubr.bf16.gmra.mrb[0].mxu0 %v6347
    %v8953 = vpop.f32.mrb[0].mxu0
    %v8954 = vadd.f32 0.0, %v8953
    %v8955 = vpop.f32.mrb[0].mxu0
    %v8956 = vpop.f32.mrb[0].mxu0
    %v8957 = vadd.f32 0.0, %v8956
    %v8958 = vpop.f32.mrb[0].mxu0
    %8959 = vmatprep.mubr.bf16.mxu0 %v6352
    %8960 = vmatmul.mubr.bf16.gmra.mrb[0].mxu0 %v6351
    %v8961 = vpop.f32.mrb[0].mxu0
    %v8962 = vadd.f32 0.0, %v8961
    %v8963 = vpop.f32.mrb[0].mxu0
    %v8964 = vpop.f32.mrb[0].mxu0
    %v8965 = vadd.f32 0.0, %v8964
    %v8966 = vpop.f32.mrb[0].mxu0
    %8967 = vmatprep.mubr.bf16.mxu0 %v6356
    %8968 = vmatmul.mubr.bf16.gmra.mrb[0].mxu0 %v6355
    %v8969 = vpop.f32.mrb[0].mxu0
    %v8970 = vadd.f32 0.0, %v8969
    %v8971 = vpop.f32.mrb[0].mxu0
    %v8972 = vpop.f32.mrb[0].mxu0
    %v8973 = vadd.f32 0.0, %v8972
    %v8974 = vpop.f32.mrb[0].mxu0
    %8975 = vmatprep.mubr.bf16.mxu0 %v6360
    %8976 = vmatmul.mubr.bf16.gmra.mrb[0].mxu0 %v6359
    %v8977 = vpop.f32.mrb[0].mxu0
    %v8978 = vadd.f32 0.0, %v8977
    %v8979 = vpop.f32.mrb[0].mxu0
    %v8980 = vpop.f32.mrb[0].mxu0
    %v8981 = vadd.f32 0.0, %v8980
    %v8982 = vpop.f32.mrb[0].mxu0
    %8983 = vmatprep.mubr.bf16.mxu0 %v6364
    %8984 = vmatmul.mubr.bf16.gmra.mrb[0].mxu0 %v6363
    %v8985 = vpop.f32.mrb[0].mxu0
    %v8986 = vadd.f32 0.0, %v8985
    %v8987 = vpop.f32.mrb[0].mxu0
    %v8988 = vpop.f32.mrb[0].mxu0
    %v8989 = vadd.f32 0.0, %v8988
    %v8990 = vpop.f32.mrb[0].mxu0
    %8991 = vmatprep.mubr.bf16.mxu0 %v6368
    %8992 = vmatmul.mubr.bf16.gmra.mrb[0].mxu0 %v6367
    %v8993 = vpop.f32.mrb[0].mxu0
    %v8994 = vadd.f32 0.0, %v8993
    %v8995 = vpop.f32.mrb[0].mxu0
    %v8996 = vpop.f32.mrb[0].mxu0
    %v8997 = vadd.f32 0.0, %v8996
    %v8998 = vpop.f32.mrb[0].mxu0
    %8999 = vmatprep.mubr.bf16.mxu0 %v6372
    %9000 = vmatmul.mubr.bf16.gmra.mrb[0].mxu0 %v6371
    %v9001 = vpop.f32.mrb[0].mxu0
    %v9002 = vadd.f32 0.0, %v9001
    %v9003 = vpop.f32.mrb[0].mxu0
    %v9004 = vpop.f32.mrb[0].mxu0
    %v9005 = vadd.f32 0.0, %v9004
    %v9006 = vpop.f32.mrb[0].mxu0
    %9007 = vmatprep.mubr.bf16.mxu0 %v6376
    %9008 = vmatmul.mubr.bf16.gmra.mrb[0].mxu0 %v6375
    %v9009 = vpop.f32.mrb[0].mxu0
    %v9010 = vadd.f32 0.0, %v9009
    %v9011 = vpop.f32.mrb[0].mxu0
    %v9012 = vpop.f32.mrb[0].mxu0
    %v9013 = vadd.f32 0.0, %v9012
    %v9014 = vpop.f32.mrb[0].mxu0
    %9015 = vmatprep.mubr.bf16.mxu0 %v6380
    %9016 = vmatmul.mubr.bf16.gmra.mrb[0].mxu0 %v6379
    %v9017 = vpop.f32.mrb[0].mxu0
    %v9018 = vadd.f32 0.0, %v9017
    %v9019 = vpop.f32.mrb[0].mxu0
    %v9020 = vpop.f32.mrb[0].mxu0
    %v9021 = vadd.f32 0.0, %v9020
    %v9022 = vpop.f32.mrb[0].mxu0
    %9023 = vmatprep.mubr.bf16.mxu0 %v6384
    %9024 = vmatmul.mubr.bf16.gmra.mrb[0].mxu0 %v6383
    %v9025 = vpop.f32.mrb[0].mxu0
    %v9026 = vadd.f32 0.0, %v9025
    %v9027 = vpop.f32.mrb[0].mxu0
    %v9028 = vpop.f32.mrb[0].mxu0
    %v9029 = vadd.f32 0.0, %v9028
    %v9030 = vpop.f32.mrb[0].mxu0
    %9031 = vmatprep.mubr.bf16.mxu0 %v6388
    %9032 = vmatmul.mubr.bf16.gmra.mrb[0].mxu0 %v6387
    %v9033 = vpop.f32.mrb[0].mxu0
    %v9034 = vadd.f32 0.0, %v9033
    %v9035 = vpop.f32.mrb[0].mxu0
    %v9036 = vpop.f32.mrb[0].mxu0
    %v9037 = vadd.f32 0.0, %v9036
    %v9038 = vpop.f32.mrb[0].mxu0
    %9039 = vmatprep.mubr.bf16.mxu0 %v6392
    %9040 = vmatmul.mubr.bf16.gmra.mrb[0].mxu0 %v6391
    %v9041 = vpop.f32.mrb[0].mxu0
    %v9042 = vadd.f32 0.0, %v9041
    %v9043 = vpop.f32.mrb[0].mxu0
    %v9044 = vpop.f32.mrb[0].mxu0
    %v9045 = vadd.f32 0.0, %v9044
    %v9046 = vpop.f32.mrb[0].mxu0
    %9047 = vmatprep.mubr.bf16.mxu0 %v6396
    %9048 = vmatmul.mubr.bf16.gmra.mrb[0].mxu0 %v6395
    %v9049 = vpop.f32.mrb[0].mxu0
    %v9050 = vadd.f32 0.0, %v9049
    %v9051 = vpop.f32.mrb[0].mxu0
    %v9052 = vpop.f32.mrb[0].mxu0
    %v9053 = vadd.f32 0.0, %v9052
    %v9054 = vpop.f32.mrb[0].mxu0
    %9055 = vmatprep.mubr.bf16.mxu0 %v6400
    %9056 = vmatmul.mubr.bf16.gmra.mrb[0].mxu0 %v6399
    %v9057 = vpop.f32.mrb[0].mxu0
    %v9058 = vadd.f32 0.0, %v9057
    %v9059 = vpop.f32.mrb[0].mxu0
    %v9060 = vpop.f32.mrb[0].mxu0
    %v9061 = vadd.f32 0.0, %v9060
    %v9062 = vpop.f32.mrb[0].mxu0
    %9063 = vmatprep.mubr.bf16.mxu0 %v6404
    %9064 = vmatmul.mubr.bf16.gmra.mrb[0].mxu0 %v6403
    %v9065 = vpop.f32.mrb[0].mxu0
    %v9066 = vadd.f32 0.0, %v9065
    %v9067 = vpop.f32.mrb[0].mxu0
    %v9068 = vpop.f32.mrb[0].mxu0
    %v9069 = vadd.f32 0.0, %v9068
    %v9070 = vpop.f32.mrb[0].mxu0
    %9071 = vmatprep.mubr.bf16.mxu0 %v6408
    %9072 = vmatmul.mubr.bf16.gmra.mrb[0].mxu0 %v6407
    %v9073 = vpop.f32.mrb[0].mxu0
    %v9074 = vadd.f32 0.0, %v9073
    %v9075 = vpop.f32.mrb[0].mxu0
    %v9076 = vpop.f32.mrb[0].mxu0
    %v9077 = vadd.f32 0.0, %v9076
    %v9078 = vpop.f32.mrb[0].mxu0
    %9079 = vmatprep.mubr.bf16.mxu0 %v6412
    %9080 = vmatmul.mubr.bf16.gmra.mrb[0].mxu0 %v6411
    %v9081 = vpop.f32.mrb[0].mxu0
    %v9082 = vadd.f32 0.0, %v9081
    %v9083 = vpop.f32.mrb[0].mxu0
    %v9084 = vpop.f32.mrb[0].mxu0
    %v9085 = vadd.f32 0.0, %v9084
    %v9086 = vpop.f32.mrb[0].mxu0
    %9087 = vmatprep.mubr.bf16.mxu0 %v6416
    %9088 = vmatmul.mubr.bf16.gmra.mrb[0].mxu0 %v6415
    %v9089 = vpop.f32.mrb[0].mxu0
    %v9090 = vadd.f32 0.0, %v9089
    %v9091 = vpop.f32.mrb[0].mxu0
    %v9092 = vpop.f32.mrb[0].mxu0
    %v9093 = vadd.f32 0.0, %v9092
    %v9094 = vpop.f32.mrb[0].mxu0
    %9095 = vmatprep.mubr.bf16.mxu0 %v6420
    %9096 = vmatmul.mubr.bf16.gmra.mrb[0].mxu0 %v6419
    %v9097 = vpop.f32.mrb[0].mxu0
    %v9098 = vadd.f32 0.0, %v9097
    %v9099 = vpop.f32.mrb[0].mxu0
    %v9100 = vpop.f32.mrb[0].mxu0
    %v9101 = vadd.f32 0.0, %v9100
    %v9102 = vpop.f32.mrb[0].mxu0
    %9103 = vmatprep.mubr.bf16.mxu0 %v6424
    %9104 = vmatmul.mubr.bf16.gmra.mrb[0].mxu0 %v6423
    %v9105 = vpop.f32.mrb[0].mxu0
    %v9106 = vadd.f32 0.0, %v9105
    %v9107 = vpop.f32.mrb[0].mxu0
    %v9108 = vpop.f32.mrb[0].mxu0
    %v9109 = vadd.f32 0.0, %v9108
    %v9110 = vpop.f32.mrb[0].mxu0
    %9111 = vmatprep.mubr.bf16.mxu0 %v6428
    %9112 = vmatmul.mubr.bf16.gmra.mrb[0].mxu0 %v6427
    %v9113 = vpop.f32.mrb[0].mxu0
    %v9114 = vadd.f32 0.0, %v9113
    %v9115 = vpop.f32.mrb[0].mxu0
    %v9116 = vpop.f32.mrb[0].mxu0
    %v9117 = vadd.f32 0.0, %v9116
    %v9118 = vpop.f32.mrb[0].mxu0
    %9119 = vmatprep.mubr.bf16.mxu0 %v6432
    %9120 = vmatmul.mubr.bf16.gmra.mrb[0].mxu0 %v6431
    %v9121 = vpop.f32.mrb[0].mxu0
    %v9122 = vadd.f32 0.0, %v9121
    %v9123 = vpop.f32.mrb[0].mxu0
    %v9124 = vpop.f32.mrb[0].mxu0
    %v9125 = vadd.f32 0.0, %v9124
    %v9126 = vpop.f32.mrb[0].mxu0
    %9127 = vmatprep.mubr.bf16.mxu0 %v6436
    %9128 = vmatmul.mubr.bf16.gmra.mrb[0].mxu0 %v6435
    %v9129 = vpop.f32.mrb[0].mxu0
    %v9130 = vadd.f32 0.0, %v9129
    %v9131 = vpop.f32.mrb[0].mxu0
    %v9132 = vpop.f32.mrb[0].mxu0
    %v9133 = vadd.f32 0.0, %v9132
    %v9134 = vpop.f32.mrb[0].mxu0
    %9135 = vmatprep.mubr.bf16.mxu0 %v6440
    %9136 = vmatmul.mubr.bf16.gmra.mrb[0].mxu0 %v6439
    %v9137 = vpop.f32.mrb[0].mxu0
    %v9138 = vadd.f32 0.0, %v9137
    %v9139 = vpop.f32.mrb[0].mxu0
    %v9140 = vpop.f32.mrb[0].mxu0
    %v9141 = vadd.f32 0.0, %v9140
    %v9142 = vpop.f32.mrb[0].mxu0
    %9143 = vmatprep.mubr.bf16.mxu0 %v6444
    %9144 = vmatmul.mubr.bf16.gmra.mrb[0].mxu0 %v6443
    %v9145 = vpop.f32.mrb[0].mxu0
    %v9146 = vadd.f32 0.0, %v9145
    %v9147 = vpop.f32.mrb[0].mxu0
    %v9148 = vpop.f32.mrb[0].mxu0
    %v9149 = vadd.f32 0.0, %v9148
    %v9150 = vpop.f32.mrb[0].mxu0
    %9151 = vmatprep.mubr.bf16.mxu0 %v6448
    %9152 = vmatmul.mubr.bf16.gmra.mrb[0].mxu0 %v6447
    %v9153 = vpop.f32.mrb[0].mxu0
    %v9154 = vadd.f32 0.0, %v9153
    %v9155 = vpop.f32.mrb[0].mxu0
    %v9156 = vpop.f32.mrb[0].mxu0
    %v9157 = vadd.f32 0.0, %v9156
    %v9158 = vpop.f32.mrb[0].mxu0
    %9159 = vmatprep.mubr.bf16.mxu0 %v6452
    %9160 = vmatmul.mubr.bf16.gmra.mrb[0].mxu0 %v6451
    %v9161 = vpop.f32.mrb[0].mxu0
    %v9162 = vadd.f32 0.0, %v9161
    %v9163 = vpop.f32.mrb[0].mxu0
    %v9164 = vpop.f32.mrb[0].mxu0
    %v9165 = vadd.f32 0.0, %v9164
    %v9166 = vpop.f32.mrb[0].mxu0
    %9167 = vmatprep.mubr.bf16.mxu0 %v6456
    %9168 = vmatmul.mubr.bf16.gmra.mrb[0].mxu0 %v6455
    %v9169 = vpop.f32.mrb[0].mxu0
    %v9170 = vadd.f32 0.0, %v9169
    %v9171 = vpop.f32.mrb[0].mxu0
    %v9172 = vpop.f32.mrb[0].mxu0
    %v9173 = vadd.f32 0.0, %v9172
    %v9174 = vpop.f32.mrb[0].mxu0
    %9175 = vmatprep.mubr.bf16.mxu0 %v6460
    %9176 = vmatmul.mubr.bf16.gmra.mrb[0].mxu0 %v6459
    %v9177 = vpop.f32.mrb[0].mxu0
    %v9178 = vadd.f32 0.0, %v9177
    %v9179 = vpop.f32.mrb[0].mxu0
    %v9180 = vpop.f32.mrb[0].mxu0
    %v9181 = vadd.f32 0.0, %v9180
    %v9182 = vpop.f32.mrb[0].mxu0
    %9183 = vmatprep.mubr.bf16.mxu0 %v6464
    %9184 = vmatmul.mubr.bf16.gmra.mrb[0].mxu0 %v6463
    %v9185 = vpop.f32.mrb[0].mxu0
    %v9186 = vadd.f32 0.0, %v9185
    %v9187 = vpop.f32.mrb[0].mxu0
    %v9188 = vpop.f32.mrb[0].mxu0
    %v9189 = vadd.f32 0.0, %v9188
    %v9190 = vpop.f32.mrb[0].mxu0
    %9191 = vdwg.mxu0
    %9192 = vmatprep.subr.bf16.mxu0 0
    %9193 = vmatpush1.bf16.msra.mxu0 %v8855
    %9194 = vmatprep.subr.bf16.mxu0 0
    %9195 = vmatpush1.bf16.msra.mxu0 %v8856
    %9196 = vmatprep.subr.bf16.mxu0 0
    %9197 = vmatpush1.bf16.msra.mxu0 %v8857
    %9198 = vmatprep.subr.bf16.mxu0 0
    %9199 = vmatpush1.bf16.msra.mxu0 %v8858
    %9200 = vmatprep.subr.bf16.mxu0 0
    %9201 = vmatpush1.bf16.msra.mxu0 %v8859
    %9202 = vmatprep.subr.bf16.mxu0 0
    %9203 = vmatpush1.bf16.msra.mxu0 %v8860
    %9204 = vmatprep.subr.bf16.mxu0 0
    %9205 = vmatpush1.bf16.msra.mxu0 %v8861
    %9206 = vmatprep.subr.bf16.mxu0 0
    %9207 = vmatpush1.bf16.msra.mxu0 %v8862
    %9208 = vmatprep.subr.bf16.mxu0 0
    %9209 = vmatpush1.bf16.msra.mxu0 %v8863
    %9210 = vmatprep.subr.bf16.mxu0 0
    %9211 = vmatpush1.bf16.msra.mxu0 %v8864
    %9212 = vmatprep.subr.bf16.mxu0 0
    %9213 = vmatpush1.bf16.msra.mxu0 %v8865
    %9214 = vmatprep.subr.bf16.mxu0 0
    %9215 = vmatpush1.bf16.msra.mxu0 %v8866
    %9216 = vmatprep.subr.bf16.mxu0 0
    %9217 = vmatpush1.bf16.msra.mxu0 %v8867
    %9218 = vmatprep.subr.bf16.mxu0 0
    %9219 = vmatpush1.bf16.msra.mxu0 %v8868
    %9220 = vmatprep.subr.bf16.mxu0 0
    %9221 = vmatpush1.bf16.msra.mxu0 %v8869
    %9222 = vmatprep.subr.bf16.mxu0 0
    %9223 = vmatpush1.bf16.msra.mxu0 %v8870
    %9224 = vmatprep.mubr.bf16.mxu0 %v6342
    %9225 = vmatmul.mubr.bf16.gmra.mrb[0].mxu0 %v6341
    %v9226 = vpop.f32.mrb[0].mxu0
    %v9227 = vadd.f32 %v8938, %v9226
    %v9228 = vpop.f32.mrb[0].mxu0
    %v9229 = vpop.f32.mrb[0].mxu0
    %v9230 = vadd.f32 %v8941, %v9229
    %v9231 = vpop.f32.mrb[0].mxu0
    %9232 = vmatprep.mubr.bf16.mxu0 %v6346
    %9233 = vmatmul.mubr.bf16.gmra.mrb[0].mxu0 %v6345
    %v9234 = vpop.f32.mrb[0].mxu0
    %v9235 = vadd.f32 %v8946, %v9234
    %v9236 = vpop.f32.mrb[0].mxu0
    %v9237 = vpop.f32.mrb[0].mxu0
    %v9238 = vadd.f32 %v8949, %v9237
    %v9239 = vpop.f32.mrb[0].mxu0
    %9240 = vmatprep.mubr.bf16.mxu0 %v6350
    %9241 = vmatmul.mubr.bf16.gmra.mrb[0].mxu0 %v6349
    %v9242 = vpop.f32.mrb[0].mxu0
    %v9243 = vadd.f32 %v8954, %v9242
    %v9244 = vpop.f32.mrb[0].mxu0
    %v9245 = vpop.f32.mrb[0].mxu0
    %v9246 = vadd.f32 %v8957, %v9245
    %v9247 = vpop.f32.mrb[0].mxu0
    %9248 = vmatprep.mubr.bf16.mxu0 %v6354
    %9249 = vmatmul.mubr.bf16.gmra.mrb[0].mxu0 %v6353
    %v9250 = vpop.f32.mrb[0].mxu0
    %v9251 = vadd.f32 %v8962, %v9250
    %v9252 = vpop.f32.mrb[0].mxu0
    %v9253 = vpop.f32.mrb[0].mxu0
    %v9254 = vadd.f32 %v8965, %v9253
    %v9255 = vpop.f32.mrb[0].mxu0
    %9256 = vmatprep.mubr.bf16.mxu0 %v6358
    %9257 = vmatmul.mubr.bf16.gmra.mrb[0].mxu0 %v6357
    %v9258 = vpop.f32.mrb[0].mxu0
    %v9259 = vadd.f32 %v8970, %v9258
    %v9260 = vpop.f32.mrb[0].mxu0
    %v9261 = vpop.f32.mrb[0].mxu0
    %v9262 = vadd.f32 %v8973, %v9261
    %v9263 = vpop.f32.mrb[0].mxu0
    %9264 = vmatprep.mubr.bf16.mxu0 %v6362
    %9265 = vmatmul.mubr.bf16.gmra.mrb[0].mxu0 %v6361
    %v9266 = vpop.f32.mrb[0].mxu0
    %v9267 = vadd.f32 %v8978, %v9266
    %v9268 = vpop.f32.mrb[0].mxu0
    %v9269 = vpop.f32.mrb[0].mxu0
    %v9270 = vadd.f32 %v8981, %v9269
    %v9271 = vpop.f32.mrb[0].mxu0
    %9272 = vmatprep.mubr.bf16.mxu0 %v6366
    %9273 = vmatmul.mubr.bf16.gmra.mrb[0].mxu0 %v6365
    %v9274 = vpop.f32.mrb[0].mxu0
    %v9275 = vadd.f32 %v8986, %v9274
    %v9276 = vpop.f32.mrb[0].mxu0
    %v9277 = vpop.f32.mrb[0].mxu0
    %v9278 = vadd.f32 %v8989, %v9277
    %v9279 = vpop.f32.mrb[0].mxu0
    %9280 = vmatprep.mubr.bf16.mxu0 %v6370
    %9281 = vmatmul.mubr.bf16.gmra.mrb[0].mxu0 %v6369
    %v9282 = vpop.f32.mrb[0].mxu0
    %v9283 = vadd.f32 %v8994, %v9282
    %v9284 = vpop.f32.mrb[0].mxu0
    %v9285 = vpop.f32.mrb[0].mxu0
    %v9286 = vadd.f32 %v8997, %v9285
    %v9287 = vpop.f32.mrb[0].mxu0
    %9288 = vmatprep.mubr.bf16.mxu0 %v6374
    %9289 = vmatmul.mubr.bf16.gmra.mrb[0].mxu0 %v6373
    %v9290 = vpop.f32.mrb[0].mxu0
    %v9291 = vadd.f32 %v9002, %v9290
    %v9292 = vpop.f32.mrb[0].mxu0
    %v9293 = vpop.f32.mrb[0].mxu0
    %v9294 = vadd.f32 %v9005, %v9293
    %v9295 = vpop.f32.mrb[0].mxu0
    %9296 = vmatprep.mubr.bf16.mxu0 %v6378
    %9297 = vmatmul.mubr.bf16.gmra.mrb[0].mxu0 %v6377
    %v9298 = vpop.f32.mrb[0].mxu0
    %v9299 = vadd.f32 %v9010, %v9298
    %v9300 = vpop.f32.mrb[0].mxu0
    %v9301 = vpop.f32.mrb[0].mxu0
    %v9302 = vadd.f32 %v9013, %v9301
    %v9303 = vpop.f32.mrb[0].mxu0
    %9304 = vmatprep.mubr.bf16.mxu0 %v6382
    %9305 = vmatmul.mubr.bf16.gmra.mrb[0].mxu0 %v6381
    %v9306 = vpop.f32.mrb[0].mxu0
    %v9307 = vadd.f32 %v9018, %v9306
    %v9308 = vpop.f32.mrb[0].mxu0
    %v9309 = vpop.f32.mrb[0].mxu0
    %v9310 = vadd.f32 %v9021, %v9309
    %v9311 = vpop.f32.mrb[0].mxu0
    %9312 = vmatprep.mubr.bf16.mxu0 %v6386
    %9313 = vmatmul.mubr.bf16.gmra.mrb[0].mxu0 %v6385
    %v9314 = vpop.f32.mrb[0].mxu0
    %v9315 = vadd.f32 %v9026, %v9314
    %v9316 = vpop.f32.mrb[0].mxu0
    %v9317 = vpop.f32.mrb[0].mxu0
    %v9318 = vadd.f32 %v9029, %v9317
    %v9319 = vpop.f32.mrb[0].mxu0
    %9320 = vmatprep.mubr.bf16.mxu0 %v6390
    %9321 = vmatmul.mubr.bf16.gmra.mrb[0].mxu0 %v6389
    %v9322 = vpop.f32.mrb[0].mxu0
    %v9323 = vadd.f32 %v9034, %v9322
    %v9324 = vpop.f32.mrb[0].mxu0
    %v9325 = vpop.f32.mrb[0].mxu0
    %v9326 = vadd.f32 %v9037, %v9325
    %v9327 = vpop.f32.mrb[0].mxu0
    %9328 = vmatprep.mubr.bf16.mxu0 %v6394
    %9329 = vmatmul.mubr.bf16.gmra.mrb[0].mxu0 %v6393
    %v9330 = vpop.f32.mrb[0].mxu0
    %v9331 = vadd.f32 %v9042, %v9330
    %v9332 = vpop.f32.mrb[0].mxu0
    %v9333 = vpop.f32.mrb[0].mxu0
    %v9334 = vadd.f32 %v9045, %v9333
    %v9335 = vpop.f32.mrb[0].mxu0
    %9336 = vmatprep.mubr.bf16.mxu0 %v6398
    %9337 = vmatmul.mubr.bf16.gmra.mrb[0].mxu0 %v6397
    %v9338 = vpop.f32.mrb[0].mxu0
    %v9339 = vadd.f32 %v9050, %v9338
    %v9340 = vpop.f32.mrb[0].mxu0
    %v9341 = vpop.f32.mrb[0].mxu0
    %v9342 = vadd.f32 %v9053, %v9341
    %v9343 = vpop.f32.mrb[0].mxu0
    %9344 = vmatprep.mubr.bf16.mxu0 %v6402
    %9345 = vmatmul.mubr.bf16.gmra.mrb[0].mxu0 %v6401
    %v9346 = vpop.f32.mrb[0].mxu0
    %v9347 = vadd.f32 %v9058, %v9346
    %v9348 = vpop.f32.mrb[0].mxu0
    %v9349 = vpop.f32.mrb[0].mxu0
    %v9350 = vadd.f32 %v9061, %v9349
    %v9351 = vpop.f32.mrb[0].mxu0
    %9352 = vmatprep.mubr.bf16.mxu0 %v6406
    %9353 = vmatmul.mubr.bf16.gmra.mrb[0].mxu0 %v6405
    %v9354 = vpop.f32.mrb[0].mxu0
    %v9355 = vadd.f32 %v9066, %v9354
    %v9356 = vpop.f32.mrb[0].mxu0
    %v9357 = vpop.f32.mrb[0].mxu0
    %v9358 = vadd.f32 %v9069, %v9357
    %v9359 = vpop.f32.mrb[0].mxu0
    %9360 = vmatprep.mubr.bf16.mxu0 %v6410
    %9361 = vmatmul.mubr.bf16.gmra.mrb[0].mxu0 %v6409
    %v9362 = vpop.f32.mrb[0].mxu0
    %v9363 = vadd.f32 %v9074, %v9362
    %v9364 = vpop.f32.mrb[0].mxu0
    %v9365 = vpop.f32.mrb[0].mxu0
    %v9366 = vadd.f32 %v9077, %v9365
    %v9367 = vpop.f32.mrb[0].mxu0
    %9368 = vmatprep.mubr.bf16.mxu0 %v6414
    %9369 = vmatmul.mubr.bf16.gmra.mrb[0].mxu0 %v6413
    %v9370 = vpop.f32.mrb[0].mxu0
    %v9371 = vadd.f32 %v9082, %v9370
    %v9372 = vpop.f32.mrb[0].mxu0
    %v9373 = vpop.f32.mrb[0].mxu0
    %v9374 = vadd.f32 %v9085, %v9373
    %v9375 = vpop.f32.mrb[0].mxu0
    %9376 = vmatprep.mubr.bf16.mxu0 %v6418
    %9377 = vmatmul.mubr.bf16.gmra.mrb[0].mxu0 %v6417
    %v9378 = vpop.f32.mrb[0].mxu0
    %v9379 = vadd.f32 %v9090, %v9378
    %v9380 = vpop.f32.mrb[0].mxu0
    %v9381 = vpop.f32.mrb[0].mxu0
    %v9382 = vadd.f32 %v9093, %v9381
    %v9383 = vpop.f32.mrb[0].mxu0
    %9384 = vmatprep.mubr.bf16.mxu0 %v6422
    %9385 = vmatmul.mubr.bf16.gmra.mrb[0].mxu0 %v6421
    %v9386 = vpop.f32.mrb[0].mxu0
    %v9387 = vadd.f32 %v9098, %v9386
    %v9388 = vpop.f32.mrb[0].mxu0
    %v9389 = vpop.f32.mrb[0].mxu0
    %v9390 = vadd.f32 %v9101, %v9389
    %v9391 = vpop.f32.mrb[0].mxu0
    %9392 = vmatprep.mubr.bf16.mxu0 %v6426
    %9393 = vmatmul.mubr.bf16.gmra.mrb[0].mxu0 %v6425
    %v9394 = vpop.f32.mrb[0].mxu0
    %v9395 = vadd.f32 %v9106, %v9394
    %v9396 = vpop.f32.mrb[0].mxu0
    %v9397 = vpop.f32.mrb[0].mxu0
    %v9398 = vadd.f32 %v9109, %v9397
    %v9399 = vpop.f32.mrb[0].mxu0
    %9400 = vmatprep.mubr.bf16.mxu0 %v6430
    %9401 = vmatmul.mubr.bf16.gmra.mrb[0].mxu0 %v6429
    %v9402 = vpop.f32.mrb[0].mxu0
    %v9403 = vadd.f32 %v9114, %v9402
    %v9404 = vpop.f32.mrb[0].mxu0
    %v9405 = vpop.f32.mrb[0].mxu0
    %v9406 = vadd.f32 %v9117, %v9405
    %v9407 = vpop.f32.mrb[0].mxu0
    %9408 = vmatprep.mubr.bf16.mxu0 %v6434
    %9409 = vmatmul.mubr.bf16.gmra.mrb[0].mxu0 %v6433
    %v9410 = vpop.f32.mrb[0].mxu0
    %v9411 = vadd.f32 %v9122, %v9410
    %v9412 = vpop.f32.mrb[0].mxu0
    %v9413 = vpop.f32.mrb[0].mxu0
    %v9414 = vadd.f32 %v9125, %v9413
    %v9415 = vpop.f32.mrb[0].mxu0
    %9416 = vmatprep.mubr.bf16.mxu0 %v6438
    %9417 = vmatmul.mubr.bf16.gmra.mrb[0].mxu0 %v6437
    %v9418 = vpop.f32.mrb[0].mxu0
    %v9419 = vadd.f32 %v9130, %v9418
    %v9420 = vpop.f32.mrb[0].mxu0
    %v9421 = vpop.f32.mrb[0].mxu0
    %v9422 = vadd.f32 %v9133, %v9421
    %v9423 = vpop.f32.mrb[0].mxu0
    %9424 = vmatprep.mubr.bf16.mxu0 %v6442
    %9425 = vmatmul.mubr.bf16.gmra.mrb[0].mxu0 %v6441
    %v9426 = vpop.f32.mrb[0].mxu0
    %v9427 = vadd.f32 %v9138, %v9426
    %v9428 = vpop.f32.mrb[0].mxu0
    %v9429 = vpop.f32.mrb[0].mxu0
    %v9430 = vadd.f32 %v9141, %v9429
    %v9431 = vpop.f32.mrb[0].mxu0
    %9432 = vmatprep.mubr.bf16.mxu0 %v6446
    %9433 = vmatmul.mubr.bf16.gmra.mrb[0].mxu0 %v6445
    %v9434 = vpop.f32.mrb[0].mxu0
    %v9435 = vadd.f32 %v9146, %v9434
    %v9436 = vpop.f32.mrb[0].mxu0
    %v9437 = vpop.f32.mrb[0].mxu0
    %v9438 = vadd.f32 %v9149, %v9437
    %v9439 = vpop.f32.mrb[0].mxu0
    %9440 = vmatprep.mubr.bf16.mxu0 %v6450
    %9441 = vmatmul.mubr.bf16.gmra.mrb[0].mxu0 %v6449
    %v9442 = vpop.f32.mrb[0].mxu0
    %v9443 = vadd.f32 %v9154, %v9442
    %v9444 = vpop.f32.mrb[0].mxu0
    %v9445 = vpop.f32.mrb[0].mxu0
    %v9446 = vadd.f32 %v9157, %v9445
    %v9447 = vpop.f32.mrb[0].mxu0
    %9448 = vmatprep.mubr.bf16.mxu0 %v6454
    %9449 = vmatmul.mubr.bf16.gmra.mrb[0].mxu0 %v6453
    %v9450 = vpop.f32.mrb[0].mxu0
    %v9451 = vadd.f32 %v9162, %v9450
    %v9452 = vpop.f32.mrb[0].mxu0
    %v9453 = vpop.f32.mrb[0].mxu0
    %v9454 = vadd.f32 %v9165, %v9453
    %v9455 = vpop.f32.mrb[0].mxu0
    %9456 = vmatprep.mubr.bf16.mxu0 %v6458
    %9457 = vmatmul.mubr.bf16.gmra.mrb[0].mxu0 %v6457
    %v9458 = vpop.f32.mrb[0].mxu0
    %v9459 = vadd.f32 %v9170, %v9458
    %v9460 = vpop.f32.mrb[0].mxu0
    %v9461 = vpop.f32.mrb[0].mxu0
    %v9462 = vadd.f32 %v9173, %v9461
    %v9463 = vpop.f32.mrb[0].mxu0
    %9464 = vmatprep.mubr.bf16.mxu0 %v6462
    %9465 = vmatmul.mubr.bf16.gmra.mrb[0].mxu0 %v6461
    %v9466 = vpop.f32.mrb[0].mxu0
    %v9467 = vadd.f32 %v9178, %v9466
    %v9468 = vpop.f32.mrb[0].mxu0
    %v9469 = vpop.f32.mrb[0].mxu0
    %v9470 = vadd.f32 %v9181, %v9469
    %v9471 = vpop.f32.mrb[0].mxu0
    %9472 = vmatprep.mubr.bf16.mxu0 %v6466
    %9473 = vmatmul.mubr.bf16.gmra.mrb[0].mxu0 %v6465
    %v9474 = vpop.f32.mrb[0].mxu0
    %v9475 = vadd.f32 %v9186, %v9474
    %v9476 = vpop.f32.mrb[0].mxu0
    %v9477 = vpop.f32.mrb[0].mxu0
    %v9478 = vadd.f32 %v9189, %v9477
    %v9479 = vpop.f32.mrb[0].mxu0
    %9480 = vdwg.mxu0
    %v9481 = vsel %vm1618, %v9227, -inf
    %v9482 = vsel %vm1618, %v9230, -inf
    %v9483 = vmax.f32 %v9481, %v9482
    %v9484 = vsel %vm1618, %v9235, -inf
    %v9485 = vmax.f32 %v9483, %v9484
    %v9486 = vsel %vm1618, %v9238, -inf
    %v9487 = vmax.f32 %v9485, %v9486
    %v9488 = vrot.slane %v9487, 4
    %v9489 = vmax.f32 %v9487, %v9488
    %v9490 = vrot.slane %v9489, 2
    %v9491 = vmax.f32 %v9489, %v9490
    %v9492 = vrot.slane %v9491, 1
    %v9493 = vmax.f32 %v9491, %v9492
    %v9494 = vsel %vm1618, %v9243, -inf
    %v9495 = vsel %vm1618, %v9246, -inf
    %v9496 = vmax.f32 %v9494, %v9495
    %v9497 = vsel %vm1618, %v9251, -inf
    %v9498 = vmax.f32 %v9496, %v9497
    %v9499 = vsel %vm1618, %v9254, -inf
    %v9500 = vmax.f32 %v9498, %v9499
    %v9501 = vrot.slane %v9500, 4
    %v9502 = vmax.f32 %v9500, %v9501
    %v9503 = vrot.slane %v9502, 2
    %v9504 = vmax.f32 %v9502, %v9503
    %v9505 = vrot.slane %v9504, 1
    %v9506 = vmax.f32 %v9504, %v9505
    %v9507 = vsel %vm1618, %v9259, -inf
    %v9508 = vsel %vm1618, %v9262, -inf
    %v9509 = vmax.f32 %v9507, %v9508
    %v9510 = vsel %vm1618, %v9267, -inf
    %v9511 = vmax.f32 %v9509, %v9510
    %v9512 = vsel %vm1618, %v9270, -inf
    %v9513 = vmax.f32 %v9511, %v9512
    %v9514 = vrot.slane %v9513, 4
    %v9515 = vmax.f32 %v9513, %v9514
    %v9516 = vrot.slane %v9515, 2
    %v9517 = vmax.f32 %v9515, %v9516
    %v9518 = vrot.slane %v9517, 1
    %v9519 = vmax.f32 %v9517, %v9518
    %v9520 = vsel %vm1618, %v9275, -inf
    %v9521 = vsel %vm1618, %v9278, -inf
    %v9522 = vmax.f32 %v9520, %v9521
    %v9523 = vsel %vm1618, %v9283, -inf
    %v9524 = vmax.f32 %v9522, %v9523
    %v9525 = vsel %vm1618, %v9286, -inf
    %v9526 = vmax.f32 %v9524, %v9525
    %v9527 = vrot.slane %v9526, 4
    %v9528 = vmax.f32 %v9526, %v9527
    %v9529 = vrot.slane %v9528, 2
    %v9530 = vmax.f32 %v9528, %v9529
    %v9531 = vrot.slane %v9530, 1
    %v9532 = vmax.f32 %v9530, %v9531
    %v9533 = vsel %vm1618, %v9291, -inf
    %v9534 = vsel %vm1618, %v9294, -inf
    %v9535 = vmax.f32 %v9533, %v9534
    %v9536 = vsel %vm1618, %v9299, -inf
    %v9537 = vmax.f32 %v9535, %v9536
    %v9538 = vsel %vm1618, %v9302, -inf
    %v9539 = vmax.f32 %v9537, %v9538
    %v9540 = vrot.slane %v9539, 4
    %v9541 = vmax.f32 %v9539, %v9540
    %v9542 = vrot.slane %v9541, 2
    %v9543 = vmax.f32 %v9541, %v9542
    %v9544 = vrot.slane %v9543, 1
    %v9545 = vmax.f32 %v9543, %v9544
    %v9546 = vsel %vm1618, %v9307, -inf
    %v9547 = vsel %vm1618, %v9310, -inf
    %v9548 = vmax.f32 %v9546, %v9547
    %v9549 = vsel %vm1618, %v9315, -inf
    %v9550 = vmax.f32 %v9548, %v9549
    %v9551 = vsel %vm1618, %v9318, -inf
    %v9552 = vmax.f32 %v9550, %v9551
    %v9553 = vrot.slane %v9552, 4
    %v9554 = vmax.f32 %v9552, %v9553
    %v9555 = vrot.slane %v9554, 2
    %v9556 = vmax.f32 %v9554, %v9555
    %v9557 = vrot.slane %v9556, 1
    %v9558 = vmax.f32 %v9556, %v9557
    %v9559 = vsel %vm1618, %v9323, -inf
    %v9560 = vsel %vm1618, %v9326, -inf
    %v9561 = vmax.f32 %v9559, %v9560
    %v9562 = vsel %vm1618, %v9331, -inf
    %v9563 = vmax.f32 %v9561, %v9562
    %v9564 = vsel %vm1618, %v9334, -inf
    %v9565 = vmax.f32 %v9563, %v9564
    %v9566 = vrot.slane %v9565, 4
    %v9567 = vmax.f32 %v9565, %v9566
    %v9568 = vrot.slane %v9567, 2
    %v9569 = vmax.f32 %v9567, %v9568
    %v9570 = vrot.slane %v9569, 1
    %v9571 = vmax.f32 %v9569, %v9570
    %v9572 = vsel %vm1618, %v9339, -inf
    %v9573 = vsel %vm1618, %v9342, -inf
    %v9574 = vmax.f32 %v9572, %v9573
    %v9575 = vsel %vm1618, %v9347, -inf
    %v9576 = vmax.f32 %v9574, %v9575
    %v9577 = vsel %vm1618, %v9350, -inf
    %v9578 = vmax.f32 %v9576, %v9577
    %v9579 = vrot.slane %v9578, 4
    %v9580 = vmax.f32 %v9578, %v9579
    %v9581 = vrot.slane %v9580, 2
    %v9582 = vmax.f32 %v9580, %v9581
    %v9583 = vrot.slane %v9582, 1
    %v9584 = vmax.f32 %v9582, %v9583
    %v9585 = vsel %vm1618, %v9355, -inf
    %v9586 = vsel %vm1618, %v9358, -inf
    %v9587 = vmax.f32 %v9585, %v9586
    %v9588 = vsel %vm1618, %v9363, -inf
    %v9589 = vmax.f32 %v9587, %v9588
    %v9590 = vsel %vm1618, %v9366, -inf
    %v9591 = vmax.f32 %v9589, %v9590
    %v9592 = vrot.slane %v9591, 4
    %v9593 = vmax.f32 %v9591, %v9592
    %v9594 = vrot.slane %v9593, 2
    %v9595 = vmax.f32 %v9593, %v9594
    %v9596 = vrot.slane %v9595, 1
    %v9597 = vmax.f32 %v9595, %v9596
    %v9598 = vsel %vm1618, %v9371, -inf
    %v9599 = vsel %vm1618, %v9374, -inf
    %v9600 = vmax.f32 %v9598, %v9599
    %v9601 = vsel %vm1618, %v9379, -inf
    %v9602 = vmax.f32 %v9600, %v9601
    %v9603 = vsel %vm1618, %v9382, -inf
    %v9604 = vmax.f32 %v9602, %v9603
    %v9605 = vrot.slane %v9604, 4
    %v9606 = vmax.f32 %v9604, %v9605
    %v9607 = vrot.slane %v9606, 2
    %v9608 = vmax.f32 %v9606, %v9607
    %v9609 = vrot.slane %v9608, 1
    %v9610 = vmax.f32 %v9608, %v9609
    %v9611 = vsel %vm1618, %v9387, -inf
    %v9612 = vsel %vm1618, %v9390, -inf
    %v9613 = vmax.f32 %v9611, %v9612
    %v9614 = vsel %vm1618, %v9395, -inf
    %v9615 = vmax.f32 %v9613, %v9614
    %v9616 = vsel %vm1618, %v9398, -inf
    %v9617 = vmax.f32 %v9615, %v9616
    %v9618 = vrot.slane %v9617, 4
    %v9619 = vmax.f32 %v9617, %v9618
    %v9620 = vrot.slane %v9619, 2
    %v9621 = vmax.f32 %v9619, %v9620
    %v9622 = vrot.slane %v9621, 1
    %v9623 = vmax.f32 %v9621, %v9622
    %v9624 = vsel %vm1618, %v9403, -inf
    %v9625 = vsel %vm1618, %v9406, -inf
    %v9626 = vmax.f32 %v9624, %v9625
    %v9627 = vsel %vm1618, %v9411, -inf
    %v9628 = vmax.f32 %v9626, %v9627
    %v9629 = vsel %vm1618, %v9414, -inf
    %v9630 = vmax.f32 %v9628, %v9629
    %v9631 = vrot.slane %v9630, 4
    %v9632 = vmax.f32 %v9630, %v9631
    %v9633 = vrot.slane %v9632, 2
    %v9634 = vmax.f32 %v9632, %v9633
    %v9635 = vrot.slane %v9634, 1
    %v9636 = vmax.f32 %v9634, %v9635
    %v9637 = vsel %vm1618, %v9419, -inf
    %v9638 = vsel %vm1618, %v9422, -inf
    %v9639 = vmax.f32 %v9637, %v9638
    %v9640 = vsel %vm1618, %v9427, -inf
    %v9641 = vmax.f32 %v9639, %v9640
    %v9642 = vsel %vm1618, %v9430, -inf
    %v9643 = vmax.f32 %v9641, %v9642
    %v9644 = vrot.slane %v9643, 4
    %v9645 = vmax.f32 %v9643, %v9644
    %v9646 = vrot.slane %v9645, 2
    %v9647 = vmax.f32 %v9645, %v9646
    %v9648 = vrot.slane %v9647, 1
    %v9649 = vmax.f32 %v9647, %v9648
    %v9650 = vsel %vm1618, %v9435, -inf
    %v9651 = vsel %vm1618, %v9438, -inf
    %v9652 = vmax.f32 %v9650, %v9651
    %v9653 = vsel %vm1618, %v9443, -inf
    %v9654 = vmax.f32 %v9652, %v9653
    %v9655 = vsel %vm1618, %v9446, -inf
    %v9656 = vmax.f32 %v9654, %v9655
    %v9657 = vrot.slane %v9656, 4
    %v9658 = vmax.f32 %v9656, %v9657
    %v9659 = vrot.slane %v9658, 2
    %v9660 = vmax.f32 %v9658, %v9659
    %v9661 = vrot.slane %v9660, 1
    %v9662 = vmax.f32 %v9660, %v9661
    %v9663 = vsel %vm1618, %v9451, -inf
    %v9664 = vsel %vm1618, %v9454, -inf
    %v9665 = vmax.f32 %v9663, %v9664
    %v9666 = vsel %vm1618, %v9459, -inf
    %v9667 = vmax.f32 %v9665, %v9666
    %v9668 = vsel %vm1618, %v9462, -inf
    %v9669 = vmax.f32 %v9667, %v9668
    %v9670 = vrot.slane %v9669, 4
    %v9671 = vmax.f32 %v9669, %v9670
    %v9672 = vrot.slane %v9671, 2
    %v9673 = vmax.f32 %v9671, %v9672
    %v9674 = vrot.slane %v9673, 1
    %v9675 = vmax.f32 %v9673, %v9674
    %v9676 = vsel %vm1618, %v9467, -inf
    %v9677 = vsel %vm1618, %v9470, -inf
    %v9678 = vmax.f32 %v9676, %v9677
    %v9679 = vsel %vm1618, %v9475, -inf
    %v9680 = vmax.f32 %v9678, %v9679
    %v9681 = vsel %vm1618, %v9478, -inf
    %v9682 = vmax.f32 %v9680, %v9681
    %v9683 = vrot.slane %v9682, 4
    %v9684 = vmax.f32 %v9682, %v9683
    %v9685 = vrot.slane %v9684, 2
    %v9686 = vmax.f32 %v9684, %v9685
    %v9687 = vrot.slane %v9686, 1
    %v9688 = vmax.f32 %v9686, %v9687
    %v9689 = vsub.f32 %v9227, %v9493
    %v9690 = vsub.f32 %v9230, %v9493
    %v9691 = vsub.f32 %v9235, %v9493
    %v9692 = vsub.f32 %v9238, %v9493
    %v9693 = vsub.f32 %v9243, %v9506
    %v9694 = vsub.f32 %v9246, %v9506
    %v9695 = vsub.f32 %v9251, %v9506
    %v9696 = vsub.f32 %v9254, %v9506
    %v9697 = vsub.f32 %v9259, %v9519
    %v9698 = vsub.f32 %v9262, %v9519
    %v9699 = vsub.f32 %v9267, %v9519
    %v9700 = vsub.f32 %v9270, %v9519
    %v9701 = vsub.f32 %v9275, %v9532
    %v9702 = vsub.f32 %v9278, %v9532
    %v9703 = vsub.f32 %v9283, %v9532
    %v9704 = vsub.f32 %v9286, %v9532
    %v9705 = vsub.f32 %v9291, %v9545
    %v9706 = vsub.f32 %v9294, %v9545
    %v9707 = vsub.f32 %v9299, %v9545
    %v9708 = vsub.f32 %v9302, %v9545
    %v9709 = vsub.f32 %v9307, %v9558
    %v9710 = vsub.f32 %v9310, %v9558
    %v9711 = vsub.f32 %v9315, %v9558
    %v9712 = vsub.f32 %v9318, %v9558
    %v9713 = vsub.f32 %v9323, %v9571
    %v9714 = vsub.f32 %v9326, %v9571
    %v9715 = vsub.f32 %v9331, %v9571
    %v9716 = vsub.f32 %v9334, %v9571
    %v9717 = vsub.f32 %v9339, %v9584
    %v9718 = vsub.f32 %v9342, %v9584
    %v9719 = vsub.f32 %v9347, %v9584
    %v9720 = vsub.f32 %v9350, %v9584
    %v9721 = vsub.f32 %v9355, %v9597
    %v9722 = vsub.f32 %v9358, %v9597
    %v9723 = vsub.f32 %v9363, %v9597
    %v9724 = vsub.f32 %v9366, %v9597
    %v9725 = vsub.f32 %v9371, %v9610
    %v9726 = vsub.f32 %v9374, %v9610
    %v9727 = vsub.f32 %v9379, %v9610
    %v9728 = vsub.f32 %v9382, %v9610
    %v9729 = vsub.f32 %v9387, %v9623
    %v9730 = vsub.f32 %v9390, %v9623
    %v9731 = vsub.f32 %v9395, %v9623
    %v9732 = vsub.f32 %v9398, %v9623
    %v9733 = vsub.f32 %v9403, %v9636
    %v9734 = vsub.f32 %v9406, %v9636
    %v9735 = vsub.f32 %v9411, %v9636
    %v9736 = vsub.f32 %v9414, %v9636
    %v9737 = vsub.f32 %v9419, %v9649
    %v9738 = vsub.f32 %v9422, %v9649
    %v9739 = vsub.f32 %v9427, %v9649
    %v9740 = vsub.f32 %v9430, %v9649
    %v9741 = vsub.f32 %v9435, %v9662
    %v9742 = vsub.f32 %v9438, %v9662
    %v9743 = vsub.f32 %v9443, %v9662
    %v9744 = vsub.f32 %v9446, %v9662
    %v9745 = vsub.f32 %v9451, %v9675
    %v9746 = vsub.f32 %v9454, %v9675
    %v9747 = vsub.f32 %v9459, %v9675
    %v9748 = vsub.f32 %v9462, %v9675
    %v9749 = vsub.f32 %v9467, %v9688
    %v9750 = vsub.f32 %v9470, %v9688
    %v9751 = vsub.f32 %v9475, %v9688
    %v9752 = vsub.f32 %v9478, %v9688
    %v9753 = vmul.f32 %v9689, 1.442695
    %v9754 = vpow.pop %v9753
    %v9755 = vmul.f32 %v9690, 1.442695
    %v9756 = vpow.pop %v9755
    %v9757 = vmul.f32 %v9691, 1.442695
    %v9758 = vpow.pop %v9757
    %v9759 = vmul.f32 %v9692, 1.442695
    %v9760 = vpow.pop %v9759
    %v9761 = vmul.f32 %v9693, 1.442695
    %v9762 = vpow.pop %v9761
    %v9763 = vmul.f32 %v9694, 1.442695
    %v9764 = vpow.pop %v9763
    %v9765 = vmul.f32 %v9695, 1.442695
    %v9766 = vpow.pop %v9765
    %v9767 = vmul.f32 %v9696, 1.442695
    %v9768 = vpow.pop %v9767
    %v9769 = vmul.f32 %v9697, 1.442695
    %v9770 = vpow.pop %v9769
    %v9771 = vmul.f32 %v9698, 1.442695
    %v9772 = vpow.pop %v9771
    %v9773 = vmul.f32 %v9699, 1.442695
    %v9774 = vpow.pop %v9773
    %v9775 = vmul.f32 %v9700, 1.442695
    %v9776 = vpow.pop %v9775
    %v9777 = vmul.f32 %v9701, 1.442695
    %v9778 = vpow.pop %v9777
    %v9779 = vmul.f32 %v9702, 1.442695
    %v9780 = vpow.pop %v9779
    %v9781 = vmul.f32 %v9703, 1.442695
    %v9782 = vpow.pop %v9781
    %v9783 = vmul.f32 %v9704, 1.442695
    %v9784 = vpow.pop %v9783
    %v9785 = vmul.f32 %v9705, 1.442695
    %v9786 = vpow.pop %v9785
    %v9787 = vmul.f32 %v9706, 1.442695
    %v9788 = vpow.pop %v9787
    %v9789 = vmul.f32 %v9707, 1.442695
    %v9790 = vpow.pop %v9789
    %v9791 = vmul.f32 %v9708, 1.442695
    %v9792 = vpow.pop %v9791
    %v9793 = vmul.f32 %v9709, 1.442695
    %v9794 = vpow.pop %v9793
    %v9795 = vmul.f32 %v9710, 1.442695
    %v9796 = vpow.pop %v9795
    %v9797 = vmul.f32 %v9711, 1.442695
    %v9798 = vpow.pop %v9797
    %v9799 = vmul.f32 %v9712, 1.442695
    %v9800 = vpow.pop %v9799
    %v9801 = vmul.f32 %v9713, 1.442695
    %v9802 = vpow.pop %v9801
    %v9803 = vmul.f32 %v9714, 1.442695
    %v9804 = vpow.pop %v9803
    %v9805 = vmul.f32 %v9715, 1.442695
    %v9806 = vpow.pop %v9805
    %v9807 = vmul.f32 %v9716, 1.442695
    %v9808 = vpow.pop %v9807
    %v9809 = vmul.f32 %v9717, 1.442695
    %v9810 = vpow.pop %v9809
    %v9811 = vmul.f32 %v9718, 1.442695
    %v9812 = vpow.pop %v9811
    %v9813 = vmul.f32 %v9719, 1.442695
    %v9814 = vpow.pop %v9813
    %v9815 = vmul.f32 %v9720, 1.442695
    %v9816 = vpow.pop %v9815
    %v9817 = vmul.f32 %v9721, 1.442695
    %v9818 = vpow.pop %v9817
    %v9819 = vmul.f32 %v9722, 1.442695
    %v9820 = vpow.pop %v9819
    %v9821 = vmul.f32 %v9723, 1.442695
    %v9822 = vpow.pop %v9821
    %v9823 = vmul.f32 %v9724, 1.442695
    %v9824 = vpow.pop %v9823
    %v9825 = vmul.f32 %v9725, 1.442695
    %v9826 = vpow.pop %v9825
    %v9827 = vmul.f32 %v9726, 1.442695
    %v9828 = vpow.pop %v9827
    %v9829 = vmul.f32 %v9727, 1.442695
    %v9830 = vpow.pop %v9829
    %v9831 = vmul.f32 %v9728, 1.442695
    %v9832 = vpow.pop %v9831
    %v9833 = vmul.f32 %v9729, 1.442695
    %v9834 = vpow.pop %v9833
    %v9835 = vmul.f32 %v9730, 1.442695
    %v9836 = vpow.pop %v9835
    %v9837 = vmul.f32 %v9731, 1.442695
    %v9838 = vpow.pop %v9837
    %v9839 = vmul.f32 %v9732, 1.442695
    %v9840 = vpow.pop %v9839
    %v9841 = vmul.f32 %v9733, 1.442695
    %v9842 = vpow.pop %v9841
    %v9843 = vmul.f32 %v9734, 1.442695
    %v9844 = vpow.pop %v9843
    %v9845 = vmul.f32 %v9735, 1.442695
    %v9846 = vpow.pop %v9845
    %v9847 = vmul.f32 %v9736, 1.442695
    %v9848 = vpow.pop %v9847
    %v9849 = vmul.f32 %v9737, 1.442695
    %v9850 = vpow.pop %v9849
    %v9851 = vmul.f32 %v9738, 1.442695
    %v9852 = vpow.pop %v9851
    %v9853 = vmul.f32 %v9739, 1.442695
    %v9854 = vpow.pop %v9853
    %v9855 = vmul.f32 %v9740, 1.442695
    %v9856 = vpow.pop %v9855
    %v9857 = vmul.f32 %v9741, 1.442695
    %v9858 = vpow.pop %v9857
    %v9859 = vmul.f32 %v9742, 1.442695
    %v9860 = vpow.pop %v9859
    %v9861 = vmul.f32 %v9743, 1.442695
    %v9862 = vpow.pop %v9861
    %v9863 = vmul.f32 %v9744, 1.442695
    %v9864 = vpow.pop %v9863
    %v9865 = vmul.f32 %v9745, 1.442695
    %v9866 = vpow.pop %v9865
    %v9867 = vmul.f32 %v9746, 1.442695
    %v9868 = vpow.pop %v9867
    %v9869 = vmul.f32 %v9747, 1.442695
    %v9870 = vpow.pop %v9869
    %v9871 = vmul.f32 %v9748, 1.442695
    %v9872 = vpow.pop %v9871
    %v9873 = vmul.f32 %v9749, 1.442695
    %v9874 = vpow.pop %v9873
    %v9875 = vmul.f32 %v9750, 1.442695
    %v9876 = vpow.pop %v9875
    %v9877 = vmul.f32 %v9751, 1.442695
    %v9878 = vpow.pop %v9877
    %v9879 = vmul.f32 %v9752, 1.442695
    %v9880 = vpow.pop %v9879
    %v9881 = vsel %vm1618, %v9754, 0.0
    %v9882 = vsel %vm1618, %v9756, 0.0
    %v9883 = vadd.f32 %v9881, %v9882
    %v9884 = vsel %vm1618, %v9758, 0.0
    %v9885 = vadd.f32 %v9883, %v9884
    %v9886 = vsel %vm1618, %v9760, 0.0
    %v9887 = vadd.f32 %v9885, %v9886
    %v9888 = vrot.slane %v9887, 4
    %v9889 = vadd.f32 %v9887, %v9888
    %v9890 = vrot.slane %v9889, 2
    %v9891 = vadd.f32 %v9889, %v9890
    %v9892 = vrot.slane %v9891, 1
    %v9893 = vadd.f32 %v9891, %v9892
    %v9894 = vsel %vm1618, %v9762, 0.0
    %v9895 = vsel %vm1618, %v9764, 0.0
    %v9896 = vadd.f32 %v9894, %v9895
    %v9897 = vsel %vm1618, %v9766, 0.0
    %v9898 = vadd.f32 %v9896, %v9897
    %v9899 = vsel %vm1618, %v9768, 0.0
    %v9900 = vadd.f32 %v9898, %v9899
    %v9901 = vrot.slane %v9900, 4
    %v9902 = vadd.f32 %v9900, %v9901
    %v9903 = vrot.slane %v9902, 2
    %v9904 = vadd.f32 %v9902, %v9903
    %v9905 = vrot.slane %v9904, 1
    %v9906 = vadd.f32 %v9904, %v9905
    %v9907 = vsel %vm1618, %v9770, 0.0
    %v9908 = vsel %vm1618, %v9772, 0.0
    %v9909 = vadd.f32 %v9907, %v9908
    %v9910 = vsel %vm1618, %v9774, 0.0
    %v9911 = vadd.f32 %v9909, %v9910
    %v9912 = vsel %vm1618, %v9776, 0.0
    %v9913 = vadd.f32 %v9911, %v9912
    %v9914 = vrot.slane %v9913, 4
    %v9915 = vadd.f32 %v9913, %v9914
    %v9916 = vrot.slane %v9915, 2
    %v9917 = vadd.f32 %v9915, %v9916
    %v9918 = vrot.slane %v9917, 1
    %v9919 = vadd.f32 %v9917, %v9918
    %v9920 = vsel %vm1618, %v9778, 0.0
    %v9921 = vsel %vm1618, %v9780, 0.0
    %v9922 = vadd.f32 %v9920, %v9921
    %v9923 = vsel %vm1618, %v9782, 0.0
    %v9924 = vadd.f32 %v9922, %v9923
    %v9925 = vsel %vm1618, %v9784, 0.0
    %v9926 = vadd.f32 %v9924, %v9925
    %v9927 = vrot.slane %v9926, 4
    %v9928 = vadd.f32 %v9926, %v9927
    %v9929 = vrot.slane %v9928, 2
    %v9930 = vadd.f32 %v9928, %v9929
    %v9931 = vrot.slane %v9930, 1
    %v9932 = vadd.f32 %v9930, %v9931
    %v9933 = vsel %vm1618, %v9786, 0.0
    %v9934 = vsel %vm1618, %v9788, 0.0
    %v9935 = vadd.f32 %v9933, %v9934
    %v9936 = vsel %vm1618, %v9790, 0.0
    %v9937 = vadd.f32 %v9935, %v9936
    %v9938 = vsel %vm1618, %v9792, 0.0
    %v9939 = vadd.f32 %v9937, %v9938
    %v9940 = vrot.slane %v9939, 4
    %v9941 = vadd.f32 %v9939, %v9940
    %v9942 = vrot.slane %v9941, 2
    %v9943 = vadd.f32 %v9941, %v9942
    %v9944 = vrot.slane %v9943, 1
    %v9945 = vadd.f32 %v9943, %v9944
    %v9946 = vsel %vm1618, %v9794, 0.0
    %v9947 = vsel %vm1618, %v9796, 0.0
    %v9948 = vadd.f32 %v9946, %v9947
    %v9949 = vsel %vm1618, %v9798, 0.0
    %v9950 = vadd.f32 %v9948, %v9949
    %v9951 = vsel %vm1618, %v9800, 0.0
    %v9952 = vadd.f32 %v9950, %v9951
    %v9953 = vrot.slane %v9952, 4
    %v9954 = vadd.f32 %v9952, %v9953
    %v9955 = vrot.slane %v9954, 2
    %v9956 = vadd.f32 %v9954, %v9955
    %v9957 = vrot.slane %v9956, 1
    %v9958 = vadd.f32 %v9956, %v9957
    %v9959 = vsel %vm1618, %v9802, 0.0
    %v9960 = vsel %vm1618, %v9804, 0.0
    %v9961 = vadd.f32 %v9959, %v9960
    %v9962 = vsel %vm1618, %v9806, 0.0
    %v9963 = vadd.f32 %v9961, %v9962
    %v9964 = vsel %vm1618, %v9808, 0.0
    %v9965 = vadd.f32 %v9963, %v9964
    %v9966 = vrot.slane %v9965, 4
    %v9967 = vadd.f32 %v9965, %v9966
    %v9968 = vrot.slane %v9967, 2
    %v9969 = vadd.f32 %v9967, %v9968
    %v9970 = vrot.slane %v9969, 1
    %v9971 = vadd.f32 %v9969, %v9970
    %v9972 = vsel %vm1618, %v9810, 0.0
    %v9973 = vsel %vm1618, %v9812, 0.0
    %v9974 = vadd.f32 %v9972, %v9973
    %v9975 = vsel %vm1618, %v9814, 0.0
    %v9976 = vadd.f32 %v9974, %v9975
    %v9977 = vsel %vm1618, %v9816, 0.0
    %v9978 = vadd.f32 %v9976, %v9977
    %v9979 = vrot.slane %v9978, 4
    %v9980 = vadd.f32 %v9978, %v9979
    %v9981 = vrot.slane %v9980, 2
    %v9982 = vadd.f32 %v9980, %v9981
    %v9983 = vrot.slane %v9982, 1
    %v9984 = vadd.f32 %v9982, %v9983
    %v9985 = vsel %vm1618, %v9818, 0.0
    %v9986 = vsel %vm1618, %v9820, 0.0
    %v9987 = vadd.f32 %v9985, %v9986
    %v9988 = vsel %vm1618, %v9822, 0.0
    %v9989 = vadd.f32 %v9987, %v9988
    %v9990 = vsel %vm1618, %v9824, 0.0
    %v9991 = vadd.f32 %v9989, %v9990
    %v9992 = vrot.slane %v9991, 4
    %v9993 = vadd.f32 %v9991, %v9992
    %v9994 = vrot.slane %v9993, 2
    %v9995 = vadd.f32 %v9993, %v9994
    %v9996 = vrot.slane %v9995, 1
    %v9997 = vadd.f32 %v9995, %v9996
    %v9998 = vsel %vm1618, %v9826, 0.0
    %v9999 = vsel %vm1618, %v9828, 0.0
    %v10000 = vadd.f32 %v9998, %v9999
    %v10001 = vsel %vm1618, %v9830, 0.0
    %v10002 = vadd.f32 %v10000, %v10001
    %v10003 = vsel %vm1618, %v9832, 0.0
    %v10004 = vadd.f32 %v10002, %v10003
    %v10005 = vrot.slane %v10004, 4
    %v10006 = vadd.f32 %v10004, %v10005
    %v10007 = vrot.slane %v10006, 2
    %v10008 = vadd.f32 %v10006, %v10007
    %v10009 = vrot.slane %v10008, 1
    %v10010 = vadd.f32 %v10008, %v10009
    %v10011 = vsel %vm1618, %v9834, 0.0
    %v10012 = vsel %vm1618, %v9836, 0.0
    %v10013 = vadd.f32 %v10011, %v10012
    %v10014 = vsel %vm1618, %v9838, 0.0
    %v10015 = vadd.f32 %v10013, %v10014
    %v10016 = vsel %vm1618, %v9840, 0.0
    %v10017 = vadd.f32 %v10015, %v10016
    %v10018 = vrot.slane %v10017, 4
    %v10019 = vadd.f32 %v10017, %v10018
    %v10020 = vrot.slane %v10019, 2
    %v10021 = vadd.f32 %v10019, %v10020
    %v10022 = vrot.slane %v10021, 1
    %v10023 = vadd.f32 %v10021, %v10022
    %v10024 = vsel %vm1618, %v9842, 0.0
    %v10025 = vsel %vm1618, %v9844, 0.0
    %v10026 = vadd.f32 %v10024, %v10025
    %v10027 = vsel %vm1618, %v9846, 0.0
    %v10028 = vadd.f32 %v10026, %v10027
    %v10029 = vsel %vm1618, %v9848, 0.0
    %v10030 = vadd.f32 %v10028, %v10029
    %v10031 = vrot.slane %v10030, 4
    %v10032 = vadd.f32 %v10030, %v10031
    %v10033 = vrot.slane %v10032, 2
    %v10034 = vadd.f32 %v10032, %v10033
    %v10035 = vrot.slane %v10034, 1
    %v10036 = vadd.f32 %v10034, %v10035
    %v10037 = vsel %vm1618, %v9850, 0.0
    %v10038 = vsel %vm1618, %v9852, 0.0
    %v10039 = vadd.f32 %v10037, %v10038
    %v10040 = vsel %vm1618, %v9854, 0.0
    %v10041 = vadd.f32 %v10039, %v10040
    %v10042 = vsel %vm1618, %v9856, 0.0
    %v10043 = vadd.f32 %v10041, %v10042
    %v10044 = vrot.slane %v10043, 4
    %v10045 = vadd.f32 %v10043, %v10044
    %v10046 = vrot.slane %v10045, 2
    %v10047 = vadd.f32 %v10045, %v10046
    %v10048 = vrot.slane %v10047, 1
    %v10049 = vadd.f32 %v10047, %v10048
    %v10050 = vsel %vm1618, %v9858, 0.0
    %v10051 = vsel %vm1618, %v9860, 0.0
    %v10052 = vadd.f32 %v10050, %v10051
    %v10053 = vsel %vm1618, %v9862, 0.0
    %v10054 = vadd.f32 %v10052, %v10053
    %v10055 = vsel %vm1618, %v9864, 0.0
    %v10056 = vadd.f32 %v10054, %v10055
    %v10057 = vrot.slane %v10056, 4
    %v10058 = vadd.f32 %v10056, %v10057
    %v10059 = vrot.slane %v10058, 2
    %v10060 = vadd.f32 %v10058, %v10059
    %v10061 = vrot.slane %v10060, 1
    %v10062 = vadd.f32 %v10060, %v10061
    %v10063 = vsel %vm1618, %v9866, 0.0
    %v10064 = vsel %vm1618, %v9868, 0.0
    %v10065 = vadd.f32 %v10063, %v10064
    %v10066 = vsel %vm1618, %v9870, 0.0
    %v10067 = vadd.f32 %v10065, %v10066
    %v10068 = vsel %vm1618, %v9872, 0.0
    %v10069 = vadd.f32 %v10067, %v10068
    %v10070 = vrot.slane %v10069, 4
    %v10071 = vadd.f32 %v10069, %v10070
    %v10072 = vrot.slane %v10071, 2
    %v10073 = vadd.f32 %v10071, %v10072
    %v10074 = vrot.slane %v10073, 1
    %v10075 = vadd.f32 %v10073, %v10074
    %v10076 = vsel %vm1618, %v9874, 0.0
    %v10077 = vsel %vm1618, %v9876, 0.0
    %v10078 = vadd.f32 %v10076, %v10077
    %v10079 = vsel %vm1618, %v9878, 0.0
    %v10080 = vadd.f32 %v10078, %v10079
    %v10081 = vsel %vm1618, %v9880, 0.0
    %v10082 = vadd.f32 %v10080, %v10081
    %v10083 = vrot.slane %v10082, 4
    %v10084 = vadd.f32 %v10082, %v10083
    %v10085 = vrot.slane %v10084, 2
    %v10086 = vadd.f32 %v10084, %v10085
    %v10087 = vrot.slane %v10086, 1
    %v10088 = vadd.f32 %v10086, %v10087
    %v10089 = vrcp.pop %v9893
    %v10090 = vrcp.pop %v9906
    %v10091 = vrcp.pop %v9919
    %v10092 = vrcp.pop %v9932
    %v10093 = vrcp.pop %v9945
    %v10094 = vrcp.pop %v9958
    %v10095 = vrcp.pop %v9971
    %v10096 = vrcp.pop %v9984
    %v10097 = vrcp.pop %v9997
    %v10098 = vrcp.pop %v10010
    %v10099 = vrcp.pop %v10023
    %v10100 = vrcp.pop %v10036
    %v10101 = vrcp.pop %v10049
    %v10102 = vrcp.pop %v10062
    %v10103 = vrcp.pop %v10075
    %v10104 = vrcp.pop %v10088
    %v10105 = vmul.f32 %v9754, %v10089
    %v10106 = vmul.f32 %v9756, %v10089
    %v10107 = vmul.f32 %v9758, %v10089
    %v10108 = vmul.f32 %v9760, %v10089
    %v10109 = vmul.f32 %v9762, %v10090
    %v10110 = vmul.f32 %v9764, %v10090
    %v10111 = vmul.f32 %v9766, %v10090
    %v10112 = vmul.f32 %v9768, %v10090
    %v10113 = vmul.f32 %v9770, %v10091
    %v10114 = vmul.f32 %v9772, %v10091
    %v10115 = vmul.f32 %v9774, %v10091
    %v10116 = vmul.f32 %v9776, %v10091
    %v10117 = vmul.f32 %v9778, %v10092
    %v10118 = vmul.f32 %v9780, %v10092
    %v10119 = vmul.f32 %v9782, %v10092
    %v10120 = vmul.f32 %v9784, %v10092
    %v10121 = vmul.f32 %v9786, %v10093
    %v10122 = vmul.f32 %v9788, %v10093
    %v10123 = vmul.f32 %v9790, %v10093
    %v10124 = vmul.f32 %v9792, %v10093
    %v10125 = vmul.f32 %v9794, %v10094
    %v10126 = vmul.f32 %v9796, %v10094
    %v10127 = vmul.f32 %v9798, %v10094
    %v10128 = vmul.f32 %v9800, %v10094
    %v10129 = vmul.f32 %v9802, %v10095
    %v10130 = vmul.f32 %v9804, %v10095
    %v10131 = vmul.f32 %v9806, %v10095
    %v10132 = vmul.f32 %v9808, %v10095
    %v10133 = vmul.f32 %v9810, %v10096
    %v10134 = vmul.f32 %v9812, %v10096
    %v10135 = vmul.f32 %v9814, %v10096
    %v10136 = vmul.f32 %v9816, %v10096
    %v10137 = vmul.f32 %v9818, %v10097
    %v10138 = vmul.f32 %v9820, %v10097
    %v10139 = vmul.f32 %v9822, %v10097
    %v10140 = vmul.f32 %v9824, %v10097
    %v10141 = vmul.f32 %v9826, %v10098
    %v10142 = vmul.f32 %v9828, %v10098
    %v10143 = vmul.f32 %v9830, %v10098
    %v10144 = vmul.f32 %v9832, %v10098
    %v10145 = vmul.f32 %v9834, %v10099
    %v10146 = vmul.f32 %v9836, %v10099
    %v10147 = vmul.f32 %v9838, %v10099
    %v10148 = vmul.f32 %v9840, %v10099
    %v10149 = vmul.f32 %v9842, %v10100
    %v10150 = vmul.f32 %v9844, %v10100
    %v10151 = vmul.f32 %v9846, %v10100
    %v10152 = vmul.f32 %v9848, %v10100
    %v10153 = vmul.f32 %v9850, %v10101
    %v10154 = vmul.f32 %v9852, %v10101
    %v10155 = vmul.f32 %v9854, %v10101
    %v10156 = vmul.f32 %v9856, %v10101
    %v10157 = vmul.f32 %v9858, %v10102
    %v10158 = vmul.f32 %v9860, %v10102
    %v10159 = vmul.f32 %v9862, %v10102
    %v10160 = vmul.f32 %v9864, %v10102
    %v10161 = vmul.f32 %v9866, %v10103
    %v10162 = vmul.f32 %v9868, %v10103
    %v10163 = vmul.f32 %v9870, %v10103
    %v10164 = vmul.f32 %v9872, %v10103
    %v10165 = vmul.f32 %v9874, %v10104
    %v10166 = vmul.f32 %v9876, %v10104
    %v10167 = vmul.f32 %v9878, %v10104
    %v10168 = vmul.f32 %v9880, %v10104
    %10170 = vset.pattern.permute.xlu0 0
    %10171 = vperm.xlu0 %10170, %v10105
    %v10172 = vpop.permute.xlu0 %10171
    %10175 = vset.pattern.permute.xlu0 0
    %10176 = vperm.xlu0 %10175, %v10106
    %v10177 = vpop.permute.xlu0 %10176
    %10180 = vset.pattern.permute.xlu0 0
    %10181 = vperm.xlu0 %10180, %v10107
    %v10182 = vpop.permute.xlu0 %10181
    %10185 = vset.pattern.permute.xlu0 0
    %10186 = vperm.xlu0 %10185, %v10108
    %v10187 = vpop.permute.xlu0 %10186
    %10190 = vset.pattern.permute.xlu0 0
    %10191 = vperm.xlu0 %10190, %v10109
    %v10192 = vpop.permute.xlu0 %10191
    %10195 = vset.pattern.permute.xlu0 0
    %10196 = vperm.xlu0 %10195, %v10110
    %v10197 = vpop.permute.xlu0 %10196
    %10200 = vset.pattern.permute.xlu0 0
    %10201 = vperm.xlu0 %10200, %v10111
    %v10202 = vpop.permute.xlu0 %10201
    %10205 = vset.pattern.permute.xlu0 0
    %10206 = vperm.xlu0 %10205, %v10112
    %v10207 = vpop.permute.xlu0 %10206
    %10210 = vset.pattern.permute.xlu0 0
    %10211 = vperm.xlu0 %10210, %v10113
    %v10212 = vpop.permute.xlu0 %10211
    %10215 = vset.pattern.permute.xlu0 0
    %10216 = vperm.xlu0 %10215, %v10114
    %v10217 = vpop.permute.xlu0 %10216
    %10220 = vset.pattern.permute.xlu0 0
    %10221 = vperm.xlu0 %10220, %v10115
    %v10222 = vpop.permute.xlu0 %10221
    %10225 = vset.pattern.permute.xlu0 0
    %10226 = vperm.xlu0 %10225, %v10116
    %v10227 = vpop.permute.xlu0 %10226
    %10230 = vset.pattern.permute.xlu0 0
    %10231 = vperm.xlu0 %10230, %v10117
    %v10232 = vpop.permute.xlu0 %10231
    %10235 = vset.pattern.permute.xlu0 0
    %10236 = vperm.xlu0 %10235, %v10118
    %v10237 = vpop.permute.xlu0 %10236
    %10240 = vset.pattern.permute.xlu0 0
    %10241 = vperm.xlu0 %10240, %v10119
    %v10242 = vpop.permute.xlu0 %10241
    %10245 = vset.pattern.permute.xlu0 0
    %10246 = vperm.xlu0 %10245, %v10120
    %v10247 = vpop.permute.xlu0 %10246
    %10250 = vset.pattern.permute.xlu0 0
    %10251 = vperm.xlu0 %10250, %v10121
    %v10252 = vpop.permute.xlu0 %10251
    %10255 = vset.pattern.permute.xlu0 0
    %10256 = vperm.xlu0 %10255, %v10122
    %v10257 = vpop.permute.xlu0 %10256
    %10260 = vset.pattern.permute.xlu0 0
    %10261 = vperm.xlu0 %10260, %v10123
    %v10262 = vpop.permute.xlu0 %10261
    %10265 = vset.pattern.permute.xlu0 0
    %10266 = vperm.xlu0 %10265, %v10124
    %v10267 = vpop.permute.xlu0 %10266
    %10270 = vset.pattern.permute.xlu0 0
    %10271 = vperm.xlu0 %10270, %v10125
    %v10272 = vpop.permute.xlu0 %10271
    %10275 = vset.pattern.permute.xlu0 0
    %10276 = vperm.xlu0 %10275, %v10126
    %v10277 = vpop.permute.xlu0 %10276
    %10280 = vset.pattern.permute.xlu0 0
    %10281 = vperm.xlu0 %10280, %v10127
    %v10282 = vpop.permute.xlu0 %10281
    %10285 = vset.pattern.permute.xlu0 0
    %10286 = vperm.xlu0 %10285, %v10128
    %v10287 = vpop.permute.xlu0 %10286
    %10290 = vset.pattern.permute.xlu0 0
    %10291 = vperm.xlu0 %10290, %v10129
    %v10292 = vpop.permute.xlu0 %10291
    %10295 = vset.pattern.permute.xlu0 0
    %10296 = vperm.xlu0 %10295, %v10130
    %v10297 = vpop.permute.xlu0 %10296
    %10300 = vset.pattern.permute.xlu0 0
    %10301 = vperm.xlu0 %10300, %v10131
    %v10302 = vpop.permute.xlu0 %10301
    %10305 = vset.pattern.permute.xlu0 0
    %10306 = vperm.xlu0 %10305, %v10132
    %v10307 = vpop.permute.xlu0 %10306
    %10310 = vset.pattern.permute.xlu0 0
    %10311 = vperm.xlu0 %10310, %v10133
    %v10312 = vpop.permute.xlu0 %10311
    %10315 = vset.pattern.permute.xlu0 0
    %10316 = vperm.xlu0 %10315, %v10134
    %v10317 = vpop.permute.xlu0 %10316
    %10320 = vset.pattern.permute.xlu0 0
    %10321 = vperm.xlu0 %10320, %v10135
    %v10322 = vpop.permute.xlu0 %10321
    %10325 = vset.pattern.permute.xlu0 0
    %10326 = vperm.xlu0 %10325, %v10136
    %v10327 = vpop.permute.xlu0 %10326
    %10330 = vset.pattern.permute.xlu0 0
    %10331 = vperm.xlu0 %10330, %v10137
    %v10332 = vpop.permute.xlu0 %10331
    %10335 = vset.pattern.permute.xlu0 0
    %10336 = vperm.xlu0 %10335, %v10138
    %v10337 = vpop.permute.xlu0 %10336
    %10340 = vset.pattern.permute.xlu0 0
    %10341 = vperm.xlu0 %10340, %v10139
    %v10342 = vpop.permute.xlu0 %10341
    %10345 = vset.pattern.permute.xlu0 0
    %10346 = vperm.xlu0 %10345, %v10140
    %v10347 = vpop.permute.xlu0 %10346
    %10350 = vset.pattern.permute.xlu0 0
    %10351 = vperm.xlu0 %10350, %v10141
    %v10352 = vpop.permute.xlu0 %10351
    %10355 = vset.pattern.permute.xlu0 0
    %10356 = vperm.xlu0 %10355, %v10142
    %v10357 = vpop.permute.xlu0 %10356
    %10360 = vset.pattern.permute.xlu0 0
    %10361 = vperm.xlu0 %10360, %v10143
    %v10362 = vpop.permute.xlu0 %10361
    %10365 = vset.pattern.permute.xlu0 0
    %10366 = vperm.xlu0 %10365, %v10144
    %v10367 = vpop.permute.xlu0 %10366
    %10370 = vset.pattern.permute.xlu0 0
    %10371 = vperm.xlu0 %10370, %v10145
    %v10372 = vpop.permute.xlu0 %10371
    %10375 = vset.pattern.permute.xlu0 0
    %10376 = vperm.xlu0 %10375, %v10146
    %v10377 = vpop.permute.xlu0 %10376
    %10380 = vset.pattern.permute.xlu0 0
    %10381 = vperm.xlu0 %10380, %v10147
    %v10382 = vpop.permute.xlu0 %10381
    %10385 = vset.pattern.permute.xlu0 0
    %10386 = vperm.xlu0 %10385, %v10148
    %v10387 = vpop.permute.xlu0 %10386
    %10390 = vset.pattern.permute.xlu0 0
    %10391 = vperm.xlu0 %10390, %v10149
    %v10392 = vpop.permute.xlu0 %10391
    %10395 = vset.pattern.permute.xlu0 0
    %10396 = vperm.xlu0 %10395, %v10150
    %v10397 = vpop.permute.xlu0 %10396
    %10400 = vset.pattern.permute.xlu0 0
    %10401 = vperm.xlu0 %10400, %v10151
    %v10402 = vpop.permute.xlu0 %10401
    %10405 = vset.pattern.permute.xlu0 0
    %10406 = vperm.xlu0 %10405, %v10152
    %v10407 = vpop.permute.xlu0 %10406
    %10410 = vset.pattern.permute.xlu0 0
    %10411 = vperm.xlu0 %10410, %v10153
    %v10412 = vpop.permute.xlu0 %10411
    %10415 = vset.pattern.permute.xlu0 0
    %10416 = vperm.xlu0 %10415, %v10154
    %v10417 = vpop.permute.xlu0 %10416
    %10420 = vset.pattern.permute.xlu0 0
    %10421 = vperm.xlu0 %10420, %v10155
    %v10422 = vpop.permute.xlu0 %10421
    %10425 = vset.pattern.permute.xlu0 0
    %10426 = vperm.xlu0 %10425, %v10156
    %v10427 = vpop.permute.xlu0 %10426
    %10430 = vset.pattern.permute.xlu0 0
    %10431 = vperm.xlu0 %10430, %v10157
    %v10432 = vpop.permute.xlu0 %10431
    %10435 = vset.pattern.permute.xlu0 0
    %10436 = vperm.xlu0 %10435, %v10158
    %v10437 = vpop.permute.xlu0 %10436
    %10440 = vset.pattern.permute.xlu0 0
    %10441 = vperm.xlu0 %10440, %v10159
    %v10442 = vpop.permute.xlu0 %10441
    %10445 = vset.pattern.permute.xlu0 0
    %10446 = vperm.xlu0 %10445, %v10160
    %v10447 = vpop.permute.xlu0 %10446
    %10450 = vset.pattern.permute.xlu0 0
    %10451 = vperm.xlu0 %10450, %v10161
    %v10452 = vpop.permute.xlu0 %10451
    %10455 = vset.pattern.permute.xlu0 0
    %10456 = vperm.xlu0 %10455, %v10162
    %v10457 = vpop.permute.xlu0 %10456
    %10460 = vset.pattern.permute.xlu0 0
    %10461 = vperm.xlu0 %10460, %v10163
    %v10462 = vpop.permute.xlu0 %10461
    %10465 = vset.pattern.permute.xlu0 0
    %10466 = vperm.xlu0 %10465, %v10164
    %v10467 = vpop.permute.xlu0 %10466
    %10470 = vset.pattern.permute.xlu0 0
    %10471 = vperm.xlu0 %10470, %v10165
    %v10472 = vpop.permute.xlu0 %10471
    %10475 = vset.pattern.permute.xlu0 0
    %10476 = vperm.xlu0 %10475, %v10166
    %v10477 = vpop.permute.xlu0 %10476
    %10480 = vset.pattern.permute.xlu0 0
    %10481 = vperm.xlu0 %10480, %v10167
    %v10482 = vpop.permute.xlu0 %10481
    %10485 = vset.pattern.permute.xlu0 0
    %10486 = vperm.xlu0 %10485, %v10168
    %v10487 = vpop.permute.xlu0 %10486
    %v10489 = vmul.f32 %v10172, %v7623
    %v10490 = vmul.f32 %v10172, %v7625
    %v10491 = vmul.f32 %v10172, %v8329
    %v10492 = vmul.f32 %v10172, %v8331
    %v10493 = vmul.f32 %v10177, %v7627
    %v10494 = vmul.f32 %v10177, %v7629
    %v10495 = vmul.f32 %v10177, %v8333
    %v10496 = vmul.f32 %v10177, %v8335
    %v10497 = vmul.f32 %v10182, %v7633
    %v10498 = vmul.f32 %v10182, %v7635
    %v10499 = vmul.f32 %v10182, %v8339
    %v10500 = vmul.f32 %v10182, %v8341
    %v10501 = vmul.f32 %v10187, %v7637
    %v10502 = vmul.f32 %v10187, %v7639
    %v10503 = vmul.f32 %v10187, %v8343
    %v10504 = vmul.f32 %v10187, %v8345
    %v10505 = vmul.f32 %v10192, %v7643
    %v10506 = vmul.f32 %v10192, %v7645
    %v10507 = vmul.f32 %v10192, %v8349
    %v10508 = vmul.f32 %v10192, %v8351
    %v10509 = vmul.f32 %v10197, %v7647
    %v10510 = vmul.f32 %v10197, %v7649
    %v10511 = vmul.f32 %v10197, %v8353
    %v10512 = vmul.f32 %v10197, %v8355
    %v10513 = vmul.f32 %v10202, %v7653
    %v10514 = vmul.f32 %v10202, %v7655
    %v10515 = vmul.f32 %v10202, %v8359
    %v10516 = vmul.f32 %v10202, %v8361
    %v10517 = vmul.f32 %v10207, %v7657
    %v10518 = vmul.f32 %v10207, %v7659
    %v10519 = vmul.f32 %v10207, %v8363
    %v10520 = vmul.f32 %v10207, %v8365
    %v10521 = vmul.f32 %v10212, %v7663
    %v10522 = vmul.f32 %v10212, %v7665
    %v10523 = vmul.f32 %v10212, %v8369
    %v10524 = vmul.f32 %v10212, %v8371
    %v10525 = vmul.f32 %v10217, %v7667
    %v10526 = vmul.f32 %v10217, %v7669
    %v10527 = vmul.f32 %v10217, %v8373
    %v10528 = vmul.f32 %v10217, %v8375
    %v10529 = vmul.f32 %v10222, %v7673
    %v10530 = vmul.f32 %v10222, %v7675
    %v10531 = vmul.f32 %v10222, %v8379
    %v10532 = vmul.f32 %v10222, %v8381
    %v10533 = vmul.f32 %v10227, %v7677
    %v10534 = vmul.f32 %v10227, %v7679
    %v10535 = vmul.f32 %v10227, %v8383
    %v10536 = vmul.f32 %v10227, %v8385
    %v10537 = vmul.f32 %v10232, %v7683
    %v10538 = vmul.f32 %v10232, %v7685
    %v10539 = vmul.f32 %v10232, %v8389
    %v10540 = vmul.f32 %v10232, %v8391
    %v10541 = vmul.f32 %v10237, %v7687
    %v10542 = vmul.f32 %v10237, %v7689
    %v10543 = vmul.f32 %v10237, %v8393
    %v10544 = vmul.f32 %v10237, %v8395
    %v10545 = vmul.f32 %v10242, %v7693
    %v10546 = vmul.f32 %v10242, %v7695
    %v10547 = vmul.f32 %v10242, %v8399
    %v10548 = vmul.f32 %v10242, %v8401
    %v10549 = vmul.f32 %v10247, %v7697
    %v10550 = vmul.f32 %v10247, %v7699
    %v10551 = vmul.f32 %v10247, %v8403
    %v10552 = vmul.f32 %v10247, %v8405
    %v10553 = vmul.f32 %v10252, %v7703
    %v10554 = vmul.f32 %v10252, %v7705
    %v10555 = vmul.f32 %v10252, %v8409
    %v10556 = vmul.f32 %v10252, %v8411
    %v10557 = vmul.f32 %v10257, %v7707
    %v10558 = vmul.f32 %v10257, %v7709
    %v10559 = vmul.f32 %v10257, %v8413
    %v10560 = vmul.f32 %v10257, %v8415
    %v10561 = vmul.f32 %v10262, %v7713
    %v10562 = vmul.f32 %v10262, %v7715
    %v10563 = vmul.f32 %v10262, %v8419
    %v10564 = vmul.f32 %v10262, %v8421
    %v10565 = vmul.f32 %v10267, %v7717
    %v10566 = vmul.f32 %v10267, %v7719
    %v10567 = vmul.f32 %v10267, %v8423
    %v10568 = vmul.f32 %v10267, %v8425
    %v10569 = vmul.f32 %v10272, %v7723
    %v10570 = vmul.f32 %v10272, %v7725
    %v10571 = vmul.f32 %v10272, %v8429
    %v10572 = vmul.f32 %v10272, %v8431
    %v10573 = vmul.f32 %v10277, %v7727
    %v10574 = vmul.f32 %v10277, %v7729
    %v10575 = vmul.f32 %v10277, %v8433
    %v10576 = vmul.f32 %v10277, %v8435
    %v10577 = vmul.f32 %v10282, %v7733
    %v10578 = vmul.f32 %v10282, %v7735
    %v10579 = vmul.f32 %v10282, %v8439
    %v10580 = vmul.f32 %v10282, %v8441
    %v10581 = vmul.f32 %v10287, %v7737
    %v10582 = vmul.f32 %v10287, %v7739
    %v10583 = vmul.f32 %v10287, %v8443
    %v10584 = vmul.f32 %v10287, %v8445
    %v10585 = vmul.f32 %v10292, %v7743
    %v10586 = vmul.f32 %v10292, %v7745
    %v10587 = vmul.f32 %v10292, %v8449
    %v10588 = vmul.f32 %v10292, %v8451
    %v10589 = vmul.f32 %v10297, %v7747
    %v10590 = vmul.f32 %v10297, %v7749
    %v10591 = vmul.f32 %v10297, %v8453
    %v10592 = vmul.f32 %v10297, %v8455
    %v10593 = vmul.f32 %v10302, %v7753
    %v10594 = vmul.f32 %v10302, %v7755
    %v10595 = vmul.f32 %v10302, %v8459
    %v10596 = vmul.f32 %v10302, %v8461
    %v10597 = vmul.f32 %v10307, %v7757
    %v10598 = vmul.f32 %v10307, %v7759
    %v10599 = vmul.f32 %v10307, %v8463
    %v10600 = vmul.f32 %v10307, %v8465
    %v10601 = vmul.f32 %v10312, %v7763
    %v10602 = vmul.f32 %v10312, %v7765
    %v10603 = vmul.f32 %v10312, %v8469
    %v10604 = vmul.f32 %v10312, %v8471
    %v10605 = vmul.f32 %v10317, %v7767
    %v10606 = vmul.f32 %v10317, %v7769
    %v10607 = vmul.f32 %v10317, %v8473
    %v10608 = vmul.f32 %v10317, %v8475
    %v10609 = vmul.f32 %v10322, %v7773
    %v10610 = vmul.f32 %v10322, %v7775
    %v10611 = vmul.f32 %v10322, %v8479
    %v10612 = vmul.f32 %v10322, %v8481
    %v10613 = vmul.f32 %v10327, %v7777
    %v10614 = vmul.f32 %v10327, %v7779
    %v10615 = vmul.f32 %v10327, %v8483
    %v10616 = vmul.f32 %v10327, %v8485
    %v10617 = vmul.f32 %v10332, %v7783
    %v10618 = vmul.f32 %v10332, %v7785
    %v10619 = vmul.f32 %v10332, %v8489
    %v10620 = vmul.f32 %v10332, %v8491
    %v10621 = vmul.f32 %v10337, %v7787
    %v10622 = vmul.f32 %v10337, %v7789
    %v10623 = vmul.f32 %v10337, %v8493
    %v10624 = vmul.f32 %v10337, %v8495
    %v10625 = vmul.f32 %v10342, %v7793
    %v10626 = vmul.f32 %v10342, %v7795
    %v10627 = vmul.f32 %v10342, %v8499
    %v10628 = vmul.f32 %v10342, %v8501
    %v10629 = vmul.f32 %v10347, %v7797
    %v10630 = vmul.f32 %v10347, %v7799
    %v10631 = vmul.f32 %v10347, %v8503
    %v10632 = vmul.f32 %v10347, %v8505
    %v10633 = vmul.f32 %v10352, %v7803
    %v10634 = vmul.f32 %v10352, %v7805
    %v10635 = vmul.f32 %v10352, %v8509
    %v10636 = vmul.f32 %v10352, %v8511
    %v10637 = vmul.f32 %v10357, %v7807
    %v10638 = vmul.f32 %v10357, %v7809
    %v10639 = vmul.f32 %v10357, %v8513
    %v10640 = vmul.f32 %v10357, %v8515
    %v10641 = vmul.f32 %v10362, %v7813
    %v10642 = vmul.f32 %v10362, %v7815
    %v10643 = vmul.f32 %v10362, %v8519
    %v10644 = vmul.f32 %v10362, %v8521
    %v10645 = vmul.f32 %v10367, %v7817
    %v10646 = vmul.f32 %v10367, %v7819
    %v10647 = vmul.f32 %v10367, %v8523
    %v10648 = vmul.f32 %v10367, %v8525
    %v10649 = vmul.f32 %v10372, %v7823
    %v10650 = vmul.f32 %v10372, %v7825
    %v10651 = vmul.f32 %v10372, %v8529
    %v10652 = vmul.f32 %v10372, %v8531
    %v10653 = vmul.f32 %v10377, %v7827
    %v10654 = vmul.f32 %v10377, %v7829
    %v10655 = vmul.f32 %v10377, %v8533
    %v10656 = vmul.f32 %v10377, %v8535
    %v10657 = vmul.f32 %v10382, %v7833
    %v10658 = vmul.f32 %v10382, %v7835
    %v10659 = vmul.f32 %v10382, %v8539
    %v10660 = vmul.f32 %v10382, %v8541
    %v10661 = vmul.f32 %v10387, %v7837
    %v10662 = vmul.f32 %v10387, %v7839
    %v10663 = vmul.f32 %v10387, %v8543
    %v10664 = vmul.f32 %v10387, %v8545
    %v10665 = vmul.f32 %v10392, %v7843
    %v10666 = vmul.f32 %v10392, %v7845
    %v10667 = vmul.f32 %v10392, %v8549
    %v10668 = vmul.f32 %v10392, %v8551
    %v10669 = vmul.f32 %v10397, %v7847
    %v10670 = vmul.f32 %v10397, %v7849
    %v10671 = vmul.f32 %v10397, %v8553
    %v10672 = vmul.f32 %v10397, %v8555
    %v10673 = vmul.f32 %v10402, %v7853
    %v10674 = vmul.f32 %v10402, %v7855
    %v10675 = vmul.f32 %v10402, %v8559
    %v10676 = vmul.f32 %v10402, %v8561
    %v10677 = vmul.f32 %v10407, %v7857
    %v10678 = vmul.f32 %v10407, %v7859
    %v10679 = vmul.f32 %v10407, %v8563
    %v10680 = vmul.f32 %v10407, %v8565
    %v10681 = vmul.f32 %v10412, %v7863
    %v10682 = vmul.f32 %v10412, %v7865
    %v10683 = vmul.f32 %v10412, %v8569
    %v10684 = vmul.f32 %v10412, %v8571
    %v10685 = vmul.f32 %v10417, %v7867
    %v10686 = vmul.f32 %v10417, %v7869
    %v10687 = vmul.f32 %v10417, %v8573
    %v10688 = vmul.f32 %v10417, %v8575
    %v10689 = vmul.f32 %v10422, %v7873
    %v10690 = vmul.f32 %v10422, %v7875
    %v10691 = vmul.f32 %v10422, %v8579
    %v10692 = vmul.f32 %v10422, %v8581
    %v10693 = vmul.f32 %v10427, %v7877
    %v10694 = vmul.f32 %v10427, %v7879
    %v10695 = vmul.f32 %v10427, %v8583
    %v10696 = vmul.f32 %v10427, %v8585
    %v10697 = vmul.f32 %v10432, %v7883
    %v10698 = vmul.f32 %v10432, %v7885
    %v10699 = vmul.f32 %v10432, %v8589
    %v10700 = vmul.f32 %v10432, %v8591
    %v10701 = vmul.f32 %v10437, %v7887
    %v10702 = vmul.f32 %v10437, %v7889
    %v10703 = vmul.f32 %v10437, %v8593
    %v10704 = vmul.f32 %v10437, %v8595
    %v10705 = vmul.f32 %v10442, %v7893
    %v10706 = vmul.f32 %v10442, %v7895
    %v10707 = vmul.f32 %v10442, %v8599
    %v10708 = vmul.f32 %v10442, %v8601
    %v10709 = vmul.f32 %v10447, %v7897
    %v10710 = vmul.f32 %v10447, %v7899
    %v10711 = vmul.f32 %v10447, %v8603
    %v10712 = vmul.f32 %v10447, %v8605
    %v10713 = vmul.f32 %v10452, %v7903
    %v10714 = vmul.f32 %v10452, %v7905
    %v10715 = vmul.f32 %v10452, %v8609
    %v10716 = vmul.f32 %v10452, %v8611
    %v10717 = vmul.f32 %v10457, %v7907
    %v10718 = vmul.f32 %v10457, %v7909
    %v10719 = vmul.f32 %v10457, %v8613
    %v10720 = vmul.f32 %v10457, %v8615
    %v10721 = vmul.f32 %v10462, %v7913
    %v10722 = vmul.f32 %v10462, %v7915
    %v10723 = vmul.f32 %v10462, %v8619
    %v10724 = vmul.f32 %v10462, %v8621
    %v10725 = vmul.f32 %v10467, %v7917
    %v10726 = vmul.f32 %v10467, %v7919
    %v10727 = vmul.f32 %v10467, %v8623
    %v10728 = vmul.f32 %v10467, %v8625
    %v10729 = vmul.f32 %v10472, %v7923
    %v10730 = vmul.f32 %v10472, %v7925
    %v10731 = vmul.f32 %v10472, %v8629
    %v10732 = vmul.f32 %v10472, %v8631
    %v10733 = vmul.f32 %v10477, %v7927
    %v10734 = vmul.f32 %v10477, %v7929
    %v10735 = vmul.f32 %v10477, %v8633
    %v10736 = vmul.f32 %v10477, %v8635
    %v10737 = vmul.f32 %v10482, %v7933
    %v10738 = vmul.f32 %v10482, %v7935
    %v10739 = vmul.f32 %v10482, %v8639
    %v10740 = vmul.f32 %v10482, %v8641
    %v10741 = vmul.f32 %v10487, %v7937
    %v10742 = vmul.f32 %v10487, %v7939
    %v10743 = vmul.f32 %v10487, %v8643
    %v10744 = vmul.f32 %v10487, %v8645
    %v10745 = vadd.f32 %v10489, %v10493
    %v10746 = vadd.f32 %v10745, %v10497
    %v10747 = vadd.f32 %v10746, %v10501
    %v10748 = vrot.slane %v10747, 4
    %v10749 = vadd.f32 %v10747, %v10748
    %v10750 = vrot.slane %v10749, 2
    %v10751 = vadd.f32 %v10749, %v10750
    %v10752 = vrot.slane %v10751, 1
    %v10753 = vadd.f32 %v10751, %v10752
    %v10754 = vadd.f32 %v10490, %v10494
    %v10755 = vadd.f32 %v10754, %v10498
    %v10756 = vadd.f32 %v10755, %v10502
    %v10757 = vrot.slane %v10756, 4
    %v10758 = vadd.f32 %v10756, %v10757
    %v10759 = vrot.slane %v10758, 2
    %v10760 = vadd.f32 %v10758, %v10759
    %v10761 = vrot.slane %v10760, 1
    %v10762 = vadd.f32 %v10760, %v10761
    %v10763 = vadd.f32 %v10491, %v10495
    %v10764 = vadd.f32 %v10763, %v10499
    %v10765 = vadd.f32 %v10764, %v10503
    %v10766 = vrot.slane %v10765, 4
    %v10767 = vadd.f32 %v10765, %v10766
    %v10768 = vrot.slane %v10767, 2
    %v10769 = vadd.f32 %v10767, %v10768
    %v10770 = vrot.slane %v10769, 1
    %v10771 = vadd.f32 %v10769, %v10770
    %v10772 = vadd.f32 %v10492, %v10496
    %v10773 = vadd.f32 %v10772, %v10500
    %v10774 = vadd.f32 %v10773, %v10504
    %v10775 = vrot.slane %v10774, 4
    %v10776 = vadd.f32 %v10774, %v10775
    %v10777 = vrot.slane %v10776, 2
    %v10778 = vadd.f32 %v10776, %v10777
    %v10779 = vrot.slane %v10778, 1
    %v10780 = vadd.f32 %v10778, %v10779
    %v10781 = vadd.f32 %v10505, %v10509
    %v10782 = vadd.f32 %v10781, %v10513
    %v10783 = vadd.f32 %v10782, %v10517
    %v10784 = vrot.slane %v10783, 4
    %v10785 = vadd.f32 %v10783, %v10784
    %v10786 = vrot.slane %v10785, 2
    %v10787 = vadd.f32 %v10785, %v10786
    %v10788 = vrot.slane %v10787, 1
    %v10789 = vadd.f32 %v10787, %v10788
    %v10790 = vadd.f32 %v10506, %v10510
    %v10791 = vadd.f32 %v10790, %v10514
    %v10792 = vadd.f32 %v10791, %v10518
    %v10793 = vrot.slane %v10792, 4
    %v10794 = vadd.f32 %v10792, %v10793
    %v10795 = vrot.slane %v10794, 2
    %v10796 = vadd.f32 %v10794, %v10795
    %v10797 = vrot.slane %v10796, 1
    %v10798 = vadd.f32 %v10796, %v10797
    %v10799 = vadd.f32 %v10507, %v10511
    %v10800 = vadd.f32 %v10799, %v10515
    %v10801 = vadd.f32 %v10800, %v10519
    %v10802 = vrot.slane %v10801, 4
    %v10803 = vadd.f32 %v10801, %v10802
    %v10804 = vrot.slane %v10803, 2
    %v10805 = vadd.f32 %v10803, %v10804
    %v10806 = vrot.slane %v10805, 1
    %v10807 = vadd.f32 %v10805, %v10806
    %v10808 = vadd.f32 %v10508, %v10512
    %v10809 = vadd.f32 %v10808, %v10516
    %v10810 = vadd.f32 %v10809, %v10520
    %v10811 = vrot.slane %v10810, 4
    %v10812 = vadd.f32 %v10810, %v10811
    %v10813 = vrot.slane %v10812, 2
    %v10814 = vadd.f32 %v10812, %v10813
    %v10815 = vrot.slane %v10814, 1
    %v10816 = vadd.f32 %v10814, %v10815
    %v10817 = vadd.f32 %v10521, %v10525
    %v10818 = vadd.f32 %v10817, %v10529
    %v10819 = vadd.f32 %v10818, %v10533
    %v10820 = vrot.slane %v10819, 4
    %v10821 = vadd.f32 %v10819, %v10820
    %v10822 = vrot.slane %v10821, 2
    %v10823 = vadd.f32 %v10821, %v10822
    %v10824 = vrot.slane %v10823, 1
    %v10825 = vadd.f32 %v10823, %v10824
    %v10826 = vadd.f32 %v10522, %v10526
    %v10827 = vadd.f32 %v10826, %v10530
    %v10828 = vadd.f32 %v10827, %v10534
    %v10829 = vrot.slane %v10828, 4
    %v10830 = vadd.f32 %v10828, %v10829
    %v10831 = vrot.slane %v10830, 2
    %v10832 = vadd.f32 %v10830, %v10831
    %v10833 = vrot.slane %v10832, 1
    %v10834 = vadd.f32 %v10832, %v10833
    %v10835 = vadd.f32 %v10523, %v10527
    %v10836 = vadd.f32 %v10835, %v10531
    %v10837 = vadd.f32 %v10836, %v10535
    %v10838 = vrot.slane %v10837, 4
    %v10839 = vadd.f32 %v10837, %v10838
    %v10840 = vrot.slane %v10839, 2
    %v10841 = vadd.f32 %v10839, %v10840
    %v10842 = vrot.slane %v10841, 1
    %v10843 = vadd.f32 %v10841, %v10842
    %v10844 = vadd.f32 %v10524, %v10528
    %v10845 = vadd.f32 %v10844, %v10532
    %v10846 = vadd.f32 %v10845, %v10536
    %v10847 = vrot.slane %v10846, 4
    %v10848 = vadd.f32 %v10846, %v10847
    %v10849 = vrot.slane %v10848, 2
    %v10850 = vadd.f32 %v10848, %v10849
    %v10851 = vrot.slane %v10850, 1
    %v10852 = vadd.f32 %v10850, %v10851
    %v10853 = vadd.f32 %v10537, %v10541
    %v10854 = vadd.f32 %v10853, %v10545
    %v10855 = vadd.f32 %v10854, %v10549
    %v10856 = vrot.slane %v10855, 4
    %v10857 = vadd.f32 %v10855, %v10856
    %v10858 = vrot.slane %v10857, 2
    %v10859 = vadd.f32 %v10857, %v10858
    %v10860 = vrot.slane %v10859, 1
    %v10861 = vadd.f32 %v10859, %v10860
    %v10862 = vadd.f32 %v10538, %v10542
    %v10863 = vadd.f32 %v10862, %v10546
    %v10864 = vadd.f32 %v10863, %v10550
    %v10865 = vrot.slane %v10864, 4
    %v10866 = vadd.f32 %v10864, %v10865
    %v10867 = vrot.slane %v10866, 2
    %v10868 = vadd.f32 %v10866, %v10867
    %v10869 = vrot.slane %v10868, 1
    %v10870 = vadd.f32 %v10868, %v10869
    %v10871 = vadd.f32 %v10539, %v10543
    %v10872 = vadd.f32 %v10871, %v10547
    %v10873 = vadd.f32 %v10872, %v10551
    %v10874 = vrot.slane %v10873, 4
    %v10875 = vadd.f32 %v10873, %v10874
    %v10876 = vrot.slane %v10875, 2
    %v10877 = vadd.f32 %v10875, %v10876
    %v10878 = vrot.slane %v10877, 1
    %v10879 = vadd.f32 %v10877, %v10878
    %v10880 = vadd.f32 %v10540, %v10544
    %v10881 = vadd.f32 %v10880, %v10548
    %v10882 = vadd.f32 %v10881, %v10552
    %v10883 = vrot.slane %v10882, 4
    %v10884 = vadd.f32 %v10882, %v10883
    %v10885 = vrot.slane %v10884, 2
    %v10886 = vadd.f32 %v10884, %v10885
    %v10887 = vrot.slane %v10886, 1
    %v10888 = vadd.f32 %v10886, %v10887
    %v10889 = vadd.f32 %v10553, %v10557
    %v10890 = vadd.f32 %v10889, %v10561
    %v10891 = vadd.f32 %v10890, %v10565
    %v10892 = vrot.slane %v10891, 4
    %v10893 = vadd.f32 %v10891, %v10892
    %v10894 = vrot.slane %v10893, 2
    %v10895 = vadd.f32 %v10893, %v10894
    %v10896 = vrot.slane %v10895, 1
    %v10897 = vadd.f32 %v10895, %v10896
    %v10898 = vadd.f32 %v10554, %v10558
    %v10899 = vadd.f32 %v10898, %v10562
    %v10900 = vadd.f32 %v10899, %v10566
    %v10901 = vrot.slane %v10900, 4
    %v10902 = vadd.f32 %v10900, %v10901
    %v10903 = vrot.slane %v10902, 2
    %v10904 = vadd.f32 %v10902, %v10903
    %v10905 = vrot.slane %v10904, 1
    %v10906 = vadd.f32 %v10904, %v10905
    %v10907 = vadd.f32 %v10555, %v10559
    %v10908 = vadd.f32 %v10907, %v10563
    %v10909 = vadd.f32 %v10908, %v10567
    %v10910 = vrot.slane %v10909, 4
    %v10911 = vadd.f32 %v10909, %v10910
    %v10912 = vrot.slane %v10911, 2
    %v10913 = vadd.f32 %v10911, %v10912
    %v10914 = vrot.slane %v10913, 1
    %v10915 = vadd.f32 %v10913, %v10914
    %v10916 = vadd.f32 %v10556, %v10560
    %v10917 = vadd.f32 %v10916, %v10564
    %v10918 = vadd.f32 %v10917, %v10568
    %v10919 = vrot.slane %v10918, 4
    %v10920 = vadd.f32 %v10918, %v10919
    %v10921 = vrot.slane %v10920, 2
    %v10922 = vadd.f32 %v10920, %v10921
    %v10923 = vrot.slane %v10922, 1
    %v10924 = vadd.f32 %v10922, %v10923
    %v10925 = vadd.f32 %v10569, %v10573
    %v10926 = vadd.f32 %v10925, %v10577
    %v10927 = vadd.f32 %v10926, %v10581
    %v10928 = vrot.slane %v10927, 4
    %v10929 = vadd.f32 %v10927, %v10928
    %v10930 = vrot.slane %v10929, 2
    %v10931 = vadd.f32 %v10929, %v10930
    %v10932 = vrot.slane %v10931, 1
    %v10933 = vadd.f32 %v10931, %v10932
    %v10934 = vadd.f32 %v10570, %v10574
    %v10935 = vadd.f32 %v10934, %v10578
    %v10936 = vadd.f32 %v10935, %v10582
    %v10937 = vrot.slane %v10936, 4
    %v10938 = vadd.f32 %v10936, %v10937
    %v10939 = vrot.slane %v10938, 2
    %v10940 = vadd.f32 %v10938, %v10939
    %v10941 = vrot.slane %v10940, 1
    %v10942 = vadd.f32 %v10940, %v10941
    %v10943 = vadd.f32 %v10571, %v10575
    %v10944 = vadd.f32 %v10943, %v10579
    %v10945 = vadd.f32 %v10944, %v10583
    %v10946 = vrot.slane %v10945, 4
    %v10947 = vadd.f32 %v10945, %v10946
    %v10948 = vrot.slane %v10947, 2
    %v10949 = vadd.f32 %v10947, %v10948
    %v10950 = vrot.slane %v10949, 1
    %v10951 = vadd.f32 %v10949, %v10950
    %v10952 = vadd.f32 %v10572, %v10576
    %v10953 = vadd.f32 %v10952, %v10580
    %v10954 = vadd.f32 %v10953, %v10584
    %v10955 = vrot.slane %v10954, 4
    %v10956 = vadd.f32 %v10954, %v10955
    %v10957 = vrot.slane %v10956, 2
    %v10958 = vadd.f32 %v10956, %v10957
    %v10959 = vrot.slane %v10958, 1
    %v10960 = vadd.f32 %v10958, %v10959
    %v10961 = vadd.f32 %v10585, %v10589
    %v10962 = vadd.f32 %v10961, %v10593
    %v10963 = vadd.f32 %v10962, %v10597
    %v10964 = vrot.slane %v10963, 4
    %v10965 = vadd.f32 %v10963, %v10964
    %v10966 = vrot.slane %v10965, 2
    %v10967 = vadd.f32 %v10965, %v10966
    %v10968 = vrot.slane %v10967, 1
    %v10969 = vadd.f32 %v10967, %v10968
    %v10970 = vadd.f32 %v10586, %v10590
    %v10971 = vadd.f32 %v10970, %v10594
    %v10972 = vadd.f32 %v10971, %v10598
    %v10973 = vrot.slane %v10972, 4
    %v10974 = vadd.f32 %v10972, %v10973
    %v10975 = vrot.slane %v10974, 2
    %v10976 = vadd.f32 %v10974, %v10975
    %v10977 = vrot.slane %v10976, 1
    %v10978 = vadd.f32 %v10976, %v10977
    %v10979 = vadd.f32 %v10587, %v10591
    %v10980 = vadd.f32 %v10979, %v10595
    %v10981 = vadd.f32 %v10980, %v10599
    %v10982 = vrot.slane %v10981, 4
    %v10983 = vadd.f32 %v10981, %v10982
    %v10984 = vrot.slane %v10983, 2
    %v10985 = vadd.f32 %v10983, %v10984
    %v10986 = vrot.slane %v10985, 1
    %v10987 = vadd.f32 %v10985, %v10986
    %v10988 = vadd.f32 %v10588, %v10592
    %v10989 = vadd.f32 %v10988, %v10596
    %v10990 = vadd.f32 %v10989, %v10600
    %v10991 = vrot.slane %v10990, 4
    %v10992 = vadd.f32 %v10990, %v10991
    %v10993 = vrot.slane %v10992, 2
    %v10994 = vadd.f32 %v10992, %v10993
    %v10995 = vrot.slane %v10994, 1
    %v10996 = vadd.f32 %v10994, %v10995
    %v10997 = vadd.f32 %v10601, %v10605
    %v10998 = vadd.f32 %v10997, %v10609
    %v10999 = vadd.f32 %v10998, %v10613
    %v11000 = vrot.slane %v10999, 4
    %v11001 = vadd.f32 %v10999, %v11000
    %v11002 = vrot.slane %v11001, 2
    %v11003 = vadd.f32 %v11001, %v11002
    %v11004 = vrot.slane %v11003, 1
    %v11005 = vadd.f32 %v11003, %v11004
    %v11006 = vadd.f32 %v10602, %v10606
    %v11007 = vadd.f32 %v11006, %v10610
    %v11008 = vadd.f32 %v11007, %v10614
    %v11009 = vrot.slane %v11008, 4
    %v11010 = vadd.f32 %v11008, %v11009
    %v11011 = vrot.slane %v11010, 2
    %v11012 = vadd.f32 %v11010, %v11011
    %v11013 = vrot.slane %v11012, 1
    %v11014 = vadd.f32 %v11012, %v11013
    %v11015 = vadd.f32 %v10603, %v10607
    %v11016 = vadd.f32 %v11015, %v10611
    %v11017 = vadd.f32 %v11016, %v10615
    %v11018 = vrot.slane %v11017, 4
    %v11019 = vadd.f32 %v11017, %v11018
    %v11020 = vrot.slane %v11019, 2
    %v11021 = vadd.f32 %v11019, %v11020
    %v11022 = vrot.slane %v11021, 1
    %v11023 = vadd.f32 %v11021, %v11022
    %v11024 = vadd.f32 %v10604, %v10608
    %v11025 = vadd.f32 %v11024, %v10612
    %v11026 = vadd.f32 %v11025, %v10616
    %v11027 = vrot.slane %v11026, 4
    %v11028 = vadd.f32 %v11026, %v11027
    %v11029 = vrot.slane %v11028, 2
    %v11030 = vadd.f32 %v11028, %v11029
    %v11031 = vrot.slane %v11030, 1
    %v11032 = vadd.f32 %v11030, %v11031
    %v11033 = vadd.f32 %v10617, %v10621
    %v11034 = vadd.f32 %v11033, %v10625
    %v11035 = vadd.f32 %v11034, %v10629
    %v11036 = vrot.slane %v11035, 4
    %v11037 = vadd.f32 %v11035, %v11036
    %v11038 = vrot.slane %v11037, 2
    %v11039 = vadd.f32 %v11037, %v11038
    %v11040 = vrot.slane %v11039, 1
    %v11041 = vadd.f32 %v11039, %v11040
    %v11042 = vadd.f32 %v10618, %v10622
    %v11043 = vadd.f32 %v11042, %v10626
    %v11044 = vadd.f32 %v11043, %v10630
    %v11045 = vrot.slane %v11044, 4
    %v11046 = vadd.f32 %v11044, %v11045
    %v11047 = vrot.slane %v11046, 2
    %v11048 = vadd.f32 %v11046, %v11047
    %v11049 = vrot.slane %v11048, 1
    %v11050 = vadd.f32 %v11048, %v11049
    %v11051 = vadd.f32 %v10619, %v10623
    %v11052 = vadd.f32 %v11051, %v10627
    %v11053 = vadd.f32 %v11052, %v10631
    %v11054 = vrot.slane %v11053, 4
    %v11055 = vadd.f32 %v11053, %v11054
    %v11056 = vrot.slane %v11055, 2
    %v11057 = vadd.f32 %v11055, %v11056
    %v11058 = vrot.slane %v11057, 1
    %v11059 = vadd.f32 %v11057, %v11058
    %v11060 = vadd.f32 %v10620, %v10624
    %v11061 = vadd.f32 %v11060, %v10628
    %v11062 = vadd.f32 %v11061, %v10632
    %v11063 = vrot.slane %v11062, 4
    %v11064 = vadd.f32 %v11062, %v11063
    %v11065 = vrot.slane %v11064, 2
    %v11066 = vadd.f32 %v11064, %v11065
    %v11067 = vrot.slane %v11066, 1
    %v11068 = vadd.f32 %v11066, %v11067
    %v11069 = vadd.f32 %v10633, %v10637
    %v11070 = vadd.f32 %v11069, %v10641
    %v11071 = vadd.f32 %v11070, %v10645
    %v11072 = vrot.slane %v11071, 4
    %v11073 = vadd.f32 %v11071, %v11072
    %v11074 = vrot.slane %v11073, 2
    %v11075 = vadd.f32 %v11073, %v11074
    %v11076 = vrot.slane %v11075, 1
    %v11077 = vadd.f32 %v11075, %v11076
    %v11078 = vadd.f32 %v10634, %v10638
    %v11079 = vadd.f32 %v11078, %v10642
    %v11080 = vadd.f32 %v11079, %v10646
    %v11081 = vrot.slane %v11080, 4
    %v11082 = vadd.f32 %v11080, %v11081
    %v11083 = vrot.slane %v11082, 2
    %v11084 = vadd.f32 %v11082, %v11083
    %v11085 = vrot.slane %v11084, 1
    %v11086 = vadd.f32 %v11084, %v11085
    %v11087 = vadd.f32 %v10635, %v10639
    %v11088 = vadd.f32 %v11087, %v10643
    %v11089 = vadd.f32 %v11088, %v10647
    %v11090 = vrot.slane %v11089, 4
    %v11091 = vadd.f32 %v11089, %v11090
    %v11092 = vrot.slane %v11091, 2
    %v11093 = vadd.f32 %v11091, %v11092
    %v11094 = vrot.slane %v11093, 1
    %v11095 = vadd.f32 %v11093, %v11094
    %v11096 = vadd.f32 %v10636, %v10640
    %v11097 = vadd.f32 %v11096, %v10644
    %v11098 = vadd.f32 %v11097, %v10648
    %v11099 = vrot.slane %v11098, 4
    %v11100 = vadd.f32 %v11098, %v11099
    %v11101 = vrot.slane %v11100, 2
    %v11102 = vadd.f32 %v11100, %v11101
    %v11103 = vrot.slane %v11102, 1
    %v11104 = vadd.f32 %v11102, %v11103
    %v11105 = vadd.f32 %v10649, %v10653
    %v11106 = vadd.f32 %v11105, %v10657
    %v11107 = vadd.f32 %v11106, %v10661
    %v11108 = vrot.slane %v11107, 4
    %v11109 = vadd.f32 %v11107, %v11108
    %v11110 = vrot.slane %v11109, 2
    %v11111 = vadd.f32 %v11109, %v11110
    %v11112 = vrot.slane %v11111, 1
    %v11113 = vadd.f32 %v11111, %v11112
    %v11114 = vadd.f32 %v10650, %v10654
    %v11115 = vadd.f32 %v11114, %v10658
    %v11116 = vadd.f32 %v11115, %v10662
    %v11117 = vrot.slane %v11116, 4
    %v11118 = vadd.f32 %v11116, %v11117
    %v11119 = vrot.slane %v11118, 2
    %v11120 = vadd.f32 %v11118, %v11119
    %v11121 = vrot.slane %v11120, 1
    %v11122 = vadd.f32 %v11120, %v11121
    %v11123 = vadd.f32 %v10651, %v10655
    %v11124 = vadd.f32 %v11123, %v10659
    %v11125 = vadd.f32 %v11124, %v10663
    %v11126 = vrot.slane %v11125, 4
    %v11127 = vadd.f32 %v11125, %v11126
    %v11128 = vrot.slane %v11127, 2
    %v11129 = vadd.f32 %v11127, %v11128
    %v11130 = vrot.slane %v11129, 1
    %v11131 = vadd.f32 %v11129, %v11130
    %v11132 = vadd.f32 %v10652, %v10656
    %v11133 = vadd.f32 %v11132, %v10660
    %v11134 = vadd.f32 %v11133, %v10664
    %v11135 = vrot.slane %v11134, 4
    %v11136 = vadd.f32 %v11134, %v11135
    %v11137 = vrot.slane %v11136, 2
    %v11138 = vadd.f32 %v11136, %v11137
    %v11139 = vrot.slane %v11138, 1
    %v11140 = vadd.f32 %v11138, %v11139
    %v11141 = vadd.f32 %v10665, %v10669
    %v11142 = vadd.f32 %v11141, %v10673
    %v11143 = vadd.f32 %v11142, %v10677
    %v11144 = vrot.slane %v11143, 4
    %v11145 = vadd.f32 %v11143, %v11144
    %v11146 = vrot.slane %v11145, 2
    %v11147 = vadd.f32 %v11145, %v11146
    %v11148 = vrot.slane %v11147, 1
    %v11149 = vadd.f32 %v11147, %v11148
    %v11150 = vadd.f32 %v10666, %v10670
    %v11151 = vadd.f32 %v11150, %v10674
    %v11152 = vadd.f32 %v11151, %v10678
    %v11153 = vrot.slane %v11152, 4
    %v11154 = vadd.f32 %v11152, %v11153
    %v11155 = vrot.slane %v11154, 2
    %v11156 = vadd.f32 %v11154, %v11155
    %v11157 = vrot.slane %v11156, 1
    %v11158 = vadd.f32 %v11156, %v11157
    %v11159 = vadd.f32 %v10667, %v10671
    %v11160 = vadd.f32 %v11159, %v10675
    %v11161 = vadd.f32 %v11160, %v10679
    %v11162 = vrot.slane %v11161, 4
    %v11163 = vadd.f32 %v11161, %v11162
    %v11164 = vrot.slane %v11163, 2
    %v11165 = vadd.f32 %v11163, %v11164
    %v11166 = vrot.slane %v11165, 1
    %v11167 = vadd.f32 %v11165, %v11166
    %v11168 = vadd.f32 %v10668, %v10672
    %v11169 = vadd.f32 %v11168, %v10676
    %v11170 = vadd.f32 %v11169, %v10680
    %v11171 = vrot.slane %v11170, 4
    %v11172 = vadd.f32 %v11170, %v11171
    %v11173 = vrot.slane %v11172, 2
    %v11174 = vadd.f32 %v11172, %v11173
    %v11175 = vrot.slane %v11174, 1
    %v11176 = vadd.f32 %v11174, %v11175
    %v11177 = vadd.f32 %v10681, %v10685
    %v11178 = vadd.f32 %v11177, %v10689
    %v11179 = vadd.f32 %v11178, %v10693
    %v11180 = vrot.slane %v11179, 4
    %v11181 = vadd.f32 %v11179, %v11180
    %v11182 = vrot.slane %v11181, 2
    %v11183 = vadd.f32 %v11181, %v11182
    %v11184 = vrot.slane %v11183, 1
    %v11185 = vadd.f32 %v11183, %v11184
    %v11186 = vadd.f32 %v10682, %v10686
    %v11187 = vadd.f32 %v11186, %v10690
    %v11188 = vadd.f32 %v11187, %v10694
    %v11189 = vrot.slane %v11188, 4
    %v11190 = vadd.f32 %v11188, %v11189
    %v11191 = vrot.slane %v11190, 2
    %v11192 = vadd.f32 %v11190, %v11191
    %v11193 = vrot.slane %v11192, 1
    %v11194 = vadd.f32 %v11192, %v11193
    %v11195 = vadd.f32 %v10683, %v10687
    %v11196 = vadd.f32 %v11195, %v10691
    %v11197 = vadd.f32 %v11196, %v10695
    %v11198 = vrot.slane %v11197, 4
    %v11199 = vadd.f32 %v11197, %v11198
    %v11200 = vrot.slane %v11199, 2
    %v11201 = vadd.f32 %v11199, %v11200
    %v11202 = vrot.slane %v11201, 1
    %v11203 = vadd.f32 %v11201, %v11202
    %v11204 = vadd.f32 %v10684, %v10688
    %v11205 = vadd.f32 %v11204, %v10692
    %v11206 = vadd.f32 %v11205, %v10696
    %v11207 = vrot.slane %v11206, 4
    %v11208 = vadd.f32 %v11206, %v11207
    %v11209 = vrot.slane %v11208, 2
    %v11210 = vadd.f32 %v11208, %v11209
    %v11211 = vrot.slane %v11210, 1
    %v11212 = vadd.f32 %v11210, %v11211
    %v11213 = vadd.f32 %v10697, %v10701
    %v11214 = vadd.f32 %v11213, %v10705
    %v11215 = vadd.f32 %v11214, %v10709
    %v11216 = vrot.slane %v11215, 4
    %v11217 = vadd.f32 %v11215, %v11216
    %v11218 = vrot.slane %v11217, 2
    %v11219 = vadd.f32 %v11217, %v11218
    %v11220 = vrot.slane %v11219, 1
    %v11221 = vadd.f32 %v11219, %v11220
    %v11222 = vadd.f32 %v10698, %v10702
    %v11223 = vadd.f32 %v11222, %v10706
    %v11224 = vadd.f32 %v11223, %v10710
    %v11225 = vrot.slane %v11224, 4
    %v11226 = vadd.f32 %v11224, %v11225
    %v11227 = vrot.slane %v11226, 2
    %v11228 = vadd.f32 %v11226, %v11227
    %v11229 = vrot.slane %v11228, 1
    %v11230 = vadd.f32 %v11228, %v11229
    %v11231 = vadd.f32 %v10699, %v10703
    %v11232 = vadd.f32 %v11231, %v10707
    %v11233 = vadd.f32 %v11232, %v10711
    %v11234 = vrot.slane %v11233, 4
    %v11235 = vadd.f32 %v11233, %v11234
    %v11236 = vrot.slane %v11235, 2
    %v11237 = vadd.f32 %v11235, %v11236
    %v11238 = vrot.slane %v11237, 1
    %v11239 = vadd.f32 %v11237, %v11238
    %v11240 = vadd.f32 %v10700, %v10704
    %v11241 = vadd.f32 %v11240, %v10708
    %v11242 = vadd.f32 %v11241, %v10712
    %v11243 = vrot.slane %v11242, 4
    %v11244 = vadd.f32 %v11242, %v11243
    %v11245 = vrot.slane %v11244, 2
    %v11246 = vadd.f32 %v11244, %v11245
    %v11247 = vrot.slane %v11246, 1
    %v11248 = vadd.f32 %v11246, %v11247
    %v11249 = vadd.f32 %v10713, %v10717
    %v11250 = vadd.f32 %v11249, %v10721
    %v11251 = vadd.f32 %v11250, %v10725
    %v11252 = vrot.slane %v11251, 4
    %v11253 = vadd.f32 %v11251, %v11252
    %v11254 = vrot.slane %v11253, 2
    %v11255 = vadd.f32 %v11253, %v11254
    %v11256 = vrot.slane %v11255, 1
    %v11257 = vadd.f32 %v11255, %v11256
    %v11258 = vadd.f32 %v10714, %v10718
    %v11259 = vadd.f32 %v11258, %v10722
    %v11260 = vadd.f32 %v11259, %v10726
    %v11261 = vrot.slane %v11260, 4
    %v11262 = vadd.f32 %v11260, %v11261
    %v11263 = vrot.slane %v11262, 2
    %v11264 = vadd.f32 %v11262, %v11263
    %v11265 = vrot.slane %v11264, 1
    %v11266 = vadd.f32 %v11264, %v11265
    %v11267 = vadd.f32 %v10715, %v10719
    %v11268 = vadd.f32 %v11267, %v10723
    %v11269 = vadd.f32 %v11268, %v10727
    %v11270 = vrot.slane %v11269, 4
    %v11271 = vadd.f32 %v11269, %v11270
    %v11272 = vrot.slane %v11271, 2
    %v11273 = vadd.f32 %v11271, %v11272
    %v11274 = vrot.slane %v11273, 1
    %v11275 = vadd.f32 %v11273, %v11274
    %v11276 = vadd.f32 %v10716, %v10720
    %v11277 = vadd.f32 %v11276, %v10724
    %v11278 = vadd.f32 %v11277, %v10728
    %v11279 = vrot.slane %v11278, 4
    %v11280 = vadd.f32 %v11278, %v11279
    %v11281 = vrot.slane %v11280, 2
    %v11282 = vadd.f32 %v11280, %v11281
    %v11283 = vrot.slane %v11282, 1
    %v11284 = vadd.f32 %v11282, %v11283
    %v11285 = vadd.f32 %v10729, %v10733
    %v11286 = vadd.f32 %v11285, %v10737
    %v11287 = vadd.f32 %v11286, %v10741
    %v11288 = vrot.slane %v11287, 4
    %v11289 = vadd.f32 %v11287, %v11288
    %v11290 = vrot.slane %v11289, 2
    %v11291 = vadd.f32 %v11289, %v11290
    %v11292 = vrot.slane %v11291, 1
    %v11293 = vadd.f32 %v11291, %v11292
    %v11294 = vadd.f32 %v10730, %v10734
    %v11295 = vadd.f32 %v11294, %v10738
    %v11296 = vadd.f32 %v11295, %v10742
    %v11297 = vrot.slane %v11296, 4
    %v11298 = vadd.f32 %v11296, %v11297
    %v11299 = vrot.slane %v11298, 2
    %v11300 = vadd.f32 %v11298, %v11299
    %v11301 = vrot.slane %v11300, 1
    %v11302 = vadd.f32 %v11300, %v11301
    %v11303 = vadd.f32 %v10731, %v10735
    %v11304 = vadd.f32 %v11303, %v10739
    %v11305 = vadd.f32 %v11304, %v10743
    %v11306 = vrot.slane %v11305, 4
    %v11307 = vadd.f32 %v11305, %v11306
    %v11308 = vrot.slane %v11307, 2
    %v11309 = vadd.f32 %v11307, %v11308
    %v11310 = vrot.slane %v11309, 1
    %v11311 = vadd.f32 %v11309, %v11310
    %v11312 = vadd.f32 %v10732, %v10736
    %v11313 = vadd.f32 %v11312, %v10740
    %v11314 = vadd.f32 %v11313, %v10744
    %v11315 = vrot.slane %v11314, 4
    %v11316 = vadd.f32 %v11314, %v11315
    %v11317 = vrot.slane %v11316, 2
    %v11318 = vadd.f32 %v11316, %v11317
    %v11319 = vrot.slane %v11318, 1
    %v11320 = vadd.f32 %v11318, %v11319
    %v11321 = vpack.c.bf16 %v10753, %v10753
    %v11322 = vpack.c.bf16 %v10762, %v10762
    %v11323 = vpack.c.bf16 %v10771, %v10771
    %v11324 = vpack.c.bf16 %v10780, %v10780
    %v11325 = vpack.c.bf16 %v10789, %v10789
    %v11326 = vpack.c.bf16 %v10798, %v10798
    %v11327 = vpack.c.bf16 %v10807, %v10807
    %v11328 = vpack.c.bf16 %v10816, %v10816
    %v11329 = vpack.c.bf16 %v10825, %v10825
    %v11330 = vpack.c.bf16 %v10834, %v10834
    %v11331 = vpack.c.bf16 %v10843, %v10843
    %v11332 = vpack.c.bf16 %v10852, %v10852
    %v11333 = vpack.c.bf16 %v10861, %v10861
    %v11334 = vpack.c.bf16 %v10870, %v10870
    %v11335 = vpack.c.bf16 %v10879, %v10879
    %v11336 = vpack.c.bf16 %v10888, %v10888
    %v11337 = vpack.c.bf16 %v10897, %v10897
    %v11338 = vpack.c.bf16 %v10906, %v10906
    %v11339 = vpack.c.bf16 %v10915, %v10915
    %v11340 = vpack.c.bf16 %v10924, %v10924
    %v11341 = vpack.c.bf16 %v10933, %v10933
    %v11342 = vpack.c.bf16 %v10942, %v10942
    %v11343 = vpack.c.bf16 %v10951, %v10951
    %v11344 = vpack.c.bf16 %v10960, %v10960
    %v11345 = vpack.c.bf16 %v10969, %v10969
    %v11346 = vpack.c.bf16 %v10978, %v10978
    %v11347 = vpack.c.bf16 %v10987, %v10987
    %v11348 = vpack.c.bf16 %v10996, %v10996
    %v11349 = vpack.c.bf16 %v11005, %v11005
    %v11350 = vpack.c.bf16 %v11014, %v11014
    %v11351 = vpack.c.bf16 %v11023, %v11023
    %v11352 = vpack.c.bf16 %v11032, %v11032
    %v11353 = vpack.c.bf16 %v11041, %v11041
    %v11354 = vpack.c.bf16 %v11050, %v11050
    %v11355 = vpack.c.bf16 %v11059, %v11059
    %v11356 = vpack.c.bf16 %v11068, %v11068
    %v11357 = vpack.c.bf16 %v11077, %v11077
    %v11358 = vpack.c.bf16 %v11086, %v11086
    %v11359 = vpack.c.bf16 %v11095, %v11095
    %v11360 = vpack.c.bf16 %v11104, %v11104
    %v11361 = vpack.c.bf16 %v11113, %v11113
    %v11362 = vpack.c.bf16 %v11122, %v11122
    %v11363 = vpack.c.bf16 %v11131, %v11131
    %v11364 = vpack.c.bf16 %v11140, %v11140
    %v11365 = vpack.c.bf16 %v11149, %v11149
    %v11366 = vpack.c.bf16 %v11158, %v11158
    %v11367 = vpack.c.bf16 %v11167, %v11167
    %v11368 = vpack.c.bf16 %v11176, %v11176
    %v11369 = vpack.c.bf16 %v11185, %v11185
    %v11370 = vpack.c.bf16 %v11194, %v11194
    %v11371 = vpack.c.bf16 %v11203, %v11203
    %v11372 = vpack.c.bf16 %v11212, %v11212
    %v11373 = vpack.c.bf16 %v11221, %v11221
    %v11374 = vpack.c.bf16 %v11230, %v11230
    %v11375 = vpack.c.bf16 %v11239, %v11239
    %v11376 = vpack.c.bf16 %v11248, %v11248
    %v11377 = vpack.c.bf16 %v11257, %v11257
    %v11378 = vpack.c.bf16 %v11266, %v11266
    %v11379 = vpack.c.bf16 %v11275, %v11275
    %v11380 = vpack.c.bf16 %v11284, %v11284
    %v11381 = vpack.c.bf16 %v11293, %v11293
    %v11382 = vpack.c.bf16 %v11302, %v11302
    %v11383 = vpack.c.bf16 %v11311, %v11311
    %v11384 = vpack.c.bf16 %v11320, %v11320
    %v11385 = vld [vmem:[#allocation13] sm:$0xff]
    %v11386 = vld [vmem:[#allocation13 + $0x8] sm:$0xff]
    %v11387 = vld [vmem:[#allocation13 + $0x10] sm:$0xff]
    %v11388 = vld [vmem:[#allocation13 + $0x18] sm:$0xff]
    %v11389 = vld [vmem:[#allocation13 + $0x20] sm:$0xff]
    %v11390 = vld [vmem:[#allocation13 + $0x28] sm:$0xff]
    %v11391 = vld [vmem:[#allocation13 + $0x30] sm:$0xff]
    %v11392 = vld [vmem:[#allocation13 + $0x38] sm:$0xff]
    %v11393 = vld [vmem:[#allocation13 + $0x40] sm:$0xff]
    %v11394 = vld [vmem:[#allocation13 + $0x48] sm:$0xff]
    %v11395 = vld [vmem:[#allocation13 + $0x50] sm:$0xff]
    %v11396 = vld [vmem:[#allocation13 + $0x58] sm:$0xff]
    %v11397 = vld [vmem:[#allocation13 + $0x60] sm:$0xff]
    %v11398 = vld [vmem:[#allocation13 + $0x68] sm:$0xff]
    %v11399 = vld [vmem:[#allocation13 + $0x70] sm:$0xff]
    %v11400 = vld [vmem:[#allocation13 + $0x78] sm:$0xff]
    %v11401 = vld [vmem:[#allocation13 + $0x80] sm:$0xff]
    %v11402 = vld [vmem:[#allocation13 + $0x88] sm:$0xff]
    %v11403 = vld [vmem:[#allocation13 + $0x90] sm:$0xff]
    %v11404 = vld [vmem:[#allocation13 + $0x98] sm:$0xff]
    %v11405 = vld [vmem:[#allocation13 + $0xa0] sm:$0xff]
    %v11406 = vld [vmem:[#allocation13 + $0xa8] sm:$0xff]
    %v11407 = vld [vmem:[#allocation13 + $0xb0] sm:$0xff]
    %v11408 = vld [vmem:[#allocation13 + $0xb8] sm:$0xff]
    %v11409 = vld [vmem:[#allocation13 + $0xc0] sm:$0xff]
    %v11410 = vld [vmem:[#allocation13 + $0xc8] sm:$0xff]
    %v11411 = vld [vmem:[#allocation13 + $0xd0] sm:$0xff]
    %v11412 = vld [vmem:[#allocation13 + $0xd8] sm:$0xff]
    %v11413 = vld [vmem:[#allocation13 + $0xe0] sm:$0xff]
    %v11414 = vld [vmem:[#allocation13 + $0xe8] sm:$0xff]
    %v11415 = vld [vmem:[#allocation13 + $0xf0] sm:$0xff]
    %v11416 = vld [vmem:[#allocation13 + $0xf8] sm:$0xff]
    %v11417 = vld [vmem:[#allocation13 + $0x100] sm:$0xff]
    %v11418 = vld [vmem:[#allocation13 + $0x108] sm:$0xff]
    %v11419 = vld [vmem:[#allocation13 + $0x110] sm:$0xff]
    %v11420 = vld [vmem:[#allocation13 + $0x118] sm:$0xff]
    %v11421 = vld [vmem:[#allocation13 + $0x120] sm:$0xff]
    %v11422 = vld [vmem:[#allocation13 + $0x128] sm:$0xff]
    %v11423 = vld [vmem:[#allocation13 + $0x130] sm:$0xff]
    %v11424 = vld [vmem:[#allocation13 + $0x138] sm:$0xff]
    %v11425 = vld [vmem:[#allocation13 + $0x140] sm:$0xff]
    %v11426 = vld [vmem:[#allocation13 + $0x148] sm:$0xff]
    %v11427 = vld [vmem:[#allocation13 + $0x150] sm:$0xff]
    %v11428 = vld [vmem:[#allocation13 + $0x158] sm:$0xff]
    %v11429 = vld [vmem:[#allocation13 + $0x160] sm:$0xff]
    %v11430 = vld [vmem:[#allocation13 + $0x168] sm:$0xff]
    %v11431 = vld [vmem:[#allocation13 + $0x170] sm:$0xff]
    %v11432 = vld [vmem:[#allocation13 + $0x178] sm:$0xff]
    %v11433 = vld [vmem:[#allocation13 + $0x180] sm:$0xff]
    %v11434 = vld [vmem:[#allocation13 + $0x188] sm:$0xff]
    %v11435 = vld [vmem:[#allocation13 + $0x190] sm:$0xff]
    %v11436 = vld [vmem:[#allocation13 + $0x198] sm:$0xff]
    %v11437 = vld [vmem:[#allocation13 + $0x1a0] sm:$0xff]
    %v11438 = vld [vmem:[#allocation13 + $0x1a8] sm:$0xff]
    %v11439 = vld [vmem:[#allocation13 + $0x1b0] sm:$0xff]
    %v11440 = vld [vmem:[#allocation13 + $0x1b8] sm:$0xff]
    %v11441 = vld [vmem:[#allocation13 + $0x1c0] sm:$0xff]
    %v11442 = vld [vmem:[#allocation13 + $0x1c8] sm:$0xff]
    %v11443 = vld [vmem:[#allocation13 + $0x1d0] sm:$0xff]
    %v11444 = vld [vmem:[#allocation13 + $0x1d8] sm:$0xff]
    %v11445 = vld [vmem:[#allocation13 + $0x1e0] sm:$0xff]
    %v11446 = vld [vmem:[#allocation13 + $0x1e8] sm:$0xff]
    %v11447 = vld [vmem:[#allocation13 + $0x1f0] sm:$0xff]
    %v11448 = vld [vmem:[#allocation13 + $0x1f8] sm:$0xff]
    %v11449 = vld [vmem:[#allocation13 + $0x200] sm:$0xff]
    %v11450 = vld [vmem:[#allocation13 + $0x208] sm:$0xff]
    %v11451 = vld [vmem:[#allocation13 + $0x210] sm:$0xff]
    %v11452 = vld [vmem:[#allocation13 + $0x218] sm:$0xff]
    %v11453 = vld [vmem:[#allocation13 + $0x220] sm:$0xff]
    %v11454 = vld [vmem:[#allocation13 + $0x228] sm:$0xff]
    %v11455 = vld [vmem:[#allocation13 + $0x230] sm:$0xff]
    %v11456 = vld [vmem:[#allocation13 + $0x238] sm:$0xff]
    %v11457 = vld [vmem:[#allocation13 + $0x240] sm:$0xff]
    %v11458 = vld [vmem:[#allocation13 + $0x248] sm:$0xff]
    %v11459 = vld [vmem:[#allocation13 + $0x250] sm:$0xff]
    %v11460 = vld [vmem:[#allocation13 + $0x258] sm:$0xff]
    %v11461 = vld [vmem:[#allocation13 + $0x260] sm:$0xff]
    %v11462 = vld [vmem:[#allocation13 + $0x268] sm:$0xff]
    %v11463 = vld [vmem:[#allocation13 + $0x270] sm:$0xff]
    %v11464 = vld [vmem:[#allocation13 + $0x278] sm:$0xff]
    %v11465 = vld [vmem:[#allocation13 + $0x280] sm:$0xff]
    %v11466 = vld [vmem:[#allocation13 + $0x288] sm:$0xff]
    %v11467 = vld [vmem:[#allocation13 + $0x290] sm:$0xff]
    %v11468 = vld [vmem:[#allocation13 + $0x298] sm:$0xff]
    %v11469 = vld [vmem:[#allocation13 + $0x2a0] sm:$0xff]
    %v11470 = vld [vmem:[#allocation13 + $0x2a8] sm:$0xff]
    %v11471 = vld [vmem:[#allocation13 + $0x2b0] sm:$0xff]
    %v11472 = vld [vmem:[#allocation13 + $0x2b8] sm:$0xff]
    %v11473 = vld [vmem:[#allocation13 + $0x2c0] sm:$0xff]
    %v11474 = vld [vmem:[#allocation13 + $0x2c8] sm:$0xff]
    %v11475 = vld [vmem:[#allocation13 + $0x2d0] sm:$0xff]
    %v11476 = vld [vmem:[#allocation13 + $0x2d8] sm:$0xff]
    %v11477 = vld [vmem:[#allocation13 + $0x2e0] sm:$0xff]
    %v11478 = vld [vmem:[#allocation13 + $0x2e8] sm:$0xff]
    %v11479 = vld [vmem:[#allocation13 + $0x2f0] sm:$0xff]
    %v11480 = vld [vmem:[#allocation13 + $0x2f8] sm:$0xff]
    %v11481 = vld [vmem:[#allocation13 + $0x300] sm:$0xff]
    %v11482 = vld [vmem:[#allocation13 + $0x308] sm:$0xff]
    %v11483 = vld [vmem:[#allocation13 + $0x310] sm:$0xff]
    %v11484 = vld [vmem:[#allocation13 + $0x318] sm:$0xff]
    %v11485 = vld [vmem:[#allocation13 + $0x320] sm:$0xff]
    %v11486 = vld [vmem:[#allocation13 + $0x328] sm:$0xff]
    %v11487 = vld [vmem:[#allocation13 + $0x330] sm:$0xff]
    %v11488 = vld [vmem:[#allocation13 + $0x338] sm:$0xff]
    %v11489 = vld [vmem:[#allocation13 + $0x340] sm:$0xff]
    %v11490 = vld [vmem:[#allocation13 + $0x348] sm:$0xff]
    %v11491 = vld [vmem:[#allocation13 + $0x350] sm:$0xff]
    %v11492 = vld [vmem:[#allocation13 + $0x358] sm:$0xff]
    %v11493 = vld [vmem:[#allocation13 + $0x360] sm:$0xff]
    %v11494 = vld [vmem:[#allocation13 + $0x368] sm:$0xff]
    %v11495 = vld [vmem:[#allocation13 + $0x370] sm:$0xff]
    %v11496 = vld [vmem:[#allocation13 + $0x378] sm:$0xff]
    %v11497 = vld [vmem:[#allocation13 + $0x380] sm:$0xff]
    %v11498 = vld [vmem:[#allocation13 + $0x388] sm:$0xff]
    %v11499 = vld [vmem:[#allocation13 + $0x390] sm:$0xff]
    %v11500 = vld [vmem:[#allocation13 + $0x398] sm:$0xff]
    %v11501 = vld [vmem:[#allocation13 + $0x3a0] sm:$0xff]
    %v11502 = vld [vmem:[#allocation13 + $0x3a8] sm:$0xff]
    %v11503 = vld [vmem:[#allocation13 + $0x3b0] sm:$0xff]
    %v11504 = vld [vmem:[#allocation13 + $0x3b8] sm:$0xff]
    %v11505 = vld [vmem:[#allocation13 + $0x3c0] sm:$0xff]
    %v11506 = vld [vmem:[#allocation13 + $0x3c8] sm:$0xff]
    %v11507 = vld [vmem:[#allocation13 + $0x3d0] sm:$0xff]
    %v11508 = vld [vmem:[#allocation13 + $0x3d8] sm:$0xff]
    %v11509 = vld [vmem:[#allocation13 + $0x3e0] sm:$0xff]
    %v11510 = vld [vmem:[#allocation13 + $0x3e8] sm:$0xff]
    %v11511 = vld [vmem:[#allocation13 + $0x3f0] sm:$0xff]
    %v11512 = vld [vmem:[#allocation13 + $0x3f8] sm:$0xff]
    %v11513 = vld [vmem:[%s15] sm:$0xf]
    %v11515 = vlaneseq
    %v11516 = vshrl.u32 %v11515, 7
    %v11517 = vsub.s32 0, %v11516
    %v11518 = vrot.slane %v11513, %v11517
    %v11519 = vlaneseq
    %v11520 = vshrl.u32 %v11519, 7
    %v11521 = vsub.s32 1, %v11520
    %v11522 = vrot.slane %v11513, %v11521
    %v11523 = vlaneseq
    %v11524 = vshrl.u32 %v11523, 7
    %v11525 = vsub.s32 2, %v11524
    %v11526 = vrot.slane %v11513, %v11525
    %v11527 = vlaneseq
    %v11528 = vshrl.u32 %v11527, 7
    %v11529 = vsub.s32 3, %v11528
    %v11530 = vrot.slane %v11513, %v11529
    %v11599 = vunpack.c.l.b16 %v11321
    %v11600 = vunpack.c.l.b16 %v11322
    %v11601 = vunpack.c.l.b16 %v11323
    %v11602 = vunpack.c.l.b16 %v11324
    %v11603 = vunpack.c.l.b16 %v11325
    %v11604 = vunpack.c.l.b16 %v11326
    %v11605 = vunpack.c.l.b16 %v11327
    %v11606 = vunpack.c.l.b16 %v11328
    %v11607 = vunpack.c.l.b16 %v11329
    %v11608 = vunpack.c.l.b16 %v11330
    %v11609 = vunpack.c.l.b16 %v11331
    %v11610 = vunpack.c.l.b16 %v11332
    %v11611 = vunpack.c.l.b16 %v11333
    %v11612 = vunpack.c.l.b16 %v11334
    %v11613 = vunpack.c.l.b16 %v11335
    %v11614 = vunpack.c.l.b16 %v11336
    %v11615 = vunpack.c.l.b16 %v11337
    %v11616 = vunpack.c.l.b16 %v11338
    %v11617 = vunpack.c.l.b16 %v11339
    %v11618 = vunpack.c.l.b16 %v11340
    %v11619 = vunpack.c.l.b16 %v11341
    %v11620 = vunpack.c.l.b16 %v11342
    %v11621 = vunpack.c.l.b16 %v11343
    %v11622 = vunpack.c.l.b16 %v11344
    %v11623 = vunpack.c.l.b16 %v11345
    %v11624 = vunpack.c.l.b16 %v11346
    %v11625 = vunpack.c.l.b16 %v11347
    %v11626 = vunpack.c.l.b16 %v11348
    %v11627 = vunpack.c.l.b16 %v11349
    %v11628 = vunpack.c.l.b16 %v11350
    %v11629 = vunpack.c.l.b16 %v11351
    %v11630 = vunpack.c.l.b16 %v11352
    %v11631 = vunpack.c.l.b16 %v11353
    %v11632 = vunpack.c.l.b16 %v11354
    %v11633 = vunpack.c.l.b16 %v11355
    %v11634 = vunpack.c.l.b16 %v11356
    %v11635 = vunpack.c.l.b16 %v11357
    %v11636 = vunpack.c.l.b16 %v11358
    %v11637 = vunpack.c.l.b16 %v11359
    %v11638 = vunpack.c.l.b16 %v11360
    %v11639 = vunpack.c.l.b16 %v11361
    %v11640 = vunpack.c.l.b16 %v11362
    %v11641 = vunpack.c.l.b16 %v11363
    %v11642 = vunpack.c.l.b16 %v11364
    %v11643 = vunpack.c.l.b16 %v11365
    %v11644 = vunpack.c.l.b16 %v11366
    %v11645 = vunpack.c.l.b16 %v11367
    %v11646 = vunpack.c.l.b16 %v11368
    %v11647 = vunpack.c.l.b16 %v11369
    %v11648 = vunpack.c.l.b16 %v11370
    %v11649 = vunpack.c.l.b16 %v11371
    %v11650 = vunpack.c.l.b16 %v11372
    %v11651 = vunpack.c.l.b16 %v11373
    %v11652 = vunpack.c.l.b16 %v11374
    %v11653 = vunpack.c.l.b16 %v11375
    %v11654 = vunpack.c.l.b16 %v11376
    %v11655 = vunpack.c.l.b16 %v11377
    %v11656 = vunpack.c.l.b16 %v11378
    %v11657 = vunpack.c.l.b16 %v11379
    %v11658 = vunpack.c.l.b16 %v11380
    %v11659 = vunpack.c.l.b16 %v11381
    %v11660 = vunpack.c.l.b16 %v11382
    %v11661 = vunpack.c.l.b16 %v11383
    %v11662 = vunpack.c.l.b16 %v11384
    %v11663 = vsel %vm3183, %v11603, %v11599
    %v11664 = vsel %vm3185, %v11607, %v11663
    %v11665 = vsel %vm3187, %v11611, %v11664
    %v11666 = vsel %vm3189, %v11615, %v11665
    %v11667 = vsel %vm3191, %v11619, %v11666
    %v11668 = vsel %vm3193, %v11623, %v11667
    %v11669 = vsel %vm3195, %v11627, %v11668
    %v11670 = vsel %vm3183, %v11604, %v11600
    %v11671 = vsel %vm3185, %v11608, %v11670
    %v11672 = vsel %vm3187, %v11612, %v11671
    %v11673 = vsel %vm3189, %v11616, %v11672
    %v11674 = vsel %vm3191, %v11620, %v11673
    %v11675 = vsel %vm3193, %v11624, %v11674
    %v11676 = vsel %vm3195, %v11628, %v11675
    %v11677 = vsel %vm3183, %v11605, %v11601
    %v11678 = vsel %vm3185, %v11609, %v11677
    %v11679 = vsel %vm3187, %v11613, %v11678
    %v11680 = vsel %vm3189, %v11617, %v11679
    %v11681 = vsel %vm3191, %v11621, %v11680
    %v11682 = vsel %vm3193, %v11625, %v11681
    %v11683 = vsel %vm3195, %v11629, %v11682
    %v11684 = vsel %vm3183, %v11606, %v11602
    %v11685 = vsel %vm3185, %v11610, %v11684
    %v11686 = vsel %vm3187, %v11614, %v11685
    %v11687 = vsel %vm3189, %v11618, %v11686
    %v11688 = vsel %vm3191, %v11622, %v11687
    %v11689 = vsel %vm3193, %v11626, %v11688
    %v11690 = vsel %vm3195, %v11630, %v11689
    %v11691 = vsel %vm3183, %v11635, %v11631
    %v11692 = vsel %vm3185, %v11639, %v11691
    %v11693 = vsel %vm3187, %v11643, %v11692
    %v11694 = vsel %vm3189, %v11647, %v11693
    %v11695 = vsel %vm3191, %v11651, %v11694
    %v11696 = vsel %vm3193, %v11655, %v11695
    %v11697 = vsel %vm3195, %v11659, %v11696
    %v11698 = vsel %vm3183, %v11636, %v11632
    %v11699 = vsel %vm3185, %v11640, %v11698
    %v11700 = vsel %vm3187, %v11644, %v11699
    %v11701 = vsel %vm3189, %v11648, %v11700
    %v11702 = vsel %vm3191, %v11652, %v11701
    %v11703 = vsel %vm3193, %v11656, %v11702
    %v11704 = vsel %vm3195, %v11660, %v11703
    %v11705 = vsel %vm3183, %v11637, %v11633
    %v11706 = vsel %vm3185, %v11641, %v11705
    %v11707 = vsel %vm3187, %v11645, %v11706
    %v11708 = vsel %vm3189, %v11649, %v11707
    %v11709 = vsel %vm3191, %v11653, %v11708
    %v11710 = vsel %vm3193, %v11657, %v11709
    %v11711 = vsel %vm3195, %v11661, %v11710
    %v11712 = vsel %vm3183, %v11638, %v11634
    %v11713 = vsel %vm3185, %v11642, %v11712
    %v11714 = vsel %vm3187, %v11646, %v11713
    %v11715 = vsel %vm3189, %v11650, %v11714
    %v11716 = vsel %vm3191, %v11654, %v11715
    %v11717 = vsel %vm3193, %v11658, %v11716
    %v11718 = vsel %vm3195, %v11662, %v11717
    %v11719 = vpack.c.b16 %v11697, %v11669
    %v11720 = vpack.c.b16 %v11704, %v11676
    %v11721 = vpack.c.b16 %v11711, %v11683
    %v11722 = vpack.c.b16 %v11718, %v11690
    %v11855 = vunpack.c.l.b16 %v11385
    %v11856 = vunpack.c.h.b16 %v11385
    %v11857 = vunpack.c.l.b16 %v11386
    %v11858 = vunpack.c.h.b16 %v11386
    %v11859 = vunpack.c.l.b16 %v11387
    %v11860 = vunpack.c.h.b16 %v11387
    %v11861 = vunpack.c.l.b16 %v11388
    %v11862 = vunpack.c.h.b16 %v11388
    %v11863 = vunpack.c.l.b16 %v11389
    %v11864 = vunpack.c.h.b16 %v11389
    %v11865 = vunpack.c.l.b16 %v11390
    %v11866 = vunpack.c.h.b16 %v11390
    %v11867 = vunpack.c.l.b16 %v11391
    %v11868 = vunpack.c.h.b16 %v11391
    %v11869 = vunpack.c.l.b16 %v11392
    %v11870 = vunpack.c.h.b16 %v11392
    %v11871 = vunpack.c.l.b16 %v11393
    %v11872 = vunpack.c.h.b16 %v11393
    %v11873 = vunpack.c.l.b16 %v11394
    %v11874 = vunpack.c.h.b16 %v11394
    %v11875 = vunpack.c.l.b16 %v11395
    %v11876 = vunpack.c.h.b16 %v11395
    %v11877 = vunpack.c.l.b16 %v11396
    %v11878 = vunpack.c.h.b16 %v11396
    %v11879 = vunpack.c.l.b16 %v11397
    %v11880 = vunpack.c.h.b16 %v11397
    %v11881 = vunpack.c.l.b16 %v11398
    %v11882 = vunpack.c.h.b16 %v11398
    %v11883 = vunpack.c.l.b16 %v11399
    %v11884 = vunpack.c.h.b16 %v11399
    %v11885 = vunpack.c.l.b16 %v11400
    %v11886 = vunpack.c.h.b16 %v11400
    %v11887 = vunpack.c.l.b16 %v11401
    %v11888 = vunpack.c.h.b16 %v11401
    %v11889 = vunpack.c.l.b16 %v11402
    %v11890 = vunpack.c.h.b16 %v11402
    %v11891 = vunpack.c.l.b16 %v11403
    %v11892 = vunpack.c.h.b16 %v11403
    %v11893 = vunpack.c.l.b16 %v11404
    %v11894 = vunpack.c.h.b16 %v11404
    %v11895 = vunpack.c.l.b16 %v11405
    %v11896 = vunpack.c.h.b16 %v11405
    %v11897 = vunpack.c.l.b16 %v11406
    %v11898 = vunpack.c.h.b16 %v11406
    %v11899 = vunpack.c.l.b16 %v11407
    %v11900 = vunpack.c.h.b16 %v11407
    %v11901 = vunpack.c.l.b16 %v11408
    %v11902 = vunpack.c.h.b16 %v11408
    %v11903 = vunpack.c.l.b16 %v11409
    %v11904 = vunpack.c.h.b16 %v11409
    %v11905 = vunpack.c.l.b16 %v11410
    %v11906 = vunpack.c.h.b16 %v11410
    %v11907 = vunpack.c.l.b16 %v11411
    %v11908 = vunpack.c.h.b16 %v11411
    %v11909 = vunpack.c.l.b16 %v11412
    %v11910 = vunpack.c.h.b16 %v11412
    %v11911 = vunpack.c.l.b16 %v11413
    %v11912 = vunpack.c.h.b16 %v11413
    %v11913 = vunpack.c.l.b16 %v11414
    %v11914 = vunpack.c.h.b16 %v11414
    %v11915 = vunpack.c.l.b16 %v11415
    %v11916 = vunpack.c.h.b16 %v11415
    %v11917 = vunpack.c.l.b16 %v11416
    %v11918 = vunpack.c.h.b16 %v11416
    %v11919 = vunpack.c.l.b16 %v11417
    %v11920 = vunpack.c.h.b16 %v11417
    %v11921 = vunpack.c.l.b16 %v11418
    %v11922 = vunpack.c.h.b16 %v11418
    %v11923 = vunpack.c.l.b16 %v11419
    %v11924 = vunpack.c.h.b16 %v11419
    %v11925 = vunpack.c.l.b16 %v11420
    %v11926 = vunpack.c.h.b16 %v11420
    %v11927 = vunpack.c.l.b16 %v11421
    %v11928 = vunpack.c.h.b16 %v11421
    %v11929 = vunpack.c.l.b16 %v11422
    %v11930 = vunpack.c.h.b16 %v11422
    %v11931 = vunpack.c.l.b16 %v11423
    %v11932 = vunpack.c.h.b16 %v11423
    %v11933 = vunpack.c.l.b16 %v11424
    %v11934 = vunpack.c.h.b16 %v11424
    %v11935 = vunpack.c.l.b16 %v11425
    %v11936 = vunpack.c.h.b16 %v11425
    %v11937 = vunpack.c.l.b16 %v11426
    %v11938 = vunpack.c.h.b16 %v11426
    %v11939 = vunpack.c.l.b16 %v11427
    %v11940 = vunpack.c.h.b16 %v11427
    %v11941 = vunpack.c.l.b16 %v11428
    %v11942 = vunpack.c.h.b16 %v11428
    %v11943 = vunpack.c.l.b16 %v11429
    %v11944 = vunpack.c.h.b16 %v11429
    %v11945 = vunpack.c.l.b16 %v11430
    %v11946 = vunpack.c.h.b16 %v11430
    %v11947 = vunpack.c.l.b16 %v11431
    %v11948 = vunpack.c.h.b16 %v11431
    %v11949 = vunpack.c.l.b16 %v11432
    %v11950 = vunpack.c.h.b16 %v11432
    %v11951 = vunpack.c.l.b16 %v11433
    %v11952 = vunpack.c.h.b16 %v11433
    %v11953 = vunpack.c.l.b16 %v11434
    %v11954 = vunpack.c.h.b16 %v11434
    %v11955 = vunpack.c.l.b16 %v11435
    %v11956 = vunpack.c.h.b16 %v11435
    %v11957 = vunpack.c.l.b16 %v11436
    %v11958 = vunpack.c.h.b16 %v11436
    %v11959 = vunpack.c.l.b16 %v11437
    %v11960 = vunpack.c.h.b16 %v11437
    %v11961 = vunpack.c.l.b16 %v11438
    %v11962 = vunpack.c.h.b16 %v11438
    %v11963 = vunpack.c.l.b16 %v11439
    %v11964 = vunpack.c.h.b16 %v11439
    %v11965 = vunpack.c.l.b16 %v11440
    %v11966 = vunpack.c.h.b16 %v11440
    %v11967 = vunpack.c.l.b16 %v11441
    %v11968 = vunpack.c.h.b16 %v11441
    %v11969 = vunpack.c.l.b16 %v11442
    %v11970 = vunpack.c.h.b16 %v11442
    %v11971 = vunpack.c.l.b16 %v11443
    %v11972 = vunpack.c.h.b16 %v11443
    %v11973 = vunpack.c.l.b16 %v11444
    %v11974 = vunpack.c.h.b16 %v11444
    %v11975 = vunpack.c.l.b16 %v11445
    %v11976 = vunpack.c.h.b16 %v11445
    %v11977 = vunpack.c.l.b16 %v11446
    %v11978 = vunpack.c.h.b16 %v11446
    %v11979 = vunpack.c.l.b16 %v11447
    %v11980 = vunpack.c.h.b16 %v11447
    %v11981 = vunpack.c.l.b16 %v11448
    %v11982 = vunpack.c.h.b16 %v11448
    %v11983 = vunpack.c.l.b16 %v11449
    %v11984 = vunpack.c.h.b16 %v11449
    %v11985 = vunpack.c.l.b16 %v11450
    %v11986 = vunpack.c.h.b16 %v11450
    %v11987 = vunpack.c.l.b16 %v11451
    %v11988 = vunpack.c.h.b16 %v11451
    %v11989 = vunpack.c.l.b16 %v11452
    %v11990 = vunpack.c.h.b16 %v11452
    %v11991 = vunpack.c.l.b16 %v11453
    %v11992 = vunpack.c.h.b16 %v11453
    %v11993 = vunpack.c.l.b16 %v11454
    %v11994 = vunpack.c.h.b16 %v11454
    %v11995 = vunpack.c.l.b16 %v11455
    %v11996 = vunpack.c.h.b16 %v11455
    %v11997 = vunpack.c.l.b16 %v11456
    %v11998 = vunpack.c.h.b16 %v11456
    %v11999 = vunpack.c.l.b16 %v11457
    %v12000 = vunpack.c.h.b16 %v11457
    %v12001 = vunpack.c.l.b16 %v11458
    %v12002 = vunpack.c.h.b16 %v11458
    %v12003 = vunpack.c.l.b16 %v11459
    %v12004 = vunpack.c.h.b16 %v11459
    %v12005 = vunpack.c.l.b16 %v11460
    %v12006 = vunpack.c.h.b16 %v11460
    %v12007 = vunpack.c.l.b16 %v11461
    %v12008 = vunpack.c.h.b16 %v11461
    %v12009 = vunpack.c.l.b16 %v11462
    %v12010 = vunpack.c.h.b16 %v11462
    %v12011 = vunpack.c.l.b16 %v11463
    %v12012 = vunpack.c.h.b16 %v11463
    %v12013 = vunpack.c.l.b16 %v11464
    %v12014 = vunpack.c.h.b16 %v11464
    %v12015 = vunpack.c.l.b16 %v11465
    %v12016 = vunpack.c.h.b16 %v11465
    %v12017 = vunpack.c.l.b16 %v11466
    %v12018 = vunpack.c.h.b16 %v11466
    %v12019 = vunpack.c.l.b16 %v11467
    %v12020 = vunpack.c.h.b16 %v11467
    %v12021 = vunpack.c.l.b16 %v11468
    %v12022 = vunpack.c.h.b16 %v11468
    %v12023 = vunpack.c.l.b16 %v11469
    %v12024 = vunpack.c.h.b16 %v11469
    %v12025 = vunpack.c.l.b16 %v11470
    %v12026 = vunpack.c.h.b16 %v11470
    %v12027 = vunpack.c.l.b16 %v11471
    %v12028 = vunpack.c.h.b16 %v11471
    %v12029 = vunpack.c.l.b16 %v11472
    %v12030 = vunpack.c.h.b16 %v11472
    %v12031 = vunpack.c.l.b16 %v11473
    %v12032 = vunpack.c.h.b16 %v11473
    %v12033 = vunpack.c.l.b16 %v11474
    %v12034 = vunpack.c.h.b16 %v11474
    %v12035 = vunpack.c.l.b16 %v11475
    %v12036 = vunpack.c.h.b16 %v11475
    %v12037 = vunpack.c.l.b16 %v11476
    %v12038 = vunpack.c.h.b16 %v11476
    %v12039 = vunpack.c.l.b16 %v11477
    %v12040 = vunpack.c.h.b16 %v11477
    %v12041 = vunpack.c.l.b16 %v11478
    %v12042 = vunpack.c.h.b16 %v11478
    %v12043 = vunpack.c.l.b16 %v11479
    %v12044 = vunpack.c.h.b16 %v11479
    %v12045 = vunpack.c.l.b16 %v11480
    %v12046 = vunpack.c.h.b16 %v11480
    %v12047 = vunpack.c.l.b16 %v11481
    %v12048 = vunpack.c.h.b16 %v11481
    %v12049 = vunpack.c.l.b16 %v11482
    %v12050 = vunpack.c.h.b16 %v11482
    %v12051 = vunpack.c.l.b16 %v11483
    %v12052 = vunpack.c.h.b16 %v11483
    %v12053 = vunpack.c.l.b16 %v11484
    %v12054 = vunpack.c.h.b16 %v11484
    %v12055 = vunpack.c.l.b16 %v11485
    %v12056 = vunpack.c.h.b16 %v11485
    %v12057 = vunpack.c.l.b16 %v11486
    %v12058 = vunpack.c.h.b16 %v11486
    %v12059 = vunpack.c.l.b16 %v11487
    %v12060 = vunpack.c.h.b16 %v11487
    %v12061 = vunpack.c.l.b16 %v11488
    %v12062 = vunpack.c.h.b16 %v11488
    %v12063 = vunpack.c.l.b16 %v11489
    %v12064 = vunpack.c.h.b16 %v11489
    %v12065 = vunpack.c.l.b16 %v11490
    %v12066 = vunpack.c.h.b16 %v11490
    %v12067 = vunpack.c.l.b16 %v11491
    %v12068 = vunpack.c.h.b16 %v11491
    %v12069 = vunpack.c.l.b16 %v11492
    %v12070 = vunpack.c.h.b16 %v11492
    %v12071 = vunpack.c.l.b16 %v11493
    %v12072 = vunpack.c.h.b16 %v11493
    %v12073 = vunpack.c.l.b16 %v11494
    %v12074 = vunpack.c.h.b16 %v11494
    %v12075 = vunpack.c.l.b16 %v11495
    %v12076 = vunpack.c.h.b16 %v11495
    %v12077 = vunpack.c.l.b16 %v11496
    %v12078 = vunpack.c.h.b16 %v11496
    %v12079 = vunpack.c.l.b16 %v11497
    %v12080 = vunpack.c.h.b16 %v11497
    %v12081 = vunpack.c.l.b16 %v11498
    %v12082 = vunpack.c.h.b16 %v11498
    %v12083 = vunpack.c.l.b16 %v11499
    %v12084 = vunpack.c.h.b16 %v11499
    %v12085 = vunpack.c.l.b16 %v11500
    %v12086 = vunpack.c.h.b16 %v11500
    %v12087 = vunpack.c.l.b16 %v11501
    %v12088 = vunpack.c.h.b16 %v11501
    %v12089 = vunpack.c.l.b16 %v11502
    %v12090 = vunpack.c.h.b16 %v11502
    %v12091 = vunpack.c.l.b16 %v11503
    %v12092 = vunpack.c.h.b16 %v11503
    %v12093 = vunpack.c.l.b16 %v11504
    %v12094 = vunpack.c.h.b16 %v11504
    %v12095 = vunpack.c.l.b16 %v11505
    %v12096 = vunpack.c.h.b16 %v11505
    %v12097 = vunpack.c.l.b16 %v11506
    %v12098 = vunpack.c.h.b16 %v11506
    %v12099 = vunpack.c.l.b16 %v11507
    %v12100 = vunpack.c.h.b16 %v11507
    %v12101 = vunpack.c.l.b16 %v11508
    %v12102 = vunpack.c.h.b16 %v11508
    %v12103 = vunpack.c.l.b16 %v11509
    %v12104 = vunpack.c.h.b16 %v11509
    %v12105 = vunpack.c.l.b16 %v11510
    %v12106 = vunpack.c.h.b16 %v11510
    %v12107 = vunpack.c.l.b16 %v11511
    %v12108 = vunpack.c.h.b16 %v11511
    %v12109 = vunpack.c.l.b16 %v11512
    %v12110 = vunpack.c.h.b16 %v11512
    %v12111 = vpack.c.b16 %v11859, %v11855
    %v12112 = vpack.c.b16 %v11860, %v11856
    %v12113 = vpack.c.b16 %v11861, %v11857
    %v12114 = vpack.c.b16 %v11862, %v11858
    %v12115 = vpack.c.b16 %v11867, %v11863
    %v12116 = vpack.c.b16 %v11868, %v11864
    %v12117 = vpack.c.b16 %v11869, %v11865
    %v12118 = vpack.c.b16 %v11870, %v11866
    %v12119 = vpack.c.b16 %v11875, %v11871
    %v12120 = vpack.c.b16 %v11876, %v11872
    %v12121 = vpack.c.b16 %v11877, %v11873
    %v12122 = vpack.c.b16 %v11878, %v11874
    %v12123 = vpack.c.b16 %v11883, %v11879
    %v12124 = vpack.c.b16 %v11884, %v11880
    %v12125 = vpack.c.b16 %v11885, %v11881
    %v12126 = vpack.c.b16 %v11886, %v11882
    %v12127 = vpack.c.b16 %v11891, %v11887
    %v12128 = vpack.c.b16 %v11892, %v11888
    %v12129 = vpack.c.b16 %v11893, %v11889
    %v12130 = vpack.c.b16 %v11894, %v11890
    %v12131 = vpack.c.b16 %v11899, %v11895
    %v12132 = vpack.c.b16 %v11900, %v11896
    %v12133 = vpack.c.b16 %v11901, %v11897
    %v12134 = vpack.c.b16 %v11902, %v11898
    %v12135 = vpack.c.b16 %v11907, %v11903
    %v12136 = vpack.c.b16 %v11908, %v11904
    %v12137 = vpack.c.b16 %v11909, %v11905
    %v12138 = vpack.c.b16 %v11910, %v11906
    %v12139 = vpack.c.b16 %v11915, %v11911
    %v12140 = vpack.c.b16 %v11916, %v11912
    %v12141 = vpack.c.b16 %v11917, %v11913
    %v12142 = vpack.c.b16 %v11918, %v11914
    %v12143 = vpack.c.b16 %v11923, %v11919
    %v12144 = vpack.c.b16 %v11924, %v11920
    %v12145 = vpack.c.b16 %v11925, %v11921
    %v12146 = vpack.c.b16 %v11926, %v11922
    %v12147 = vpack.c.b16 %v11931, %v11927
    %v12148 = vpack.c.b16 %v11932, %v11928
    %v12149 = vpack.c.b16 %v11933, %v11929
    %v12150 = vpack.c.b16 %v11934, %v11930
    %v12151 = vpack.c.b16 %v11939, %v11935
    %v12152 = vpack.c.b16 %v11940, %v11936
    %v12153 = vpack.c.b16 %v11941, %v11937
    %v12154 = vpack.c.b16 %v11942, %v11938
    %v12155 = vpack.c.b16 %v11947, %v11943
    %v12156 = vpack.c.b16 %v11948, %v11944
    %v12157 = vpack.c.b16 %v11949, %v11945
    %v12158 = vpack.c.b16 %v11950, %v11946
    %v12159 = vpack.c.b16 %v11955, %v11951
    %v12160 = vpack.c.b16 %v11956, %v11952
    %v12161 = vpack.c.b16 %v11957, %v11953
    %v12162 = vpack.c.b16 %v11958, %v11954
    %v12163 = vpack.c.b16 %v11963, %v11959
    %v12164 = vpack.c.b16 %v11964, %v11960
    %v12165 = vpack.c.b16 %v11965, %v11961
    %v12166 = vpack.c.b16 %v11966, %v11962
    %v12167 = vpack.c.b16 %v11971, %v11967
    %v12168 = vpack.c.b16 %v11972, %v11968
    %v12169 = vpack.c.b16 %v11973, %v11969
    %v12170 = vpack.c.b16 %v11974, %v11970
    %v12171 = vpack.c.b16 %v11979, %v11975
    %v12172 = vpack.c.b16 %v11980, %v11976
    %v12173 = vpack.c.b16 %v11981, %v11977
    %v12174 = vpack.c.b16 %v11982, %v11978
    %v12175 = vpack.c.b16 %v11987, %v11983
    %v12176 = vpack.c.b16 %v11988, %v11984
    %v12177 = vpack.c.b16 %v11989, %v11985
    %v12178 = vpack.c.b16 %v11990, %v11986
    %v12179 = vpack.c.b16 %v11995, %v11991
    %v12180 = vpack.c.b16 %v11996, %v11992
    %v12181 = vpack.c.b16 %v11997, %v11993
    %v12182 = vpack.c.b16 %v11998, %v11994
    %v12183 = vpack.c.b16 %v12003, %v11999
    %v12184 = vpack.c.b16 %v12004, %v12000
    %v12185 = vpack.c.b16 %v12005, %v12001
    %v12186 = vpack.c.b16 %v12006, %v12002
    %v12187 = vpack.c.b16 %v12011, %v12007
    %v12188 = vpack.c.b16 %v12012, %v12008
    %v12189 = vpack.c.b16 %v12013, %v12009
    %v12190 = vpack.c.b16 %v12014, %v12010
    %v12191 = vpack.c.b16 %v12019, %v12015
    %v12192 = vpack.c.b16 %v12020, %v12016
    %v12193 = vpack.c.b16 %v12021, %v12017
    %v12194 = vpack.c.b16 %v12022, %v12018
    %v12195 = vpack.c.b16 %v12027, %v12023
    %v12196 = vpack.c.b16 %v12028, %v12024
    %v12197 = vpack.c.b16 %v12029, %v12025
    %v12198 = vpack.c.b16 %v12030, %v12026
    %v12199 = vpack.c.b16 %v12035, %v12031
    %v12200 = vpack.c.b16 %v12036, %v12032
    %v12201 = vpack.c.b16 %v12037, %v12033
    %v12202 = vpack.c.b16 %v12038, %v12034
    %v12203 = vpack.c.b16 %v12043, %v12039
    %v12204 = vpack.c.b16 %v12044, %v12040
    %v12205 = vpack.c.b16 %v12045, %v12041
    %v12206 = vpack.c.b16 %v12046, %v12042
    %v12207 = vpack.c.b16 %v12051, %v12047
    %v12208 = vpack.c.b16 %v12052, %v12048
    %v12209 = vpack.c.b16 %v12053, %v12049
    %v12210 = vpack.c.b16 %v12054, %v12050
    %v12211 = vpack.c.b16 %v12059, %v12055
    %v12212 = vpack.c.b16 %v12060, %v12056
    %v12213 = vpack.c.b16 %v12061, %v12057
    %v12214 = vpack.c.b16 %v12062, %v12058
    %v12215 = vpack.c.b16 %v12067, %v12063
    %v12216 = vpack.c.b16 %v12068, %v12064
    %v12217 = vpack.c.b16 %v12069, %v12065
    %v12218 = vpack.c.b16 %v12070, %v12066
    %v12219 = vpack.c.b16 %v12075, %v12071
    %v12220 = vpack.c.b16 %v12076, %v12072
    %v12221 = vpack.c.b16 %v12077, %v12073
    %v12222 = vpack.c.b16 %v12078, %v12074
    %v12223 = vpack.c.b16 %v12083, %v12079
    %v12224 = vpack.c.b16 %v12084, %v12080
    %v12225 = vpack.c.b16 %v12085, %v12081
    %v12226 = vpack.c.b16 %v12086, %v12082
    %v12227 = vpack.c.b16 %v12091, %v12087
    %v12228 = vpack.c.b16 %v12092, %v12088
    %v12229 = vpack.c.b16 %v12093, %v12089
    %v12230 = vpack.c.b16 %v12094, %v12090
    %v12231 = vpack.c.b16 %v12099, %v12095
    %v12232 = vpack.c.b16 %v12100, %v12096
    %v12233 = vpack.c.b16 %v12101, %v12097
    %v12234 = vpack.c.b16 %v12102, %v12098
    %v12235 = vpack.c.b16 %v12107, %v12103
    %v12236 = vpack.c.b16 %v12108, %v12104
    %v12237 = vpack.c.b16 %v12109, %v12105
    %v12238 = vpack.c.b16 %v12110, %v12106
    %12367 = vmatprep.subr.bf16.mxu0 %v12112
    %12368 = vmatpush1.bf16.msra.mxu0 %v12111
    %12369 = vmatprep.subr.bf16.mxu0 %v12116
    %12370 = vmatpush1.bf16.msra.mxu0 %v12115
    %12371 = vmatprep.subr.bf16.mxu0 %v12120
    %12372 = vmatpush1.bf16.msra.mxu0 %v12119
    %12373 = vmatprep.subr.bf16.mxu0 %v12124
    %12374 = vmatpush1.bf16.msra.mxu0 %v12123
    %12375 = vmatprep.subr.bf16.mxu0 %v12128
    %12376 = vmatpush1.bf16.msra.mxu0 %v12127
    %12377 = vmatprep.subr.bf16.mxu0 %v12132
    %12378 = vmatpush1.bf16.msra.mxu0 %v12131
    %12379 = vmatprep.subr.bf16.mxu0 %v12136
    %12380 = vmatpush1.bf16.msra.mxu0 %v12135
    %12381 = vmatprep.subr.bf16.mxu0 %v12140
    %12382 = vmatpush1.bf16.msra.mxu0 %v12139
    %12383 = vmatprep.subr.bf16.mxu0 %v12144
    %12384 = vmatpush1.bf16.msra.mxu0 %v12143
    %12385 = vmatprep.subr.bf16.mxu0 %v12148
    %12386 = vmatpush1.bf16.msra.mxu0 %v12147
    %12387 = vmatprep.subr.bf16.mxu0 %v12152
    %12388 = vmatpush1.bf16.msra.mxu0 %v12151
    %12389 = vmatprep.subr.bf16.mxu0 %v12156
    %12390 = vmatpush1.bf16.msra.mxu0 %v12155
    %12391 = vmatprep.subr.bf16.mxu0 %v12160
    %12392 = vmatpush1.bf16.msra.mxu0 %v12159
    %12393 = vmatprep.subr.bf16.mxu0 %v12164
    %12394 = vmatpush1.bf16.msra.mxu0 %v12163
    %12395 = vmatprep.subr.bf16.mxu0 %v12168
    %12396 = vmatpush1.bf16.msra.mxu0 %v12167
    %12397 = vmatprep.subr.bf16.mxu0 %v12172
    %12398 = vmatpush1.bf16.msra.mxu0 %v12171
    %12399 = vmatprep.mubr.bf16.mxu0 %v11720
    %12400 = vmatmul.mubr.bf16.gmra.mrb[0].mxu0 %v11719
    %v12401 = vpop.f32.mrb[0].mxu0
    %v12402 = vadd.f32 %v11518, %v12401
    %v12403 = vpop.f32.mrb[0].mxu0
    %v12404 = vadd.f32 %v11522, %v12403
    %v12405 = vpop.f32.mrb[0].mxu0
    %v12406 = vadd.f32 %v11518, %v12405
    %v12407 = vpop.f32.mrb[0].mxu0
    %v12408 = vadd.f32 %v11522, %v12407
    %12409 = vdwg.mxu0
    %12410 = vmatprep.subr.bf16.mxu0 %v12176
    %12411 = vmatpush1.bf16.msra.mxu0 %v12175
    %12412 = vmatprep.subr.bf16.mxu0 %v12180
    %12413 = vmatpush1.bf16.msra.mxu0 %v12179
    %12414 = vmatprep.subr.bf16.mxu0 %v12184
    %12415 = vmatpush1.bf16.msra.mxu0 %v12183
    %12416 = vmatprep.subr.bf16.mxu0 %v12188
    %12417 = vmatpush1.bf16.msra.mxu0 %v12187
    %12418 = vmatprep.subr.bf16.mxu0 %v12192
    %12419 = vmatpush1.bf16.msra.mxu0 %v12191
    %12420 = vmatprep.subr.bf16.mxu0 %v12196
    %12421 = vmatpush1.bf16.msra.mxu0 %v12195
    %12422 = vmatprep.subr.bf16.mxu0 %v12200
    %12423 = vmatpush1.bf16.msra.mxu0 %v12199
    %12424 = vmatprep.subr.bf16.mxu0 %v12204
    %12425 = vmatpush1.bf16.msra.mxu0 %v12203
    %12426 = vmatprep.subr.bf16.mxu0 %v12208
    %12427 = vmatpush1.bf16.msra.mxu0 %v12207
    %12428 = vmatprep.subr.bf16.mxu0 %v12212
    %12429 = vmatpush1.bf16.msra.mxu0 %v12211
    %12430 = vmatprep.subr.bf16.mxu0 %v12216
    %12431 = vmatpush1.bf16.msra.mxu0 %v12215
    %12432 = vmatprep.subr.bf16.mxu0 %v12220
    %12433 = vmatpush1.bf16.msra.mxu0 %v12219
    %12434 = vmatprep.subr.bf16.mxu0 %v12224
    %12435 = vmatpush1.bf16.msra.mxu0 %v12223
    %12436 = vmatprep.subr.bf16.mxu0 %v12228
    %12437 = vmatpush1.bf16.msra.mxu0 %v12227
    %12438 = vmatprep.subr.bf16.mxu0 %v12232
    %12439 = vmatpush1.bf16.msra.mxu0 %v12231
    %12440 = vmatprep.subr.bf16.mxu0 %v12236
    %12441 = vmatpush1.bf16.msra.mxu0 %v12235
    %12442 = vmatprep.mubr.bf16.mxu0 %v11722
    %12443 = vmatmul.mubr.bf16.gmra.mrb[0].mxu0 %v11721
    %v12444 = vpop.f32.mrb[0].mxu0
    %v12445 = vadd.f32 %v12402, %v12444
    %v12446 = vpop.f32.mrb[0].mxu0
    %v12447 = vadd.f32 %v12404, %v12446
    %v12448 = vpop.f32.mrb[0].mxu0
    %v12449 = vadd.f32 %v12406, %v12448
    %v12450 = vpop.f32.mrb[0].mxu0
    %v12451 = vadd.f32 %v12408, %v12450
    %12452 = vdwg.mxu0
    %12453 = vmatprep.subr.bf16.mxu0 %v12114
    %12454 = vmatpush1.bf16.msra.mxu0 %v12113
    %12455 = vmatprep.subr.bf16.mxu0 %v12118
    %12456 = vmatpush1.bf16.msra.mxu0 %v12117
    %12457 = vmatprep.subr.bf16.mxu0 %v12122
    %12458 = vmatpush1.bf16.msra.mxu0 %v12121
    %12459 = vmatprep.subr.bf16.mxu0 %v12126
    %12460 = vmatpush1.bf16.msra.mxu0 %v12125
    %12461 = vmatprep.subr.bf16.mxu0 %v12130
    %12462 = vmatpush1.bf16.msra.mxu0 %v12129
    %12463 = vmatprep.subr.bf16.mxu0 %v12134
    %12464 = vmatpush1.bf16.msra.mxu0 %v12133
    %12465 = vmatprep.subr.bf16.mxu0 %v12138
    %12466 = vmatpush1.bf16.msra.mxu0 %v12137
    %12467 = vmatprep.subr.bf16.mxu0 %v12142
    %12468 = vmatpush1.bf16.msra.mxu0 %v12141
    %12469 = vmatprep.subr.bf16.mxu0 %v12146
    %12470 = vmatpush1.bf16.msra.mxu0 %v12145
    %12471 = vmatprep.subr.bf16.mxu0 %v12150
    %12472 = vmatpush1.bf16.msra.mxu0 %v12149
    %12473 = vmatprep.subr.bf16.mxu0 %v12154
    %12474 = vmatpush1.bf16.msra.mxu0 %v12153
    %12475 = vmatprep.subr.bf16.mxu0 %v12158
    %12476 = vmatpush1.bf16.msra.mxu0 %v12157
    %12477 = vmatprep.subr.bf16.mxu0 %v12162
    %12478 = vmatpush1.bf16.msra.mxu0 %v12161
    %12479 = vmatprep.subr.bf16.mxu0 %v12166
    %12480 = vmatpush1.bf16.msra.mxu0 %v12165
    %12481 = vmatprep.subr.bf16.mxu0 %v12170
    %12482 = vmatpush1.bf16.msra.mxu0 %v12169
    %12483 = vmatprep.subr.bf16.mxu0 %v12174
    %12484 = vmatpush1.bf16.msra.mxu0 %v12173
    %12485 = vmatprep.mubr.bf16.mxu0 %v11720
    %12486 = vmatmul.mubr.bf16.gmra.mrb[0].mxu0 %v11719
    %v12487 = vpop.f32.mrb[0].mxu0
    %v12488 = vadd.f32 %v11526, %v12487
    %v12489 = vpop.f32.mrb[0].mxu0
    %v12490 = vadd.f32 %v11530, %v12489
    %v12491 = vpop.f32.mrb[0].mxu0
    %v12492 = vadd.f32 %v11526, %v12491
    %v12493 = vpop.f32.mrb[0].mxu0
    %v12494 = vadd.f32 %v11530, %v12493
    %12495 = vdwg.mxu0
    %12496 = vmatprep.subr.bf16.mxu0 %v12178
    %12497 = vmatpush1.bf16.msra.mxu0 %v12177
    %12498 = vmatprep.subr.bf16.mxu0 %v12182
    %12499 = vmatpush1.bf16.msra.mxu0 %v12181
    %12500 = vmatprep.subr.bf16.mxu0 %v12186
    %12501 = vmatpush1.bf16.msra.mxu0 %v12185
    %12502 = vmatprep.subr.bf16.mxu0 %v12190
    %12503 = vmatpush1.bf16.msra.mxu0 %v12189
    %12504 = vmatprep.subr.bf16.mxu0 %v12194
    %12505 = vmatpush1.bf16.msra.mxu0 %v12193
    %12506 = vmatprep.subr.bf16.mxu0 %v12198
    %12507 = vmatpush1.bf16.msra.mxu0 %v12197
    %12508 = vmatprep.subr.bf16.mxu0 %v12202
    %12509 = vmatpush1.bf16.msra.mxu0 %v12201
    %12510 = vmatprep.subr.bf16.mxu0 %v12206
    %12511 = vmatpush1.bf16.msra.mxu0 %v12205
    %12512 = vmatprep.subr.bf16.mxu0 %v12210
    %12513 = vmatpush1.bf16.msra.mxu0 %v12209
    %12514 = vmatprep.subr.bf16.mxu0 %v12214
    %12515 = vmatpush1.bf16.msra.mxu0 %v12213
    %12516 = vmatprep.subr.bf16.mxu0 %v12218
    %12517 = vmatpush1.bf16.msra.mxu0 %v12217
    %12518 = vmatprep.subr.bf16.mxu0 %v12222
    %12519 = vmatpush1.bf16.msra.mxu0 %v12221
    %12520 = vmatprep.subr.bf16.mxu0 %v12226
    %12521 = vmatpush1.bf16.msra.mxu0 %v12225
    %12522 = vmatprep.subr.bf16.mxu0 %v12230
    %12523 = vmatpush1.bf16.msra.mxu0 %v12229
    %12524 = vmatprep.subr.bf16.mxu0 %v12234
    %12525 = vmatpush1.bf16.msra.mxu0 %v12233
    %12526 = vmatprep.subr.bf16.mxu0 %v12238
    %12527 = vmatpush1.bf16.msra.mxu0 %v12237
    %12528 = vmatprep.mubr.bf16.mxu0 %v11722
    %12529 = vmatmul.mubr.bf16.gmra.mrb[0].mxu0 %v11721
    %v12530 = vpop.f32.mrb[0].mxu0
    %v12531 = vadd.f32 %v12488, %v12530
    %v12532 = vpop.f32.mrb[0].mxu0
    %v12533 = vadd.f32 %v12490, %v12532
    %v12534 = vpop.f32.mrb[0].mxu0
    %v12535 = vadd.f32 %v12492, %v12534
    %v12536 = vpop.f32.mrb[0].mxu0
    %v12537 = vadd.f32 %v12494, %v12536
    %12538 = vdwg.mxu0
    %12539 = vst [vmem:[#allocation14] sm:$0xff] %v12445
    %12540 = vst [vmem:[#allocation14 + $0x8] sm:$0xff] %v12447
    %12541 = vst [vmem:[#allocation14 + $0x10] sm:$0xff] %v12531
    %12542 = vst [vmem:[#allocation14 + $0x18] sm:$0xff] %v12533
    %12543 = vst [vmem:[#allocation14 + $0x20] sm:$0xff] %v12449
    %12544 = vst [vmem:[#allocation14 + $0x28] sm:$0xff] %v12451
    %12545 = vst [vmem:[#allocation14 + $0x30] sm:$0xff] %v12535
    %12546 = vst [vmem:[#allocation14 + $0x38] sm:$0xff] %v12537
    // Predicated region
    $region94: #{tpu_custom_call.1} parent=1 // pred_check
      _
    $region95: #{tpu_custom_call.1} parent=1 // pred_check_branch
      %12548 = sbr.rel (0) target = $region97
    $region96: #{tpu_custom_call.1} parent=1 // pred_region
      %s12550 = ssub.s32 1024, 1024
      %12551 = vsyncadd [#allocation4], %s12550
      %s12552 = sshll.u32 [#allocation14], 4
      %s12553 = int_to_ptr.vmem [resolvable:$true] %s12552
      %12558 = dma.vmem_to_hbm [thread:$0]  %s12553, 1024, %s16, [#allocation4], 512, 512, 32
    $region97: #{tpu_custom_call.1} parent=1 // pred_fallthru
      _
    // Predicated region
    $region98: #{tpu_custom_call.1} parent=1 // pred_check
      _
    $region99: #{tpu_custom_call.1} parent=1 // pred_check_branch
      %12560 = sbr.rel (0) target = $region101
    $region100: #{tpu_custom_call.1} parent=1 // pred_region
      %12561 = dma.done [#allocation4], 1024
    $region101: #{tpu_custom_call.1} parent=1 // pred_fallthru
      _
    %12562 = vsyncpa [#allocation3], 1
    %12563 = vsyncpa [#allocation6], 1
    %12564 = vsyncpa [#allocation9], 1
    %12565 = vsyncpa [#allocation12], 1
    %12566 = vsyncpa [#allocation4], 1

</llo_original>
